<compile_context>
chip_gen: v7x
topology: tpu7x:2x2x1
jax: 0.10.0
libtpu: 0.0.40
codegen_flags: <defaults>
</compile_context>

<pallas_src>
import functools

import numpy as np
import jax
import jax.numpy as jnp
from jax import lax
from jax.experimental import pallas as pl
from jax.experimental.pallas import tpu as pltpu


def _prepare_params(weight_oihw, *, K, Cin, C, H, W):
    """Split the conv weight into x / h halves, build per-tap masks & shifts."""
    P = (K - 1) // 2
    C4 = 4 * C
    HW = H * W
    w = weight_oihw.astype(jnp.float32)
    w_x = w[:, :Cin]                                    # (C4, Cin, K, K) -> wrapper conv
    # (C4, C, K, K) -> (C4, K, K, C) -> (C4, K*K*C); column = tap*C + ic.
    w_h = jnp.transpose(w[:, Cin:], (0, 2, 3, 1)).reshape(C4, K * K * C)

    ys = np.arange(H).reshape(H, 1)
    xcs = np.arange(W).reshape(1, W)
    rows, shifts = [], []
    for ky in range(K):
        for kx in range(K):
            dy, dx = ky - P, kx - P
            valid = ((ys + dy >= 0) & (ys + dy < H) &
                     (xcs + dx >= 0) & (xcs + dx < W)).astype(np.float32)
            rows.append(valid.reshape(1, HW))
            shifts.append(int((-(dy * W + dx)) % HW))   # pull from pixel p + dy*W + dx
    mask = jnp.asarray(np.concatenate(rows, axis=0))    # (K*K, HW) -- 9 KiB
    return w_x, w_h, mask, tuple(shifts)


def _make_kernel(S, C, HW, shifts):
    C4 = 4 * C

    def kernel(gx_ref, wh_ref, m_ref, hseq_ref, clast_ref):
        # (C4, K*K*C) is only ~2 vregs; cheap to keep hoisted across the loop.
        wh = wh_ref[...]

        def one_step(t, h, c):
            # im2col(h) via 9 static lane rolls (XLU slot); mask each piece as
            # it is produced, re-reading the (1, HW) mask row from VMEM.
            pieces = []
            for tap, sh in enumerate(shifts):
                rolled = h if sh == 0 else pltpu.roll(h, sh, 1)
                pieces.append(rolled * m_ref[pl.ds(tap, 1), :])
            stacked = jnp.concatenate(pieces, axis=0)        # (K*K*C, HW)
            # One small MXU matmul for all taps and gates; x-contribution and
            # bias were hoisted off the recurrence (gx_ref).
            gates = jnp.dot(wh, stacked,
                            precision=jax.lax.Precision.HIGHEST,
                            preferred_element_type=jnp.float32) + gx_ref[t]
            i_g = jax.nn.sigmoid(gates[0 * C:1 * C])
            f_g = jax.nn.sigmoid(gates[1 * C:2 * C])
            g_g = jnp.tanh(gates[2 * C:3 * C])
            o_g = jax.nn.sigmoid(gates[3 * C:4 * C])
            c_new = f_g * c + i_g * g_g
            h_new = o_g * jnp.tanh(c_new)
            return h_new, c_new

        h = jnp.zeros((C, HW), jnp.float32)
        c = jnp.zeros((C, HW), jnp.float32)
        # Recurrence fully unrolled at trace time (short fixed S): all indices
        # are static; pairs of steps share one aligned (2*C, HW) store.
        for j in range(S // 2):
            t0 = 2 * j
            h1, c = one_step(t0, h, c)
            h, c = one_step(t0 + 1, h1, c)
            hseq_ref[pl.ds(t0 * C, 2 * C), :] = jnp.concatenate([h1, h], axis=0)
        if S % 2:                                           # static tail
            h, c = one_step(S - 1, h, c)
            hseq_ref[pl.ds((S - 1) * C, C), :] = h
        clast_ref[...] = c                                  # written once

    return kernel


def conv_lstm_forward(xs, weight, bias, *, kernel_size):
    """ConvLSTM recurrence with zero initial (h, c) state.

    Args (PyTorch layouts):
      xs:     (S, B, Cin, H, W) float32
      weight: (4*C, Cin + C, K, K) float32 (OIHW), C == Cin
      bias:   (4*C,) float32
    Returns:
      h_seq: (S, B, C, H, W);  (h_out, c_out): each (B, C, H, W)
    """
    S, B, Cin, H, W = xs.shape
    C = Cin
    K = kernel_size
    C4 = 4 * C
    HW = H * W
    P = (K - 1) // 2

    w_x, wh_k, mask_k, shifts = _prepare_params(weight, K=K, Cin=Cin, C=C, H=H, W=W)

    # x-half of the gate conv + bias, hoisted off the serial recurrence: one
    # batched conv over all S*B frames (perf-review items 1 & 2).
    dn = lax.conv_dimension_numbers((S * B, Cin, H, W), w_x.shape,
                                    ('NCHW', 'OIHW', 'NCHW'))
    gx = lax.conv_general_dilated(
        xs.astype(jnp.float32).reshape(S * B, Cin, H, W), w_x,
        (1, 1), [(P, P), (P, P)], dimension_numbers=dn,
        precision=lax.Precision.HIGHEST)
    gx = gx + bias.astype(jnp.float32).reshape(1, C4, 1, 1)
    # (S*B, C4, H, W) -> (B, S, C4, HW): per-batch blocks, HW lanes (>=128).
    gx_k = jnp.transpose(gx.reshape(S, B, C4, HW), (1, 0, 2, 3))

    kernel = _make_kernel(S, C, HW, shifts)

    grid_spec = pltpu.PrefetchScalarGridSpec(
        num_scalar_prefetch=0,
        grid=(B,),                       # independent batches -> "parallel"
        in_specs=[
            pl.BlockSpec((None, S, C4, HW), lambda b: (b, 0, 0, 0)),
            pl.BlockSpec((C4, wh_k.shape[1]), lambda b: (0, 0)),
            pl.BlockSpec((K * K, HW), lambda b: (0, 0)),
        ],
        out_specs=(
            pl.BlockSpec((None, S * C, HW), lambda b: (b, 0, 0)),
            pl.BlockSpec((None, C, HW), lambda b: (b, 0, 0)),
        ),
    )

    h_seq_k, c_last_k = pl.pallas_call(
        kernel,
        out_shape=(jax.ShapeDtypeStruct((B, S * C, HW), jnp.float32),
                   jax.ShapeDtypeStruct((B, C, HW), jnp.float32)),
        grid_spec=grid_spec,
        compiler_params=pltpu.CompilerParams(
            dimension_semantics=("parallel",)),   # shards batches across v7x TCs
    )(gx_k, wh_k, mask_k)

    # Back to PyTorch NCHW layouts (wrapper-side layout plumbing only).
    h_seq = jnp.transpose(h_seq_k.reshape(B, S, C, H, W), (1, 0, 2, 3, 4))
    c_out = c_last_k.reshape(B, C, H, W)
    h_out = h_seq[-1]
    return h_seq, (h_out, c_out)


def conv_lstm_reference(xs, weight, bias, *, kernel_size):
    """Pure-JAX NCHW reference (lax.conv), mirrors the PyTorch module."""
    S, B, Cin, H, W = xs.shape
    C = Cin
    P = (kernel_size - 1) // 2
    dn = lax.conv_dimension_numbers(
        (B, Cin + C, H, W), weight.shape, ('NCHW', 'OIHW', 'NCHW'))
    h = jnp.zeros((B, C, H, W), jnp.float32)
    c = jnp.zeros((B, C, H, W), jnp.float32)
    h_seq = []
    for t in range(S):
        combined = jnp.concatenate([xs[t], h], axis=1)
        gates = lax.conv_general_dilated(
            combined, weight, (1, 1), [(P, P), (P, P)],
            dimension_numbers=dn,
            precision=lax.Precision.HIGHEST) + bias.reshape(1, 4 * C, 1, 1)
        i = jax.nn.sigmoid(gates[:, 0 * C:1 * C])
        f = jax.nn.sigmoid(gates[:, 1 * C:2 * C])
        g = jnp.tanh(gates[:, 2 * C:3 * C])
        o = jax.nn.sigmoid(gates[:, 3 * C:4 * C])
        c = f * c + i * g
        h = o * jnp.tanh(c)
        h_seq.append(h)
    return jnp.stack(h_seq), (h, c)


if __name__ == "__main__":
    # Module config: in_shape=(B, C, H, W)=(2, 4, 16, 16), kernel_size=3,
    # am without 'groupnorm'; forward with seq_len=8.
    SEQ, B, C, HW_SIDE, K = 8, 2, 4, 16, 3

    key = jax.random.PRNGKey(0)
    kx, kw, kb = jax.random.split(key, 3)

    xs = jax.random.normal(kx, (SEQ, B, C, HW_SIDE, HW_SIDE), dtype=jnp.float32)

    # Deterministic conv params (PyTorch Conv2d-style uniform init), OIHW.
    fan_in = (C + C) * K * K
    bound = 1.0 / (fan_in ** 0.5)
    w_oihw = jax.random.uniform(kw, (4 * C, C + C, K, K),
                                minval=-bound, maxval=bound, dtype=jnp.float32)
    bias = jax.random.uniform(kb, (4 * C,),
                              minval=-bound, maxval=bound, dtype=jnp.float32)

    run = jax.jit(functools.partial(conv_lstm_forward, kernel_size=K))
    h_seq, (h_out, c_out) = run(xs, w_oihw, bias)
    jax.block_until_ready((h_seq, h_out, c_out))

    # Correctness check against the pure-JAX reference.
    h_ref, (h_out_ref, c_out_ref) = conv_lstm_reference(
        xs, w_oihw, bias, kernel_size=K)
    assert h_seq.shape == (SEQ, B, C, HW_SIDE, HW_SIDE)
    assert h_out.shape == (B, C, HW_SIDE, HW_SIDE)
    assert c_out.shape == (B, C, HW_SIDE, HW_SIDE)
    # Tolerance covers MXU f32 summation-order differences over the 8-step
    # recurrence (both paths use HIGHEST-precision contractions).
    tol = dict(atol=5e-4, rtol=5e-4)
    assert jnp.allclose(h_seq, h_ref, **tol)
    assert jnp.allclose(h_out, h_out_ref, **tol)
    assert jnp.allclose(c_out, c_out_ref, **tol)

    print("KERNEL_OK")
</pallas_src>

<mosaic_0001>
module attributes {stable_mosaic.version = 11 : i64} {
  func.func @kernel(%arg0: i32, %arg1: memref<1x8x16x256xf32, #tpu.memory_space<vmem>>, %arg2: memref<16x36xf32, #tpu.memory_space<vmem>>, %arg3: memref<9x256xf32, #tpu.memory_space<vmem>>, %arg4: memref<1x32x256xf32, #tpu.memory_space<vmem>>, %arg5: memref<1x4x256xf32, #tpu.memory_space<vmem>>) attributes {dimension_semantics = [#tpu.dimension_semantics<parallel>], iteration_bounds = array<i64: 2>, scalar_prefetch = 0 : i64, scratch_operands = 0 : i64, tpu.core_type = #tpu.core_type<tc>, window_params = [{transform_indices = @transform_0, window_bounds = array<i64: 1, 8, 16, 256>}, {pipeline_mode = #tpu.pipeline_mode<synchronous>, transform_indices = @transform_1, window_bounds = array<i64: 16, 36>}, {pipeline_mode = #tpu.pipeline_mode<synchronous>, transform_indices = @transform_2, window_bounds = array<i64: 9, 256>}, {transform_indices = @transform_3, window_bounds = array<i64: 1, 32, 256>}, {transform_indices = @transform_4, window_bounds = array<i64: 1, 4, 256>}]} {
    %c0 = arith.constant 0 : index
    %c0_0 = arith.constant 0 : index
    %0 = vector.load %arg2[%c0, %c0_0] : memref<16x36xf32, #tpu.memory_space<vmem>>, vector<16x36xf32>
    %cst = arith.constant 0.000000e+00 : f32
    %1 = vector.broadcast %cst : f32 to vector<4x256xf32>
    %cst_1 = arith.constant 0.000000e+00 : f32
    %2 = vector.broadcast %cst_1 : f32 to vector<4x256xf32>
    %c17_i32 = arith.constant 17 : i32
    %3 = tpu.dynamic_rotate %1 by %c17_i32 dim 1 : vector<4x256xf32>, i32 -> vector<4x256xf32>
    %c0_2 = arith.constant 0 : index
    %c0_3 = arith.constant 0 : index
    %4 = vector.load %arg3[%c0_2, %c0_3] : memref<9x256xf32, #tpu.memory_space<vmem>>, vector<1x256xf32>
    %5 = vector.broadcast %4 : vector<1x256xf32> to vector<4x256xf32>
    %6 = arith.mulf %3, %5 : vector<4x256xf32>
    %c16_i32 = arith.constant 16 : i32
    %7 = tpu.dynamic_rotate %1 by %c16_i32 dim 1 : vector<4x256xf32>, i32 -> vector<4x256xf32>
    %c1 = arith.constant 1 : index
    %c0_4 = arith.constant 0 : index
    %8 = vector.load %arg3[%c1, %c0_4] : memref<9x256xf32, #tpu.memory_space<vmem>>, vector<1x256xf32>
    %9 = vector.broadcast %8 : vector<1x256xf32> to vector<4x256xf32>
    %10 = arith.mulf %7, %9 : vector<4x256xf32>
    %c15_i32 = arith.constant 15 : i32
    %11 = tpu.dynamic_rotate %1 by %c15_i32 dim 1 : vector<4x256xf32>, i32 -> vector<4x256xf32>
    %c2 = arith.constant 2 : index
    %c0_5 = arith.constant 0 : index
    %12 = vector.load %arg3[%c2, %c0_5] : memref<9x256xf32, #tpu.memory_space<vmem>>, vector<1x256xf32>
    %13 = vector.broadcast %12 : vector<1x256xf32> to vector<4x256xf32>
    %14 = arith.mulf %11, %13 : vector<4x256xf32>
    %c1_i32 = arith.constant 1 : i32
    %15 = tpu.dynamic_rotate %1 by %c1_i32 dim 1 : vector<4x256xf32>, i32 -> vector<4x256xf32>
    %c3 = arith.constant 3 : index
    %c0_6 = arith.constant 0 : index
    %16 = vector.load %arg3[%c3, %c0_6] : memref<9x256xf32, #tpu.memory_space<vmem>>, vector<1x256xf32>
    %17 = vector.broadcast %16 : vector<1x256xf32> to vector<4x256xf32>
    %18 = arith.mulf %15, %17 : vector<4x256xf32>
    %c4 = arith.constant 4 : index
    %c0_7 = arith.constant 0 : index
    %19 = vector.load %arg3[%c4, %c0_7] : memref<9x256xf32, #tpu.memory_space<vmem>>, vector<1x256xf32>
    %20 = vector.broadcast %19 : vector<1x256xf32> to vector<4x256xf32>
    %21 = arith.mulf %1, %20 : vector<4x256xf32>
    %c255_i32 = arith.constant 255 : i32
    %22 = tpu.dynamic_rotate %1 by %c255_i32 dim 1 : vector<4x256xf32>, i32 -> vector<4x256xf32>
    %c5 = arith.constant 5 : index
    %c0_8 = arith.constant 0 : index
    %23 = vector.load %arg3[%c5, %c0_8] : memref<9x256xf32, #tpu.memory_space<vmem>>, vector<1x256xf32>
    %24 = vector.broadcast %23 : vector<1x256xf32> to vector<4x256xf32>
    %25 = arith.mulf %22, %24 : vector<4x256xf32>
    %c241_i32 = arith.constant 241 : i32
    %26 = tpu.dynamic_rotate %1 by %c241_i32 dim 1 : vector<4x256xf32>, i32 -> vector<4x256xf32>
    %c6 = arith.constant 6 : index
    %c0_9 = arith.constant 0 : index
    %27 = vector.load %arg3[%c6, %c0_9] : memref<9x256xf32, #tpu.memory_space<vmem>>, vector<1x256xf32>
    %28 = vector.broadcast %27 : vector<1x256xf32> to vector<4x256xf32>
    %29 = arith.mulf %26, %28 : vector<4x256xf32>
    %c240_i32 = arith.constant 240 : i32
    %30 = tpu.dynamic_rotate %1 by %c240_i32 dim 1 : vector<4x256xf32>, i32 -> vector<4x256xf32>
    %c7 = arith.constant 7 : index
    %c0_10 = arith.constant 0 : index
    %31 = vector.load %arg3[%c7, %c0_10] : memref<9x256xf32, #tpu.memory_space<vmem>>, vector<1x256xf32>
    %32 = vector.broadcast %31 : vector<1x256xf32> to vector<4x256xf32>
    %33 = arith.mulf %30, %32 : vector<4x256xf32>
    %c239_i32 = arith.constant 239 : i32
    %34 = tpu.dynamic_rotate %1 by %c239_i32 dim 1 : vector<4x256xf32>, i32 -> vector<4x256xf32>
    %c8 = arith.constant 8 : index
    %c0_11 = arith.constant 0 : index
    %35 = vector.load %arg3[%c8, %c0_11] : memref<9x256xf32, #tpu.memory_space<vmem>>, vector<1x256xf32>
    %36 = vector.broadcast %35 : vector<1x256xf32> to vector<4x256xf32>
    %37 = arith.mulf %34, %36 : vector<4x256xf32>
    %38 = tpu.concatenate %6, %10, %14, %18, %21, %25, %29, %33, %37 in 0 : vector<4x256xf32>, vector<4x256xf32>, vector<4x256xf32>, vector<4x256xf32>, vector<4x256xf32>, vector<4x256xf32>, vector<4x256xf32>, vector<4x256xf32>, vector<4x256xf32> -> vector<36x256xf32>
    %cst_12 = arith.constant dense<0.000000e+00> : vector<16x256xf32>
    %39 = tpu.matmul %0, %38, %cst_12 {dimension_numbers = #tpu.dot_dimension_numbers<[1], [0], [0], [1], [0, 0, 1, 1], [], []>, precision = #tpu.contract_precision<fp32>} : vector<16x36xf32>, vector<36x256xf32>, vector<16x256xf32> -> vector<16x256xf32>
    %c0_13 = arith.constant 0 : index
    %c0_14 = arith.constant 0 : index
    %c0_15 = arith.constant 0 : index
    %c0_16 = arith.constant 0 : index
    %40 = vector.load %arg1[%c0_13, %c0_14, %c0_15, %c0_16] : memref<1x8x16x256xf32, #tpu.memory_space<vmem>>, vector<1x1x16x256xf32>
    %41 = vector.shape_cast %40 : vector<1x1x16x256xf32> to vector<16x256xf32>
    %42 = arith.addf %39, %41 : vector<16x256xf32>
    %43 = vector.extract_strided_slice %42 {offsets = [0, 0], sizes = [4, 256], strides = [1, 1]} : vector<16x256xf32> to vector<4x256xf32>
    %44 = arith.negf %43 : vector<4x256xf32>
    %45 = math.exp %44 : vector<4x256xf32>
    %cst_17 = arith.constant 1.000000e+00 : f32
    %46 = vector.broadcast %cst_17 : f32 to vector<4x256xf32>
    %47 = arith.addf %46, %45 : vector<4x256xf32>
    %48 = arith.divf %46, %47 : vector<4x256xf32>
    %49 = vector.extract_strided_slice %42 {offsets = [4, 0], sizes = [4, 256], strides = [1, 1]} : vector<16x256xf32> to vector<4x256xf32>
    %50 = arith.negf %49 : vector<4x256xf32>
    %51 = math.exp %50 : vector<4x256xf32>
    %cst_18 = arith.constant 1.000000e+00 : f32
    %52 = vector.broadcast %cst_18 : f32 to vector<4x256xf32>
    %53 = arith.addf %52, %51 : vector<4x256xf32>
    %54 = arith.divf %52, %53 : vector<4x256xf32>
    %55 = vector.extract_strided_slice %42 {offsets = [8, 0], sizes = [4, 256], strides = [1, 1]} : vector<16x256xf32> to vector<4x256xf32>
    %56 = math.tanh %55 : vector<4x256xf32>
    %57 = vector.extract_strided_slice %42 {offsets = [12, 0], sizes = [4, 256], strides = [1, 1]} : vector<16x256xf32> to vector<4x256xf32>
    %58 = arith.negf %57 : vector<4x256xf32>
    %59 = math.exp %58 : vector<4x256xf32>
    %cst_19 = arith.constant 1.000000e+00 : f32
    %60 = vector.broadcast %cst_19 : f32 to vector<4x256xf32>
    %61 = arith.addf %60, %59 : vector<4x256xf32>
    %62 = arith.divf %60, %61 : vector<4x256xf32>
    %63 = arith.mulf %54, %2 : vector<4x256xf32>
    %64 = arith.mulf %48, %56 : vector<4x256xf32>
    %65 = arith.addf %63, %64 : vector<4x256xf32>
    %66 = math.tanh %65 : vector<4x256xf32>
    %67 = arith.mulf %62, %66 : vector<4x256xf32>
    %c17_i32_20 = arith.constant 17 : i32
    %68 = tpu.dynamic_rotate %67 by %c17_i32_20 dim 1 : vector<4x256xf32>, i32 -> vector<4x256xf32>
    %c0_21 = arith.constant 0 : index
    %c0_22 = arith.constant 0 : index
    %69 = vector.load %arg3[%c0_21, %c0_22] : memref<9x256xf32, #tpu.memory_space<vmem>>, vector<1x256xf32>
    %70 = vector.broadcast %69 : vector<1x256xf32> to vector<4x256xf32>
    %71 = arith.mulf %68, %70 : vector<4x256xf32>
    %c16_i32_23 = arith.constant 16 : i32
    %72 = tpu.dynamic_rotate %67 by %c16_i32_23 dim 1 : vector<4x256xf32>, i32 -> vector<4x256xf32>
    %c1_24 = arith.constant 1 : index
    %c0_25 = arith.constant 0 : index
    %73 = vector.load %arg3[%c1_24, %c0_25] : memref<9x256xf32, #tpu.memory_space<vmem>>, vector<1x256xf32>
    %74 = vector.broadcast %73 : vector<1x256xf32> to vector<4x256xf32>
    %75 = arith.mulf %72, %74 : vector<4x256xf32>
    %c15_i32_26 = arith.constant 15 : i32
    %76 = tpu.dynamic_rotate %67 by %c15_i32_26 dim 1 : vector<4x256xf32>, i32 -> vector<4x256xf32>
    %c2_27 = arith.constant 2 : index
    %c0_28 = arith.constant 0 : index
    %77 = vector.load %arg3[%c2_27, %c0_28] : memref<9x256xf32, #tpu.memory_space<vmem>>, vector<1x256xf32>
    %78 = vector.broadcast %77 : vector<1x256xf32> to vector<4x256xf32>
    %79 = arith.mulf %76, %78 : vector<4x256xf32>
    %c1_i32_29 = arith.constant 1 : i32
    %80 = tpu.dynamic_rotate %67 by %c1_i32_29 dim 1 : vector<4x256xf32>, i32 -> vector<4x256xf32>
    %c3_30 = arith.constant 3 : index
    %c0_31 = arith.constant 0 : index
    %81 = vector.load %arg3[%c3_30, %c0_31] : memref<9x256xf32, #tpu.memory_space<vmem>>, vector<1x256xf32>
    %82 = vector.broadcast %81 : vector<1x256xf32> to vector<4x256xf32>
    %83 = arith.mulf %80, %82 : vector<4x256xf32>
    %c4_32 = arith.constant 4 : index
    %c0_33 = arith.constant 0 : index
    %84 = vector.load %arg3[%c4_32, %c0_33] : memref<9x256xf32, #tpu.memory_space<vmem>>, vector<1x256xf32>
    %85 = vector.broadcast %84 : vector<1x256xf32> to vector<4x256xf32>
    %86 = arith.mulf %67, %85 : vector<4x256xf32>
    %c255_i32_34 = arith.constant 255 : i32
    %87 = tpu.dynamic_rotate %67 by %c255_i32_34 dim 1 : vector<4x256xf32>, i32 -> vector<4x256xf32>
    %c5_35 = arith.constant 5 : index
    %c0_36 = arith.constant 0 : index
    %88 = vector.load %arg3[%c5_35, %c0_36] : memref<9x256xf32, #tpu.memory_space<vmem>>, vector<1x256xf32>
    %89 = vector.broadcast %88 : vector<1x256xf32> to vector<4x256xf32>
    %90 = arith.mulf %87, %89 : vector<4x256xf32>
    %c241_i32_37 = arith.constant 241 : i32
    %91 = tpu.dynamic_rotate %67 by %c241_i32_37 dim 1 : vector<4x256xf32>, i32 -> vector<4x256xf32>
    %c6_38 = arith.constant 6 : index
    %c0_39 = arith.constant 0 : index
    %92 = vector.load %arg3[%c6_38, %c0_39] : memref<9x256xf32, #tpu.memory_space<vmem>>, vector<1x256xf32>
    %93 = vector.broadcast %92 : vector<1x256xf32> to vector<4x256xf32>
    %94 = arith.mulf %91, %93 : vector<4x256xf32>
    %c240_i32_40 = arith.constant 240 : i32
    %95 = tpu.dynamic_rotate %67 by %c240_i32_40 dim 1 : vector<4x256xf32>, i32 -> vector<4x256xf32>
    %c7_41 = arith.constant 7 : index
    %c0_42 = arith.constant 0 : index
    %96 = vector.load %arg3[%c7_41, %c0_42] : memref<9x256xf32, #tpu.memory_space<vmem>>, vector<1x256xf32>
    %97 = vector.broadcast %96 : vector<1x256xf32> to vector<4x256xf32>
    %98 = arith.mulf %95, %97 : vector<4x256xf32>
    %c239_i32_43 = arith.constant 239 : i32
    %99 = tpu.dynamic_rotate %67 by %c239_i32_43 dim 1 : vector<4x256xf32>, i32 -> vector<4x256xf32>
    %c8_44 = arith.constant 8 : index
    %c0_45 = arith.constant 0 : index
    %100 = vector.load %arg3[%c8_44, %c0_45] : memref<9x256xf32, #tpu.memory_space<vmem>>, vector<1x256xf32>
    %101 = vector.broadcast %100 : vector<1x256xf32> to vector<4x256xf32>
    %102 = arith.mulf %99, %101 : vector<4x256xf32>
    %103 = tpu.concatenate %71, %75, %79, %83, %86, %90, %94, %98, %102 in 0 : vector<4x256xf32>, vector<4x256xf32>, vector<4x256xf32>, vector<4x256xf32>, vector<4x256xf32>, vector<4x256xf32>, vector<4x256xf32>, vector<4x256xf32>, vector<4x256xf32> -> vector<36x256xf32>
    %cst_46 = arith.constant dense<0.000000e+00> : vector<16x256xf32>
    %104 = tpu.matmul %0, %103, %cst_46 {dimension_numbers = #tpu.dot_dimension_numbers<[1], [0], [0], [1], [0, 0, 1, 1], [], []>, precision = #tpu.contract_precision<fp32>} : vector<16x36xf32>, vector<36x256xf32>, vector<16x256xf32> -> vector<16x256xf32>
    %c0_47 = arith.constant 0 : index
    %c1_48 = arith.constant 1 : index
    %c0_49 = arith.constant 0 : index
    %c0_50 = arith.constant 0 : index
    %105 = vector.load %arg1[%c0_47, %c1_48, %c0_49, %c0_50] : memref<1x8x16x256xf32, #tpu.memory_space<vmem>>, vector<1x1x16x256xf32>
    %106 = vector.shape_cast %105 : vector<1x1x16x256xf32> to vector<16x256xf32>
    %107 = arith.addf %104, %106 : vector<16x256xf32>
    %108 = vector.extract_strided_slice %107 {offsets = [0, 0], sizes = [4, 256], strides = [1, 1]} : vector<16x256xf32> to vector<4x256xf32>
    %109 = arith.negf %108 : vector<4x256xf32>
    %110 = math.exp %109 : vector<4x256xf32>
    %cst_51 = arith.constant 1.000000e+00 : f32
    %111 = vector.broadcast %cst_51 : f32 to vector<4x256xf32>
    %112 = arith.addf %111, %110 : vector<4x256xf32>
    %113 = arith.divf %111, %112 : vector<4x256xf32>
    %114 = vector.extract_strided_slice %107 {offsets = [4, 0], sizes = [4, 256], strides = [1, 1]} : vector<16x256xf32> to vector<4x256xf32>
    %115 = arith.negf %114 : vector<4x256xf32>
    %116 = math.exp %115 : vector<4x256xf32>
    %cst_52 = arith.constant 1.000000e+00 : f32
    %117 = vector.broadcast %cst_52 : f32 to vector<4x256xf32>
    %118 = arith.addf %117, %116 : vector<4x256xf32>
    %119 = arith.divf %117, %118 : vector<4x256xf32>
    %120 = vector.extract_strided_slice %107 {offsets = [8, 0], sizes = [4, 256], strides = [1, 1]} : vector<16x256xf32> to vector<4x256xf32>
    %121 = math.tanh %120 : vector<4x256xf32>
    %122 = vector.extract_strided_slice %107 {offsets = [12, 0], sizes = [4, 256], strides = [1, 1]} : vector<16x256xf32> to vector<4x256xf32>
    %123 = arith.negf %122 : vector<4x256xf32>
    %124 = math.exp %123 : vector<4x256xf32>
    %cst_53 = arith.constant 1.000000e+00 : f32
    %125 = vector.broadcast %cst_53 : f32 to vector<4x256xf32>
    %126 = arith.addf %125, %124 : vector<4x256xf32>
    %127 = arith.divf %125, %126 : vector<4x256xf32>
    %128 = arith.mulf %119, %65 : vector<4x256xf32>
    %129 = arith.mulf %113, %121 : vector<4x256xf32>
    %130 = arith.addf %128, %129 : vector<4x256xf32>
    %131 = math.tanh %130 : vector<4x256xf32>
    %132 = arith.mulf %127, %131 : vector<4x256xf32>
    %133 = tpu.concatenate %67, %132 in 0 : vector<4x256xf32>, vector<4x256xf32> -> vector<8x256xf32>
    %c0_54 = arith.constant 0 : index
    %c0_55 = arith.constant 0 : index
    %c0_56 = arith.constant 0 : index
    %134 = vector.load %arg4[%c0_54, %c0_55, %c0_56] : memref<1x32x256xf32, #tpu.memory_space<vmem>>, vector<1x8x256xf32>
    %135 = vector.shape_cast %134 : vector<1x8x256xf32> to vector<8x256xf32>
    %136 = vector.shape_cast %133 : vector<8x256xf32> to vector<1x8x256xf32>
    tpu.vector_store %arg4[%c0_54, %c0_55, %c0_56], %136 {strides = array<i32>} : memref<1x32x256xf32, #tpu.memory_space<vmem>>, vector<1x8x256xf32>,
    %c17_i32_57 = arith.constant 17 : i32
    %137 = tpu.dynamic_rotate %132 by %c17_i32_57 dim 1 : vector<4x256xf32>, i32 -> vector<4x256xf32>
    %c0_58 = arith.constant 0 : index
    %c0_59 = arith.constant 0 : index
    %138 = vector.load %arg3[%c0_58, %c0_59] : memref<9x256xf32, #tpu.memory_space<vmem>>, vector<1x256xf32>
    %139 = vector.broadcast %138 : vector<1x256xf32> to vector<4x256xf32>
    %140 = arith.mulf %137, %139 : vector<4x256xf32>
    %c16_i32_60 = arith.constant 16 : i32
    %141 = tpu.dynamic_rotate %132 by %c16_i32_60 dim 1 : vector<4x256xf32>, i32 -> vector<4x256xf32>
    %c1_61 = arith.constant 1 : index
    %c0_62 = arith.constant 0 : index
    %142 = vector.load %arg3[%c1_61, %c0_62] : memref<9x256xf32, #tpu.memory_space<vmem>>, vector<1x256xf32>
    %143 = vector.broadcast %142 : vector<1x256xf32> to vector<4x256xf32>
    %144 = arith.mulf %141, %143 : vector<4x256xf32>
    %c15_i32_63 = arith.constant 15 : i32
    %145 = tpu.dynamic_rotate %132 by %c15_i32_63 dim 1 : vector<4x256xf32>, i32 -> vector<4x256xf32>
    %c2_64 = arith.constant 2 : index
    %c0_65 = arith.constant 0 : index
    %146 = vector.load %arg3[%c2_64, %c0_65] : memref<9x256xf32, #tpu.memory_space<vmem>>, vector<1x256xf32>
    %147 = vector.broadcast %146 : vector<1x256xf32> to vector<4x256xf32>
    %148 = arith.mulf %145, %147 : vector<4x256xf32>
    %c1_i32_66 = arith.constant 1 : i32
    %149 = tpu.dynamic_rotate %132 by %c1_i32_66 dim 1 : vector<4x256xf32>, i32 -> vector<4x256xf32>
    %c3_67 = arith.constant 3 : index
    %c0_68 = arith.constant 0 : index
    %150 = vector.load %arg3[%c3_67, %c0_68] : memref<9x256xf32, #tpu.memory_space<vmem>>, vector<1x256xf32>
    %151 = vector.broadcast %150 : vector<1x256xf32> to vector<4x256xf32>
    %152 = arith.mulf %149, %151 : vector<4x256xf32>
    %c4_69 = arith.constant 4 : index
    %c0_70 = arith.constant 0 : index
    %153 = vector.load %arg3[%c4_69, %c0_70] : memref<9x256xf32, #tpu.memory_space<vmem>>, vector<1x256xf32>
    %154 = vector.broadcast %153 : vector<1x256xf32> to vector<4x256xf32>
    %155 = arith.mulf %132, %154 : vector<4x256xf32>
    %c255_i32_71 = arith.constant 255 : i32
    %156 = tpu.dynamic_rotate %132 by %c255_i32_71 dim 1 : vector<4x256xf32>, i32 -> vector<4x256xf32>
    %c5_72 = arith.constant 5 : index
    %c0_73 = arith.constant 0 : index
    %157 = vector.load %arg3[%c5_72, %c0_73] : memref<9x256xf32, #tpu.memory_space<vmem>>, vector<1x256xf32>
    %158 = vector.broadcast %157 : vector<1x256xf32> to vector<4x256xf32>
    %159 = arith.mulf %156, %158 : vector<4x256xf32>
    %c241_i32_74 = arith.constant 241 : i32
    %160 = tpu.dynamic_rotate %132 by %c241_i32_74 dim 1 : vector<4x256xf32>, i32 -> vector<4x256xf32>
    %c6_75 = arith.constant 6 : index
    %c0_76 = arith.constant 0 : index
    %161 = vector.load %arg3[%c6_75, %c0_76] : memref<9x256xf32, #tpu.memory_space<vmem>>, vector<1x256xf32>
    %162 = vector.broadcast %161 : vector<1x256xf32> to vector<4x256xf32>
    %163 = arith.mulf %160, %162 : vector<4x256xf32>
    %c240_i32_77 = arith.constant 240 : i32
    %164 = tpu.dynamic_rotate %132 by %c240_i32_77 dim 1 : vector<4x256xf32>, i32 -> vector<4x256xf32>
    %c7_78 = arith.constant 7 : index
    %c0_79 = arith.constant 0 : index
    %165 = vector.load %arg3[%c7_78, %c0_79] : memref<9x256xf32, #tpu.memory_space<vmem>>, vector<1x256xf32>
    %166 = vector.broadcast %165 : vector<1x256xf32> to vector<4x256xf32>
    %167 = arith.mulf %164, %166 : vector<4x256xf32>
    %c239_i32_80 = arith.constant 239 : i32
    %168 = tpu.dynamic_rotate %132 by %c239_i32_80 dim 1 : vector<4x256xf32>, i32 -> vector<4x256xf32>
    %c8_81 = arith.constant 8 : index
    %c0_82 = arith.constant 0 : index
    %169 = vector.load %arg3[%c8_81, %c0_82] : memref<9x256xf32, #tpu.memory_space<vmem>>, vector<1x256xf32>
    %170 = vector.broadcast %169 : vector<1x256xf32> to vector<4x256xf32>
    %171 = arith.mulf %168, %170 : vector<4x256xf32>
    %172 = tpu.concatenate %140, %144, %148, %152, %155, %159, %163, %167, %171 in 0 : vector<4x256xf32>, vector<4x256xf32>, vector<4x256xf32>, vector<4x256xf32>, vector<4x256xf32>, vector<4x256xf32>, vector<4x256xf32>, vector<4x256xf32>, vector<4x256xf32> -> vector<36x256xf32>
    %cst_83 = arith.constant dense<0.000000e+00> : vector<16x256xf32>
    %173 = tpu.matmul %0, %172, %cst_83 {dimension_numbers = #tpu.dot_dimension_numbers<[1], [0], [0], [1], [0, 0, 1, 1], [], []>, precision = #tpu.contract_precision<fp32>} : vector<16x36xf32>, vector<36x256xf32>, vector<16x256xf32> -> vector<16x256xf32>
    %c0_84 = arith.constant 0 : index
    %c2_85 = arith.constant 2 : index
    %c0_86 = arith.constant 0 : index
    %c0_87 = arith.constant 0 : index
    %174 = vector.load %arg1[%c0_84, %c2_85, %c0_86, %c0_87] : memref<1x8x16x256xf32, #tpu.memory_space<vmem>>, vector<1x1x16x256xf32>
    %175 = vector.shape_cast %174 : vector<1x1x16x256xf32> to vector<16x256xf32>
    %176 = arith.addf %173, %175 : vector<16x256xf32>
    %177 = vector.extract_strided_slice %176 {offsets = [0, 0], sizes = [4, 256], strides = [1, 1]} : vector<16x256xf32> to vector<4x256xf32>
    %178 = arith.negf %177 : vector<4x256xf32>
    %179 = math.exp %178 : vector<4x256xf32>
    %cst_88 = arith.constant 1.000000e+00 : f32
    %180 = vector.broadcast %cst_88 : f32 to vector<4x256xf32>
    %181 = arith.addf %180, %179 : vector<4x256xf32>
    %182 = arith.divf %180, %181 : vector<4x256xf32>
    %183 = vector.extract_strided_slice %176 {offsets = [4, 0], sizes = [4, 256], strides = [1, 1]} : vector<16x256xf32> to vector<4x256xf32>
    %184 = arith.negf %183 : vector<4x256xf32>
    %185 = math.exp %184 : vector<4x256xf32>
    %cst_89 = arith.constant 1.000000e+00 : f32
    %186 = vector.broadcast %cst_89 : f32 to vector<4x256xf32>
    %187 = arith.addf %186, %185 : vector<4x256xf32>
    %188 = arith.divf %186, %187 : vector<4x256xf32>
    %189 = vector.extract_strided_slice %176 {offsets = [8, 0], sizes = [4, 256], strides = [1, 1]} : vector<16x256xf32> to vector<4x256xf32>
    %190 = math.tanh %189 : vector<4x256xf32>
    %191 = vector.extract_strided_slice %176 {offsets = [12, 0], sizes = [4, 256], strides = [1, 1]} : vector<16x256xf32> to vector<4x256xf32>
    %192 = arith.negf %191 : vector<4x256xf32>
    %193 = math.exp %192 : vector<4x256xf32>
    %cst_90 = arith.constant 1.000000e+00 : f32
    %194 = vector.broadcast %cst_90 : f32 to vector<4x256xf32>
    %195 = arith.addf %194, %193 : vector<4x256xf32>
    %196 = arith.divf %194, %195 : vector<4x256xf32>
    %197 = arith.mulf %188, %130 : vector<4x256xf32>
    %198 = arith.mulf %182, %190 : vector<4x256xf32>
    %199 = arith.addf %197, %198 : vector<4x256xf32>
    %200 = math.tanh %199 : vector<4x256xf32>
    %201 = arith.mulf %196, %200 : vector<4x256xf32>
    %c17_i32_91 = arith.constant 17 : i32
    %202 = tpu.dynamic_rotate %201 by %c17_i32_91 dim 1 : vector<4x256xf32>, i32 -> vector<4x256xf32>
    %c0_92 = arith.constant 0 : index
    %c0_93 = arith.constant 0 : index
    %203 = vector.load %arg3[%c0_92, %c0_93] : memref<9x256xf32, #tpu.memory_space<vmem>>, vector<1x256xf32>
    %204 = vector.broadcast %203 : vector<1x256xf32> to vector<4x256xf32>
    %205 = arith.mulf %202, %204 : vector<4x256xf32>
    %c16_i32_94 = arith.constant 16 : i32
    %206 = tpu.dynamic_rotate %201 by %c16_i32_94 dim 1 : vector<4x256xf32>, i32 -> vector<4x256xf32>
    %c1_95 = arith.constant 1 : index
    %c0_96 = arith.constant 0 : index
    %207 = vector.load %arg3[%c1_95, %c0_96] : memref<9x256xf32, #tpu.memory_space<vmem>>, vector<1x256xf32>
    %208 = vector.broadcast %207 : vector<1x256xf32> to vector<4x256xf32>
    %209 = arith.mulf %206, %208 : vector<4x256xf32>
    %c15_i32_97 = arith.constant 15 : i32
    %210 = tpu.dynamic_rotate %201 by %c15_i32_97 dim 1 : vector<4x256xf32>, i32 -> vector<4x256xf32>
    %c2_98 = arith.constant 2 : index
    %c0_99 = arith.constant 0 : index
    %211 = vector.load %arg3[%c2_98, %c0_99] : memref<9x256xf32, #tpu.memory_space<vmem>>, vector<1x256xf32>
    %212 = vector.broadcast %211 : vector<1x256xf32> to vector<4x256xf32>
    %213 = arith.mulf %210, %212 : vector<4x256xf32>
    %c1_i32_100 = arith.constant 1 : i32
    %214 = tpu.dynamic_rotate %201 by %c1_i32_100 dim 1 : vector<4x256xf32>, i32 -> vector<4x256xf32>
    %c3_101 = arith.constant 3 : index
    %c0_102 = arith.constant 0 : index
    %215 = vector.load %arg3[%c3_101, %c0_102] : memref<9x256xf32, #tpu.memory_space<vmem>>, vector<1x256xf32>
    %216 = vector.broadcast %215 : vector<1x256xf32> to vector<4x256xf32>
    %217 = arith.mulf %214, %216 : vector<4x256xf32>
    %c4_103 = arith.constant 4 : index
    %c0_104 = arith.constant 0 : index
    %218 = vector.load %arg3[%c4_103, %c0_104] : memref<9x256xf32, #tpu.memory_space<vmem>>, vector<1x256xf32>
    %219 = vector.broadcast %218 : vector<1x256xf32> to vector<4x256xf32>
    %220 = arith.mulf %201, %219 : vector<4x256xf32>
    %c255_i32_105 = arith.constant 255 : i32
    %221 = tpu.dynamic_rotate %201 by %c255_i32_105 dim 1 : vector<4x256xf32>, i32 -> vector<4x256xf32>
    %c5_106 = arith.constant 5 : index
    %c0_107 = arith.constant 0 : index
    %222 = vector.load %arg3[%c5_106, %c0_107] : memref<9x256xf32, #tpu.memory_space<vmem>>, vector<1x256xf32>
    %223 = vector.broadcast %222 : vector<1x256xf32> to vector<4x256xf32>
    %224 = arith.mulf %221, %223 : vector<4x256xf32>
    %c241_i32_108 = arith.constant 241 : i32
    %225 = tpu.dynamic_rotate %201 by %c241_i32_108 dim 1 : vector<4x256xf32>, i32 -> vector<4x256xf32>
    %c6_109 = arith.constant 6 : index
    %c0_110 = arith.constant 0 : index
    %226 = vector.load %arg3[%c6_109, %c0_110] : memref<9x256xf32, #tpu.memory_space<vmem>>, vector<1x256xf32>
    %227 = vector.broadcast %226 : vector<1x256xf32> to vector<4x256xf32>
    %228 = arith.mulf %225, %227 : vector<4x256xf32>
    %c240_i32_111 = arith.constant 240 : i32
    %229 = tpu.dynamic_rotate %201 by %c240_i32_111 dim 1 : vector<4x256xf32>, i32 -> vector<4x256xf32>
    %c7_112 = arith.constant 7 : index
    %c0_113 = arith.constant 0 : index
    %230 = vector.load %arg3[%c7_112, %c0_113] : memref<9x256xf32, #tpu.memory_space<vmem>>, vector<1x256xf32>
    %231 = vector.broadcast %230 : vector<1x256xf32> to vector<4x256xf32>
    %232 = arith.mulf %229, %231 : vector<4x256xf32>
    %c239_i32_114 = arith.constant 239 : i32
    %233 = tpu.dynamic_rotate %201 by %c239_i32_114 dim 1 : vector<4x256xf32>, i32 -> vector<4x256xf32>
    %c8_115 = arith.constant 8 : index
    %c0_116 = arith.constant 0 : index
    %234 = vector.load %arg3[%c8_115, %c0_116] : memref<9x256xf32, #tpu.memory_space<vmem>>, vector<1x256xf32>
    %235 = vector.broadcast %234 : vector<1x256xf32> to vector<4x256xf32>
    %236 = arith.mulf %233, %235 : vector<4x256xf32>
    %237 = tpu.concatenate %205, %209, %213, %217, %220, %224, %228, %232, %236 in 0 : vector<4x256xf32>, vector<4x256xf32>, vector<4x256xf32>, vector<4x256xf32>, vector<4x256xf32>, vector<4x256xf32>, vector<4x256xf32>, vector<4x256xf32>, vector<4x256xf32> -> vector<36x256xf32>
    %cst_117 = arith.constant dense<0.000000e+00> : vector<16x256xf32>
    %238 = tpu.matmul %0, %237, %cst_117 {dimension_numbers = #tpu.dot_dimension_numbers<[1], [0], [0], [1], [0, 0, 1, 1], [], []>, precision = #tpu.contract_precision<fp32>} : vector<16x36xf32>, vector<36x256xf32>, vector<16x256xf32> -> vector<16x256xf32>
    %c0_118 = arith.constant 0 : index
    %c3_119 = arith.constant 3 : index
    %c0_120 = arith.constant 0 : index
    %c0_121 = arith.constant 0 : index
    %239 = vector.load %arg1[%c0_118, %c3_119, %c0_120, %c0_121] : memref<1x8x16x256xf32, #tpu.memory_space<vmem>>, vector<1x1x16x256xf32>
    %240 = vector.shape_cast %239 : vector<1x1x16x256xf32> to vector<16x256xf32>
    %241 = arith.addf %238, %240 : vector<16x256xf32>
    %242 = vector.extract_strided_slice %241 {offsets = [0, 0], sizes = [4, 256], strides = [1, 1]} : vector<16x256xf32> to vector<4x256xf32>
    %243 = arith.negf %242 : vector<4x256xf32>
    %244 = math.exp %243 : vector<4x256xf32>
    %cst_122 = arith.constant 1.000000e+00 : f32
    %245 = vector.broadcast %cst_122 : f32 to vector<4x256xf32>
    %246 = arith.addf %245, %244 : vector<4x256xf32>
    %247 = arith.divf %245, %246 : vector<4x256xf32>
    %248 = vector.extract_strided_slice %241 {offsets = [4, 0], sizes = [4, 256], strides = [1, 1]} : vector<16x256xf32> to vector<4x256xf32>
    %249 = arith.negf %248 : vector<4x256xf32>
    %250 = math.exp %249 : vector<4x256xf32>
    %cst_123 = arith.constant 1.000000e+00 : f32
    %251 = vector.broadcast %cst_123 : f32 to vector<4x256xf32>
    %252 = arith.addf %251, %250 : vector<4x256xf32>
    %253 = arith.divf %251, %252 : vector<4x256xf32>
    %254 = vector.extract_strided_slice %241 {offsets = [8, 0], sizes = [4, 256], strides = [1, 1]} : vector<16x256xf32> to vector<4x256xf32>
    %255 = math.tanh %254 : vector<4x256xf32>
    %256 = vector.extract_strided_slice %241 {offsets = [12, 0], sizes = [4, 256], strides = [1, 1]} : vector<16x256xf32> to vector<4x256xf32>
    %257 = arith.negf %256 : vector<4x256xf32>
    %258 = math.exp %257 : vector<4x256xf32>
    %cst_124 = arith.constant 1.000000e+00 : f32
    %259 = vector.broadcast %cst_124 : f32 to vector<4x256xf32>
    %260 = arith.addf %259, %258 : vector<4x256xf32>
    %261 = arith.divf %259, %260 : vector<4x256xf32>
    %262 = arith.mulf %253, %199 : vector<4x256xf32>
    %263 = arith.mulf %247, %255 : vector<4x256xf32>
    %264 = arith.addf %262, %263 : vector<4x256xf32>
    %265 = math.tanh %264 : vector<4x256xf32>
    %266 = arith.mulf %261, %265 : vector<4x256xf32>
    %267 = tpu.concatenate %201, %266 in 0 : vector<4x256xf32>, vector<4x256xf32> -> vector<8x256xf32>
    %c0_125 = arith.constant 0 : index
    %c8_126 = arith.constant 8 : index
    %c0_127 = arith.constant 0 : index
    %268 = vector.load %arg4[%c0_125, %c8_126, %c0_127] : memref<1x32x256xf32, #tpu.memory_space<vmem>>, vector<1x8x256xf32>
    %269 = vector.shape_cast %268 : vector<1x8x256xf32> to vector<8x256xf32>
    %270 = vector.shape_cast %267 : vector<8x256xf32> to vector<1x8x256xf32>
    tpu.vector_store %arg4[%c0_125, %c8_126, %c0_127], %270 {strides = array<i32>} : memref<1x32x256xf32, #tpu.memory_space<vmem>>, vector<1x8x256xf32>,
    %c17_i32_128 = arith.constant 17 : i32
    %271 = tpu.dynamic_rotate %266 by %c17_i32_128 dim 1 : vector<4x256xf32>, i32 -> vector<4x256xf32>
    %c0_129 = arith.constant 0 : index
    %c0_130 = arith.constant 0 : index
    %272 = vector.load %arg3[%c0_129, %c0_130] : memref<9x256xf32, #tpu.memory_space<vmem>>, vector<1x256xf32>
    %273 = vector.broadcast %272 : vector<1x256xf32> to vector<4x256xf32>
    %274 = arith.mulf %271, %273 : vector<4x256xf32>
    %c16_i32_131 = arith.constant 16 : i32
    %275 = tpu.dynamic_rotate %266 by %c16_i32_131 dim 1 : vector<4x256xf32>, i32 -> vector<4x256xf32>
    %c1_132 = arith.constant 1 : index
    %c0_133 = arith.constant 0 : index
    %276 = vector.load %arg3[%c1_132, %c0_133] : memref<9x256xf32, #tpu.memory_space<vmem>>, vector<1x256xf32>
    %277 = vector.broadcast %276 : vector<1x256xf32> to vector<4x256xf32>
    %278 = arith.mulf %275, %277 : vector<4x256xf32>
    %c15_i32_134 = arith.constant 15 : i32
    %279 = tpu.dynamic_rotate %266 by %c15_i32_134 dim 1 : vector<4x256xf32>, i32 -> vector<4x256xf32>
    %c2_135 = arith.constant 2 : index
    %c0_136 = arith.constant 0 : index
    %280 = vector.load %arg3[%c2_135, %c0_136] : memref<9x256xf32, #tpu.memory_space<vmem>>, vector<1x256xf32>
    %281 = vector.broadcast %280 : vector<1x256xf32> to vector<4x256xf32>
    %282 = arith.mulf %279, %281 : vector<4x256xf32>
    %c1_i32_137 = arith.constant 1 : i32
    %283 = tpu.dynamic_rotate %266 by %c1_i32_137 dim 1 : vector<4x256xf32>, i32 -> vector<4x256xf32>
    %c3_138 = arith.constant 3 : index
    %c0_139 = arith.constant 0 : index
    %284 = vector.load %arg3[%c3_138, %c0_139] : memref<9x256xf32, #tpu.memory_space<vmem>>, vector<1x256xf32>
    %285 = vector.broadcast %284 : vector<1x256xf32> to vector<4x256xf32>
    %286 = arith.mulf %283, %285 : vector<4x256xf32>
    %c4_140 = arith.constant 4 : index
    %c0_141 = arith.constant 0 : index
    %287 = vector.load %arg3[%c4_140, %c0_141] : memref<9x256xf32, #tpu.memory_space<vmem>>, vector<1x256xf32>
    %288 = vector.broadcast %287 : vector<1x256xf32> to vector<4x256xf32>
    %289 = arith.mulf %266, %288 : vector<4x256xf32>
    %c255_i32_142 = arith.constant 255 : i32
    %290 = tpu.dynamic_rotate %266 by %c255_i32_142 dim 1 : vector<4x256xf32>, i32 -> vector<4x256xf32>
    %c5_143 = arith.constant 5 : index
    %c0_144 = arith.constant 0 : index
    %291 = vector.load %arg3[%c5_143, %c0_144] : memref<9x256xf32, #tpu.memory_space<vmem>>, vector<1x256xf32>
    %292 = vector.broadcast %291 : vector<1x256xf32> to vector<4x256xf32>
    %293 = arith.mulf %290, %292 : vector<4x256xf32>
    %c241_i32_145 = arith.constant 241 : i32
    %294 = tpu.dynamic_rotate %266 by %c241_i32_145 dim 1 : vector<4x256xf32>, i32 -> vector<4x256xf32>
    %c6_146 = arith.constant 6 : index
    %c0_147 = arith.constant 0 : index
    %295 = vector.load %arg3[%c6_146, %c0_147] : memref<9x256xf32, #tpu.memory_space<vmem>>, vector<1x256xf32>
    %296 = vector.broadcast %295 : vector<1x256xf32> to vector<4x256xf32>
    %297 = arith.mulf %294, %296 : vector<4x256xf32>
    %c240_i32_148 = arith.constant 240 : i32
    %298 = tpu.dynamic_rotate %266 by %c240_i32_148 dim 1 : vector<4x256xf32>, i32 -> vector<4x256xf32>
    %c7_149 = arith.constant 7 : index
    %c0_150 = arith.constant 0 : index
    %299 = vector.load %arg3[%c7_149, %c0_150] : memref<9x256xf32, #tpu.memory_space<vmem>>, vector<1x256xf32>
    %300 = vector.broadcast %299 : vector<1x256xf32> to vector<4x256xf32>
    %301 = arith.mulf %298, %300 : vector<4x256xf32>
    %c239_i32_151 = arith.constant 239 : i32
    %302 = tpu.dynamic_rotate %266 by %c239_i32_151 dim 1 : vector<4x256xf32>, i32 -> vector<4x256xf32>
    %c8_152 = arith.constant 8 : index
    %c0_153 = arith.constant 0 : index
    %303 = vector.load %arg3[%c8_152, %c0_153] : memref<9x256xf32, #tpu.memory_space<vmem>>, vector<1x256xf32>
    %304 = vector.broadcast %303 : vector<1x256xf32> to vector<4x256xf32>
    %305 = arith.mulf %302, %304 : vector<4x256xf32>
    %306 = tpu.concatenate %274, %278, %282, %286, %289, %293, %297, %301, %305 in 0 : vector<4x256xf32>, vector<4x256xf32>, vector<4x256xf32>, vector<4x256xf32>, vector<4x256xf32>, vector<4x256xf32>, vector<4x256xf32>, vector<4x256xf32>, vector<4x256xf32> -> vector<36x256xf32>
    %cst_154 = arith.constant dense<0.000000e+00> : vector<16x256xf32>
    %307 = tpu.matmul %0, %306, %cst_154 {dimension_numbers = #tpu.dot_dimension_numbers<[1], [0], [0], [1], [0, 0, 1, 1], [], []>, precision = #tpu.contract_precision<fp32>} : vector<16x36xf32>, vector<36x256xf32>, vector<16x256xf32> -> vector<16x256xf32>
    %c0_155 = arith.constant 0 : index
    %c4_156 = arith.constant 4 : index
    %c0_157 = arith.constant 0 : index
    %c0_158 = arith.constant 0 : index
    %308 = vector.load %arg1[%c0_155, %c4_156, %c0_157, %c0_158] : memref<1x8x16x256xf32, #tpu.memory_space<vmem>>, vector<1x1x16x256xf32>
    %309 = vector.shape_cast %308 : vector<1x1x16x256xf32> to vector<16x256xf32>
    %310 = arith.addf %307, %309 : vector<16x256xf32>
    %311 = vector.extract_strided_slice %310 {offsets = [0, 0], sizes = [4, 256], strides = [1, 1]} : vector<16x256xf32> to vector<4x256xf32>
    %312 = arith.negf %311 : vector<4x256xf32>
    %313 = math.exp %312 : vector<4x256xf32>
    %cst_159 = arith.constant 1.000000e+00 : f32
    %314 = vector.broadcast %cst_159 : f32 to vector<4x256xf32>
    %315 = arith.addf %314, %313 : vector<4x256xf32>
    %316 = arith.divf %314, %315 : vector<4x256xf32>
    %317 = vector.extract_strided_slice %310 {offsets = [4, 0], sizes = [4, 256], strides = [1, 1]} : vector<16x256xf32> to vector<4x256xf32>
    %318 = arith.negf %317 : vector<4x256xf32>
    %319 = math.exp %318 : vector<4x256xf32>
    %cst_160 = arith.constant 1.000000e+00 : f32
    %320 = vector.broadcast %cst_160 : f32 to vector<4x256xf32>
    %321 = arith.addf %320, %319 : vector<4x256xf32>
    %322 = arith.divf %320, %321 : vector<4x256xf32>
    %323 = vector.extract_strided_slice %310 {offsets = [8, 0], sizes = [4, 256], strides = [1, 1]} : vector<16x256xf32> to vector<4x256xf32>
    %324 = math.tanh %323 : vector<4x256xf32>
    %325 = vector.extract_strided_slice %310 {offsets = [12, 0], sizes = [4, 256], strides = [1, 1]} : vector<16x256xf32> to vector<4x256xf32>
    %326 = arith.negf %325 : vector<4x256xf32>
    %327 = math.exp %326 : vector<4x256xf32>
    %cst_161 = arith.constant 1.000000e+00 : f32
    %328 = vector.broadcast %cst_161 : f32 to vector<4x256xf32>
    %329 = arith.addf %328, %327 : vector<4x256xf32>
    %330 = arith.divf %328, %329 : vector<4x256xf32>
    %331 = arith.mulf %322, %264 : vector<4x256xf32>
    %332 = arith.mulf %316, %324 : vector<4x256xf32>
    %333 = arith.addf %331, %332 : vector<4x256xf32>
    %334 = math.tanh %333 : vector<4x256xf32>
    %335 = arith.mulf %330, %334 : vector<4x256xf32>
    %c17_i32_162 = arith.constant 17 : i32
    %336 = tpu.dynamic_rotate %335 by %c17_i32_162 dim 1 : vector<4x256xf32>, i32 -> vector<4x256xf32>
    %c0_163 = arith.constant 0 : index
    %c0_164 = arith.constant 0 : index
    %337 = vector.load %arg3[%c0_163, %c0_164] : memref<9x256xf32, #tpu.memory_space<vmem>>, vector<1x256xf32>
    %338 = vector.broadcast %337 : vector<1x256xf32> to vector<4x256xf32>
    %339 = arith.mulf %336, %338 : vector<4x256xf32>
    %c16_i32_165 = arith.constant 16 : i32
    %340 = tpu.dynamic_rotate %335 by %c16_i32_165 dim 1 : vector<4x256xf32>, i32 -> vector<4x256xf32>
    %c1_166 = arith.constant 1 : index
    %c0_167 = arith.constant 0 : index
    %341 = vector.load %arg3[%c1_166, %c0_167] : memref<9x256xf32, #tpu.memory_space<vmem>>, vector<1x256xf32>
    %342 = vector.broadcast %341 : vector<1x256xf32> to vector<4x256xf32>
    %343 = arith.mulf %340, %342 : vector<4x256xf32>
    %c15_i32_168 = arith.constant 15 : i32
    %344 = tpu.dynamic_rotate %335 by %c15_i32_168 dim 1 : vector<4x256xf32>, i32 -> vector<4x256xf32>
    %c2_169 = arith.constant 2 : index
    %c0_170 = arith.constant 0 : index
    %345 = vector.load %arg3[%c2_169, %c0_170] : memref<9x256xf32, #tpu.memory_space<vmem>>, vector<1x256xf32>
    %346 = vector.broadcast %345 : vector<1x256xf32> to vector<4x256xf32>
    %347 = arith.mulf %344, %346 : vector<4x256xf32>
    %c1_i32_171 = arith.constant 1 : i32
    %348 = tpu.dynamic_rotate %335 by %c1_i32_171 dim 1 : vector<4x256xf32>, i32 -> vector<4x256xf32>
    %c3_172 = arith.constant 3 : index
    %c0_173 = arith.constant 0 : index
    %349 = vector.load %arg3[%c3_172, %c0_173] : memref<9x256xf32, #tpu.memory_space<vmem>>, vector<1x256xf32>
    %350 = vector.broadcast %349 : vector<1x256xf32> to vector<4x256xf32>
    %351 = arith.mulf %348, %350 : vector<4x256xf32>
    %c4_174 = arith.constant 4 : index
    %c0_175 = arith.constant 0 : index
    %352 = vector.load %arg3[%c4_174, %c0_175] : memref<9x256xf32, #tpu.memory_space<vmem>>, vector<1x256xf32>
    %353 = vector.broadcast %352 : vector<1x256xf32> to vector<4x256xf32>
    %354 = arith.mulf %335, %353 : vector<4x256xf32>
    %c255_i32_176 = arith.constant 255 : i32
    %355 = tpu.dynamic_rotate %335 by %c255_i32_176 dim 1 : vector<4x256xf32>, i32 -> vector<4x256xf32>
    %c5_177 = arith.constant 5 : index
    %c0_178 = arith.constant 0 : index
    %356 = vector.load %arg3[%c5_177, %c0_178] : memref<9x256xf32, #tpu.memory_space<vmem>>, vector<1x256xf32>
    %357 = vector.broadcast %356 : vector<1x256xf32> to vector<4x256xf32>
    %358 = arith.mulf %355, %357 : vector<4x256xf32>
    %c241_i32_179 = arith.constant 241 : i32
    %359 = tpu.dynamic_rotate %335 by %c241_i32_179 dim 1 : vector<4x256xf32>, i32 -> vector<4x256xf32>
    %c6_180 = arith.constant 6 : index
    %c0_181 = arith.constant 0 : index
    %360 = vector.load %arg3[%c6_180, %c0_181] : memref<9x256xf32, #tpu.memory_space<vmem>>, vector<1x256xf32>
    %361 = vector.broadcast %360 : vector<1x256xf32> to vector<4x256xf32>
    %362 = arith.mulf %359, %361 : vector<4x256xf32>
    %c240_i32_182 = arith.constant 240 : i32
    %363 = tpu.dynamic_rotate %335 by %c240_i32_182 dim 1 : vector<4x256xf32>, i32 -> vector<4x256xf32>
    %c7_183 = arith.constant 7 : index
    %c0_184 = arith.constant 0 : index
    %364 = vector.load %arg3[%c7_183, %c0_184] : memref<9x256xf32, #tpu.memory_space<vmem>>, vector<1x256xf32>
    %365 = vector.broadcast %364 : vector<1x256xf32> to vector<4x256xf32>
    %366 = arith.mulf %363, %365 : vector<4x256xf32>
    %c239_i32_185 = arith.constant 239 : i32
    %367 = tpu.dynamic_rotate %335 by %c239_i32_185 dim 1 : vector<4x256xf32>, i32 -> vector<4x256xf32>
    %c8_186 = arith.constant 8 : index
    %c0_187 = arith.constant 0 : index
    %368 = vector.load %arg3[%c8_186, %c0_187] : memref<9x256xf32, #tpu.memory_space<vmem>>, vector<1x256xf32>
    %369 = vector.broadcast %368 : vector<1x256xf32> to vector<4x256xf32>
    %370 = arith.mulf %367, %369 : vector<4x256xf32>
    %371 = tpu.concatenate %339, %343, %347, %351, %354, %358, %362, %366, %370 in 0 : vector<4x256xf32>, vector<4x256xf32>, vector<4x256xf32>, vector<4x256xf32>, vector<4x256xf32>, vector<4x256xf32>, vector<4x256xf32>, vector<4x256xf32>, vector<4x256xf32> -> vector<36x256xf32>
    %cst_188 = arith.constant dense<0.000000e+00> : vector<16x256xf32>
    %372 = tpu.matmul %0, %371, %cst_188 {dimension_numbers = #tpu.dot_dimension_numbers<[1], [0], [0], [1], [0, 0, 1, 1], [], []>, precision = #tpu.contract_precision<fp32>} : vector<16x36xf32>, vector<36x256xf32>, vector<16x256xf32> -> vector<16x256xf32>
    %c0_189 = arith.constant 0 : index
    %c5_190 = arith.constant 5 : index
    %c0_191 = arith.constant 0 : index
    %c0_192 = arith.constant 0 : index
    %373 = vector.load %arg1[%c0_189, %c5_190, %c0_191, %c0_192] : memref<1x8x16x256xf32, #tpu.memory_space<vmem>>, vector<1x1x16x256xf32>
    %374 = vector.shape_cast %373 : vector<1x1x16x256xf32> to vector<16x256xf32>
    %375 = arith.addf %372, %374 : vector<16x256xf32>
    %376 = vector.extract_strided_slice %375 {offsets = [0, 0], sizes = [4, 256], strides = [1, 1]} : vector<16x256xf32> to vector<4x256xf32>
    %377 = arith.negf %376 : vector<4x256xf32>
    %378 = math.exp %377 : vector<4x256xf32>
    %cst_193 = arith.constant 1.000000e+00 : f32
    %379 = vector.broadcast %cst_193 : f32 to vector<4x256xf32>
    %380 = arith.addf %379, %378 : vector<4x256xf32>
    %381 = arith.divf %379, %380 : vector<4x256xf32>
    %382 = vector.extract_strided_slice %375 {offsets = [4, 0], sizes = [4, 256], strides = [1, 1]} : vector<16x256xf32> to vector<4x256xf32>
    %383 = arith.negf %382 : vector<4x256xf32>
    %384 = math.exp %383 : vector<4x256xf32>
    %cst_194 = arith.constant 1.000000e+00 : f32
    %385 = vector.broadcast %cst_194 : f32 to vector<4x256xf32>
    %386 = arith.addf %385, %384 : vector<4x256xf32>
    %387 = arith.divf %385, %386 : vector<4x256xf32>
    %388 = vector.extract_strided_slice %375 {offsets = [8, 0], sizes = [4, 256], strides = [1, 1]} : vector<16x256xf32> to vector<4x256xf32>
    %389 = math.tanh %388 : vector<4x256xf32>
    %390 = vector.extract_strided_slice %375 {offsets = [12, 0], sizes = [4, 256], strides = [1, 1]} : vector<16x256xf32> to vector<4x256xf32>
    %391 = arith.negf %390 : vector<4x256xf32>
    %392 = math.exp %391 : vector<4x256xf32>
    %cst_195 = arith.constant 1.000000e+00 : f32
    %393 = vector.broadcast %cst_195 : f32 to vector<4x256xf32>
    %394 = arith.addf %393, %392 : vector<4x256xf32>
    %395 = arith.divf %393, %394 : vector<4x256xf32>
    %396 = arith.mulf %387, %333 : vector<4x256xf32>
    %397 = arith.mulf %381, %389 : vector<4x256xf32>
    %398 = arith.addf %396, %397 : vector<4x256xf32>
    %399 = math.tanh %398 : vector<4x256xf32>
    %400 = arith.mulf %395, %399 : vector<4x256xf32>
    %401 = tpu.concatenate %335, %400 in 0 : vector<4x256xf32>, vector<4x256xf32> -> vector<8x256xf32>
    %c0_196 = arith.constant 0 : index
    %c16 = arith.constant 16 : index
    %c0_197 = arith.constant 0 : index
    %402 = vector.load %arg4[%c0_196, %c16, %c0_197] : memref<1x32x256xf32, #tpu.memory_space<vmem>>, vector<1x8x256xf32>
    %403 = vector.shape_cast %402 : vector<1x8x256xf32> to vector<8x256xf32>
    %404 = vector.shape_cast %401 : vector<8x256xf32> to vector<1x8x256xf32>
    tpu.vector_store %arg4[%c0_196, %c16, %c0_197], %404 {strides = array<i32>} : memref<1x32x256xf32, #tpu.memory_space<vmem>>, vector<1x8x256xf32>,
    %c17_i32_198 = arith.constant 17 : i32
    %405 = tpu.dynamic_rotate %400 by %c17_i32_198 dim 1 : vector<4x256xf32>, i32 -> vector<4x256xf32>
    %c0_199 = arith.constant 0 : index
    %c0_200 = arith.constant 0 : index
    %406 = vector.load %arg3[%c0_199, %c0_200] : memref<9x256xf32, #tpu.memory_space<vmem>>, vector<1x256xf32>
    %407 = vector.broadcast %406 : vector<1x256xf32> to vector<4x256xf32>
    %408 = arith.mulf %405, %407 : vector<4x256xf32>
    %c16_i32_201 = arith.constant 16 : i32
    %409 = tpu.dynamic_rotate %400 by %c16_i32_201 dim 1 : vector<4x256xf32>, i32 -> vector<4x256xf32>
    %c1_202 = arith.constant 1 : index
    %c0_203 = arith.constant 0 : index
    %410 = vector.load %arg3[%c1_202, %c0_203] : memref<9x256xf32, #tpu.memory_space<vmem>>, vector<1x256xf32>
    %411 = vector.broadcast %410 : vector<1x256xf32> to vector<4x256xf32>
    %412 = arith.mulf %409, %411 : vector<4x256xf32>
    %c15_i32_204 = arith.constant 15 : i32
    %413 = tpu.dynamic_rotate %400 by %c15_i32_204 dim 1 : vector<4x256xf32>, i32 -> vector<4x256xf32>
    %c2_205 = arith.constant 2 : index
    %c0_206 = arith.constant 0 : index
    %414 = vector.load %arg3[%c2_205, %c0_206] : memref<9x256xf32, #tpu.memory_space<vmem>>, vector<1x256xf32>
    %415 = vector.broadcast %414 : vector<1x256xf32> to vector<4x256xf32>
    %416 = arith.mulf %413, %415 : vector<4x256xf32>
    %c1_i32_207 = arith.constant 1 : i32
    %417 = tpu.dynamic_rotate %400 by %c1_i32_207 dim 1 : vector<4x256xf32>, i32 -> vector<4x256xf32>
    %c3_208 = arith.constant 3 : index
    %c0_209 = arith.constant 0 : index
    %418 = vector.load %arg3[%c3_208, %c0_209] : memref<9x256xf32, #tpu.memory_space<vmem>>, vector<1x256xf32>
    %419 = vector.broadcast %418 : vector<1x256xf32> to vector<4x256xf32>
    %420 = arith.mulf %417, %419 : vector<4x256xf32>
    %c4_210 = arith.constant 4 : index
    %c0_211 = arith.constant 0 : index
    %421 = vector.load %arg3[%c4_210, %c0_211] : memref<9x256xf32, #tpu.memory_space<vmem>>, vector<1x256xf32>
    %422 = vector.broadcast %421 : vector<1x256xf32> to vector<4x256xf32>
    %423 = arith.mulf %400, %422 : vector<4x256xf32>
    %c255_i32_212 = arith.constant 255 : i32
    %424 = tpu.dynamic_rotate %400 by %c255_i32_212 dim 1 : vector<4x256xf32>, i32 -> vector<4x256xf32>
    %c5_213 = arith.constant 5 : index
    %c0_214 = arith.constant 0 : index
    %425 = vector.load %arg3[%c5_213, %c0_214] : memref<9x256xf32, #tpu.memory_space<vmem>>, vector<1x256xf32>
    %426 = vector.broadcast %425 : vector<1x256xf32> to vector<4x256xf32>
    %427 = arith.mulf %424, %426 : vector<4x256xf32>
    %c241_i32_215 = arith.constant 241 : i32
    %428 = tpu.dynamic_rotate %400 by %c241_i32_215 dim 1 : vector<4x256xf32>, i32 -> vector<4x256xf32>
    %c6_216 = arith.constant 6 : index
    %c0_217 = arith.constant 0 : index
    %429 = vector.load %arg3[%c6_216, %c0_217] : memref<9x256xf32, #tpu.memory_space<vmem>>, vector<1x256xf32>
    %430 = vector.broadcast %429 : vector<1x256xf32> to vector<4x256xf32>
    %431 = arith.mulf %428, %430 : vector<4x256xf32>
    %c240_i32_218 = arith.constant 240 : i32
    %432 = tpu.dynamic_rotate %400 by %c240_i32_218 dim 1 : vector<4x256xf32>, i32 -> vector<4x256xf32>
    %c7_219 = arith.constant 7 : index
    %c0_220 = arith.constant 0 : index
    %433 = vector.load %arg3[%c7_219, %c0_220] : memref<9x256xf32, #tpu.memory_space<vmem>>, vector<1x256xf32>
    %434 = vector.broadcast %433 : vector<1x256xf32> to vector<4x256xf32>
    %435 = arith.mulf %432, %434 : vector<4x256xf32>
    %c239_i32_221 = arith.constant 239 : i32
    %436 = tpu.dynamic_rotate %400 by %c239_i32_221 dim 1 : vector<4x256xf32>, i32 -> vector<4x256xf32>
    %c8_222 = arith.constant 8 : index
    %c0_223 = arith.constant 0 : index
    %437 = vector.load %arg3[%c8_222, %c0_223] : memref<9x256xf32, #tpu.memory_space<vmem>>, vector<1x256xf32>
    %438 = vector.broadcast %437 : vector<1x256xf32> to vector<4x256xf32>
    %439 = arith.mulf %436, %438 : vector<4x256xf32>
    %440 = tpu.concatenate %408, %412, %416, %420, %423, %427, %431, %435, %439 in 0 : vector<4x256xf32>, vector<4x256xf32>, vector<4x256xf32>, vector<4x256xf32>, vector<4x256xf32>, vector<4x256xf32>, vector<4x256xf32>, vector<4x256xf32>, vector<4x256xf32> -> vector<36x256xf32>
    %cst_224 = arith.constant dense<0.000000e+00> : vector<16x256xf32>
    %441 = tpu.matmul %0, %440, %cst_224 {dimension_numbers = #tpu.dot_dimension_numbers<[1], [0], [0], [1], [0, 0, 1, 1], [], []>, precision = #tpu.contract_precision<fp32>} : vector<16x36xf32>, vector<36x256xf32>, vector<16x256xf32> -> vector<16x256xf32>
    %c0_225 = arith.constant 0 : index
    %c6_226 = arith.constant 6 : index
    %c0_227 = arith.constant 0 : index
    %c0_228 = arith.constant 0 : index
    %442 = vector.load %arg1[%c0_225, %c6_226, %c0_227, %c0_228] : memref<1x8x16x256xf32, #tpu.memory_space<vmem>>, vector<1x1x16x256xf32>
    %443 = vector.shape_cast %442 : vector<1x1x16x256xf32> to vector<16x256xf32>
    %444 = arith.addf %441, %443 : vector<16x256xf32>
    %445 = vector.extract_strided_slice %444 {offsets = [0, 0], sizes = [4, 256], strides = [1, 1]} : vector<16x256xf32> to vector<4x256xf32>
    %446 = arith.negf %445 : vector<4x256xf32>
    %447 = math.exp %446 : vector<4x256xf32>
    %cst_229 = arith.constant 1.000000e+00 : f32
    %448 = vector.broadcast %cst_229 : f32 to vector<4x256xf32>
    %449 = arith.addf %448, %447 : vector<4x256xf32>
    %450 = arith.divf %448, %449 : vector<4x256xf32>
    %451 = vector.extract_strided_slice %444 {offsets = [4, 0], sizes = [4, 256], strides = [1, 1]} : vector<16x256xf32> to vector<4x256xf32>
    %452 = arith.negf %451 : vector<4x256xf32>
    %453 = math.exp %452 : vector<4x256xf32>
    %cst_230 = arith.constant 1.000000e+00 : f32
    %454 = vector.broadcast %cst_230 : f32 to vector<4x256xf32>
    %455 = arith.addf %454, %453 : vector<4x256xf32>
    %456 = arith.divf %454, %455 : vector<4x256xf32>
    %457 = vector.extract_strided_slice %444 {offsets = [8, 0], sizes = [4, 256], strides = [1, 1]} : vector<16x256xf32> to vector<4x256xf32>
    %458 = math.tanh %457 : vector<4x256xf32>
    %459 = vector.extract_strided_slice %444 {offsets = [12, 0], sizes = [4, 256], strides = [1, 1]} : vector<16x256xf32> to vector<4x256xf32>
    %460 = arith.negf %459 : vector<4x256xf32>
    %461 = math.exp %460 : vector<4x256xf32>
    %cst_231 = arith.constant 1.000000e+00 : f32
    %462 = vector.broadcast %cst_231 : f32 to vector<4x256xf32>
    %463 = arith.addf %462, %461 : vector<4x256xf32>
    %464 = arith.divf %462, %463 : vector<4x256xf32>
    %465 = arith.mulf %456, %398 : vector<4x256xf32>
    %466 = arith.mulf %450, %458 : vector<4x256xf32>
    %467 = arith.addf %465, %466 : vector<4x256xf32>
    %468 = math.tanh %467 : vector<4x256xf32>
    %469 = arith.mulf %464, %468 : vector<4x256xf32>
    %c17_i32_232 = arith.constant 17 : i32
    %470 = tpu.dynamic_rotate %469 by %c17_i32_232 dim 1 : vector<4x256xf32>, i32 -> vector<4x256xf32>
    %c0_233 = arith.constant 0 : index
    %c0_234 = arith.constant 0 : index
    %471 = vector.load %arg3[%c0_233, %c0_234] : memref<9x256xf32, #tpu.memory_space<vmem>>, vector<1x256xf32>
    %472 = vector.broadcast %471 : vector<1x256xf32> to vector<4x256xf32>
    %473 = arith.mulf %470, %472 : vector<4x256xf32>
    %c16_i32_235 = arith.constant 16 : i32
    %474 = tpu.dynamic_rotate %469 by %c16_i32_235 dim 1 : vector<4x256xf32>, i32 -> vector<4x256xf32>
    %c1_236 = arith.constant 1 : index
    %c0_237 = arith.constant 0 : index
    %475 = vector.load %arg3[%c1_236, %c0_237] : memref<9x256xf32, #tpu.memory_space<vmem>>, vector<1x256xf32>
    %476 = vector.broadcast %475 : vector<1x256xf32> to vector<4x256xf32>
    %477 = arith.mulf %474, %476 : vector<4x256xf32>
    %c15_i32_238 = arith.constant 15 : i32
    %478 = tpu.dynamic_rotate %469 by %c15_i32_238 dim 1 : vector<4x256xf32>, i32 -> vector<4x256xf32>
    %c2_239 = arith.constant 2 : index
    %c0_240 = arith.constant 0 : index
    %479 = vector.load %arg3[%c2_239, %c0_240] : memref<9x256xf32, #tpu.memory_space<vmem>>, vector<1x256xf32>
    %480 = vector.broadcast %479 : vector<1x256xf32> to vector<4x256xf32>
    %481 = arith.mulf %478, %480 : vector<4x256xf32>
    %c1_i32_241 = arith.constant 1 : i32
    %482 = tpu.dynamic_rotate %469 by %c1_i32_241 dim 1 : vector<4x256xf32>, i32 -> vector<4x256xf32>
    %c3_242 = arith.constant 3 : index
    %c0_243 = arith.constant 0 : index
    %483 = vector.load %arg3[%c3_242, %c0_243] : memref<9x256xf32, #tpu.memory_space<vmem>>, vector<1x256xf32>
    %484 = vector.broadcast %483 : vector<1x256xf32> to vector<4x256xf32>
    %485 = arith.mulf %482, %484 : vector<4x256xf32>
    %c4_244 = arith.constant 4 : index
    %c0_245 = arith.constant 0 : index
    %486 = vector.load %arg3[%c4_244, %c0_245] : memref<9x256xf32, #tpu.memory_space<vmem>>, vector<1x256xf32>
    %487 = vector.broadcast %486 : vector<1x256xf32> to vector<4x256xf32>
    %488 = arith.mulf %469, %487 : vector<4x256xf32>
    %c255_i32_246 = arith.constant 255 : i32
    %489 = tpu.dynamic_rotate %469 by %c255_i32_246 dim 1 : vector<4x256xf32>, i32 -> vector<4x256xf32>
    %c5_247 = arith.constant 5 : index
    %c0_248 = arith.constant 0 : index
    %490 = vector.load %arg3[%c5_247, %c0_248] : memref<9x256xf32, #tpu.memory_space<vmem>>, vector<1x256xf32>
    %491 = vector.broadcast %490 : vector<1x256xf32> to vector<4x256xf32>
    %492 = arith.mulf %489, %491 : vector<4x256xf32>
    %c241_i32_249 = arith.constant 241 : i32
    %493 = tpu.dynamic_rotate %469 by %c241_i32_249 dim 1 : vector<4x256xf32>, i32 -> vector<4x256xf32>
    %c6_250 = arith.constant 6 : index
    %c0_251 = arith.constant 0 : index
    %494 = vector.load %arg3[%c6_250, %c0_251] : memref<9x256xf32, #tpu.memory_space<vmem>>, vector<1x256xf32>
    %495 = vector.broadcast %494 : vector<1x256xf32> to vector<4x256xf32>
    %496 = arith.mulf %493, %495 : vector<4x256xf32>
    %c240_i32_252 = arith.constant 240 : i32
    %497 = tpu.dynamic_rotate %469 by %c240_i32_252 dim 1 : vector<4x256xf32>, i32 -> vector<4x256xf32>
    %c7_253 = arith.constant 7 : index
    %c0_254 = arith.constant 0 : index
    %498 = vector.load %arg3[%c7_253, %c0_254] : memref<9x256xf32, #tpu.memory_space<vmem>>, vector<1x256xf32>
    %499 = vector.broadcast %498 : vector<1x256xf32> to vector<4x256xf32>
    %500 = arith.mulf %497, %499 : vector<4x256xf32>
    %c239_i32_255 = arith.constant 239 : i32
    %501 = tpu.dynamic_rotate %469 by %c239_i32_255 dim 1 : vector<4x256xf32>, i32 -> vector<4x256xf32>
    %c8_256 = arith.constant 8 : index
    %c0_257 = arith.constant 0 : index
    %502 = vector.load %arg3[%c8_256, %c0_257] : memref<9x256xf32, #tpu.memory_space<vmem>>, vector<1x256xf32>
    %503 = vector.broadcast %502 : vector<1x256xf32> to vector<4x256xf32>
    %504 = arith.mulf %501, %503 : vector<4x256xf32>
    %505 = tpu.concatenate %473, %477, %481, %485, %488, %492, %496, %500, %504 in 0 : vector<4x256xf32>, vector<4x256xf32>, vector<4x256xf32>, vector<4x256xf32>, vector<4x256xf32>, vector<4x256xf32>, vector<4x256xf32>, vector<4x256xf32>, vector<4x256xf32> -> vector<36x256xf32>
    %cst_258 = arith.constant dense<0.000000e+00> : vector<16x256xf32>
    %506 = tpu.matmul %0, %505, %cst_258 {dimension_numbers = #tpu.dot_dimension_numbers<[1], [0], [0], [1], [0, 0, 1, 1], [], []>, precision = #tpu.contract_precision<fp32>} : vector<16x36xf32>, vector<36x256xf32>, vector<16x256xf32> -> vector<16x256xf32>
    %c0_259 = arith.constant 0 : index
    %c7_260 = arith.constant 7 : index
    %c0_261 = arith.constant 0 : index
    %c0_262 = arith.constant 0 : index
    %507 = vector.load %arg1[%c0_259, %c7_260, %c0_261, %c0_262] : memref<1x8x16x256xf32, #tpu.memory_space<vmem>>, vector<1x1x16x256xf32>
    %508 = vector.shape_cast %507 : vector<1x1x16x256xf32> to vector<16x256xf32>
    %509 = arith.addf %506, %508 : vector<16x256xf32>
    %510 = vector.extract_strided_slice %509 {offsets = [0, 0], sizes = [4, 256], strides = [1, 1]} : vector<16x256xf32> to vector<4x256xf32>
    %511 = arith.negf %510 : vector<4x256xf32>
    %512 = math.exp %511 : vector<4x256xf32>
    %cst_263 = arith.constant 1.000000e+00 : f32
    %513 = vector.broadcast %cst_263 : f32 to vector<4x256xf32>
    %514 = arith.addf %513, %512 : vector<4x256xf32>
    %515 = arith.divf %513, %514 : vector<4x256xf32>
    %516 = vector.extract_strided_slice %509 {offsets = [4, 0], sizes = [4, 256], strides = [1, 1]} : vector<16x256xf32> to vector<4x256xf32>
    %517 = arith.negf %516 : vector<4x256xf32>
    %518 = math.exp %517 : vector<4x256xf32>
    %cst_264 = arith.constant 1.000000e+00 : f32
    %519 = vector.broadcast %cst_264 : f32 to vector<4x256xf32>
    %520 = arith.addf %519, %518 : vector<4x256xf32>
    %521 = arith.divf %519, %520 : vector<4x256xf32>
    %522 = vector.extract_strided_slice %509 {offsets = [8, 0], sizes = [4, 256], strides = [1, 1]} : vector<16x256xf32> to vector<4x256xf32>
    %523 = math.tanh %522 : vector<4x256xf32>
    %524 = vector.extract_strided_slice %509 {offsets = [12, 0], sizes = [4, 256], strides = [1, 1]} : vector<16x256xf32> to vector<4x256xf32>
    %525 = arith.negf %524 : vector<4x256xf32>
    %526 = math.exp %525 : vector<4x256xf32>
    %cst_265 = arith.constant 1.000000e+00 : f32
    %527 = vector.broadcast %cst_265 : f32 to vector<4x256xf32>
    %528 = arith.addf %527, %526 : vector<4x256xf32>
    %529 = arith.divf %527, %528 : vector<4x256xf32>
    %530 = arith.mulf %521, %467 : vector<4x256xf32>
    %531 = arith.mulf %515, %523 : vector<4x256xf32>
    %532 = arith.addf %530, %531 : vector<4x256xf32>
    %533 = math.tanh %532 : vector<4x256xf32>
    %534 = arith.mulf %529, %533 : vector<4x256xf32>
    %535 = tpu.concatenate %469, %534 in 0 : vector<4x256xf32>, vector<4x256xf32> -> vector<8x256xf32>
    %c0_266 = arith.constant 0 : index
    %c24 = arith.constant 24 : index
    %c0_267 = arith.constant 0 : index
    %536 = vector.load %arg4[%c0_266, %c24, %c0_267] : memref<1x32x256xf32, #tpu.memory_space<vmem>>, vector<1x8x256xf32>
    %537 = vector.shape_cast %536 : vector<1x8x256xf32> to vector<8x256xf32>
    %538 = vector.shape_cast %535 : vector<8x256xf32> to vector<1x8x256xf32>
    tpu.vector_store %arg4[%c0_266, %c24, %c0_267], %538 {strides = array<i32>} : memref<1x32x256xf32, #tpu.memory_space<vmem>>, vector<1x8x256xf32>,
    %c0_268 = arith.constant 0 : index
    %c0_269 = arith.constant 0 : index
    %c0_270 = arith.constant 0 : index
    %539 = vector.load %arg5[%c0_268, %c0_269, %c0_270] : memref<1x4x256xf32, #tpu.memory_space<vmem>>, vector<1x4x256xf32>
    %540 = vector.shape_cast %539 : vector<1x4x256xf32> to vector<4x256xf32>
    %541 = vector.shape_cast %532 : vector<4x256xf32> to vector<1x4x256xf32>
    tpu.vector_store %arg5[%c0_268, %c0_269, %c0_270], %541 {strides = array<i32>} : memref<1x4x256xf32, #tpu.memory_space<vmem>>, vector<1x4x256xf32>,
    return
  }
  func.func @transform_0(%arg0: i32) -> (i32, i32, i32, i32) {
    %c0_i32 = arith.constant 0 : i32
    %c0_i32_0 = arith.constant 0 : i32
    %c0_i32_1 = arith.constant 0 : i32
    %c0_i32_2 = arith.constant 0 : i32
    return %arg0, %c0_i32, %c0_i32_0, %c0_i32_1 : i32, i32, i32, i32
  }
  func.func @transform_1(%arg0: i32) -> (i32, i32) {
    %c0_i32 = arith.constant 0 : i32
    %c0_i32_0 = arith.constant 0 : i32
    %c0_i32_1 = arith.constant 0 : i32
    return %c0_i32, %c0_i32_0 : i32, i32
  }
  func.func @transform_2(%arg0: i32) -> (i32, i32) {
    %c0_i32 = arith.constant 0 : i32
    %c0_i32_0 = arith.constant 0 : i32
    %c0_i32_1 = arith.constant 0 : i32
    return %c0_i32, %c0_i32_0 : i32, i32
  }
  func.func @transform_3(%arg0: i32) -> (i32, i32, i32) {
    %c0_i32 = arith.constant 0 : i32
    %c0_i32_0 = arith.constant 0 : i32
    %c0_i32_1 = arith.constant 0 : i32
    return %arg0, %c0_i32, %c0_i32_0 : i32, i32, i32
  }
  func.func @transform_4(%arg0: i32) -> (i32, i32, i32) {
    %c0_i32 = arith.constant 0 : i32
    %c0_i32_0 = arith.constant 0 : i32
    %c0_i32_1 = arith.constant 0 : i32
    return %arg0, %c0_i32, %c0_i32_0 : i32, i32, i32
  }
}

</mosaic_0001>

<llo_original>
// kernel: conv_lstm_forward.1
$region0: #{conv_lstm_forward.1}
  #allocation0 [shape = 'u32[]', space=smem, size = 0x4, offset = 0x4, fixed_abs, tag = 'smem constant byte address 0x4 - core index']
  #allocation1 [shape = 'u32[144,128]{1,0:T(1,128)}', space=vmem, size = 0x12000, scoped, tag = 'internal scratch']
  %s0 = inlined_call_operand.vmem [shape: f32[2,8,16,256], index: 0, kind: input, shape index: {}]
  %s1 = inlined_call_operand.vmem [shape: f32[16,36], index: 1, kind: input, shape index: {}]
  %s2 = inlined_call_operand.vmem [shape: f32[9,256], index: 2, kind: input, shape index: {}]
  %s3 = inlined_call_operand.vmem [shape: f32[2,32,256], index: 3, kind: output, shape index: {0}]
  %s4 = inlined_call_operand.vmem [shape: f32[2,4,256], index: 4, kind: output, shape index: {1}]
  %5 = xla_tuple %s3, %s4
  %s6 = sld [smem:[#allocation0]]
  $region53: #{conv_lstm_forward.1} parent=0
    _
  %s8 = ssub.s32 1, %s6
  %s9 = scalar_select 0, %s8, %s6
  loop: start=0, step=1, limit=4
  $region2: #{conv_lstm_forward.1} parent=0 // loop_pre_header
    _
  $region3: #{conv_lstm_forward.1} parent=0 // loop_header
    %s11 = sphi 0, %s15
    %p12 = scmp.ge.s32.totalorder %s11, 4
    %s21 = sphi 0, %s23
    %s24 = sphi 0, %s21
    %s25 = sphi 0, %s24
    %s41 = sphi 0, %s25
    %s45 = sphi 0, %s45
    %s47 = sphi 0, %s45
    %s48 = sphi 0, %s47
    %s62 = sphi 0, %s48
    %s66 = sphi 0, %s66
    %s68 = sphi 0, %s66
    %s69 = sphi 0, %s68
    %s83 = sphi 0, %s69
    %s89 = sphi 0, %s91
    %s92 = sphi 0, %s89
    %s93 = sphi 0, %s92
    %s109 = sphi 0, %s93
    %s115 = sphi 0, %s117
    %s118 = sphi 0, %s115
    %s119 = sphi 0, %s118
    %s135 = sphi 0, %s119
  $region4: #{conv_lstm_forward.1} parent=0 // loop_header_branch
    %14 = sbr.rel (%p12) target = $region8
  $region5: #{conv_lstm_forward.1} parent=0 // loop_body
    %s16 = ssub.s32 %s11, 1
    %s17 = ssub.s32 %s11, 2
    %s18 = sadd.s32 %s11, 1
    %s19 = ssub.s32 %s11, %s18
    %p20 = scmp.eq.s32.totalorder %s19, 0
    %s22 = sadd.s32 %s21, 1
    %s23 = scalar_select %p20, %s21, %s22
    %p26 = pneg %p20
    %p27 = scmp.eq.s32.totalorder %s11, 1
    %p28 = por %p26, %p27
    %p29 = scmp.ne.s32.totalorder %s21, %s24
    %p30 = scmp.eq.s32.totalorder %s11, 0
    %p31 = por %p29, %p30
    %p32 = scmp.ne.s32.totalorder %s21, %s24
    %p33 = scmp.eq.s32.totalorder %s16, 1
    %p34 = por %p32, %p33
    %p35 = scmp.ne.s32.totalorder %s24, %s25
    %p36 = scmp.eq.s32.totalorder %s16, 0
    %p37 = por %p35, %p36
    %p38 = scmp.ne.s32.totalorder %s24, %s25
    %p39 = scmp.eq.s32.totalorder %s17, 1
    %p40 = por %p38, %p39
    %p42 = scmp.ne.s32.totalorder %s25, %s41
    %p43 = scmp.eq.s32.totalorder %s17, 0
    %p44 = por %p42, %p43
    %s46 = sadd.s32 %s45, 1
    %p49 = scmp.eq.s32.totalorder %s11, 1
    %p50 = scmp.ne.s32.totalorder %s45, %s47
    %p51 = scmp.eq.s32.totalorder %s11, 0
    %p52 = por %p50, %p51
    %p53 = scmp.ne.s32.totalorder %s45, %s47
    %p54 = scmp.eq.s32.totalorder %s16, 1
    %p55 = por %p53, %p54
    %p56 = scmp.ne.s32.totalorder %s47, %s48
    %p57 = scmp.eq.s32.totalorder %s16, 0
    %p58 = por %p56, %p57
    %p59 = scmp.ne.s32.totalorder %s47, %s48
    %p60 = scmp.eq.s32.totalorder %s17, 1
    %p61 = por %p59, %p60
    %p63 = scmp.ne.s32.totalorder %s48, %s62
    %p64 = scmp.eq.s32.totalorder %s17, 0
    %p65 = por %p63, %p64
    %s67 = sadd.s32 %s66, 1
    %p70 = scmp.eq.s32.totalorder %s11, 1
    %p71 = scmp.ne.s32.totalorder %s66, %s68
    %p72 = scmp.eq.s32.totalorder %s11, 0
    %p73 = por %p71, %p72
    %p74 = scmp.ne.s32.totalorder %s66, %s68
    %p75 = scmp.eq.s32.totalorder %s16, 1
    %p76 = por %p74, %p75
    %p77 = scmp.ne.s32.totalorder %s68, %s69
    %p78 = scmp.eq.s32.totalorder %s16, 0
    %p79 = por %p77, %p78
    %p80 = scmp.ne.s32.totalorder %s68, %s69
    %p81 = scmp.eq.s32.totalorder %s17, 1
    %p82 = por %p80, %p81
    %p84 = scmp.ne.s32.totalorder %s69, %s83
    %p85 = scmp.eq.s32.totalorder %s17, 0
    %p86 = por %p84, %p85
    %s87 = ssub.s32 %s11, %s18
    %p88 = scmp.eq.s32.totalorder %s87, 0
    %s90 = sadd.s32 %s89, 1
    %s91 = scalar_select %p88, %s89, %s90
    %p94 = pneg %p88
    %p95 = scmp.eq.s32.totalorder %s11, 1
    %p96 = por %p94, %p95
    %p97 = scmp.ne.s32.totalorder %s89, %s92
    %p98 = scmp.eq.s32.totalorder %s11, 0
    %p99 = por %p97, %p98
    %p100 = scmp.ne.s32.totalorder %s89, %s92
    %p101 = scmp.eq.s32.totalorder %s16, 1
    %p102 = por %p100, %p101
    %p103 = scmp.ne.s32.totalorder %s92, %s93
    %p104 = scmp.eq.s32.totalorder %s16, 0
    %p105 = por %p103, %p104
    %p106 = scmp.ne.s32.totalorder %s92, %s93
    %p107 = scmp.eq.s32.totalorder %s17, 1
    %p108 = por %p106, %p107
    %p110 = scmp.ne.s32.totalorder %s93, %s109
    %p111 = scmp.eq.s32.totalorder %s17, 0
    %p112 = por %p110, %p111
    %s113 = ssub.s32 %s11, %s18
    %p114 = scmp.eq.s32.totalorder %s113, 0
    %s116 = sadd.s32 %s115, 1
    %s117 = scalar_select %p114, %s115, %s116
    %p120 = pneg %p114
    %p121 = scmp.eq.s32.totalorder %s11, 1
    %p122 = por %p120, %p121
    %p123 = scmp.ne.s32.totalorder %s115, %s118
    %p124 = scmp.eq.s32.totalorder %s11, 0
    %p125 = por %p123, %p124
    %p126 = scmp.ne.s32.totalorder %s115, %s118
    %p127 = scmp.eq.s32.totalorder %s16, 1
    %p128 = por %p126, %p127
    %p129 = scmp.ne.s32.totalorder %s118, %s119
    %p130 = scmp.eq.s32.totalorder %s16, 0
    %p131 = por %p129, %p130
    %p132 = scmp.ne.s32.totalorder %s118, %s119
    %p133 = scmp.eq.s32.totalorder %s17, 1
    %p134 = por %p132, %p133
    %p136 = scmp.ne.s32.totalorder %s119, %s135
    %p137 = scmp.eq.s32.totalorder %s17, 0
    %p138 = por %p136, %p137
    %p139 = scmp.le.s32.totalorder 1, %s11
    %p140 = scmp.lt.s32.totalorder %s11, 3
    %p141 = pnand %p139, %p140
    %p142 = pneg %p141
    // Predicated region
    $region9: #{conv_lstm_forward.1} parent=5 // pred_check
      _
    $region10: #{conv_lstm_forward.1} parent=5 // pred_check_branch
      %144 = sbr.rel (%p141) target = $region12
    $region11: #{conv_lstm_forward.1} parent=5 // pred_region
      %s145 = ssub.s32 %s11, 1
      // Predicated region
      $region13: #{conv_lstm_forward.1} parent=11 // pred_check
        %p146 = pneg %p58
      $region14: #{conv_lstm_forward.1} parent=11 // pred_check_branch
        %148 = sbr.rel (%p146) target = $region16
      $region15: #{conv_lstm_forward.1} parent=11 // pred_region
        _
      $region16: #{conv_lstm_forward.1} parent=11 // pred_fallthru
        _
      // Predicated region
      $region17: #{conv_lstm_forward.1} parent=11 // pred_check
        %p149 = pneg %p79
      $region18: #{conv_lstm_forward.1} parent=11 // pred_check_branch
        %151 = sbr.rel (%p149) target = $region20
      $region19: #{conv_lstm_forward.1} parent=11 // pred_region
        _
      $region20: #{conv_lstm_forward.1} parent=11 // pred_fallthru
        _
    $region12: #{conv_lstm_forward.1} parent=5 // pred_fallthru
      _
    %p152 = scmp.lt.s32.totalorder %s11, 2
    // Predicated region
    $region21: #{conv_lstm_forward.1} parent=5 // pred_check
      %p153 = pneg %p152
    $region22: #{conv_lstm_forward.1} parent=5 // pred_check_branch
      %155 = sbr.rel (%p153) target = $region24
    $region23: #{conv_lstm_forward.1} parent=5 // pred_region
      // Predicated region
      $region25: #{conv_lstm_forward.1} parent=23 // pred_check
        %p156 = pneg %p31
      $region26: #{conv_lstm_forward.1} parent=23 // pred_check_branch
        %158 = sbr.rel (%p156) target = $region28
      $region27: #{conv_lstm_forward.1} parent=23 // pred_region
        %p159 = scmp.lt.s32.totalorder %s11, 1
        %s160 = scalar_select %p159, %s11, 1
        %s161 = smul.addr %s160, 32
        %s162 = smul.addr %s161, 8
        %s163 = scalar_lea.vmem %s0, %s162
      $region28: #{conv_lstm_forward.1} parent=23 // pred_fallthru
        _
    $region24: #{conv_lstm_forward.1} parent=5 // pred_fallthru
      _
    %p164 = scmp.le.s32.totalorder 1, %s11
    %p165 = scmp.lt.s32.totalorder %s11, 3
    %p166 = pnand %p164, %p165
    %p167 = pneg %p166
    // Predicated region
    $region29: #{conv_lstm_forward.1} parent=5 // pred_check
      _
    $region30: #{conv_lstm_forward.1} parent=5 // pred_check_branch
      %169 = sbr.rel (%p166) target = $region32
    $region31: #{conv_lstm_forward.1} parent=5 // pred_region
      %s170 = ssub.s32 %s11, 1
      %p171 = scmp.lt.s32.totalorder %s16, 1
      %s172 = scalar_select %p171, %s16, 1
      %s173 = smul.addr %s172, 32
      %s174 = smul.addr %s173, 8
      %s175 = scalar_lea.vmem %s0, %s174
      %p176 = pneg %p37
      %p177 = pneg %p34
      %p178 = pneg %p58
      %p179 = pneg %p55
      %p180 = pneg %p79
      %p181 = pneg %p76
      %p182 = pneg %p105
      %p183 = pneg %p102
      %p184 = scmp.lt.s32.totalorder %s16, 1
      %s185 = scalar_select %p184, %s16, 1
      %s186 = smul.addr %s185, 8
      %s187 = smul.addr %s186, 8
      %s188 = scalar_lea.vmem %s3, %s187
      %p189 = pneg %p131
      %p190 = pneg %p128
      %p191 = scmp.lt.s32.totalorder %s16, 1
      %s192 = scalar_select %p191, %s16, 1
      %s193 = smul.addr %s192, 2
      %s194 = smul.addr %s193, 4
      %s195 = scalar_lea.vmem %s4, %s194
      %p196 = scmp.lt.s32.totalorder %s16, 1
      %s197 = scalar_select %p196, %s16, 1
      %s198 = smul.addr %s197, 32
      %s199 = smul.addr %s198, 8
      %s200 = scalar_lea.vmem %s0, %s199
      %p201 = scmp.lt.s32.totalorder %s16, 1
      %s202 = scalar_select %p201, %s16, 1
      %s203 = smul.addr %s202, 8
      %s204 = smul.addr %s203, 8
      %s205 = scalar_lea.vmem %s3, %s204
      %p206 = scmp.lt.s32.totalorder %s16, 1
      %s207 = scalar_select %p206, %s16, 1
      %s208 = smul.addr %s207, 2
      %s209 = smul.addr %s208, 4
      %s210 = scalar_lea.vmem %s4, %s209
      %v211 = vld [vmem:[%s1] sm:$0xff]
      %v212 = vld [vmem:[%s1 + $0x8] sm:$0xff]
      %213 = vrot.lane.b32.xlu0 0.0, 17
      %v214 = vpop.permute.xlu0 %213
      %v215 = vlaneseq
      %v216 = vand.u32 %v215, 127
      %vm217 = vcmp.lt.s32.totalorder %v216, 17
      %v218 = vld [vmem:[%s2] ss:$8 sm:$0x3]
      %v220 = vlaneseq
      %v221 = vshrl.u32 %v220, 7
      %v222 = vsub.s32 0, %v221
      %v223 = vrot.slane %v218, %v222
      %v224 = vlaneseq
      %v225 = vshrl.u32 %v224, 7
      %v226 = vsub.s32 1, %v225
      %v227 = vrot.slane %v218, %v226
      %v230 = vmul.f32 %v214, %v223
      %v231 = vmul.f32 %v214, %v227
      %232 = vrot.lane.b32.xlu0 0.0, 16
      %v233 = vpop.permute.xlu0 %232
      %vm234 = vcmp.lt.s32.totalorder %v216, 16
      %s235 = scalar_lea.vmem %s2, 1
      %v236 = vld [vmem:[%s235] ss:$8 sm:$0x3]
      %v238 = vlaneseq
      %v239 = vshrl.u32 %v238, 7
      %v240 = vsub.s32 0, %v239
      %v241 = vrot.slane %v236, %v240
      %v242 = vlaneseq
      %v243 = vshrl.u32 %v242, 7
      %v244 = vsub.s32 1, %v243
      %v245 = vrot.slane %v236, %v244
      %v248 = vmul.f32 %v233, %v241
      %v249 = vmul.f32 %v233, %v245
      %250 = vrot.lane.b32.xlu0 0.0, 15
      %v251 = vpop.permute.xlu0 %250
      %vm252 = vcmp.lt.s32.totalorder %v216, 15
      %s253 = scalar_lea.vmem %s2, 2
      %v254 = vld [vmem:[%s253] ss:$8 sm:$0x3]
      %v256 = vlaneseq
      %v257 = vshrl.u32 %v256, 7
      %v258 = vsub.s32 0, %v257
      %v259 = vrot.slane %v254, %v258
      %v260 = vlaneseq
      %v261 = vshrl.u32 %v260, 7
      %v262 = vsub.s32 1, %v261
      %v263 = vrot.slane %v254, %v262
      %v266 = vmul.f32 %v251, %v259
      %v267 = vmul.f32 %v251, %v263
      %268 = vrot.lane.b32.xlu0 0.0, 1
      %v269 = vpop.permute.xlu0 %268
      %vm270 = vcmp.lt.s32.totalorder %v216, 1
      %s271 = scalar_lea.vmem %s2, 3
      %v272 = vld [vmem:[%s271] ss:$8 sm:$0x3]
      %v274 = vlaneseq
      %v275 = vshrl.u32 %v274, 7
      %v276 = vsub.s32 0, %v275
      %v277 = vrot.slane %v272, %v276
      %v278 = vlaneseq
      %v279 = vshrl.u32 %v278, 7
      %v280 = vsub.s32 1, %v279
      %v281 = vrot.slane %v272, %v280
      %v284 = vmul.f32 %v269, %v277
      %v285 = vmul.f32 %v269, %v281
      %s286 = scalar_lea.vmem %s2, 4
      %v287 = vld [vmem:[%s286] ss:$8 sm:$0x3]
      %v289 = vlaneseq
      %v290 = vshrl.u32 %v289, 7
      %v291 = vsub.s32 0, %v290
      %v292 = vrot.slane %v287, %v291
      %v293 = vlaneseq
      %v294 = vshrl.u32 %v293, 7
      %v295 = vsub.s32 1, %v294
      %v296 = vrot.slane %v287, %v295
      %v299 = vmul.f32 %v292, 0.0
      %v300 = vmul.f32 %v296, 0.0
      %301 = vrot.lane.b32.xlu0 0.0, 127
      %v302 = vpop.permute.xlu0 %301
      %vm303 = vcmp.lt.s32.totalorder %v216, 127
      %s304 = scalar_lea.vmem %s2, 5
      %v305 = vld [vmem:[%s304] ss:$8 sm:$0x3]
      %v307 = vlaneseq
      %v308 = vshrl.u32 %v307, 7
      %v309 = vsub.s32 0, %v308
      %v310 = vrot.slane %v305, %v309
      %v311 = vlaneseq
      %v312 = vshrl.u32 %v311, 7
      %v313 = vsub.s32 1, %v312
      %v314 = vrot.slane %v305, %v313
      %v317 = vmul.f32 %v302, %v310
      %v318 = vmul.f32 %v302, %v314
      %319 = vrot.lane.b32.xlu0 0.0, 113
      %v320 = vpop.permute.xlu0 %319
      %vm321 = vcmp.lt.s32.totalorder %v216, 113
      %s322 = scalar_lea.vmem %s2, 6
      %v323 = vld [vmem:[%s322] ss:$8 sm:$0x3]
      %v325 = vlaneseq
      %v326 = vshrl.u32 %v325, 7
      %v327 = vsub.s32 0, %v326
      %v328 = vrot.slane %v323, %v327
      %v329 = vlaneseq
      %v330 = vshrl.u32 %v329, 7
      %v331 = vsub.s32 1, %v330
      %v332 = vrot.slane %v323, %v331
      %v335 = vmul.f32 %v320, %v328
      %v336 = vmul.f32 %v320, %v332
      %337 = vrot.lane.b32.xlu0 0.0, 112
      %v338 = vpop.permute.xlu0 %337
      %vm339 = vcmp.lt.s32.totalorder %v216, 112
      %s340 = scalar_lea.vmem %s2, 7
      %v341 = vld [vmem:[%s340] ss:$8 sm:$0x3]
      %v343 = vlaneseq
      %v344 = vshrl.u32 %v343, 7
      %v345 = vsub.s32 0, %v344
      %v346 = vrot.slane %v341, %v345
      %v347 = vlaneseq
      %v348 = vshrl.u32 %v347, 7
      %v349 = vsub.s32 1, %v348
      %v350 = vrot.slane %v341, %v349
      %v353 = vmul.f32 %v338, %v346
      %v354 = vmul.f32 %v338, %v350
      %355 = vrot.lane.b32.xlu0 0.0, 111
      %v356 = vpop.permute.xlu0 %355
      %vm357 = vcmp.lt.s32.totalorder %v216, 111
      %s358 = scalar_lea.vmem %s2, 16
      %v359 = vld [vmem:[%s358] ss:$8 sm:$0x3]
      %v361 = vlaneseq
      %v362 = vshrl.u32 %v361, 7
      %v363 = vsub.s32 0, %v362
      %v364 = vrot.slane %v359, %v363
      %v365 = vlaneseq
      %v366 = vshrl.u32 %v365, 7
      %v367 = vsub.s32 1, %v366
      %v368 = vrot.slane %v359, %v367
      %v371 = vmul.f32 %v356, %v364
      %v372 = vmul.f32 %v356, %v368
      %v375 = vrot.slane %v248, 4
      %v376 = vrot.slane %v249, 4
      %v381 = vrot.slane %v284, 4
      %v382 = vrot.slane %v285, 4
      %v387 = vrot.slane %v317, 4
      %v388 = vrot.slane %v318, 4
      %v393 = vrot.slane %v353, 4
      %v394 = vrot.slane %v354, 4
      %vm397 = vcmask 1043456
      %v398 = vsel %vm397, %v230, %v375
      %v399 = vsel %vm397, %v231, %v376
      %v400 = vsel %vm397, %v266, %v381
      %v401 = vsel %vm397, %v267, %v382
      %v402 = vsel %vm397, %v299, %v387
      %v403 = vsel %vm397, %v300, %v388
      %v404 = vsel %vm397, %v335, %v393
      %v405 = vsel %vm397, %v336, %v394
      %v406 = vld [vmem:[%s200] sm:$0xff]
      %v407 = vld [vmem:[%s200 + $0x8] sm:$0xff]
      %v408 = vld [vmem:[%s200 + $0x10] sm:$0xff]
      %v409 = vld [vmem:[%s200 + $0x18] sm:$0xff]
      %vm410 = vcmask 293888
      %v412 = vsel %vm410, %v211, 0
      %v415 = vsel %vm410, %v212, 0
      %v418 = vsel %vm397, %v371, 0
      %v421 = vsel %vm397, %v372, 0
      %v423 = vand.u32 %v399, 4294901760
      %424 = vmatprep.subr.mxu0 %v423
      %v425 = vand.u32 %v398, 4294901760
      %426 = vmatpush1.msra.mxu0 %v425
      %v427 = vand.u32 %v401, 4294901760
      %428 = vmatprep.subr.mxu0 %v427
      %v429 = vand.u32 %v400, 4294901760
      %430 = vmatpush1.msra.mxu0 %v429
      %v431 = vand.u32 %v403, 4294901760
      %432 = vmatprep.subr.mxu0 %v431
      %v433 = vand.u32 %v402, 4294901760
      %434 = vmatpush1.msra.mxu0 %v433
      %v435 = vand.u32 %v405, 4294901760
      %436 = vmatprep.subr.mxu0 %v435
      %v437 = vand.u32 %v404, 4294901760
      %438 = vmatpush1.msra.mxu0 %v437
      %v439 = vand.u32 %v421, 4294901760
      %440 = vmatprep.subr.mxu0 %v439
      %v441 = vand.u32 %v418, 4294901760
      %442 = vmatpush1.msra.mxu0 %v441
      %443 = vmatprep.subr.mxu0 0.0
      %444 = vmatpush1.msra.mxu0 0.0
      %445 = vmatprep.subr.mxu0 0.0
      %446 = vmatpush1.msra.mxu0 0.0
      %447 = vmatprep.subr.mxu0 0.0
      %448 = vmatpush1.msra.mxu0 0.0
      %449 = vmatprep.subr.mxu0 0.0
      %450 = vmatpush1.msra.mxu0 0.0
      %451 = vmatprep.subr.mxu0 0.0
      %452 = vmatpush1.msra.mxu0 0.0
      %453 = vmatprep.subr.mxu0 0.0
      %454 = vmatpush1.msra.mxu0 0.0
      %455 = vmatprep.subr.mxu0 0.0
      %456 = vmatpush1.msra.mxu0 0.0
      %457 = vmatprep.subr.mxu0 0.0
      %458 = vmatpush1.msra.mxu0 0.0
      %459 = vmatprep.subr.mxu0 0.0
      %460 = vmatpush1.msra.mxu0 0.0
      %461 = vmatprep.subr.mxu0 0.0
      %462 = vmatpush1.msra.mxu0 0.0
      %463 = vmatprep.subr.mxu0 0.0
      %464 = vmatpush1.msra.mxu0 0.0
      %465 = vmatprep.subr.mxu0 0.0
      %466 = vmatpush1.msra.mxu0 0.0
      %467 = vmatprep.subr.mxu0 0.0
      %468 = vmatpush1.msra.mxu0 0.0
      %469 = vmatprep.subr.mxu0 0.0
      %470 = vmatpush1.msra.mxu0 0.0
      %471 = vmatprep.subr.mxu0 0.0
      %472 = vmatpush1.msra.mxu0 0.0
      %473 = vmatprep.subr.mxu0 0.0
      %474 = vmatpush1.msra.mxu0 0.0
      %475 = vmatprep.subr.mxu0 0.0
      %476 = vmatpush1.msra.mxu0 0.0
      %477 = vmatprep.subr.mxu0 0.0
      %478 = vmatpush1.msra.mxu0 0.0
      %479 = vmatprep.subr.mxu0 0.0
      %480 = vmatpush1.msra.mxu0 0.0
      %481 = vmatprep.subr.mxu0 0.0
      %482 = vmatpush1.msra.mxu0 0.0
      %483 = vmatprep.subr.mxu0 0.0
      %484 = vmatpush1.msra.mxu0 0.0
      %485 = vmatprep.subr.mxu0 0.0
      %486 = vmatpush1.msra.mxu0 0.0
      %487 = vmatprep.subr.mxu0 0.0
      %488 = vmatpush1.msra.mxu0 0.0
      %489 = vmatprep.subr.mxu0 0.0
      %490 = vmatpush1.msra.mxu0 0.0
      %491 = vmatprep.subr.mxu0 0.0
      %492 = vmatpush1.msra.mxu0 0.0
      %493 = vmatprep.subr.mxu0 0.0
      %494 = vmatpush1.msra.mxu0 0.0
      %495 = vmatprep.subr.mxu0 0.0
      %496 = vmatpush1.msra.mxu0 0.0
      %497 = vmatprep.mubr.f32.mxu0 0.0
      %v498 = vand.u32 %v412, 4294901760
      %v499 = vsub.f32 %v412, %v498
      %v500 = vand.u32 %v499, 4294901760
      %v501 = vsub.f32 %v499, %v500
      %v502 = vand.u32 %v501, 4294901760
      %503 = vmatmul.mubr.f32.gmra.mrb[0].mxu0 %v502
      %v504 = vpop.f32.mrb[0].mxu0
      %v505 = vadd.f32 %v406, %v504
      %v506 = vpop.f32.mrb[0].mxu0
      %v507 = vadd.f32 %v407, %v506
      %508 = vmatprep.mubr.f32.mxu0 0.0
      %v509 = vand.u32 %v415, 4294901760
      %v510 = vsub.f32 %v415, %v509
      %v511 = vand.u32 %v510, 4294901760
      %v512 = vsub.f32 %v510, %v511
      %v513 = vand.u32 %v512, 4294901760
      %514 = vmatmul.mubr.f32.gmra.mrb[0].mxu0 %v513
      %v515 = vpop.f32.mrb[0].mxu0
      %v516 = vadd.f32 %v408, %v515
      %v517 = vpop.f32.mrb[0].mxu0
      %v518 = vadd.f32 %v409, %v517
      %519 = vdwg.mxu0
      %v520 = vand.u32 %v399, 4294901760
      %v521 = vsub.f32 %v399, %v520
      %v522 = vand.u32 %v521, 4294901760
      %v523 = vsub.f32 %v521, %v522
      %v524 = vand.u32 %v523, 4294901760
      %525 = vmatprep.subr.mxu0 %v524
      %v526 = vand.u32 %v398, 4294901760
      %v527 = vsub.f32 %v398, %v526
      %v528 = vand.u32 %v527, 4294901760
      %v529 = vsub.f32 %v527, %v528
      %v530 = vand.u32 %v529, 4294901760
      %531 = vmatpush1.msra.mxu0 %v530
      %v532 = vand.u32 %v401, 4294901760
      %v533 = vsub.f32 %v401, %v532
      %v534 = vand.u32 %v533, 4294901760
      %v535 = vsub.f32 %v533, %v534
      %v536 = vand.u32 %v535, 4294901760
      %537 = vmatprep.subr.mxu0 %v536
      %v538 = vand.u32 %v400, 4294901760
      %v539 = vsub.f32 %v400, %v538
      %v540 = vand.u32 %v539, 4294901760
      %v541 = vsub.f32 %v539, %v540
      %v542 = vand.u32 %v541, 4294901760
      %543 = vmatpush1.msra.mxu0 %v542
      %v544 = vand.u32 %v403, 4294901760
      %v545 = vsub.f32 %v403, %v544
      %v546 = vand.u32 %v545, 4294901760
      %v547 = vsub.f32 %v545, %v546
      %v548 = vand.u32 %v547, 4294901760
      %549 = vmatprep.subr.mxu0 %v548
      %v550 = vand.u32 %v402, 4294901760
      %v551 = vsub.f32 %v402, %v550
      %v552 = vand.u32 %v551, 4294901760
      %v553 = vsub.f32 %v551, %v552
      %v554 = vand.u32 %v553, 4294901760
      %555 = vmatpush1.msra.mxu0 %v554
      %v556 = vand.u32 %v405, 4294901760
      %v557 = vsub.f32 %v405, %v556
      %v558 = vand.u32 %v557, 4294901760
      %v559 = vsub.f32 %v557, %v558
      %v560 = vand.u32 %v559, 4294901760
      %561 = vmatprep.subr.mxu0 %v560
      %v562 = vand.u32 %v404, 4294901760
      %v563 = vsub.f32 %v404, %v562
      %v564 = vand.u32 %v563, 4294901760
      %v565 = vsub.f32 %v563, %v564
      %v566 = vand.u32 %v565, 4294901760
      %567 = vmatpush1.msra.mxu0 %v566
      %v568 = vand.u32 %v421, 4294901760
      %v569 = vsub.f32 %v421, %v568
      %v570 = vand.u32 %v569, 4294901760
      %v571 = vsub.f32 %v569, %v570
      %v572 = vand.u32 %v571, 4294901760
      %573 = vmatprep.subr.mxu0 %v572
      %v574 = vand.u32 %v418, 4294901760
      %v575 = vsub.f32 %v418, %v574
      %v576 = vand.u32 %v575, 4294901760
      %v577 = vsub.f32 %v575, %v576
      %v578 = vand.u32 %v577, 4294901760
      %579 = vmatpush1.msra.mxu0 %v578
      %580 = vmatprep.subr.mxu0 0.0
      %581 = vmatpush1.msra.mxu0 0.0
      %582 = vmatprep.subr.mxu0 0.0
      %583 = vmatpush1.msra.mxu0 0.0
      %584 = vmatprep.subr.mxu0 0.0
      %585 = vmatpush1.msra.mxu0 0.0
      %586 = vmatprep.subr.mxu0 0.0
      %587 = vmatpush1.msra.mxu0 0.0
      %588 = vmatprep.subr.mxu0 0.0
      %589 = vmatpush1.msra.mxu0 0.0
      %590 = vmatprep.subr.mxu0 0.0
      %591 = vmatpush1.msra.mxu0 0.0
      %592 = vmatprep.subr.mxu0 0.0
      %593 = vmatpush1.msra.mxu0 0.0
      %594 = vmatprep.subr.mxu0 0.0
      %595 = vmatpush1.msra.mxu0 0.0
      %596 = vmatprep.subr.mxu0 0.0
      %597 = vmatpush1.msra.mxu0 0.0
      %598 = vmatprep.subr.mxu0 0.0
      %599 = vmatpush1.msra.mxu0 0.0
      %600 = vmatprep.subr.mxu0 0.0
      %601 = vmatpush1.msra.mxu0 0.0
      %602 = vmatprep.subr.mxu0 0.0
      %603 = vmatpush1.msra.mxu0 0.0
      %604 = vmatprep.subr.mxu0 0.0
      %605 = vmatpush1.msra.mxu0 0.0
      %606 = vmatprep.subr.mxu0 0.0
      %607 = vmatpush1.msra.mxu0 0.0
      %608 = vmatprep.subr.mxu0 0.0
      %609 = vmatpush1.msra.mxu0 0.0
      %610 = vmatprep.subr.mxu0 0.0
      %611 = vmatpush1.msra.mxu0 0.0
      %612 = vmatprep.subr.mxu0 0.0
      %613 = vmatpush1.msra.mxu0 0.0
      %614 = vmatprep.subr.mxu0 0.0
      %615 = vmatpush1.msra.mxu0 0.0
      %616 = vmatprep.subr.mxu0 0.0
      %617 = vmatpush1.msra.mxu0 0.0
      %618 = vmatprep.subr.mxu0 0.0
      %619 = vmatpush1.msra.mxu0 0.0
      %620 = vmatprep.subr.mxu0 0.0
      %621 = vmatpush1.msra.mxu0 0.0
      %622 = vmatprep.subr.mxu0 0.0
      %623 = vmatpush1.msra.mxu0 0.0
      %624 = vmatprep.subr.mxu0 0.0
      %625 = vmatpush1.msra.mxu0 0.0
      %626 = vmatprep.subr.mxu0 0.0
      %627 = vmatpush1.msra.mxu0 0.0
      %628 = vmatprep.subr.mxu0 0.0
      %629 = vmatpush1.msra.mxu0 0.0
      %630 = vmatprep.subr.mxu0 0.0
      %631 = vmatpush1.msra.mxu0 0.0
      %632 = vmatprep.subr.mxu0 0.0
      %633 = vmatpush1.msra.mxu0 0.0
      %634 = vmatprep.mubr.f32.mxu0 0.0
      %v635 = vand.u32 %v412, 4294901760
      %636 = vmatmul.mubr.f32.gmra.mrb[0].mxu0 %v635
      %v637 = vpop.f32.mrb[0].mxu0
      %v638 = vadd.f32 %v505, %v637
      %v639 = vpop.f32.mrb[0].mxu0
      %v640 = vadd.f32 %v507, %v639
      %641 = vmatprep.mubr.f32.mxu0 0.0
      %v642 = vand.u32 %v415, 4294901760
      %643 = vmatmul.mubr.f32.gmra.mrb[0].mxu0 %v642
      %v644 = vpop.f32.mrb[0].mxu0
      %v645 = vadd.f32 %v516, %v644
      %v646 = vpop.f32.mrb[0].mxu0
      %v647 = vadd.f32 %v518, %v646
      %648 = vdwg.mxu0
      %v649 = vand.u32 %v399, 4294901760
      %v650 = vsub.f32 %v399, %v649
      %651 = vmatprep.subr.mxu0 %v650
      %v652 = vand.u32 %v398, 4294901760
      %v653 = vsub.f32 %v398, %v652
      %654 = vmatpush1.msra.mxu0 %v653
      %v655 = vand.u32 %v401, 4294901760
      %v656 = vsub.f32 %v401, %v655
      %657 = vmatprep.subr.mxu0 %v656
      %v658 = vand.u32 %v400, 4294901760
      %v659 = vsub.f32 %v400, %v658
      %660 = vmatpush1.msra.mxu0 %v659
      %v661 = vand.u32 %v403, 4294901760
      %v662 = vsub.f32 %v403, %v661
      %663 = vmatprep.subr.mxu0 %v662
      %v664 = vand.u32 %v402, 4294901760
      %v665 = vsub.f32 %v402, %v664
      %666 = vmatpush1.msra.mxu0 %v665
      %v667 = vand.u32 %v405, 4294901760
      %v668 = vsub.f32 %v405, %v667
      %669 = vmatprep.subr.mxu0 %v668
      %v670 = vand.u32 %v404, 4294901760
      %v671 = vsub.f32 %v404, %v670
      %672 = vmatpush1.msra.mxu0 %v671
      %v673 = vand.u32 %v421, 4294901760
      %v674 = vsub.f32 %v421, %v673
      %675 = vmatprep.subr.mxu0 %v674
      %v676 = vand.u32 %v418, 4294901760
      %v677 = vsub.f32 %v418, %v676
      %678 = vmatpush1.msra.mxu0 %v677
      %679 = vmatprep.subr.mxu0 0.0
      %680 = vmatpush1.msra.mxu0 0.0
      %681 = vmatprep.subr.mxu0 0.0
      %682 = vmatpush1.msra.mxu0 0.0
      %683 = vmatprep.subr.mxu0 0.0
      %684 = vmatpush1.msra.mxu0 0.0
      %685 = vmatprep.subr.mxu0 0.0
      %686 = vmatpush1.msra.mxu0 0.0
      %687 = vmatprep.subr.mxu0 0.0
      %688 = vmatpush1.msra.mxu0 0.0
      %689 = vmatprep.subr.mxu0 0.0
      %690 = vmatpush1.msra.mxu0 0.0
      %691 = vmatprep.subr.mxu0 0.0
      %692 = vmatpush1.msra.mxu0 0.0
      %693 = vmatprep.subr.mxu0 0.0
      %694 = vmatpush1.msra.mxu0 0.0
      %695 = vmatprep.subr.mxu0 0.0
      %696 = vmatpush1.msra.mxu0 0.0
      %697 = vmatprep.subr.mxu0 0.0
      %698 = vmatpush1.msra.mxu0 0.0
      %699 = vmatprep.subr.mxu0 0.0
      %700 = vmatpush1.msra.mxu0 0.0
      %701 = vmatprep.subr.mxu0 0.0
      %702 = vmatpush1.msra.mxu0 0.0
      %703 = vmatprep.subr.mxu0 0.0
      %704 = vmatpush1.msra.mxu0 0.0
      %705 = vmatprep.subr.mxu0 0.0
      %706 = vmatpush1.msra.mxu0 0.0
      %707 = vmatprep.subr.mxu0 0.0
      %708 = vmatpush1.msra.mxu0 0.0
      %709 = vmatprep.subr.mxu0 0.0
      %710 = vmatpush1.msra.mxu0 0.0
      %711 = vmatprep.subr.mxu0 0.0
      %712 = vmatpush1.msra.mxu0 0.0
      %713 = vmatprep.subr.mxu0 0.0
      %714 = vmatpush1.msra.mxu0 0.0
      %715 = vmatprep.subr.mxu0 0.0
      %716 = vmatpush1.msra.mxu0 0.0
      %717 = vmatprep.subr.mxu0 0.0
      %718 = vmatpush1.msra.mxu0 0.0
      %719 = vmatprep.subr.mxu0 0.0
      %720 = vmatpush1.msra.mxu0 0.0
      %721 = vmatprep.subr.mxu0 0.0
      %722 = vmatpush1.msra.mxu0 0.0
      %723 = vmatprep.subr.mxu0 0.0
      %724 = vmatpush1.msra.mxu0 0.0
      %725 = vmatprep.subr.mxu0 0.0
      %726 = vmatpush1.msra.mxu0 0.0
      %727 = vmatprep.subr.mxu0 0.0
      %728 = vmatpush1.msra.mxu0 0.0
      %729 = vmatprep.subr.mxu0 0.0
      %730 = vmatpush1.msra.mxu0 0.0
      %731 = vmatprep.subr.mxu0 0.0
      %732 = vmatpush1.msra.mxu0 0.0
      %733 = vmatprep.mubr.f32.mxu0 0.0
      %v734 = vand.u32 %v412, 4294901760
      %v735 = vsub.f32 %v412, %v734
      %736 = vmatmul.mubr.f32.gmra.mrb[0].mxu0 %v735
      %v737 = vpop.f32.mrb[0].mxu0
      %v738 = vadd.f32 %v638, %v737
      %v739 = vpop.f32.mrb[0].mxu0
      %v740 = vadd.f32 %v640, %v739
      %741 = vmatprep.mubr.f32.mxu0 0.0
      %v742 = vand.u32 %v415, 4294901760
      %v743 = vsub.f32 %v415, %v742
      %744 = vmatmul.mubr.f32.gmra.mrb[0].mxu0 %v743
      %v745 = vpop.f32.mrb[0].mxu0
      %v746 = vadd.f32 %v645, %v745
      %v747 = vpop.f32.mrb[0].mxu0
      %v748 = vadd.f32 %v647, %v747
      %749 = vdwg.mxu0
      %v750 = vand.u32 %v399, 4294901760
      %751 = vmatprep.subr.mxu0 %v750
      %v752 = vand.u32 %v398, 4294901760
      %753 = vmatpush1.msra.mxu0 %v752
      %v754 = vand.u32 %v401, 4294901760
      %755 = vmatprep.subr.mxu0 %v754
      %v756 = vand.u32 %v400, 4294901760
      %757 = vmatpush1.msra.mxu0 %v756
      %v758 = vand.u32 %v403, 4294901760
      %759 = vmatprep.subr.mxu0 %v758
      %v760 = vand.u32 %v402, 4294901760
      %761 = vmatpush1.msra.mxu0 %v760
      %v762 = vand.u32 %v405, 4294901760
      %763 = vmatprep.subr.mxu0 %v762
      %v764 = vand.u32 %v404, 4294901760
      %765 = vmatpush1.msra.mxu0 %v764
      %v766 = vand.u32 %v421, 4294901760
      %767 = vmatprep.subr.mxu0 %v766
      %v768 = vand.u32 %v418, 4294901760
      %769 = vmatpush1.msra.mxu0 %v768
      %770 = vmatprep.subr.mxu0 0.0
      %771 = vmatpush1.msra.mxu0 0.0
      %772 = vmatprep.subr.mxu0 0.0
      %773 = vmatpush1.msra.mxu0 0.0
      %774 = vmatprep.subr.mxu0 0.0
      %775 = vmatpush1.msra.mxu0 0.0
      %776 = vmatprep.subr.mxu0 0.0
      %777 = vmatpush1.msra.mxu0 0.0
      %778 = vmatprep.subr.mxu0 0.0
      %779 = vmatpush1.msra.mxu0 0.0
      %780 = vmatprep.subr.mxu0 0.0
      %781 = vmatpush1.msra.mxu0 0.0
      %782 = vmatprep.subr.mxu0 0.0
      %783 = vmatpush1.msra.mxu0 0.0
      %784 = vmatprep.subr.mxu0 0.0
      %785 = vmatpush1.msra.mxu0 0.0
      %786 = vmatprep.subr.mxu0 0.0
      %787 = vmatpush1.msra.mxu0 0.0
      %788 = vmatprep.subr.mxu0 0.0
      %789 = vmatpush1.msra.mxu0 0.0
      %790 = vmatprep.subr.mxu0 0.0
      %791 = vmatpush1.msra.mxu0 0.0
      %792 = vmatprep.subr.mxu0 0.0
      %793 = vmatpush1.msra.mxu0 0.0
      %794 = vmatprep.subr.mxu0 0.0
      %795 = vmatpush1.msra.mxu0 0.0
      %796 = vmatprep.subr.mxu0 0.0
      %797 = vmatpush1.msra.mxu0 0.0
      %798 = vmatprep.subr.mxu0 0.0
      %799 = vmatpush1.msra.mxu0 0.0
      %800 = vmatprep.subr.mxu0 0.0
      %801 = vmatpush1.msra.mxu0 0.0
      %802 = vmatprep.subr.mxu0 0.0
      %803 = vmatpush1.msra.mxu0 0.0
      %804 = vmatprep.subr.mxu0 0.0
      %805 = vmatpush1.msra.mxu0 0.0
      %806 = vmatprep.subr.mxu0 0.0
      %807 = vmatpush1.msra.mxu0 0.0
      %808 = vmatprep.subr.mxu0 0.0
      %809 = vmatpush1.msra.mxu0 0.0
      %810 = vmatprep.subr.mxu0 0.0
      %811 = vmatpush1.msra.mxu0 0.0
      %812 = vmatprep.subr.mxu0 0.0
      %813 = vmatpush1.msra.mxu0 0.0
      %814 = vmatprep.subr.mxu0 0.0
      %815 = vmatpush1.msra.mxu0 0.0
      %816 = vmatprep.subr.mxu0 0.0
      %817 = vmatpush1.msra.mxu0 0.0
      %818 = vmatprep.subr.mxu0 0.0
      %819 = vmatpush1.msra.mxu0 0.0
      %820 = vmatprep.subr.mxu0 0.0
      %821 = vmatpush1.msra.mxu0 0.0
      %822 = vmatprep.subr.mxu0 0.0
      %823 = vmatpush1.msra.mxu0 0.0
      %824 = vmatprep.mubr.f32.mxu0 0.0
      %v825 = vand.u32 %v412, 4294901760
      %v826 = vsub.f32 %v412, %v825
      %v827 = vand.u32 %v826, 4294901760
      %828 = vmatmul.mubr.f32.gmra.mrb[0].mxu0 %v827
      %v829 = vpop.f32.mrb[0].mxu0
      %v830 = vadd.f32 %v738, %v829
      %v831 = vpop.f32.mrb[0].mxu0
      %v832 = vadd.f32 %v740, %v831
      %833 = vmatprep.mubr.f32.mxu0 0.0
      %v834 = vand.u32 %v415, 4294901760
      %v835 = vsub.f32 %v415, %v834
      %v836 = vand.u32 %v835, 4294901760
      %837 = vmatmul.mubr.f32.gmra.mrb[0].mxu0 %v836
      %v838 = vpop.f32.mrb[0].mxu0
      %v839 = vadd.f32 %v746, %v838
      %v840 = vpop.f32.mrb[0].mxu0
      %v841 = vadd.f32 %v748, %v840
      %842 = vdwg.mxu0
      %v843 = vand.u32 %v399, 4294901760
      %v844 = vsub.f32 %v399, %v843
      %v845 = vand.u32 %v844, 4294901760
      %846 = vmatprep.subr.mxu0 %v845
      %v847 = vand.u32 %v398, 4294901760
      %v848 = vsub.f32 %v398, %v847
      %v849 = vand.u32 %v848, 4294901760
      %850 = vmatpush1.msra.mxu0 %v849
      %v851 = vand.u32 %v401, 4294901760
      %v852 = vsub.f32 %v401, %v851
      %v853 = vand.u32 %v852, 4294901760
      %854 = vmatprep.subr.mxu0 %v853
      %v855 = vand.u32 %v400, 4294901760
      %v856 = vsub.f32 %v400, %v855
      %v857 = vand.u32 %v856, 4294901760
      %858 = vmatpush1.msra.mxu0 %v857
      %v859 = vand.u32 %v403, 4294901760
      %v860 = vsub.f32 %v403, %v859
      %v861 = vand.u32 %v860, 4294901760
      %862 = vmatprep.subr.mxu0 %v861
      %v863 = vand.u32 %v402, 4294901760
      %v864 = vsub.f32 %v402, %v863
      %v865 = vand.u32 %v864, 4294901760
      %866 = vmatpush1.msra.mxu0 %v865
      %v867 = vand.u32 %v405, 4294901760
      %v868 = vsub.f32 %v405, %v867
      %v869 = vand.u32 %v868, 4294901760
      %870 = vmatprep.subr.mxu0 %v869
      %v871 = vand.u32 %v404, 4294901760
      %v872 = vsub.f32 %v404, %v871
      %v873 = vand.u32 %v872, 4294901760
      %874 = vmatpush1.msra.mxu0 %v873
      %v875 = vand.u32 %v421, 4294901760
      %v876 = vsub.f32 %v421, %v875
      %v877 = vand.u32 %v876, 4294901760
      %878 = vmatprep.subr.mxu0 %v877
      %v879 = vand.u32 %v418, 4294901760
      %v880 = vsub.f32 %v418, %v879
      %v881 = vand.u32 %v880, 4294901760
      %882 = vmatpush1.msra.mxu0 %v881
      %883 = vmatprep.subr.mxu0 0.0
      %884 = vmatpush1.msra.mxu0 0.0
      %885 = vmatprep.subr.mxu0 0.0
      %886 = vmatpush1.msra.mxu0 0.0
      %887 = vmatprep.subr.mxu0 0.0
      %888 = vmatpush1.msra.mxu0 0.0
      %889 = vmatprep.subr.mxu0 0.0
      %890 = vmatpush1.msra.mxu0 0.0
      %891 = vmatprep.subr.mxu0 0.0
      %892 = vmatpush1.msra.mxu0 0.0
      %893 = vmatprep.subr.mxu0 0.0
      %894 = vmatpush1.msra.mxu0 0.0
      %895 = vmatprep.subr.mxu0 0.0
      %896 = vmatpush1.msra.mxu0 0.0
      %897 = vmatprep.subr.mxu0 0.0
      %898 = vmatpush1.msra.mxu0 0.0
      %899 = vmatprep.subr.mxu0 0.0
      %900 = vmatpush1.msra.mxu0 0.0
      %901 = vmatprep.subr.mxu0 0.0
      %902 = vmatpush1.msra.mxu0 0.0
      %903 = vmatprep.subr.mxu0 0.0
      %904 = vmatpush1.msra.mxu0 0.0
      %905 = vmatprep.subr.mxu0 0.0
      %906 = vmatpush1.msra.mxu0 0.0
      %907 = vmatprep.subr.mxu0 0.0
      %908 = vmatpush1.msra.mxu0 0.0
      %909 = vmatprep.subr.mxu0 0.0
      %910 = vmatpush1.msra.mxu0 0.0
      %911 = vmatprep.subr.mxu0 0.0
      %912 = vmatpush1.msra.mxu0 0.0
      %913 = vmatprep.subr.mxu0 0.0
      %914 = vmatpush1.msra.mxu0 0.0
      %915 = vmatprep.subr.mxu0 0.0
      %916 = vmatpush1.msra.mxu0 0.0
      %917 = vmatprep.subr.mxu0 0.0
      %918 = vmatpush1.msra.mxu0 0.0
      %919 = vmatprep.subr.mxu0 0.0
      %920 = vmatpush1.msra.mxu0 0.0
      %921 = vmatprep.subr.mxu0 0.0
      %922 = vmatpush1.msra.mxu0 0.0
      %923 = vmatprep.subr.mxu0 0.0
      %924 = vmatpush1.msra.mxu0 0.0
      %925 = vmatprep.subr.mxu0 0.0
      %926 = vmatpush1.msra.mxu0 0.0
      %927 = vmatprep.subr.mxu0 0.0
      %928 = vmatpush1.msra.mxu0 0.0
      %929 = vmatprep.subr.mxu0 0.0
      %930 = vmatpush1.msra.mxu0 0.0
      %931 = vmatprep.subr.mxu0 0.0
      %932 = vmatpush1.msra.mxu0 0.0
      %933 = vmatprep.subr.mxu0 0.0
      %934 = vmatpush1.msra.mxu0 0.0
      %935 = vmatprep.subr.mxu0 0.0
      %936 = vmatpush1.msra.mxu0 0.0
      %937 = vmatprep.mubr.f32.mxu0 0.0
      %v938 = vand.u32 %v412, 4294901760
      %939 = vmatmul.mubr.f32.gmra.mrb[0].mxu0 %v938
      %v940 = vpop.f32.mrb[0].mxu0
      %v941 = vadd.f32 %v830, %v940
      %v942 = vpop.f32.mrb[0].mxu0
      %v943 = vadd.f32 %v832, %v942
      %944 = vmatprep.mubr.f32.mxu0 0.0
      %v945 = vand.u32 %v415, 4294901760
      %946 = vmatmul.mubr.f32.gmra.mrb[0].mxu0 %v945
      %v947 = vpop.f32.mrb[0].mxu0
      %v948 = vadd.f32 %v839, %v947
      %v949 = vpop.f32.mrb[0].mxu0
      %v950 = vadd.f32 %v841, %v949
      %951 = vdwg.mxu0
      %v952 = vand.u32 %v399, 4294901760
      %953 = vmatprep.subr.mxu0 %v952
      %v954 = vand.u32 %v398, 4294901760
      %955 = vmatpush1.msra.mxu0 %v954
      %v956 = vand.u32 %v401, 4294901760
      %957 = vmatprep.subr.mxu0 %v956
      %v958 = vand.u32 %v400, 4294901760
      %959 = vmatpush1.msra.mxu0 %v958
      %v960 = vand.u32 %v403, 4294901760
      %961 = vmatprep.subr.mxu0 %v960
      %v962 = vand.u32 %v402, 4294901760
      %963 = vmatpush1.msra.mxu0 %v962
      %v964 = vand.u32 %v405, 4294901760
      %965 = vmatprep.subr.mxu0 %v964
      %v966 = vand.u32 %v404, 4294901760
      %967 = vmatpush1.msra.mxu0 %v966
      %v968 = vand.u32 %v421, 4294901760
      %969 = vmatprep.subr.mxu0 %v968
      %v970 = vand.u32 %v418, 4294901760
      %971 = vmatpush1.msra.mxu0 %v970
      %972 = vmatprep.subr.mxu0 0.0
      %973 = vmatpush1.msra.mxu0 0.0
      %974 = vmatprep.subr.mxu0 0.0
      %975 = vmatpush1.msra.mxu0 0.0
      %976 = vmatprep.subr.mxu0 0.0
      %977 = vmatpush1.msra.mxu0 0.0
      %978 = vmatprep.subr.mxu0 0.0
      %979 = vmatpush1.msra.mxu0 0.0
      %980 = vmatprep.subr.mxu0 0.0
      %981 = vmatpush1.msra.mxu0 0.0
      %982 = vmatprep.subr.mxu0 0.0
      %983 = vmatpush1.msra.mxu0 0.0
      %984 = vmatprep.subr.mxu0 0.0
      %985 = vmatpush1.msra.mxu0 0.0
      %986 = vmatprep.subr.mxu0 0.0
      %987 = vmatpush1.msra.mxu0 0.0
      %988 = vmatprep.subr.mxu0 0.0
      %989 = vmatpush1.msra.mxu0 0.0
      %990 = vmatprep.subr.mxu0 0.0
      %991 = vmatpush1.msra.mxu0 0.0
      %992 = vmatprep.subr.mxu0 0.0
      %993 = vmatpush1.msra.mxu0 0.0
      %994 = vmatprep.subr.mxu0 0.0
      %995 = vmatpush1.msra.mxu0 0.0
      %996 = vmatprep.subr.mxu0 0.0
      %997 = vmatpush1.msra.mxu0 0.0
      %998 = vmatprep.subr.mxu0 0.0
      %999 = vmatpush1.msra.mxu0 0.0
      %1000 = vmatprep.subr.mxu0 0.0
      %1001 = vmatpush1.msra.mxu0 0.0
      %1002 = vmatprep.subr.mxu0 0.0
      %1003 = vmatpush1.msra.mxu0 0.0
      %1004 = vmatprep.subr.mxu0 0.0
      %1005 = vmatpush1.msra.mxu0 0.0
      %1006 = vmatprep.subr.mxu0 0.0
      %1007 = vmatpush1.msra.mxu0 0.0
      %1008 = vmatprep.subr.mxu0 0.0
      %1009 = vmatpush1.msra.mxu0 0.0
      %1010 = vmatprep.subr.mxu0 0.0
      %1011 = vmatpush1.msra.mxu0 0.0
      %1012 = vmatprep.subr.mxu0 0.0
      %1013 = vmatpush1.msra.mxu0 0.0
      %1014 = vmatprep.subr.mxu0 0.0
      %1015 = vmatpush1.msra.mxu0 0.0
      %1016 = vmatprep.subr.mxu0 0.0
      %1017 = vmatpush1.msra.mxu0 0.0
      %1018 = vmatprep.subr.mxu0 0.0
      %1019 = vmatpush1.msra.mxu0 0.0
      %1020 = vmatprep.subr.mxu0 0.0
      %1021 = vmatpush1.msra.mxu0 0.0
      %1022 = vmatprep.subr.mxu0 0.0
      %1023 = vmatpush1.msra.mxu0 0.0
      %1024 = vmatprep.subr.mxu0 0.0
      %1025 = vmatpush1.msra.mxu0 0.0
      %1026 = vmatprep.mubr.f32.mxu0 0.0
      %v1027 = vand.u32 %v412, 4294901760
      %1028 = vmatmul.mubr.f32.gmra.mrb[0].mxu0 %v1027
      %v1029 = vpop.f32.mrb[0].mxu0
      %v1030 = vadd.f32 %v941, %v1029
      %v1031 = vpop.f32.mrb[0].mxu0
      %v1032 = vadd.f32 %v943, %v1031
      %1033 = vmatprep.mubr.f32.mxu0 0.0
      %v1034 = vand.u32 %v415, 4294901760
      %1035 = vmatmul.mubr.f32.gmra.mrb[0].mxu0 %v1034
      %v1036 = vpop.f32.mrb[0].mxu0
      %v1037 = vadd.f32 %v948, %v1036
      %v1038 = vpop.f32.mrb[0].mxu0
      %v1039 = vadd.f32 %v950, %v1038
      %1040 = vdwg.mxu0
      %v1041 = vxor.u32 %v1030, 2147483648
      %v1042 = vxor.u32 %v1032, 2147483648
      %v1043 = vmul.f32 %v1041, 1.442695
      %v1044 = vpow.pop %v1043
      %v1045 = vmul.f32 %v1042, 1.442695
      %v1046 = vpow.pop %v1045
      %v1047 = vadd.f32 %v1044, 1.0
      %v1048 = vadd.f32 %v1046, 1.0
      %v1049 = vrcp.pop %v1047
      %v1050 = vmul.f32 1.0, %v1049
      %v1051 = vrcp.pop %v1048
      %v1052 = vmul.f32 1.0, %v1051
      %v1053 = vtanh.pop %v1037
      %v1054 = vtanh.pop %v1039
      %v1055 = vxor.u32 %v1037, 2147483648
      %v1056 = vxor.u32 %v1039, 2147483648
      %v1057 = vmul.f32 %v1055, 1.442695
      %v1058 = vpow.pop %v1057
      %v1059 = vmul.f32 %v1056, 1.442695
      %v1060 = vpow.pop %v1059
      %v1061 = vadd.f32 %v1058, 1.0
      %v1062 = vadd.f32 %v1060, 1.0
      %v1063 = vrcp.pop %v1061
      %v1064 = vmul.f32 1.0, %v1063
      %v1065 = vrcp.pop %v1062
      %v1066 = vmul.f32 1.0, %v1065
      %v1067 = vmul.f32 %v1050, 0.0
      %v1068 = vmul.f32 %v1052, 0.0
      %v1069 = vmul.f32 %v1050, %v1053
      %v1070 = vmul.f32 %v1052, %v1054
      %v1073 = vrot.slane %v1069, 4
      %v1074 = vrot.slane %v1070, 4
      %v1077 = vadd.f32 %v1067, %v1073
      %v1078 = vadd.f32 %v1068, %v1074
      %v1079 = vtanh.pop %v1077
      %v1080 = vtanh.pop %v1078
      %v1081 = vmul.f32 %v1064, %v1079
      %v1082 = vmul.f32 %v1066, %v1080
      %v1085 = vrot.slane %v1081, 4
      %v1086 = vrot.slane %v1082, 4
      %1089 = vrot.lane.b32.xlu0 %v1085, 17
      %v1090 = vpop.permute.xlu0 %1089
      %1091 = vrot.lane.b32.xlu0 %v1086, 17
      %v1092 = vpop.permute.xlu0 %1091
      %v1093 = vsel %vm217, %v1090, %v1092
      %v1094 = vsel %vm217, %v1092, %v1090
      %v1095 = vmul.f32 %v1094, %v223
      %v1096 = vmul.f32 %v1093, %v227
      %1097 = vrot.lane.b32.xlu0 %v1085, 16
      %v1098 = vpop.permute.xlu0 %1097
      %1099 = vrot.lane.b32.xlu0 %v1086, 16
      %v1100 = vpop.permute.xlu0 %1099
      %v1101 = vsel %vm234, %v1098, %v1100
      %v1102 = vsel %vm234, %v1100, %v1098
      %v1103 = vmul.f32 %v1102, %v241
      %v1104 = vmul.f32 %v1101, %v245
      %1105 = vrot.lane.b32.xlu0 %v1085, 15
      %v1106 = vpop.permute.xlu0 %1105
      %1107 = vrot.lane.b32.xlu0 %v1086, 15
      %v1108 = vpop.permute.xlu0 %1107
      %v1109 = vsel %vm252, %v1106, %v1108
      %v1110 = vsel %vm252, %v1108, %v1106
      %v1111 = vmul.f32 %v1110, %v259
      %v1112 = vmul.f32 %v1109, %v263
      %1113 = vrot.lane.b32.xlu0 %v1085, 1
      %v1114 = vpop.permute.xlu0 %1113
      %1115 = vrot.lane.b32.xlu0 %v1086, 1
      %v1116 = vpop.permute.xlu0 %1115
      %v1117 = vsel %vm270, %v1114, %v1116
      %v1118 = vsel %vm270, %v1116, %v1114
      %v1119 = vmul.f32 %v1118, %v277
      %v1120 = vmul.f32 %v1117, %v281
      %v1121 = vmul.f32 %v1081, %v292
      %v1122 = vmul.f32 %v1082, %v296
      %1123 = vrot.lane.b32.xlu0 %v1085, 127
      %v1124 = vpop.permute.xlu0 %1123
      %1125 = vrot.lane.b32.xlu0 %v1086, 127
      %v1126 = vpop.permute.xlu0 %1125
      %v1127 = vsel %vm303, %v1124, %v1126
      %v1128 = vsel %vm303, %v1126, %v1124
      %v1129 = vmul.f32 %v1127, %v310
      %v1130 = vmul.f32 %v1128, %v314
      %1131 = vrot.lane.b32.xlu0 %v1085, 113
      %v1132 = vpop.permute.xlu0 %1131
      %1133 = vrot.lane.b32.xlu0 %v1086, 113
      %v1134 = vpop.permute.xlu0 %1133
      %v1135 = vsel %vm321, %v1132, %v1134
      %v1136 = vsel %vm321, %v1134, %v1132
      %v1137 = vmul.f32 %v1135, %v328
      %v1138 = vmul.f32 %v1136, %v332
      %1139 = vrot.lane.b32.xlu0 %v1085, 112
      %v1140 = vpop.permute.xlu0 %1139
      %1141 = vrot.lane.b32.xlu0 %v1086, 112
      %v1142 = vpop.permute.xlu0 %1141
      %v1143 = vsel %vm339, %v1140, %v1142
      %v1144 = vsel %vm339, %v1142, %v1140
      %v1145 = vmul.f32 %v1143, %v346
      %v1146 = vmul.f32 %v1144, %v350
      %1147 = vrot.lane.b32.xlu0 %v1085, 111
      %v1148 = vpop.permute.xlu0 %1147
      %1149 = vrot.lane.b32.xlu0 %v1086, 111
      %v1150 = vpop.permute.xlu0 %1149
      %v1151 = vsel %vm357, %v1148, %v1150
      %v1152 = vsel %vm357, %v1150, %v1148
      %v1153 = vmul.f32 %v1151, %v364
      %v1154 = vmul.f32 %v1152, %v368
      %v1157 = vrot.slane %v1103, 4
      %v1158 = vrot.slane %v1104, 4
      %v1163 = vrot.slane %v1119, 4
      %v1164 = vrot.slane %v1120, 4
      %v1169 = vrot.slane %v1121, 4
      %v1170 = vrot.slane %v1122, 4
      %v1175 = vrot.slane %v1129, 4
      %v1176 = vrot.slane %v1130, 4
      %v1181 = vrot.slane %v1145, 4
      %v1182 = vrot.slane %v1146, 4
      %v1185 = vsel %vm397, %v1095, %v1157
      %v1186 = vsel %vm397, %v1096, %v1158
      %v1187 = vsel %vm397, %v1111, %v1163
      %v1188 = vsel %vm397, %v1112, %v1164
      %v1189 = vsel %vm397, %v1169, %v1175
      %v1190 = vsel %vm397, %v1170, %v1176
      %v1191 = vsel %vm397, %v1137, %v1181
      %v1192 = vsel %vm397, %v1138, %v1182
      %s1193 = scalar_lea.vmem %s200, 32
      %v1194 = vld [vmem:[%s1193] sm:$0xff]
      %v1195 = vld [vmem:[%s1193 + $0x8] sm:$0xff]
      %v1196 = vld [vmem:[%s1193 + $0x10] sm:$0xff]
      %v1197 = vld [vmem:[%s1193 + $0x18] sm:$0xff]
      %v1199 = vsel %vm397, %v1153, 0
      %v1202 = vsel %vm397, %v1154, 0
      %v1204 = vand.u32 %v1186, 4294901760
      %1205 = vmatprep.subr.mxu0 %v1204
      %v1206 = vand.u32 %v1185, 4294901760
      %1207 = vmatpush1.msra.mxu0 %v1206
      %v1208 = vand.u32 %v1188, 4294901760
      %1209 = vmatprep.subr.mxu0 %v1208
      %v1210 = vand.u32 %v1187, 4294901760
      %1211 = vmatpush1.msra.mxu0 %v1210
      %v1212 = vand.u32 %v1190, 4294901760
      %1213 = vmatprep.subr.mxu0 %v1212
      %v1214 = vand.u32 %v1189, 4294901760
      %1215 = vmatpush1.msra.mxu0 %v1214
      %v1216 = vand.u32 %v1192, 4294901760
      %1217 = vmatprep.subr.mxu0 %v1216
      %v1218 = vand.u32 %v1191, 4294901760
      %1219 = vmatpush1.msra.mxu0 %v1218
      %v1220 = vand.u32 %v1202, 4294901760
      %1221 = vmatprep.subr.mxu0 %v1220
      %v1222 = vand.u32 %v1199, 4294901760
      %1223 = vmatpush1.msra.mxu0 %v1222
      %1224 = vmatprep.subr.mxu0 0.0
      %1225 = vmatpush1.msra.mxu0 0.0
      %1226 = vmatprep.subr.mxu0 0.0
      %1227 = vmatpush1.msra.mxu0 0.0
      %1228 = vmatprep.subr.mxu0 0.0
      %1229 = vmatpush1.msra.mxu0 0.0
      %1230 = vmatprep.subr.mxu0 0.0
      %1231 = vmatpush1.msra.mxu0 0.0
      %1232 = vmatprep.subr.mxu0 0.0
      %1233 = vmatpush1.msra.mxu0 0.0
      %1234 = vmatprep.subr.mxu0 0.0
      %1235 = vmatpush1.msra.mxu0 0.0
      %1236 = vmatprep.subr.mxu0 0.0
      %1237 = vmatpush1.msra.mxu0 0.0
      %1238 = vmatprep.subr.mxu0 0.0
      %1239 = vmatpush1.msra.mxu0 0.0
      %1240 = vmatprep.subr.mxu0 0.0
      %1241 = vmatpush1.msra.mxu0 0.0
      %1242 = vmatprep.subr.mxu0 0.0
      %1243 = vmatpush1.msra.mxu0 0.0
      %1244 = vmatprep.subr.mxu0 0.0
      %1245 = vmatpush1.msra.mxu0 0.0
      %1246 = vmatprep.subr.mxu0 0.0
      %1247 = vmatpush1.msra.mxu0 0.0
      %1248 = vmatprep.subr.mxu0 0.0
      %1249 = vmatpush1.msra.mxu0 0.0
      %1250 = vmatprep.subr.mxu0 0.0
      %1251 = vmatpush1.msra.mxu0 0.0
      %1252 = vmatprep.subr.mxu0 0.0
      %1253 = vmatpush1.msra.mxu0 0.0
      %1254 = vmatprep.subr.mxu0 0.0
      %1255 = vmatpush1.msra.mxu0 0.0
      %1256 = vmatprep.subr.mxu0 0.0
      %1257 = vmatpush1.msra.mxu0 0.0
      %1258 = vmatprep.subr.mxu0 0.0
      %1259 = vmatpush1.msra.mxu0 0.0
      %1260 = vmatprep.subr.mxu0 0.0
      %1261 = vmatpush1.msra.mxu0 0.0
      %1262 = vmatprep.subr.mxu0 0.0
      %1263 = vmatpush1.msra.mxu0 0.0
      %1264 = vmatprep.subr.mxu0 0.0
      %1265 = vmatpush1.msra.mxu0 0.0
      %1266 = vmatprep.subr.mxu0 0.0
      %1267 = vmatpush1.msra.mxu0 0.0
      %1268 = vmatprep.subr.mxu0 0.0
      %1269 = vmatpush1.msra.mxu0 0.0
      %1270 = vmatprep.subr.mxu0 0.0
      %1271 = vmatpush1.msra.mxu0 0.0
      %1272 = vmatprep.subr.mxu0 0.0
      %1273 = vmatpush1.msra.mxu0 0.0
      %1274 = vmatprep.subr.mxu0 0.0
      %1275 = vmatpush1.msra.mxu0 0.0
      %1276 = vmatprep.subr.mxu0 0.0
      %1277 = vmatpush1.msra.mxu0 0.0
      %1278 = vmatprep.mubr.f32.mxu0 0.0
      %v1279 = vand.u32 %v412, 4294901760
      %v1280 = vsub.f32 %v412, %v1279
      %v1281 = vand.u32 %v1280, 4294901760
      %v1282 = vsub.f32 %v1280, %v1281
      %v1283 = vand.u32 %v1282, 4294901760
      %1284 = vmatmul.mubr.f32.gmra.mrb[0].mxu0 %v1283
      %v1285 = vpop.f32.mrb[0].mxu0
      %v1286 = vadd.f32 %v1194, %v1285
      %v1287 = vpop.f32.mrb[0].mxu0
      %v1288 = vadd.f32 %v1195, %v1287
      %1289 = vmatprep.mubr.f32.mxu0 0.0
      %v1290 = vand.u32 %v415, 4294901760
      %v1291 = vsub.f32 %v415, %v1290
      %v1292 = vand.u32 %v1291, 4294901760
      %v1293 = vsub.f32 %v1291, %v1292
      %v1294 = vand.u32 %v1293, 4294901760
      %1295 = vmatmul.mubr.f32.gmra.mrb[0].mxu0 %v1294
      %v1296 = vpop.f32.mrb[0].mxu0
      %v1297 = vadd.f32 %v1196, %v1296
      %v1298 = vpop.f32.mrb[0].mxu0
      %v1299 = vadd.f32 %v1197, %v1298
      %1300 = vdwg.mxu0
      %v1301 = vand.u32 %v1186, 4294901760
      %v1302 = vsub.f32 %v1186, %v1301
      %v1303 = vand.u32 %v1302, 4294901760
      %v1304 = vsub.f32 %v1302, %v1303
      %v1305 = vand.u32 %v1304, 4294901760
      %1306 = vmatprep.subr.mxu0 %v1305
      %v1307 = vand.u32 %v1185, 4294901760
      %v1308 = vsub.f32 %v1185, %v1307
      %v1309 = vand.u32 %v1308, 4294901760
      %v1310 = vsub.f32 %v1308, %v1309
      %v1311 = vand.u32 %v1310, 4294901760
      %1312 = vmatpush1.msra.mxu0 %v1311
      %v1313 = vand.u32 %v1188, 4294901760
      %v1314 = vsub.f32 %v1188, %v1313
      %v1315 = vand.u32 %v1314, 4294901760
      %v1316 = vsub.f32 %v1314, %v1315
      %v1317 = vand.u32 %v1316, 4294901760
      %1318 = vmatprep.subr.mxu0 %v1317
      %v1319 = vand.u32 %v1187, 4294901760
      %v1320 = vsub.f32 %v1187, %v1319
      %v1321 = vand.u32 %v1320, 4294901760
      %v1322 = vsub.f32 %v1320, %v1321
      %v1323 = vand.u32 %v1322, 4294901760
      %1324 = vmatpush1.msra.mxu0 %v1323
      %v1325 = vand.u32 %v1190, 4294901760
      %v1326 = vsub.f32 %v1190, %v1325
      %v1327 = vand.u32 %v1326, 4294901760
      %v1328 = vsub.f32 %v1326, %v1327
      %v1329 = vand.u32 %v1328, 4294901760
      %1330 = vmatprep.subr.mxu0 %v1329
      %v1331 = vand.u32 %v1189, 4294901760
      %v1332 = vsub.f32 %v1189, %v1331
      %v1333 = vand.u32 %v1332, 4294901760
      %v1334 = vsub.f32 %v1332, %v1333
      %v1335 = vand.u32 %v1334, 4294901760
      %1336 = vmatpush1.msra.mxu0 %v1335
      %v1337 = vand.u32 %v1192, 4294901760
      %v1338 = vsub.f32 %v1192, %v1337
      %v1339 = vand.u32 %v1338, 4294901760
      %v1340 = vsub.f32 %v1338, %v1339
      %v1341 = vand.u32 %v1340, 4294901760
      %1342 = vmatprep.subr.mxu0 %v1341
      %v1343 = vand.u32 %v1191, 4294901760
      %v1344 = vsub.f32 %v1191, %v1343
      %v1345 = vand.u32 %v1344, 4294901760
      %v1346 = vsub.f32 %v1344, %v1345
      %v1347 = vand.u32 %v1346, 4294901760
      %1348 = vmatpush1.msra.mxu0 %v1347
      %v1349 = vand.u32 %v1202, 4294901760
      %v1350 = vsub.f32 %v1202, %v1349
      %v1351 = vand.u32 %v1350, 4294901760
      %v1352 = vsub.f32 %v1350, %v1351
      %v1353 = vand.u32 %v1352, 4294901760
      %1354 = vmatprep.subr.mxu0 %v1353
      %v1355 = vand.u32 %v1199, 4294901760
      %v1356 = vsub.f32 %v1199, %v1355
      %v1357 = vand.u32 %v1356, 4294901760
      %v1358 = vsub.f32 %v1356, %v1357
      %v1359 = vand.u32 %v1358, 4294901760
      %1360 = vmatpush1.msra.mxu0 %v1359
      %1361 = vmatprep.subr.mxu0 0.0
      %1362 = vmatpush1.msra.mxu0 0.0
      %1363 = vmatprep.subr.mxu0 0.0
      %1364 = vmatpush1.msra.mxu0 0.0
      %1365 = vmatprep.subr.mxu0 0.0
      %1366 = vmatpush1.msra.mxu0 0.0
      %1367 = vmatprep.subr.mxu0 0.0
      %1368 = vmatpush1.msra.mxu0 0.0
      %1369 = vmatprep.subr.mxu0 0.0
      %1370 = vmatpush1.msra.mxu0 0.0
      %1371 = vmatprep.subr.mxu0 0.0
      %1372 = vmatpush1.msra.mxu0 0.0
      %1373 = vmatprep.subr.mxu0 0.0
      %1374 = vmatpush1.msra.mxu0 0.0
      %1375 = vmatprep.subr.mxu0 0.0
      %1376 = vmatpush1.msra.mxu0 0.0
      %1377 = vmatprep.subr.mxu0 0.0
      %1378 = vmatpush1.msra.mxu0 0.0
      %1379 = vmatprep.subr.mxu0 0.0
      %1380 = vmatpush1.msra.mxu0 0.0
      %1381 = vmatprep.subr.mxu0 0.0
      %1382 = vmatpush1.msra.mxu0 0.0
      %1383 = vmatprep.subr.mxu0 0.0
      %1384 = vmatpush1.msra.mxu0 0.0
      %1385 = vmatprep.subr.mxu0 0.0
      %1386 = vmatpush1.msra.mxu0 0.0
      %1387 = vmatprep.subr.mxu0 0.0
      %1388 = vmatpush1.msra.mxu0 0.0
      %1389 = vmatprep.subr.mxu0 0.0
      %1390 = vmatpush1.msra.mxu0 0.0
      %1391 = vmatprep.subr.mxu0 0.0
      %1392 = vmatpush1.msra.mxu0 0.0
      %1393 = vmatprep.subr.mxu0 0.0
      %1394 = vmatpush1.msra.mxu0 0.0
      %1395 = vmatprep.subr.mxu0 0.0
      %1396 = vmatpush1.msra.mxu0 0.0
      %1397 = vmatprep.subr.mxu0 0.0
      %1398 = vmatpush1.msra.mxu0 0.0
      %1399 = vmatprep.subr.mxu0 0.0
      %1400 = vmatpush1.msra.mxu0 0.0
      %1401 = vmatprep.subr.mxu0 0.0
      %1402 = vmatpush1.msra.mxu0 0.0
      %1403 = vmatprep.subr.mxu0 0.0
      %1404 = vmatpush1.msra.mxu0 0.0
      %1405 = vmatprep.subr.mxu0 0.0
      %1406 = vmatpush1.msra.mxu0 0.0
      %1407 = vmatprep.subr.mxu0 0.0
      %1408 = vmatpush1.msra.mxu0 0.0
      %1409 = vmatprep.subr.mxu0 0.0
      %1410 = vmatpush1.msra.mxu0 0.0
      %1411 = vmatprep.subr.mxu0 0.0
      %1412 = vmatpush1.msra.mxu0 0.0
      %1413 = vmatprep.subr.mxu0 0.0
      %1414 = vmatpush1.msra.mxu0 0.0
      %1415 = vmatprep.mubr.f32.mxu0 0.0
      %v1416 = vand.u32 %v412, 4294901760
      %1417 = vmatmul.mubr.f32.gmra.mrb[0].mxu0 %v1416
      %v1418 = vpop.f32.mrb[0].mxu0
      %v1419 = vadd.f32 %v1286, %v1418
      %v1420 = vpop.f32.mrb[0].mxu0
      %v1421 = vadd.f32 %v1288, %v1420
      %1422 = vmatprep.mubr.f32.mxu0 0.0
      %v1423 = vand.u32 %v415, 4294901760
      %1424 = vmatmul.mubr.f32.gmra.mrb[0].mxu0 %v1423
      %v1425 = vpop.f32.mrb[0].mxu0
      %v1426 = vadd.f32 %v1297, %v1425
      %v1427 = vpop.f32.mrb[0].mxu0
      %v1428 = vadd.f32 %v1299, %v1427
      %1429 = vdwg.mxu0
      %v1430 = vand.u32 %v1186, 4294901760
      %v1431 = vsub.f32 %v1186, %v1430
      %1432 = vmatprep.subr.mxu0 %v1431
      %v1433 = vand.u32 %v1185, 4294901760
      %v1434 = vsub.f32 %v1185, %v1433
      %1435 = vmatpush1.msra.mxu0 %v1434
      %v1436 = vand.u32 %v1188, 4294901760
      %v1437 = vsub.f32 %v1188, %v1436
      %1438 = vmatprep.subr.mxu0 %v1437
      %v1439 = vand.u32 %v1187, 4294901760
      %v1440 = vsub.f32 %v1187, %v1439
      %1441 = vmatpush1.msra.mxu0 %v1440
      %v1442 = vand.u32 %v1190, 4294901760
      %v1443 = vsub.f32 %v1190, %v1442
      %1444 = vmatprep.subr.mxu0 %v1443
      %v1445 = vand.u32 %v1189, 4294901760
      %v1446 = vsub.f32 %v1189, %v1445
      %1447 = vmatpush1.msra.mxu0 %v1446
      %v1448 = vand.u32 %v1192, 4294901760
      %v1449 = vsub.f32 %v1192, %v1448
      %1450 = vmatprep.subr.mxu0 %v1449
      %v1451 = vand.u32 %v1191, 4294901760
      %v1452 = vsub.f32 %v1191, %v1451
      %1453 = vmatpush1.msra.mxu0 %v1452
      %v1454 = vand.u32 %v1202, 4294901760
      %v1455 = vsub.f32 %v1202, %v1454
      %1456 = vmatprep.subr.mxu0 %v1455
      %v1457 = vand.u32 %v1199, 4294901760
      %v1458 = vsub.f32 %v1199, %v1457
      %1459 = vmatpush1.msra.mxu0 %v1458
      %1460 = vmatprep.subr.mxu0 0.0
      %1461 = vmatpush1.msra.mxu0 0.0
      %1462 = vmatprep.subr.mxu0 0.0
      %1463 = vmatpush1.msra.mxu0 0.0
      %1464 = vmatprep.subr.mxu0 0.0
      %1465 = vmatpush1.msra.mxu0 0.0
      %1466 = vmatprep.subr.mxu0 0.0
      %1467 = vmatpush1.msra.mxu0 0.0
      %1468 = vmatprep.subr.mxu0 0.0
      %1469 = vmatpush1.msra.mxu0 0.0
      %1470 = vmatprep.subr.mxu0 0.0
      %1471 = vmatpush1.msra.mxu0 0.0
      %1472 = vmatprep.subr.mxu0 0.0
      %1473 = vmatpush1.msra.mxu0 0.0
      %1474 = vmatprep.subr.mxu0 0.0
      %1475 = vmatpush1.msra.mxu0 0.0
      %1476 = vmatprep.subr.mxu0 0.0
      %1477 = vmatpush1.msra.mxu0 0.0
      %1478 = vmatprep.subr.mxu0 0.0
      %1479 = vmatpush1.msra.mxu0 0.0
      %1480 = vmatprep.subr.mxu0 0.0
      %1481 = vmatpush1.msra.mxu0 0.0
      %1482 = vmatprep.subr.mxu0 0.0
      %1483 = vmatpush1.msra.mxu0 0.0
      %1484 = vmatprep.subr.mxu0 0.0
      %1485 = vmatpush1.msra.mxu0 0.0
      %1486 = vmatprep.subr.mxu0 0.0
      %1487 = vmatpush1.msra.mxu0 0.0
      %1488 = vmatprep.subr.mxu0 0.0
      %1489 = vmatpush1.msra.mxu0 0.0
      %1490 = vmatprep.subr.mxu0 0.0
      %1491 = vmatpush1.msra.mxu0 0.0
      %1492 = vmatprep.subr.mxu0 0.0
      %1493 = vmatpush1.msra.mxu0 0.0
      %1494 = vmatprep.subr.mxu0 0.0
      %1495 = vmatpush1.msra.mxu0 0.0
      %1496 = vmatprep.subr.mxu0 0.0
      %1497 = vmatpush1.msra.mxu0 0.0
      %1498 = vmatprep.subr.mxu0 0.0
      %1499 = vmatpush1.msra.mxu0 0.0
      %1500 = vmatprep.subr.mxu0 0.0
      %1501 = vmatpush1.msra.mxu0 0.0
      %1502 = vmatprep.subr.mxu0 0.0
      %1503 = vmatpush1.msra.mxu0 0.0
      %1504 = vmatprep.subr.mxu0 0.0
      %1505 = vmatpush1.msra.mxu0 0.0
      %1506 = vmatprep.subr.mxu0 0.0
      %1507 = vmatpush1.msra.mxu0 0.0
      %1508 = vmatprep.subr.mxu0 0.0
      %1509 = vmatpush1.msra.mxu0 0.0
      %1510 = vmatprep.subr.mxu0 0.0
      %1511 = vmatpush1.msra.mxu0 0.0
      %1512 = vmatprep.subr.mxu0 0.0
      %1513 = vmatpush1.msra.mxu0 0.0
      %1514 = vmatprep.mubr.f32.mxu0 0.0
      %v1515 = vand.u32 %v412, 4294901760
      %v1516 = vsub.f32 %v412, %v1515
      %1517 = vmatmul.mubr.f32.gmra.mrb[0].mxu0 %v1516
      %v1518 = vpop.f32.mrb[0].mxu0
      %v1519 = vadd.f32 %v1419, %v1518
      %v1520 = vpop.f32.mrb[0].mxu0
      %v1521 = vadd.f32 %v1421, %v1520
      %1522 = vmatprep.mubr.f32.mxu0 0.0
      %v1523 = vand.u32 %v415, 4294901760
      %v1524 = vsub.f32 %v415, %v1523
      %1525 = vmatmul.mubr.f32.gmra.mrb[0].mxu0 %v1524
      %v1526 = vpop.f32.mrb[0].mxu0
      %v1527 = vadd.f32 %v1426, %v1526
      %v1528 = vpop.f32.mrb[0].mxu0
      %v1529 = vadd.f32 %v1428, %v1528
      %1530 = vdwg.mxu0
      %v1531 = vand.u32 %v1186, 4294901760
      %1532 = vmatprep.subr.mxu0 %v1531
      %v1533 = vand.u32 %v1185, 4294901760
      %1534 = vmatpush1.msra.mxu0 %v1533
      %v1535 = vand.u32 %v1188, 4294901760
      %1536 = vmatprep.subr.mxu0 %v1535
      %v1537 = vand.u32 %v1187, 4294901760
      %1538 = vmatpush1.msra.mxu0 %v1537
      %v1539 = vand.u32 %v1190, 4294901760
      %1540 = vmatprep.subr.mxu0 %v1539
      %v1541 = vand.u32 %v1189, 4294901760
      %1542 = vmatpush1.msra.mxu0 %v1541
      %v1543 = vand.u32 %v1192, 4294901760
      %1544 = vmatprep.subr.mxu0 %v1543
      %v1545 = vand.u32 %v1191, 4294901760
      %1546 = vmatpush1.msra.mxu0 %v1545
      %v1547 = vand.u32 %v1202, 4294901760
      %1548 = vmatprep.subr.mxu0 %v1547
      %v1549 = vand.u32 %v1199, 4294901760
      %1550 = vmatpush1.msra.mxu0 %v1549
      %1551 = vmatprep.subr.mxu0 0.0
      %1552 = vmatpush1.msra.mxu0 0.0
      %1553 = vmatprep.subr.mxu0 0.0
      %1554 = vmatpush1.msra.mxu0 0.0
      %1555 = vmatprep.subr.mxu0 0.0
      %1556 = vmatpush1.msra.mxu0 0.0
      %1557 = vmatprep.subr.mxu0 0.0
      %1558 = vmatpush1.msra.mxu0 0.0
      %1559 = vmatprep.subr.mxu0 0.0
      %1560 = vmatpush1.msra.mxu0 0.0
      %1561 = vmatprep.subr.mxu0 0.0
      %1562 = vmatpush1.msra.mxu0 0.0
      %1563 = vmatprep.subr.mxu0 0.0
      %1564 = vmatpush1.msra.mxu0 0.0
      %1565 = vmatprep.subr.mxu0 0.0
      %1566 = vmatpush1.msra.mxu0 0.0
      %1567 = vmatprep.subr.mxu0 0.0
      %1568 = vmatpush1.msra.mxu0 0.0
      %1569 = vmatprep.subr.mxu0 0.0
      %1570 = vmatpush1.msra.mxu0 0.0
      %1571 = vmatprep.subr.mxu0 0.0
      %1572 = vmatpush1.msra.mxu0 0.0
      %1573 = vmatprep.subr.mxu0 0.0
      %1574 = vmatpush1.msra.mxu0 0.0
      %1575 = vmatprep.subr.mxu0 0.0
      %1576 = vmatpush1.msra.mxu0 0.0
      %1577 = vmatprep.subr.mxu0 0.0
      %1578 = vmatpush1.msra.mxu0 0.0
      %1579 = vmatprep.subr.mxu0 0.0
      %1580 = vmatpush1.msra.mxu0 0.0
      %1581 = vmatprep.subr.mxu0 0.0
      %1582 = vmatpush1.msra.mxu0 0.0
      %1583 = vmatprep.subr.mxu0 0.0
      %1584 = vmatpush1.msra.mxu0 0.0
      %1585 = vmatprep.subr.mxu0 0.0
      %1586 = vmatpush1.msra.mxu0 0.0
      %1587 = vmatprep.subr.mxu0 0.0
      %1588 = vmatpush1.msra.mxu0 0.0
      %1589 = vmatprep.subr.mxu0 0.0
      %1590 = vmatpush1.msra.mxu0 0.0
      %1591 = vmatprep.subr.mxu0 0.0
      %1592 = vmatpush1.msra.mxu0 0.0
      %1593 = vmatprep.subr.mxu0 0.0
      %1594 = vmatpush1.msra.mxu0 0.0
      %1595 = vmatprep.subr.mxu0 0.0
      %1596 = vmatpush1.msra.mxu0 0.0
      %1597 = vmatprep.subr.mxu0 0.0
      %1598 = vmatpush1.msra.mxu0 0.0
      %1599 = vmatprep.subr.mxu0 0.0
      %1600 = vmatpush1.msra.mxu0 0.0
      %1601 = vmatprep.subr.mxu0 0.0
      %1602 = vmatpush1.msra.mxu0 0.0
      %1603 = vmatprep.subr.mxu0 0.0
      %1604 = vmatpush1.msra.mxu0 0.0
      %1605 = vmatprep.mubr.f32.mxu0 0.0
      %v1606 = vand.u32 %v412, 4294901760
      %v1607 = vsub.f32 %v412, %v1606
      %v1608 = vand.u32 %v1607, 4294901760
      %1609 = vmatmul.mubr.f32.gmra.mrb[0].mxu0 %v1608
      %v1610 = vpop.f32.mrb[0].mxu0
      %v1611 = vadd.f32 %v1519, %v1610
      %v1612 = vpop.f32.mrb[0].mxu0
      %v1613 = vadd.f32 %v1521, %v1612
      %1614 = vmatprep.mubr.f32.mxu0 0.0
      %v1615 = vand.u32 %v415, 4294901760
      %v1616 = vsub.f32 %v415, %v1615
      %v1617 = vand.u32 %v1616, 4294901760
      %1618 = vmatmul.mubr.f32.gmra.mrb[0].mxu0 %v1617
      %v1619 = vpop.f32.mrb[0].mxu0
      %v1620 = vadd.f32 %v1527, %v1619
      %v1621 = vpop.f32.mrb[0].mxu0
      %v1622 = vadd.f32 %v1529, %v1621
      %1623 = vdwg.mxu0
      %v1624 = vand.u32 %v1186, 4294901760
      %v1625 = vsub.f32 %v1186, %v1624
      %v1626 = vand.u32 %v1625, 4294901760
      %1627 = vmatprep.subr.mxu0 %v1626
      %v1628 = vand.u32 %v1185, 4294901760
      %v1629 = vsub.f32 %v1185, %v1628
      %v1630 = vand.u32 %v1629, 4294901760
      %1631 = vmatpush1.msra.mxu0 %v1630
      %v1632 = vand.u32 %v1188, 4294901760
      %v1633 = vsub.f32 %v1188, %v1632
      %v1634 = vand.u32 %v1633, 4294901760
      %1635 = vmatprep.subr.mxu0 %v1634
      %v1636 = vand.u32 %v1187, 4294901760
      %v1637 = vsub.f32 %v1187, %v1636
      %v1638 = vand.u32 %v1637, 4294901760
      %1639 = vmatpush1.msra.mxu0 %v1638
      %v1640 = vand.u32 %v1190, 4294901760
      %v1641 = vsub.f32 %v1190, %v1640
      %v1642 = vand.u32 %v1641, 4294901760
      %1643 = vmatprep.subr.mxu0 %v1642
      %v1644 = vand.u32 %v1189, 4294901760
      %v1645 = vsub.f32 %v1189, %v1644
      %v1646 = vand.u32 %v1645, 4294901760
      %1647 = vmatpush1.msra.mxu0 %v1646
      %v1648 = vand.u32 %v1192, 4294901760
      %v1649 = vsub.f32 %v1192, %v1648
      %v1650 = vand.u32 %v1649, 4294901760
      %1651 = vmatprep.subr.mxu0 %v1650
      %v1652 = vand.u32 %v1191, 4294901760
      %v1653 = vsub.f32 %v1191, %v1652
      %v1654 = vand.u32 %v1653, 4294901760
      %1655 = vmatpush1.msra.mxu0 %v1654
      %v1656 = vand.u32 %v1202, 4294901760
      %v1657 = vsub.f32 %v1202, %v1656
      %v1658 = vand.u32 %v1657, 4294901760
      %1659 = vmatprep.subr.mxu0 %v1658
      %v1660 = vand.u32 %v1199, 4294901760
      %v1661 = vsub.f32 %v1199, %v1660
      %v1662 = vand.u32 %v1661, 4294901760
      %1663 = vmatpush1.msra.mxu0 %v1662
      %1664 = vmatprep.subr.mxu0 0.0
      %1665 = vmatpush1.msra.mxu0 0.0
      %1666 = vmatprep.subr.mxu0 0.0
      %1667 = vmatpush1.msra.mxu0 0.0
      %1668 = vmatprep.subr.mxu0 0.0
      %1669 = vmatpush1.msra.mxu0 0.0
      %1670 = vmatprep.subr.mxu0 0.0
      %1671 = vmatpush1.msra.mxu0 0.0
      %1672 = vmatprep.subr.mxu0 0.0
      %1673 = vmatpush1.msra.mxu0 0.0
      %1674 = vmatprep.subr.mxu0 0.0
      %1675 = vmatpush1.msra.mxu0 0.0
      %1676 = vmatprep.subr.mxu0 0.0
      %1677 = vmatpush1.msra.mxu0 0.0
      %1678 = vmatprep.subr.mxu0 0.0
      %1679 = vmatpush1.msra.mxu0 0.0
      %1680 = vmatprep.subr.mxu0 0.0
      %1681 = vmatpush1.msra.mxu0 0.0
      %1682 = vmatprep.subr.mxu0 0.0
      %1683 = vmatpush1.msra.mxu0 0.0
      %1684 = vmatprep.subr.mxu0 0.0
      %1685 = vmatpush1.msra.mxu0 0.0
      %1686 = vmatprep.subr.mxu0 0.0
      %1687 = vmatpush1.msra.mxu0 0.0
      %1688 = vmatprep.subr.mxu0 0.0
      %1689 = vmatpush1.msra.mxu0 0.0
      %1690 = vmatprep.subr.mxu0 0.0
      %1691 = vmatpush1.msra.mxu0 0.0
      %1692 = vmatprep.subr.mxu0 0.0
      %1693 = vmatpush1.msra.mxu0 0.0
      %1694 = vmatprep.subr.mxu0 0.0
      %1695 = vmatpush1.msra.mxu0 0.0
      %1696 = vmatprep.subr.mxu0 0.0
      %1697 = vmatpush1.msra.mxu0 0.0
      %1698 = vmatprep.subr.mxu0 0.0
      %1699 = vmatpush1.msra.mxu0 0.0
      %1700 = vmatprep.subr.mxu0 0.0
      %1701 = vmatpush1.msra.mxu0 0.0
      %1702 = vmatprep.subr.mxu0 0.0
      %1703 = vmatpush1.msra.mxu0 0.0
      %1704 = vmatprep.subr.mxu0 0.0
      %1705 = vmatpush1.msra.mxu0 0.0
      %1706 = vmatprep.subr.mxu0 0.0
      %1707 = vmatpush1.msra.mxu0 0.0
      %1708 = vmatprep.subr.mxu0 0.0
      %1709 = vmatpush1.msra.mxu0 0.0
      %1710 = vmatprep.subr.mxu0 0.0
      %1711 = vmatpush1.msra.mxu0 0.0
      %1712 = vmatprep.subr.mxu0 0.0
      %1713 = vmatpush1.msra.mxu0 0.0
      %1714 = vmatprep.subr.mxu0 0.0
      %1715 = vmatpush1.msra.mxu0 0.0
      %1716 = vmatprep.subr.mxu0 0.0
      %1717 = vmatpush1.msra.mxu0 0.0
      %1718 = vmatprep.mubr.f32.mxu0 0.0
      %v1719 = vand.u32 %v412, 4294901760
      %1720 = vmatmul.mubr.f32.gmra.mrb[0].mxu0 %v1719
      %v1721 = vpop.f32.mrb[0].mxu0
      %v1722 = vadd.f32 %v1611, %v1721
      %v1723 = vpop.f32.mrb[0].mxu0
      %v1724 = vadd.f32 %v1613, %v1723
      %1725 = vmatprep.mubr.f32.mxu0 0.0
      %v1726 = vand.u32 %v415, 4294901760
      %1727 = vmatmul.mubr.f32.gmra.mrb[0].mxu0 %v1726
      %v1728 = vpop.f32.mrb[0].mxu0
      %v1729 = vadd.f32 %v1620, %v1728
      %v1730 = vpop.f32.mrb[0].mxu0
      %v1731 = vadd.f32 %v1622, %v1730
      %1732 = vdwg.mxu0
      %v1733 = vand.u32 %v1186, 4294901760
      %1734 = vmatprep.subr.mxu0 %v1733
      %v1735 = vand.u32 %v1185, 4294901760
      %1736 = vmatpush1.msra.mxu0 %v1735
      %v1737 = vand.u32 %v1188, 4294901760
      %1738 = vmatprep.subr.mxu0 %v1737
      %v1739 = vand.u32 %v1187, 4294901760
      %1740 = vmatpush1.msra.mxu0 %v1739
      %v1741 = vand.u32 %v1190, 4294901760
      %1742 = vmatprep.subr.mxu0 %v1741
      %v1743 = vand.u32 %v1189, 4294901760
      %1744 = vmatpush1.msra.mxu0 %v1743
      %v1745 = vand.u32 %v1192, 4294901760
      %1746 = vmatprep.subr.mxu0 %v1745
      %v1747 = vand.u32 %v1191, 4294901760
      %1748 = vmatpush1.msra.mxu0 %v1747
      %v1749 = vand.u32 %v1202, 4294901760
      %1750 = vmatprep.subr.mxu0 %v1749
      %v1751 = vand.u32 %v1199, 4294901760
      %1752 = vmatpush1.msra.mxu0 %v1751
      %1753 = vmatprep.subr.mxu0 0.0
      %1754 = vmatpush1.msra.mxu0 0.0
      %1755 = vmatprep.subr.mxu0 0.0
      %1756 = vmatpush1.msra.mxu0 0.0
      %1757 = vmatprep.subr.mxu0 0.0
      %1758 = vmatpush1.msra.mxu0 0.0
      %1759 = vmatprep.subr.mxu0 0.0
      %1760 = vmatpush1.msra.mxu0 0.0
      %1761 = vmatprep.subr.mxu0 0.0
      %1762 = vmatpush1.msra.mxu0 0.0
      %1763 = vmatprep.subr.mxu0 0.0
      %1764 = vmatpush1.msra.mxu0 0.0
      %1765 = vmatprep.subr.mxu0 0.0
      %1766 = vmatpush1.msra.mxu0 0.0
      %1767 = vmatprep.subr.mxu0 0.0
      %1768 = vmatpush1.msra.mxu0 0.0
      %1769 = vmatprep.subr.mxu0 0.0
      %1770 = vmatpush1.msra.mxu0 0.0
      %1771 = vmatprep.subr.mxu0 0.0
      %1772 = vmatpush1.msra.mxu0 0.0
      %1773 = vmatprep.subr.mxu0 0.0
      %1774 = vmatpush1.msra.mxu0 0.0
      %1775 = vmatprep.subr.mxu0 0.0
      %1776 = vmatpush1.msra.mxu0 0.0
      %1777 = vmatprep.subr.mxu0 0.0
      %1778 = vmatpush1.msra.mxu0 0.0
      %1779 = vmatprep.subr.mxu0 0.0
      %1780 = vmatpush1.msra.mxu0 0.0
      %1781 = vmatprep.subr.mxu0 0.0
      %1782 = vmatpush1.msra.mxu0 0.0
      %1783 = vmatprep.subr.mxu0 0.0
      %1784 = vmatpush1.msra.mxu0 0.0
      %1785 = vmatprep.subr.mxu0 0.0
      %1786 = vmatpush1.msra.mxu0 0.0
      %1787 = vmatprep.subr.mxu0 0.0
      %1788 = vmatpush1.msra.mxu0 0.0
      %1789 = vmatprep.subr.mxu0 0.0
      %1790 = vmatpush1.msra.mxu0 0.0
      %1791 = vmatprep.subr.mxu0 0.0
      %1792 = vmatpush1.msra.mxu0 0.0
      %1793 = vmatprep.subr.mxu0 0.0
      %1794 = vmatpush1.msra.mxu0 0.0
      %1795 = vmatprep.subr.mxu0 0.0
      %1796 = vmatpush1.msra.mxu0 0.0
      %1797 = vmatprep.subr.mxu0 0.0
      %1798 = vmatpush1.msra.mxu0 0.0
      %1799 = vmatprep.subr.mxu0 0.0
      %1800 = vmatpush1.msra.mxu0 0.0
      %1801 = vmatprep.subr.mxu0 0.0
      %1802 = vmatpush1.msra.mxu0 0.0
      %1803 = vmatprep.subr.mxu0 0.0
      %1804 = vmatpush1.msra.mxu0 0.0
      %1805 = vmatprep.subr.mxu0 0.0
      %1806 = vmatpush1.msra.mxu0 0.0
      %1807 = vmatprep.mubr.f32.mxu0 0.0
      %v1808 = vand.u32 %v412, 4294901760
      %1809 = vmatmul.mubr.f32.gmra.mrb[0].mxu0 %v1808
      %v1810 = vpop.f32.mrb[0].mxu0
      %v1811 = vadd.f32 %v1722, %v1810
      %v1812 = vpop.f32.mrb[0].mxu0
      %v1813 = vadd.f32 %v1724, %v1812
      %1814 = vmatprep.mubr.f32.mxu0 0.0
      %v1815 = vand.u32 %v415, 4294901760
      %1816 = vmatmul.mubr.f32.gmra.mrb[0].mxu0 %v1815
      %v1817 = vpop.f32.mrb[0].mxu0
      %v1818 = vadd.f32 %v1729, %v1817
      %v1819 = vpop.f32.mrb[0].mxu0
      %v1820 = vadd.f32 %v1731, %v1819
      %1821 = vdwg.mxu0
      %v1822 = vxor.u32 %v1811, 2147483648
      %v1823 = vxor.u32 %v1813, 2147483648
      %v1824 = vmul.f32 %v1822, 1.442695
      %v1825 = vpow.pop %v1824
      %v1826 = vmul.f32 %v1823, 1.442695
      %v1827 = vpow.pop %v1826
      %v1828 = vadd.f32 %v1825, 1.0
      %v1829 = vadd.f32 %v1827, 1.0
      %v1830 = vrcp.pop %v1828
      %v1831 = vmul.f32 1.0, %v1830
      %v1832 = vrcp.pop %v1829
      %v1833 = vmul.f32 1.0, %v1832
      %v1834 = vtanh.pop %v1818
      %v1835 = vtanh.pop %v1820
      %v1836 = vxor.u32 %v1818, 2147483648
      %v1837 = vxor.u32 %v1820, 2147483648
      %v1838 = vmul.f32 %v1836, 1.442695
      %v1839 = vpow.pop %v1838
      %v1840 = vmul.f32 %v1837, 1.442695
      %v1841 = vpow.pop %v1840
      %v1842 = vadd.f32 %v1839, 1.0
      %v1843 = vadd.f32 %v1841, 1.0
      %v1844 = vrcp.pop %v1842
      %v1845 = vmul.f32 1.0, %v1844
      %v1846 = vrcp.pop %v1843
      %v1847 = vmul.f32 1.0, %v1846
      %v1848 = vmul.f32 %v1831, %v1077
      %v1849 = vmul.f32 %v1833, %v1078
      %v1850 = vmul.f32 %v1831, %v1834
      %v1851 = vmul.f32 %v1833, %v1835
      %v1854 = vrot.slane %v1850, 4
      %v1855 = vrot.slane %v1851, 4
      %v1858 = vadd.f32 %v1848, %v1854
      %v1859 = vadd.f32 %v1849, %v1855
      %v1860 = vtanh.pop %v1858
      %v1861 = vtanh.pop %v1859
      %v1862 = vmul.f32 %v1845, %v1860
      %v1863 = vmul.f32 %v1847, %v1861
      %v1864 = vsel %vm397, %v1085, %v1862
      %v1865 = vsel %vm397, %v1086, %v1863
      %1866 = vst [vmem:[%s205] sm:$0xff] %v1864
      %1867 = vst [vmem:[%s205 + $0x8] sm:$0xff] %v1865
      %v1870 = vrot.slane %v1862, 4
      %v1871 = vrot.slane %v1863, 4
      %1874 = vrot.lane.b32.xlu0 %v1870, 17
      %v1875 = vpop.permute.xlu0 %1874
      %1876 = vrot.lane.b32.xlu0 %v1871, 17
      %v1877 = vpop.permute.xlu0 %1876
      %v1878 = vsel %vm217, %v1875, %v1877
      %v1879 = vsel %vm217, %v1877, %v1875
      %v1880 = vld [vmem:[%s2] ss:$8 sm:$0x3]
      %v1882 = vlaneseq
      %v1883 = vshrl.u32 %v1882, 7
      %v1884 = vsub.s32 0, %v1883
      %v1885 = vrot.slane %v1880, %v1884
      %v1886 = vlaneseq
      %v1887 = vshrl.u32 %v1886, 7
      %v1888 = vsub.s32 1, %v1887
      %v1889 = vrot.slane %v1880, %v1888
      %v1892 = vmul.f32 %v1879, %v1885
      %v1893 = vmul.f32 %v1878, %v1889
      %1894 = vrot.lane.b32.xlu0 %v1870, 16
      %v1895 = vpop.permute.xlu0 %1894
      %1896 = vrot.lane.b32.xlu0 %v1871, 16
      %v1897 = vpop.permute.xlu0 %1896
      %v1898 = vsel %vm234, %v1895, %v1897
      %v1899 = vsel %vm234, %v1897, %v1895
      %v1900 = vld [vmem:[%s235] ss:$8 sm:$0x3]
      %v1902 = vlaneseq
      %v1903 = vshrl.u32 %v1902, 7
      %v1904 = vsub.s32 0, %v1903
      %v1905 = vrot.slane %v1900, %v1904
      %v1906 = vlaneseq
      %v1907 = vshrl.u32 %v1906, 7
      %v1908 = vsub.s32 1, %v1907
      %v1909 = vrot.slane %v1900, %v1908
      %v1912 = vmul.f32 %v1899, %v1905
      %v1913 = vmul.f32 %v1898, %v1909
      %1914 = vrot.lane.b32.xlu0 %v1870, 15
      %v1915 = vpop.permute.xlu0 %1914
      %1916 = vrot.lane.b32.xlu0 %v1871, 15
      %v1917 = vpop.permute.xlu0 %1916
      %v1918 = vsel %vm252, %v1915, %v1917
      %v1919 = vsel %vm252, %v1917, %v1915
      %v1920 = vld [vmem:[%s253] ss:$8 sm:$0x3]
      %v1922 = vlaneseq
      %v1923 = vshrl.u32 %v1922, 7
      %v1924 = vsub.s32 0, %v1923
      %v1925 = vrot.slane %v1920, %v1924
      %v1926 = vlaneseq
      %v1927 = vshrl.u32 %v1926, 7
      %v1928 = vsub.s32 1, %v1927
      %v1929 = vrot.slane %v1920, %v1928
      %v1932 = vmul.f32 %v1919, %v1925
      %v1933 = vmul.f32 %v1918, %v1929
      %1934 = vrot.lane.b32.xlu0 %v1870, 1
      %v1935 = vpop.permute.xlu0 %1934
      %1936 = vrot.lane.b32.xlu0 %v1871, 1
      %v1937 = vpop.permute.xlu0 %1936
      %v1938 = vsel %vm270, %v1935, %v1937
      %v1939 = vsel %vm270, %v1937, %v1935
      %v1940 = vld [vmem:[%s271] ss:$8 sm:$0x3]
      %v1942 = vlaneseq
      %v1943 = vshrl.u32 %v1942, 7
      %v1944 = vsub.s32 0, %v1943
      %v1945 = vrot.slane %v1940, %v1944
      %v1946 = vlaneseq
      %v1947 = vshrl.u32 %v1946, 7
      %v1948 = vsub.s32 1, %v1947
      %v1949 = vrot.slane %v1940, %v1948
      %v1952 = vmul.f32 %v1939, %v1945
      %v1953 = vmul.f32 %v1938, %v1949
      %v1954 = vld [vmem:[%s286] ss:$8 sm:$0x3]
      %v1956 = vlaneseq
      %v1957 = vshrl.u32 %v1956, 7
      %v1958 = vsub.s32 0, %v1957
      %v1959 = vrot.slane %v1954, %v1958
      %v1960 = vlaneseq
      %v1961 = vshrl.u32 %v1960, 7
      %v1962 = vsub.s32 1, %v1961
      %v1963 = vrot.slane %v1954, %v1962
      %v1966 = vmul.f32 %v1862, %v1959
      %v1967 = vmul.f32 %v1863, %v1963
      %1968 = vrot.lane.b32.xlu0 %v1870, 127
      %v1969 = vpop.permute.xlu0 %1968
      %1970 = vrot.lane.b32.xlu0 %v1871, 127
      %v1971 = vpop.permute.xlu0 %1970
      %v1972 = vsel %vm303, %v1969, %v1971
      %v1973 = vsel %vm303, %v1971, %v1969
      %v1974 = vld [vmem:[%s304] ss:$8 sm:$0x3]
      %v1976 = vlaneseq
      %v1977 = vshrl.u32 %v1976, 7
      %v1978 = vsub.s32 0, %v1977
      %v1979 = vrot.slane %v1974, %v1978
      %v1980 = vlaneseq
      %v1981 = vshrl.u32 %v1980, 7
      %v1982 = vsub.s32 1, %v1981
      %v1983 = vrot.slane %v1974, %v1982
      %v1986 = vmul.f32 %v1972, %v1979
      %v1987 = vmul.f32 %v1973, %v1983
      %1988 = vrot.lane.b32.xlu0 %v1870, 113
      %v1989 = vpop.permute.xlu0 %1988
      %1990 = vrot.lane.b32.xlu0 %v1871, 113
      %v1991 = vpop.permute.xlu0 %1990
      %v1992 = vsel %vm321, %v1989, %v1991
      %v1993 = vsel %vm321, %v1991, %v1989
      %v1994 = vld [vmem:[%s322] ss:$8 sm:$0x3]
      %v1996 = vlaneseq
      %v1997 = vshrl.u32 %v1996, 7
      %v1998 = vsub.s32 0, %v1997
      %v1999 = vrot.slane %v1994, %v1998
      %v2000 = vlaneseq
      %v2001 = vshrl.u32 %v2000, 7
      %v2002 = vsub.s32 1, %v2001
      %v2003 = vrot.slane %v1994, %v2002
      %v2006 = vmul.f32 %v1992, %v1999
      %v2007 = vmul.f32 %v1993, %v2003
      %2008 = vrot.lane.b32.xlu0 %v1870, 112
      %v2009 = vpop.permute.xlu0 %2008
      %2010 = vrot.lane.b32.xlu0 %v1871, 112
      %v2011 = vpop.permute.xlu0 %2010
      %v2012 = vsel %vm339, %v2009, %v2011
      %v2013 = vsel %vm339, %v2011, %v2009
      %v2014 = vld [vmem:[%s340] ss:$8 sm:$0x3]
      %v2016 = vlaneseq
      %v2017 = vshrl.u32 %v2016, 7
      %v2018 = vsub.s32 0, %v2017
      %v2019 = vrot.slane %v2014, %v2018
      %v2020 = vlaneseq
      %v2021 = vshrl.u32 %v2020, 7
      %v2022 = vsub.s32 1, %v2021
      %v2023 = vrot.slane %v2014, %v2022
      %v2026 = vmul.f32 %v2012, %v2019
      %v2027 = vmul.f32 %v2013, %v2023
      %2028 = vrot.lane.b32.xlu0 %v1870, 111
      %v2029 = vpop.permute.xlu0 %2028
      %2030 = vrot.lane.b32.xlu0 %v1871, 111
      %v2031 = vpop.permute.xlu0 %2030
      %v2032 = vsel %vm357, %v2029, %v2031
      %v2033 = vsel %vm357, %v2031, %v2029
      %v2034 = vld [vmem:[%s358] ss:$8 sm:$0x3]
      %v2036 = vlaneseq
      %v2037 = vshrl.u32 %v2036, 7
      %v2038 = vsub.s32 0, %v2037
      %v2039 = vrot.slane %v2034, %v2038
      %v2040 = vlaneseq
      %v2041 = vshrl.u32 %v2040, 7
      %v2042 = vsub.s32 1, %v2041
      %v2043 = vrot.slane %v2034, %v2042
      %v2046 = vmul.f32 %v2032, %v2039
      %v2047 = vmul.f32 %v2033, %v2043
      %v2050 = vrot.slane %v1912, 4
      %v2051 = vrot.slane %v1913, 4
      %v2056 = vrot.slane %v1952, 4
      %v2057 = vrot.slane %v1953, 4
      %v2062 = vrot.slane %v1966, 4
      %v2063 = vrot.slane %v1967, 4
      %v2068 = vrot.slane %v1986, 4
      %v2069 = vrot.slane %v1987, 4
      %v2074 = vrot.slane %v2026, 4
      %v2075 = vrot.slane %v2027, 4
      %v2078 = vsel %vm397, %v1892, %v2050
      %v2079 = vsel %vm397, %v1893, %v2051
      %v2080 = vsel %vm397, %v1932, %v2056
      %v2081 = vsel %vm397, %v1933, %v2057
      %v2082 = vsel %vm397, %v2062, %v2068
      %v2083 = vsel %vm397, %v2063, %v2069
      %v2084 = vsel %vm397, %v2006, %v2074
      %v2085 = vsel %vm397, %v2007, %v2075
      %s2086 = scalar_lea.vmem %s200, 64
      %v2087 = vld [vmem:[%s2086] sm:$0xff]
      %v2088 = vld [vmem:[%s2086 + $0x8] sm:$0xff]
      %v2089 = vld [vmem:[%s2086 + $0x10] sm:$0xff]
      %v2090 = vld [vmem:[%s2086 + $0x18] sm:$0xff]
      %v2092 = vsel %vm397, %v2046, 0
      %v2095 = vsel %vm397, %v2047, 0
      %v2097 = vand.u32 %v2079, 4294901760
      %2098 = vmatprep.subr.mxu0 %v2097
      %v2099 = vand.u32 %v2078, 4294901760
      %2100 = vmatpush1.msra.mxu0 %v2099
      %v2101 = vand.u32 %v2081, 4294901760
      %2102 = vmatprep.subr.mxu0 %v2101
      %v2103 = vand.u32 %v2080, 4294901760
      %2104 = vmatpush1.msra.mxu0 %v2103
      %v2105 = vand.u32 %v2083, 4294901760
      %2106 = vmatprep.subr.mxu0 %v2105
      %v2107 = vand.u32 %v2082, 4294901760
      %2108 = vmatpush1.msra.mxu0 %v2107
      %v2109 = vand.u32 %v2085, 4294901760
      %2110 = vmatprep.subr.mxu0 %v2109
      %v2111 = vand.u32 %v2084, 4294901760
      %2112 = vmatpush1.msra.mxu0 %v2111
      %v2113 = vand.u32 %v2095, 4294901760
      %2114 = vmatprep.subr.mxu0 %v2113
      %v2115 = vand.u32 %v2092, 4294901760
      %2116 = vmatpush1.msra.mxu0 %v2115
      %2117 = vmatprep.subr.mxu0 0.0
      %2118 = vmatpush1.msra.mxu0 0.0
      %2119 = vmatprep.subr.mxu0 0.0
      %2120 = vmatpush1.msra.mxu0 0.0
      %2121 = vmatprep.subr.mxu0 0.0
      %2122 = vmatpush1.msra.mxu0 0.0
      %2123 = vmatprep.subr.mxu0 0.0
      %2124 = vmatpush1.msra.mxu0 0.0
      %2125 = vmatprep.subr.mxu0 0.0
      %2126 = vmatpush1.msra.mxu0 0.0
      %2127 = vmatprep.subr.mxu0 0.0
      %2128 = vmatpush1.msra.mxu0 0.0
      %2129 = vmatprep.subr.mxu0 0.0
      %2130 = vmatpush1.msra.mxu0 0.0
      %2131 = vmatprep.subr.mxu0 0.0
      %2132 = vmatpush1.msra.mxu0 0.0
      %2133 = vmatprep.subr.mxu0 0.0
      %2134 = vmatpush1.msra.mxu0 0.0
      %2135 = vmatprep.subr.mxu0 0.0
      %2136 = vmatpush1.msra.mxu0 0.0
      %2137 = vmatprep.subr.mxu0 0.0
      %2138 = vmatpush1.msra.mxu0 0.0
      %2139 = vmatprep.subr.mxu0 0.0
      %2140 = vmatpush1.msra.mxu0 0.0
      %2141 = vmatprep.subr.mxu0 0.0
      %2142 = vmatpush1.msra.mxu0 0.0
      %2143 = vmatprep.subr.mxu0 0.0
      %2144 = vmatpush1.msra.mxu0 0.0
      %2145 = vmatprep.subr.mxu0 0.0
      %2146 = vmatpush1.msra.mxu0 0.0
      %2147 = vmatprep.subr.mxu0 0.0
      %2148 = vmatpush1.msra.mxu0 0.0
      %2149 = vmatprep.subr.mxu0 0.0
      %2150 = vmatpush1.msra.mxu0 0.0
      %2151 = vmatprep.subr.mxu0 0.0
      %2152 = vmatpush1.msra.mxu0 0.0
      %2153 = vmatprep.subr.mxu0 0.0
      %2154 = vmatpush1.msra.mxu0 0.0
      %2155 = vmatprep.subr.mxu0 0.0
      %2156 = vmatpush1.msra.mxu0 0.0
      %2157 = vmatprep.subr.mxu0 0.0
      %2158 = vmatpush1.msra.mxu0 0.0
      %2159 = vmatprep.subr.mxu0 0.0
      %2160 = vmatpush1.msra.mxu0 0.0
      %2161 = vmatprep.subr.mxu0 0.0
      %2162 = vmatpush1.msra.mxu0 0.0
      %2163 = vmatprep.subr.mxu0 0.0
      %2164 = vmatpush1.msra.mxu0 0.0
      %2165 = vmatprep.subr.mxu0 0.0
      %2166 = vmatpush1.msra.mxu0 0.0
      %2167 = vmatprep.subr.mxu0 0.0
      %2168 = vmatpush1.msra.mxu0 0.0
      %2169 = vmatprep.subr.mxu0 0.0
      %2170 = vmatpush1.msra.mxu0 0.0
      %2171 = vmatprep.mubr.f32.mxu0 0.0
      %v2172 = vand.u32 %v412, 4294901760
      %v2173 = vsub.f32 %v412, %v2172
      %v2174 = vand.u32 %v2173, 4294901760
      %v2175 = vsub.f32 %v2173, %v2174
      %v2176 = vand.u32 %v2175, 4294901760
      %2177 = vmatmul.mubr.f32.gmra.mrb[0].mxu0 %v2176
      %v2178 = vpop.f32.mrb[0].mxu0
      %v2179 = vadd.f32 %v2087, %v2178
      %v2180 = vpop.f32.mrb[0].mxu0
      %v2181 = vadd.f32 %v2088, %v2180
      %2182 = vmatprep.mubr.f32.mxu0 0.0
      %v2183 = vand.u32 %v415, 4294901760
      %v2184 = vsub.f32 %v415, %v2183
      %v2185 = vand.u32 %v2184, 4294901760
      %v2186 = vsub.f32 %v2184, %v2185
      %v2187 = vand.u32 %v2186, 4294901760
      %2188 = vmatmul.mubr.f32.gmra.mrb[0].mxu0 %v2187
      %v2189 = vpop.f32.mrb[0].mxu0
      %v2190 = vadd.f32 %v2089, %v2189
      %v2191 = vpop.f32.mrb[0].mxu0
      %v2192 = vadd.f32 %v2090, %v2191
      %2193 = vdwg.mxu0
      %v2194 = vand.u32 %v2079, 4294901760
      %v2195 = vsub.f32 %v2079, %v2194
      %v2196 = vand.u32 %v2195, 4294901760
      %v2197 = vsub.f32 %v2195, %v2196
      %v2198 = vand.u32 %v2197, 4294901760
      %2199 = vmatprep.subr.mxu0 %v2198
      %v2200 = vand.u32 %v2078, 4294901760
      %v2201 = vsub.f32 %v2078, %v2200
      %v2202 = vand.u32 %v2201, 4294901760
      %v2203 = vsub.f32 %v2201, %v2202
      %v2204 = vand.u32 %v2203, 4294901760
      %2205 = vmatpush1.msra.mxu0 %v2204
      %v2206 = vand.u32 %v2081, 4294901760
      %v2207 = vsub.f32 %v2081, %v2206
      %v2208 = vand.u32 %v2207, 4294901760
      %v2209 = vsub.f32 %v2207, %v2208
      %v2210 = vand.u32 %v2209, 4294901760
      %2211 = vmatprep.subr.mxu0 %v2210
      %v2212 = vand.u32 %v2080, 4294901760
      %v2213 = vsub.f32 %v2080, %v2212
      %v2214 = vand.u32 %v2213, 4294901760
      %v2215 = vsub.f32 %v2213, %v2214
      %v2216 = vand.u32 %v2215, 4294901760
      %2217 = vmatpush1.msra.mxu0 %v2216
      %v2218 = vand.u32 %v2083, 4294901760
      %v2219 = vsub.f32 %v2083, %v2218
      %v2220 = vand.u32 %v2219, 4294901760
      %v2221 = vsub.f32 %v2219, %v2220
      %v2222 = vand.u32 %v2221, 4294901760
      %2223 = vmatprep.subr.mxu0 %v2222
      %v2224 = vand.u32 %v2082, 4294901760
      %v2225 = vsub.f32 %v2082, %v2224
      %v2226 = vand.u32 %v2225, 4294901760
      %v2227 = vsub.f32 %v2225, %v2226
      %v2228 = vand.u32 %v2227, 4294901760
      %2229 = vmatpush1.msra.mxu0 %v2228
      %v2230 = vand.u32 %v2085, 4294901760
      %v2231 = vsub.f32 %v2085, %v2230
      %v2232 = vand.u32 %v2231, 4294901760
      %v2233 = vsub.f32 %v2231, %v2232
      %v2234 = vand.u32 %v2233, 4294901760
      %2235 = vmatprep.subr.mxu0 %v2234
      %v2236 = vand.u32 %v2084, 4294901760
      %v2237 = vsub.f32 %v2084, %v2236
      %v2238 = vand.u32 %v2237, 4294901760
      %v2239 = vsub.f32 %v2237, %v2238
      %v2240 = vand.u32 %v2239, 4294901760
      %2241 = vmatpush1.msra.mxu0 %v2240
      %v2242 = vand.u32 %v2095, 4294901760
      %v2243 = vsub.f32 %v2095, %v2242
      %v2244 = vand.u32 %v2243, 4294901760
      %v2245 = vsub.f32 %v2243, %v2244
      %v2246 = vand.u32 %v2245, 4294901760
      %2247 = vmatprep.subr.mxu0 %v2246
      %v2248 = vand.u32 %v2092, 4294901760
      %v2249 = vsub.f32 %v2092, %v2248
      %v2250 = vand.u32 %v2249, 4294901760
      %v2251 = vsub.f32 %v2249, %v2250
      %v2252 = vand.u32 %v2251, 4294901760
      %2253 = vmatpush1.msra.mxu0 %v2252
      %2254 = vmatprep.subr.mxu0 0.0
      %2255 = vmatpush1.msra.mxu0 0.0
      %2256 = vmatprep.subr.mxu0 0.0
      %2257 = vmatpush1.msra.mxu0 0.0
      %2258 = vmatprep.subr.mxu0 0.0
      %2259 = vmatpush1.msra.mxu0 0.0
      %2260 = vmatprep.subr.mxu0 0.0
      %2261 = vmatpush1.msra.mxu0 0.0
      %2262 = vmatprep.subr.mxu0 0.0
      %2263 = vmatpush1.msra.mxu0 0.0
      %2264 = vmatprep.subr.mxu0 0.0
      %2265 = vmatpush1.msra.mxu0 0.0
      %2266 = vmatprep.subr.mxu0 0.0
      %2267 = vmatpush1.msra.mxu0 0.0
      %2268 = vmatprep.subr.mxu0 0.0
      %2269 = vmatpush1.msra.mxu0 0.0
      %2270 = vmatprep.subr.mxu0 0.0
      %2271 = vmatpush1.msra.mxu0 0.0
      %2272 = vmatprep.subr.mxu0 0.0
      %2273 = vmatpush1.msra.mxu0 0.0
      %2274 = vmatprep.subr.mxu0 0.0
      %2275 = vmatpush1.msra.mxu0 0.0
      %2276 = vmatprep.subr.mxu0 0.0
      %2277 = vmatpush1.msra.mxu0 0.0
      %2278 = vmatprep.subr.mxu0 0.0
      %2279 = vmatpush1.msra.mxu0 0.0
      %2280 = vmatprep.subr.mxu0 0.0
      %2281 = vmatpush1.msra.mxu0 0.0
      %2282 = vmatprep.subr.mxu0 0.0
      %2283 = vmatpush1.msra.mxu0 0.0
      %2284 = vmatprep.subr.mxu0 0.0
      %2285 = vmatpush1.msra.mxu0 0.0
      %2286 = vmatprep.subr.mxu0 0.0
      %2287 = vmatpush1.msra.mxu0 0.0
      %2288 = vmatprep.subr.mxu0 0.0
      %2289 = vmatpush1.msra.mxu0 0.0
      %2290 = vmatprep.subr.mxu0 0.0
      %2291 = vmatpush1.msra.mxu0 0.0
      %2292 = vmatprep.subr.mxu0 0.0
      %2293 = vmatpush1.msra.mxu0 0.0
      %2294 = vmatprep.subr.mxu0 0.0
      %2295 = vmatpush1.msra.mxu0 0.0
      %2296 = vmatprep.subr.mxu0 0.0
      %2297 = vmatpush1.msra.mxu0 0.0
      %2298 = vmatprep.subr.mxu0 0.0
      %2299 = vmatpush1.msra.mxu0 0.0
      %2300 = vmatprep.subr.mxu0 0.0
      %2301 = vmatpush1.msra.mxu0 0.0
      %2302 = vmatprep.subr.mxu0 0.0
      %2303 = vmatpush1.msra.mxu0 0.0
      %2304 = vmatprep.subr.mxu0 0.0
      %2305 = vmatpush1.msra.mxu0 0.0
      %2306 = vmatprep.subr.mxu0 0.0
      %2307 = vmatpush1.msra.mxu0 0.0
      %2308 = vmatprep.mubr.f32.mxu0 0.0
      %v2309 = vand.u32 %v412, 4294901760
      %2310 = vmatmul.mubr.f32.gmra.mrb[0].mxu0 %v2309
      %v2311 = vpop.f32.mrb[0].mxu0
      %v2312 = vadd.f32 %v2179, %v2311
      %v2313 = vpop.f32.mrb[0].mxu0
      %v2314 = vadd.f32 %v2181, %v2313
      %2315 = vmatprep.mubr.f32.mxu0 0.0
      %v2316 = vand.u32 %v415, 4294901760
      %2317 = vmatmul.mubr.f32.gmra.mrb[0].mxu0 %v2316
      %v2318 = vpop.f32.mrb[0].mxu0
      %v2319 = vadd.f32 %v2190, %v2318
      %v2320 = vpop.f32.mrb[0].mxu0
      %v2321 = vadd.f32 %v2192, %v2320
      %2322 = vdwg.mxu0
      %v2323 = vand.u32 %v2079, 4294901760
      %v2324 = vsub.f32 %v2079, %v2323
      %2325 = vmatprep.subr.mxu0 %v2324
      %v2326 = vand.u32 %v2078, 4294901760
      %v2327 = vsub.f32 %v2078, %v2326
      %2328 = vmatpush1.msra.mxu0 %v2327
      %v2329 = vand.u32 %v2081, 4294901760
      %v2330 = vsub.f32 %v2081, %v2329
      %2331 = vmatprep.subr.mxu0 %v2330
      %v2332 = vand.u32 %v2080, 4294901760
      %v2333 = vsub.f32 %v2080, %v2332
      %2334 = vmatpush1.msra.mxu0 %v2333
      %v2335 = vand.u32 %v2083, 4294901760
      %v2336 = vsub.f32 %v2083, %v2335
      %2337 = vmatprep.subr.mxu0 %v2336
      %v2338 = vand.u32 %v2082, 4294901760
      %v2339 = vsub.f32 %v2082, %v2338
      %2340 = vmatpush1.msra.mxu0 %v2339
      %v2341 = vand.u32 %v2085, 4294901760
      %v2342 = vsub.f32 %v2085, %v2341
      %2343 = vmatprep.subr.mxu0 %v2342
      %v2344 = vand.u32 %v2084, 4294901760
      %v2345 = vsub.f32 %v2084, %v2344
      %2346 = vmatpush1.msra.mxu0 %v2345
      %v2347 = vand.u32 %v2095, 4294901760
      %v2348 = vsub.f32 %v2095, %v2347
      %2349 = vmatprep.subr.mxu0 %v2348
      %v2350 = vand.u32 %v2092, 4294901760
      %v2351 = vsub.f32 %v2092, %v2350
      %2352 = vmatpush1.msra.mxu0 %v2351
      %2353 = vmatprep.subr.mxu0 0.0
      %2354 = vmatpush1.msra.mxu0 0.0
      %2355 = vmatprep.subr.mxu0 0.0
      %2356 = vmatpush1.msra.mxu0 0.0
      %2357 = vmatprep.subr.mxu0 0.0
      %2358 = vmatpush1.msra.mxu0 0.0
      %2359 = vmatprep.subr.mxu0 0.0
      %2360 = vmatpush1.msra.mxu0 0.0
      %2361 = vmatprep.subr.mxu0 0.0
      %2362 = vmatpush1.msra.mxu0 0.0
      %2363 = vmatprep.subr.mxu0 0.0
      %2364 = vmatpush1.msra.mxu0 0.0
      %2365 = vmatprep.subr.mxu0 0.0
      %2366 = vmatpush1.msra.mxu0 0.0
      %2367 = vmatprep.subr.mxu0 0.0
      %2368 = vmatpush1.msra.mxu0 0.0
      %2369 = vmatprep.subr.mxu0 0.0
      %2370 = vmatpush1.msra.mxu0 0.0
      %2371 = vmatprep.subr.mxu0 0.0
      %2372 = vmatpush1.msra.mxu0 0.0
      %2373 = vmatprep.subr.mxu0 0.0
      %2374 = vmatpush1.msra.mxu0 0.0
      %2375 = vmatprep.subr.mxu0 0.0
      %2376 = vmatpush1.msra.mxu0 0.0
      %2377 = vmatprep.subr.mxu0 0.0
      %2378 = vmatpush1.msra.mxu0 0.0
      %2379 = vmatprep.subr.mxu0 0.0
      %2380 = vmatpush1.msra.mxu0 0.0
      %2381 = vmatprep.subr.mxu0 0.0
      %2382 = vmatpush1.msra.mxu0 0.0
      %2383 = vmatprep.subr.mxu0 0.0
      %2384 = vmatpush1.msra.mxu0 0.0
      %2385 = vmatprep.subr.mxu0 0.0
      %2386 = vmatpush1.msra.mxu0 0.0
      %2387 = vmatprep.subr.mxu0 0.0
      %2388 = vmatpush1.msra.mxu0 0.0
      %2389 = vmatprep.subr.mxu0 0.0
      %2390 = vmatpush1.msra.mxu0 0.0
      %2391 = vmatprep.subr.mxu0 0.0
      %2392 = vmatpush1.msra.mxu0 0.0
      %2393 = vmatprep.subr.mxu0 0.0
      %2394 = vmatpush1.msra.mxu0 0.0
      %2395 = vmatprep.subr.mxu0 0.0
      %2396 = vmatpush1.msra.mxu0 0.0
      %2397 = vmatprep.subr.mxu0 0.0
      %2398 = vmatpush1.msra.mxu0 0.0
      %2399 = vmatprep.subr.mxu0 0.0
      %2400 = vmatpush1.msra.mxu0 0.0
      %2401 = vmatprep.subr.mxu0 0.0
      %2402 = vmatpush1.msra.mxu0 0.0
      %2403 = vmatprep.subr.mxu0 0.0
      %2404 = vmatpush1.msra.mxu0 0.0
      %2405 = vmatprep.subr.mxu0 0.0
      %2406 = vmatpush1.msra.mxu0 0.0
      %2407 = vmatprep.mubr.f32.mxu0 0.0
      %v2408 = vand.u32 %v412, 4294901760
      %v2409 = vsub.f32 %v412, %v2408
      %2410 = vmatmul.mubr.f32.gmra.mrb[0].mxu0 %v2409
      %v2411 = vpop.f32.mrb[0].mxu0
      %v2412 = vadd.f32 %v2312, %v2411
      %v2413 = vpop.f32.mrb[0].mxu0
      %v2414 = vadd.f32 %v2314, %v2413
      %2415 = vmatprep.mubr.f32.mxu0 0.0
      %v2416 = vand.u32 %v415, 4294901760
      %v2417 = vsub.f32 %v415, %v2416
      %2418 = vmatmul.mubr.f32.gmra.mrb[0].mxu0 %v2417
      %v2419 = vpop.f32.mrb[0].mxu0
      %v2420 = vadd.f32 %v2319, %v2419
      %v2421 = vpop.f32.mrb[0].mxu0
      %v2422 = vadd.f32 %v2321, %v2421
      %2423 = vdwg.mxu0
      %v2424 = vand.u32 %v2079, 4294901760
      %2425 = vmatprep.subr.mxu0 %v2424
      %v2426 = vand.u32 %v2078, 4294901760
      %2427 = vmatpush1.msra.mxu0 %v2426
      %v2428 = vand.u32 %v2081, 4294901760
      %2429 = vmatprep.subr.mxu0 %v2428
      %v2430 = vand.u32 %v2080, 4294901760
      %2431 = vmatpush1.msra.mxu0 %v2430
      %v2432 = vand.u32 %v2083, 4294901760
      %2433 = vmatprep.subr.mxu0 %v2432
      %v2434 = vand.u32 %v2082, 4294901760
      %2435 = vmatpush1.msra.mxu0 %v2434
      %v2436 = vand.u32 %v2085, 4294901760
      %2437 = vmatprep.subr.mxu0 %v2436
      %v2438 = vand.u32 %v2084, 4294901760
      %2439 = vmatpush1.msra.mxu0 %v2438
      %v2440 = vand.u32 %v2095, 4294901760
      %2441 = vmatprep.subr.mxu0 %v2440
      %v2442 = vand.u32 %v2092, 4294901760
      %2443 = vmatpush1.msra.mxu0 %v2442
      %2444 = vmatprep.subr.mxu0 0.0
      %2445 = vmatpush1.msra.mxu0 0.0
      %2446 = vmatprep.subr.mxu0 0.0
      %2447 = vmatpush1.msra.mxu0 0.0
      %2448 = vmatprep.subr.mxu0 0.0
      %2449 = vmatpush1.msra.mxu0 0.0
      %2450 = vmatprep.subr.mxu0 0.0
      %2451 = vmatpush1.msra.mxu0 0.0
      %2452 = vmatprep.subr.mxu0 0.0
      %2453 = vmatpush1.msra.mxu0 0.0
      %2454 = vmatprep.subr.mxu0 0.0
      %2455 = vmatpush1.msra.mxu0 0.0
      %2456 = vmatprep.subr.mxu0 0.0
      %2457 = vmatpush1.msra.mxu0 0.0
      %2458 = vmatprep.subr.mxu0 0.0
      %2459 = vmatpush1.msra.mxu0 0.0
      %2460 = vmatprep.subr.mxu0 0.0
      %2461 = vmatpush1.msra.mxu0 0.0
      %2462 = vmatprep.subr.mxu0 0.0
      %2463 = vmatpush1.msra.mxu0 0.0
      %2464 = vmatprep.subr.mxu0 0.0
      %2465 = vmatpush1.msra.mxu0 0.0
      %2466 = vmatprep.subr.mxu0 0.0
      %2467 = vmatpush1.msra.mxu0 0.0
      %2468 = vmatprep.subr.mxu0 0.0
      %2469 = vmatpush1.msra.mxu0 0.0
      %2470 = vmatprep.subr.mxu0 0.0
      %2471 = vmatpush1.msra.mxu0 0.0
      %2472 = vmatprep.subr.mxu0 0.0
      %2473 = vmatpush1.msra.mxu0 0.0
      %2474 = vmatprep.subr.mxu0 0.0
      %2475 = vmatpush1.msra.mxu0 0.0
      %2476 = vmatprep.subr.mxu0 0.0
      %2477 = vmatpush1.msra.mxu0 0.0
      %2478 = vmatprep.subr.mxu0 0.0
      %2479 = vmatpush1.msra.mxu0 0.0
      %2480 = vmatprep.subr.mxu0 0.0
      %2481 = vmatpush1.msra.mxu0 0.0
      %2482 = vmatprep.subr.mxu0 0.0
      %2483 = vmatpush1.msra.mxu0 0.0
      %2484 = vmatprep.subr.mxu0 0.0
      %2485 = vmatpush1.msra.mxu0 0.0
      %2486 = vmatprep.subr.mxu0 0.0
      %2487 = vmatpush1.msra.mxu0 0.0
      %2488 = vmatprep.subr.mxu0 0.0
      %2489 = vmatpush1.msra.mxu0 0.0
      %2490 = vmatprep.subr.mxu0 0.0
      %2491 = vmatpush1.msra.mxu0 0.0
      %2492 = vmatprep.subr.mxu0 0.0
      %2493 = vmatpush1.msra.mxu0 0.0
      %2494 = vmatprep.subr.mxu0 0.0
      %2495 = vmatpush1.msra.mxu0 0.0
      %2496 = vmatprep.subr.mxu0 0.0
      %2497 = vmatpush1.msra.mxu0 0.0
      %2498 = vmatprep.mubr.f32.mxu0 0.0
      %v2499 = vand.u32 %v412, 4294901760
      %v2500 = vsub.f32 %v412, %v2499
      %v2501 = vand.u32 %v2500, 4294901760
      %2502 = vmatmul.mubr.f32.gmra.mrb[0].mxu0 %v2501
      %v2503 = vpop.f32.mrb[0].mxu0
      %v2504 = vadd.f32 %v2412, %v2503
      %v2505 = vpop.f32.mrb[0].mxu0
      %v2506 = vadd.f32 %v2414, %v2505
      %2507 = vmatprep.mubr.f32.mxu0 0.0
      %v2508 = vand.u32 %v415, 4294901760
      %v2509 = vsub.f32 %v415, %v2508
      %v2510 = vand.u32 %v2509, 4294901760
      %2511 = vmatmul.mubr.f32.gmra.mrb[0].mxu0 %v2510
      %v2512 = vpop.f32.mrb[0].mxu0
      %v2513 = vadd.f32 %v2420, %v2512
      %v2514 = vpop.f32.mrb[0].mxu0
      %v2515 = vadd.f32 %v2422, %v2514
      %2516 = vdwg.mxu0
      %v2517 = vand.u32 %v2079, 4294901760
      %v2518 = vsub.f32 %v2079, %v2517
      %v2519 = vand.u32 %v2518, 4294901760
      %2520 = vmatprep.subr.mxu0 %v2519
      %v2521 = vand.u32 %v2078, 4294901760
      %v2522 = vsub.f32 %v2078, %v2521
      %v2523 = vand.u32 %v2522, 4294901760
      %2524 = vmatpush1.msra.mxu0 %v2523
      %v2525 = vand.u32 %v2081, 4294901760
      %v2526 = vsub.f32 %v2081, %v2525
      %v2527 = vand.u32 %v2526, 4294901760
      %2528 = vmatprep.subr.mxu0 %v2527
      %v2529 = vand.u32 %v2080, 4294901760
      %v2530 = vsub.f32 %v2080, %v2529
      %v2531 = vand.u32 %v2530, 4294901760
      %2532 = vmatpush1.msra.mxu0 %v2531
      %v2533 = vand.u32 %v2083, 4294901760
      %v2534 = vsub.f32 %v2083, %v2533
      %v2535 = vand.u32 %v2534, 4294901760
      %2536 = vmatprep.subr.mxu0 %v2535
      %v2537 = vand.u32 %v2082, 4294901760
      %v2538 = vsub.f32 %v2082, %v2537
      %v2539 = vand.u32 %v2538, 4294901760
      %2540 = vmatpush1.msra.mxu0 %v2539
      %v2541 = vand.u32 %v2085, 4294901760
      %v2542 = vsub.f32 %v2085, %v2541
      %v2543 = vand.u32 %v2542, 4294901760
      %2544 = vmatprep.subr.mxu0 %v2543
      %v2545 = vand.u32 %v2084, 4294901760
      %v2546 = vsub.f32 %v2084, %v2545
      %v2547 = vand.u32 %v2546, 4294901760
      %2548 = vmatpush1.msra.mxu0 %v2547
      %v2549 = vand.u32 %v2095, 4294901760
      %v2550 = vsub.f32 %v2095, %v2549
      %v2551 = vand.u32 %v2550, 4294901760
      %2552 = vmatprep.subr.mxu0 %v2551
      %v2553 = vand.u32 %v2092, 4294901760
      %v2554 = vsub.f32 %v2092, %v2553
      %v2555 = vand.u32 %v2554, 4294901760
      %2556 = vmatpush1.msra.mxu0 %v2555
      %2557 = vmatprep.subr.mxu0 0.0
      %2558 = vmatpush1.msra.mxu0 0.0
      %2559 = vmatprep.subr.mxu0 0.0
      %2560 = vmatpush1.msra.mxu0 0.0
      %2561 = vmatprep.subr.mxu0 0.0
      %2562 = vmatpush1.msra.mxu0 0.0
      %2563 = vmatprep.subr.mxu0 0.0
      %2564 = vmatpush1.msra.mxu0 0.0
      %2565 = vmatprep.subr.mxu0 0.0
      %2566 = vmatpush1.msra.mxu0 0.0
      %2567 = vmatprep.subr.mxu0 0.0
      %2568 = vmatpush1.msra.mxu0 0.0
      %2569 = vmatprep.subr.mxu0 0.0
      %2570 = vmatpush1.msra.mxu0 0.0
      %2571 = vmatprep.subr.mxu0 0.0
      %2572 = vmatpush1.msra.mxu0 0.0
      %2573 = vmatprep.subr.mxu0 0.0
      %2574 = vmatpush1.msra.mxu0 0.0
      %2575 = vmatprep.subr.mxu0 0.0
      %2576 = vmatpush1.msra.mxu0 0.0
      %2577 = vmatprep.subr.mxu0 0.0
      %2578 = vmatpush1.msra.mxu0 0.0
      %2579 = vmatprep.subr.mxu0 0.0
      %2580 = vmatpush1.msra.mxu0 0.0
      %2581 = vmatprep.subr.mxu0 0.0
      %2582 = vmatpush1.msra.mxu0 0.0
      %2583 = vmatprep.subr.mxu0 0.0
      %2584 = vmatpush1.msra.mxu0 0.0
      %2585 = vmatprep.subr.mxu0 0.0
      %2586 = vmatpush1.msra.mxu0 0.0
      %2587 = vmatprep.subr.mxu0 0.0
      %2588 = vmatpush1.msra.mxu0 0.0
      %2589 = vmatprep.subr.mxu0 0.0
      %2590 = vmatpush1.msra.mxu0 0.0
      %2591 = vmatprep.subr.mxu0 0.0
      %2592 = vmatpush1.msra.mxu0 0.0
      %2593 = vmatprep.subr.mxu0 0.0
      %2594 = vmatpush1.msra.mxu0 0.0
      %2595 = vmatprep.subr.mxu0 0.0
      %2596 = vmatpush1.msra.mxu0 0.0
      %2597 = vmatprep.subr.mxu0 0.0
      %2598 = vmatpush1.msra.mxu0 0.0
      %2599 = vmatprep.subr.mxu0 0.0
      %2600 = vmatpush1.msra.mxu0 0.0
      %2601 = vmatprep.subr.mxu0 0.0
      %2602 = vmatpush1.msra.mxu0 0.0
      %2603 = vmatprep.subr.mxu0 0.0
      %2604 = vmatpush1.msra.mxu0 0.0
      %2605 = vmatprep.subr.mxu0 0.0
      %2606 = vmatpush1.msra.mxu0 0.0
      %2607 = vmatprep.subr.mxu0 0.0
      %2608 = vmatpush1.msra.mxu0 0.0
      %2609 = vmatprep.subr.mxu0 0.0
      %2610 = vmatpush1.msra.mxu0 0.0
      %2611 = vmatprep.mubr.f32.mxu0 0.0
      %v2612 = vand.u32 %v412, 4294901760
      %2613 = vmatmul.mubr.f32.gmra.mrb[0].mxu0 %v2612
      %v2614 = vpop.f32.mrb[0].mxu0
      %v2615 = vadd.f32 %v2504, %v2614
      %v2616 = vpop.f32.mrb[0].mxu0
      %v2617 = vadd.f32 %v2506, %v2616
      %2618 = vmatprep.mubr.f32.mxu0 0.0
      %v2619 = vand.u32 %v415, 4294901760
      %2620 = vmatmul.mubr.f32.gmra.mrb[0].mxu0 %v2619
      %v2621 = vpop.f32.mrb[0].mxu0
      %v2622 = vadd.f32 %v2513, %v2621
      %v2623 = vpop.f32.mrb[0].mxu0
      %v2624 = vadd.f32 %v2515, %v2623
      %2625 = vdwg.mxu0
      %v2626 = vand.u32 %v2079, 4294901760
      %2627 = vmatprep.subr.mxu0 %v2626
      %v2628 = vand.u32 %v2078, 4294901760
      %2629 = vmatpush1.msra.mxu0 %v2628
      %v2630 = vand.u32 %v2081, 4294901760
      %2631 = vmatprep.subr.mxu0 %v2630
      %v2632 = vand.u32 %v2080, 4294901760
      %2633 = vmatpush1.msra.mxu0 %v2632
      %v2634 = vand.u32 %v2083, 4294901760
      %2635 = vmatprep.subr.mxu0 %v2634
      %v2636 = vand.u32 %v2082, 4294901760
      %2637 = vmatpush1.msra.mxu0 %v2636
      %v2638 = vand.u32 %v2085, 4294901760
      %2639 = vmatprep.subr.mxu0 %v2638
      %v2640 = vand.u32 %v2084, 4294901760
      %2641 = vmatpush1.msra.mxu0 %v2640
      %v2642 = vand.u32 %v2095, 4294901760
      %2643 = vmatprep.subr.mxu0 %v2642
      %v2644 = vand.u32 %v2092, 4294901760
      %2645 = vmatpush1.msra.mxu0 %v2644
      %2646 = vmatprep.subr.mxu0 0.0
      %2647 = vmatpush1.msra.mxu0 0.0
      %2648 = vmatprep.subr.mxu0 0.0
      %2649 = vmatpush1.msra.mxu0 0.0
      %2650 = vmatprep.subr.mxu0 0.0
      %2651 = vmatpush1.msra.mxu0 0.0
      %2652 = vmatprep.subr.mxu0 0.0
      %2653 = vmatpush1.msra.mxu0 0.0
      %2654 = vmatprep.subr.mxu0 0.0
      %2655 = vmatpush1.msra.mxu0 0.0
      %2656 = vmatprep.subr.mxu0 0.0
      %2657 = vmatpush1.msra.mxu0 0.0
      %2658 = vmatprep.subr.mxu0 0.0
      %2659 = vmatpush1.msra.mxu0 0.0
      %2660 = vmatprep.subr.mxu0 0.0
      %2661 = vmatpush1.msra.mxu0 0.0
      %2662 = vmatprep.subr.mxu0 0.0
      %2663 = vmatpush1.msra.mxu0 0.0
      %2664 = vmatprep.subr.mxu0 0.0
      %2665 = vmatpush1.msra.mxu0 0.0
      %2666 = vmatprep.subr.mxu0 0.0
      %2667 = vmatpush1.msra.mxu0 0.0
      %2668 = vmatprep.subr.mxu0 0.0
      %2669 = vmatpush1.msra.mxu0 0.0
      %2670 = vmatprep.subr.mxu0 0.0
      %2671 = vmatpush1.msra.mxu0 0.0
      %2672 = vmatprep.subr.mxu0 0.0
      %2673 = vmatpush1.msra.mxu0 0.0
      %2674 = vmatprep.subr.mxu0 0.0
      %2675 = vmatpush1.msra.mxu0 0.0
      %2676 = vmatprep.subr.mxu0 0.0
      %2677 = vmatpush1.msra.mxu0 0.0
      %2678 = vmatprep.subr.mxu0 0.0
      %2679 = vmatpush1.msra.mxu0 0.0
      %2680 = vmatprep.subr.mxu0 0.0
      %2681 = vmatpush1.msra.mxu0 0.0
      %2682 = vmatprep.subr.mxu0 0.0
      %2683 = vmatpush1.msra.mxu0 0.0
      %2684 = vmatprep.subr.mxu0 0.0
      %2685 = vmatpush1.msra.mxu0 0.0
      %2686 = vmatprep.subr.mxu0 0.0
      %2687 = vmatpush1.msra.mxu0 0.0
      %2688 = vmatprep.subr.mxu0 0.0
      %2689 = vmatpush1.msra.mxu0 0.0
      %2690 = vmatprep.subr.mxu0 0.0
      %2691 = vmatpush1.msra.mxu0 0.0
      %2692 = vmatprep.subr.mxu0 0.0
      %2693 = vmatpush1.msra.mxu0 0.0
      %2694 = vmatprep.subr.mxu0 0.0
      %2695 = vmatpush1.msra.mxu0 0.0
      %2696 = vmatprep.subr.mxu0 0.0
      %2697 = vmatpush1.msra.mxu0 0.0
      %2698 = vmatprep.subr.mxu0 0.0
      %2699 = vmatpush1.msra.mxu0 0.0
      %2700 = vmatprep.mubr.f32.mxu0 0.0
      %v2701 = vand.u32 %v412, 4294901760
      %2702 = vmatmul.mubr.f32.gmra.mrb[0].mxu0 %v2701
      %v2703 = vpop.f32.mrb[0].mxu0
      %v2704 = vadd.f32 %v2615, %v2703
      %v2705 = vpop.f32.mrb[0].mxu0
      %v2706 = vadd.f32 %v2617, %v2705
      %2707 = vmatprep.mubr.f32.mxu0 0.0
      %v2708 = vand.u32 %v415, 4294901760
      %2709 = vmatmul.mubr.f32.gmra.mrb[0].mxu0 %v2708
      %v2710 = vpop.f32.mrb[0].mxu0
      %v2711 = vadd.f32 %v2622, %v2710
      %v2712 = vpop.f32.mrb[0].mxu0
      %v2713 = vadd.f32 %v2624, %v2712
      %2714 = vdwg.mxu0
      %v2715 = vxor.u32 %v2704, 2147483648
      %v2716 = vxor.u32 %v2706, 2147483648
      %v2717 = vmul.f32 %v2715, 1.442695
      %v2718 = vpow.pop %v2717
      %v2719 = vmul.f32 %v2716, 1.442695
      %v2720 = vpow.pop %v2719
      %v2721 = vadd.f32 %v2718, 1.0
      %v2722 = vadd.f32 %v2720, 1.0
      %v2723 = vrcp.pop %v2721
      %v2724 = vmul.f32 1.0, %v2723
      %v2725 = vrcp.pop %v2722
      %v2726 = vmul.f32 1.0, %v2725
      %v2727 = vtanh.pop %v2711
      %v2728 = vtanh.pop %v2713
      %v2729 = vxor.u32 %v2711, 2147483648
      %v2730 = vxor.u32 %v2713, 2147483648
      %v2731 = vmul.f32 %v2729, 1.442695
      %v2732 = vpow.pop %v2731
      %v2733 = vmul.f32 %v2730, 1.442695
      %v2734 = vpow.pop %v2733
      %v2735 = vadd.f32 %v2732, 1.0
      %v2736 = vadd.f32 %v2734, 1.0
      %v2737 = vrcp.pop %v2735
      %v2738 = vmul.f32 1.0, %v2737
      %v2739 = vrcp.pop %v2736
      %v2740 = vmul.f32 1.0, %v2739
      %v2741 = vmul.f32 %v2724, %v1858
      %v2742 = vmul.f32 %v2726, %v1859
      %v2743 = vmul.f32 %v2724, %v2727
      %v2744 = vmul.f32 %v2726, %v2728
      %v2747 = vrot.slane %v2743, 4
      %v2748 = vrot.slane %v2744, 4
      %v2751 = vadd.f32 %v2741, %v2747
      %v2752 = vadd.f32 %v2742, %v2748
      %v2753 = vtanh.pop %v2751
      %v2754 = vtanh.pop %v2752
      %v2755 = vmul.f32 %v2738, %v2753
      %v2756 = vmul.f32 %v2740, %v2754
      %v2759 = vrot.slane %v2755, 4
      %v2760 = vrot.slane %v2756, 4
      %2763 = vrot.lane.b32.xlu0 %v2759, 17
      %v2764 = vpop.permute.xlu0 %2763
      %2765 = vrot.lane.b32.xlu0 %v2760, 17
      %v2766 = vpop.permute.xlu0 %2765
      %v2767 = vsel %vm217, %v2764, %v2766
      %v2768 = vsel %vm217, %v2766, %v2764
      %v2769 = vmul.f32 %v2768, %v1885
      %v2770 = vmul.f32 %v2767, %v1889
      %2771 = vrot.lane.b32.xlu0 %v2759, 16
      %v2772 = vpop.permute.xlu0 %2771
      %2773 = vrot.lane.b32.xlu0 %v2760, 16
      %v2774 = vpop.permute.xlu0 %2773
      %v2775 = vsel %vm234, %v2772, %v2774
      %v2776 = vsel %vm234, %v2774, %v2772
      %v2777 = vmul.f32 %v2776, %v1905
      %v2778 = vmul.f32 %v2775, %v1909
      %2779 = vrot.lane.b32.xlu0 %v2759, 15
      %v2780 = vpop.permute.xlu0 %2779
      %2781 = vrot.lane.b32.xlu0 %v2760, 15
      %v2782 = vpop.permute.xlu0 %2781
      %v2783 = vsel %vm252, %v2780, %v2782
      %v2784 = vsel %vm252, %v2782, %v2780
      %v2785 = vmul.f32 %v2784, %v1925
      %v2786 = vmul.f32 %v2783, %v1929
      %2787 = vrot.lane.b32.xlu0 %v2759, 1
      %v2788 = vpop.permute.xlu0 %2787
      %2789 = vrot.lane.b32.xlu0 %v2760, 1
      %v2790 = vpop.permute.xlu0 %2789
      %v2791 = vsel %vm270, %v2788, %v2790
      %v2792 = vsel %vm270, %v2790, %v2788
      %v2793 = vmul.f32 %v2792, %v1945
      %v2794 = vmul.f32 %v2791, %v1949
      %v2795 = vmul.f32 %v2755, %v1959
      %v2796 = vmul.f32 %v2756, %v1963
      %2797 = vrot.lane.b32.xlu0 %v2759, 127
      %v2798 = vpop.permute.xlu0 %2797
      %2799 = vrot.lane.b32.xlu0 %v2760, 127
      %v2800 = vpop.permute.xlu0 %2799
      %v2801 = vsel %vm303, %v2798, %v2800
      %v2802 = vsel %vm303, %v2800, %v2798
      %v2803 = vmul.f32 %v2801, %v1979
      %v2804 = vmul.f32 %v2802, %v1983
      %2805 = vrot.lane.b32.xlu0 %v2759, 113
      %v2806 = vpop.permute.xlu0 %2805
      %2807 = vrot.lane.b32.xlu0 %v2760, 113
      %v2808 = vpop.permute.xlu0 %2807
      %v2809 = vsel %vm321, %v2806, %v2808
      %v2810 = vsel %vm321, %v2808, %v2806
      %v2811 = vmul.f32 %v2809, %v1999
      %v2812 = vmul.f32 %v2810, %v2003
      %2813 = vrot.lane.b32.xlu0 %v2759, 112
      %v2814 = vpop.permute.xlu0 %2813
      %2815 = vrot.lane.b32.xlu0 %v2760, 112
      %v2816 = vpop.permute.xlu0 %2815
      %v2817 = vsel %vm339, %v2814, %v2816
      %v2818 = vsel %vm339, %v2816, %v2814
      %v2819 = vmul.f32 %v2817, %v2019
      %v2820 = vmul.f32 %v2818, %v2023
      %2821 = vrot.lane.b32.xlu0 %v2759, 111
      %v2822 = vpop.permute.xlu0 %2821
      %2823 = vrot.lane.b32.xlu0 %v2760, 111
      %v2824 = vpop.permute.xlu0 %2823
      %v2825 = vsel %vm357, %v2822, %v2824
      %v2826 = vsel %vm357, %v2824, %v2822
      %v2827 = vmul.f32 %v2825, %v2039
      %v2828 = vmul.f32 %v2826, %v2043
      %v2831 = vrot.slane %v2777, 4
      %v2832 = vrot.slane %v2778, 4
      %v2837 = vrot.slane %v2793, 4
      %v2838 = vrot.slane %v2794, 4
      %v2843 = vrot.slane %v2795, 4
      %v2844 = vrot.slane %v2796, 4
      %v2849 = vrot.slane %v2803, 4
      %v2850 = vrot.slane %v2804, 4
      %v2855 = vrot.slane %v2819, 4
      %v2856 = vrot.slane %v2820, 4
      %v2859 = vsel %vm397, %v2769, %v2831
      %v2860 = vsel %vm397, %v2770, %v2832
      %v2861 = vsel %vm397, %v2785, %v2837
      %v2862 = vsel %vm397, %v2786, %v2838
      %v2863 = vsel %vm397, %v2843, %v2849
      %v2864 = vsel %vm397, %v2844, %v2850
      %v2865 = vsel %vm397, %v2811, %v2855
      %v2866 = vsel %vm397, %v2812, %v2856
      %s2867 = scalar_lea.vmem %s200, 96
      %v2868 = vld [vmem:[%s2867] sm:$0xff]
      %v2869 = vld [vmem:[%s2867 + $0x8] sm:$0xff]
      %v2870 = vld [vmem:[%s2867 + $0x10] sm:$0xff]
      %v2871 = vld [vmem:[%s2867 + $0x18] sm:$0xff]
      %v2873 = vsel %vm397, %v2827, 0
      %v2876 = vsel %vm397, %v2828, 0
      %v2878 = vand.u32 %v2860, 4294901760
      %2879 = vmatprep.subr.mxu0 %v2878
      %v2880 = vand.u32 %v2859, 4294901760
      %2881 = vmatpush1.msra.mxu0 %v2880
      %v2882 = vand.u32 %v2862, 4294901760
      %2883 = vmatprep.subr.mxu0 %v2882
      %v2884 = vand.u32 %v2861, 4294901760
      %2885 = vmatpush1.msra.mxu0 %v2884
      %v2886 = vand.u32 %v2864, 4294901760
      %2887 = vmatprep.subr.mxu0 %v2886
      %v2888 = vand.u32 %v2863, 4294901760
      %2889 = vmatpush1.msra.mxu0 %v2888
      %v2890 = vand.u32 %v2866, 4294901760
      %2891 = vmatprep.subr.mxu0 %v2890
      %v2892 = vand.u32 %v2865, 4294901760
      %2893 = vmatpush1.msra.mxu0 %v2892
      %v2894 = vand.u32 %v2876, 4294901760
      %2895 = vmatprep.subr.mxu0 %v2894
      %v2896 = vand.u32 %v2873, 4294901760
      %2897 = vmatpush1.msra.mxu0 %v2896
      %2898 = vmatprep.subr.mxu0 0.0
      %2899 = vmatpush1.msra.mxu0 0.0
      %2900 = vmatprep.subr.mxu0 0.0
      %2901 = vmatpush1.msra.mxu0 0.0
      %2902 = vmatprep.subr.mxu0 0.0
      %2903 = vmatpush1.msra.mxu0 0.0
      %2904 = vmatprep.subr.mxu0 0.0
      %2905 = vmatpush1.msra.mxu0 0.0
      %2906 = vmatprep.subr.mxu0 0.0
      %2907 = vmatpush1.msra.mxu0 0.0
      %2908 = vmatprep.subr.mxu0 0.0
      %2909 = vmatpush1.msra.mxu0 0.0
      %2910 = vmatprep.subr.mxu0 0.0
      %2911 = vmatpush1.msra.mxu0 0.0
      %2912 = vmatprep.subr.mxu0 0.0
      %2913 = vmatpush1.msra.mxu0 0.0
      %2914 = vmatprep.subr.mxu0 0.0
      %2915 = vmatpush1.msra.mxu0 0.0
      %2916 = vmatprep.subr.mxu0 0.0
      %2917 = vmatpush1.msra.mxu0 0.0
      %2918 = vmatprep.subr.mxu0 0.0
      %2919 = vmatpush1.msra.mxu0 0.0
      %2920 = vmatprep.subr.mxu0 0.0
      %2921 = vmatpush1.msra.mxu0 0.0
      %2922 = vmatprep.subr.mxu0 0.0
      %2923 = vmatpush1.msra.mxu0 0.0
      %2924 = vmatprep.subr.mxu0 0.0
      %2925 = vmatpush1.msra.mxu0 0.0
      %2926 = vmatprep.subr.mxu0 0.0
      %2927 = vmatpush1.msra.mxu0 0.0
      %2928 = vmatprep.subr.mxu0 0.0
      %2929 = vmatpush1.msra.mxu0 0.0
      %2930 = vmatprep.subr.mxu0 0.0
      %2931 = vmatpush1.msra.mxu0 0.0
      %2932 = vmatprep.subr.mxu0 0.0
      %2933 = vmatpush1.msra.mxu0 0.0
      %2934 = vmatprep.subr.mxu0 0.0
      %2935 = vmatpush1.msra.mxu0 0.0
      %2936 = vmatprep.subr.mxu0 0.0
      %2937 = vmatpush1.msra.mxu0 0.0
      %2938 = vmatprep.subr.mxu0 0.0
      %2939 = vmatpush1.msra.mxu0 0.0
      %2940 = vmatprep.subr.mxu0 0.0
      %2941 = vmatpush1.msra.mxu0 0.0
      %2942 = vmatprep.subr.mxu0 0.0
      %2943 = vmatpush1.msra.mxu0 0.0
      %2944 = vmatprep.subr.mxu0 0.0
      %2945 = vmatpush1.msra.mxu0 0.0
      %2946 = vmatprep.subr.mxu0 0.0
      %2947 = vmatpush1.msra.mxu0 0.0
      %2948 = vmatprep.subr.mxu0 0.0
      %2949 = vmatpush1.msra.mxu0 0.0
      %2950 = vmatprep.subr.mxu0 0.0
      %2951 = vmatpush1.msra.mxu0 0.0
      %2952 = vmatprep.mubr.f32.mxu0 0.0
      %v2953 = vand.u32 %v412, 4294901760
      %v2954 = vsub.f32 %v412, %v2953
      %v2955 = vand.u32 %v2954, 4294901760
      %v2956 = vsub.f32 %v2954, %v2955
      %v2957 = vand.u32 %v2956, 4294901760
      %2958 = vmatmul.mubr.f32.gmra.mrb[0].mxu0 %v2957
      %v2959 = vpop.f32.mrb[0].mxu0
      %v2960 = vadd.f32 %v2868, %v2959
      %v2961 = vpop.f32.mrb[0].mxu0
      %v2962 = vadd.f32 %v2869, %v2961
      %2963 = vmatprep.mubr.f32.mxu0 0.0
      %v2964 = vand.u32 %v415, 4294901760
      %v2965 = vsub.f32 %v415, %v2964
      %v2966 = vand.u32 %v2965, 4294901760
      %v2967 = vsub.f32 %v2965, %v2966
      %v2968 = vand.u32 %v2967, 4294901760
      %2969 = vmatmul.mubr.f32.gmra.mrb[0].mxu0 %v2968
      %v2970 = vpop.f32.mrb[0].mxu0
      %v2971 = vadd.f32 %v2870, %v2970
      %v2972 = vpop.f32.mrb[0].mxu0
      %v2973 = vadd.f32 %v2871, %v2972
      %2974 = vdwg.mxu0
      %v2975 = vand.u32 %v2860, 4294901760
      %v2976 = vsub.f32 %v2860, %v2975
      %v2977 = vand.u32 %v2976, 4294901760
      %v2978 = vsub.f32 %v2976, %v2977
      %v2979 = vand.u32 %v2978, 4294901760
      %2980 = vmatprep.subr.mxu0 %v2979
      %v2981 = vand.u32 %v2859, 4294901760
      %v2982 = vsub.f32 %v2859, %v2981
      %v2983 = vand.u32 %v2982, 4294901760
      %v2984 = vsub.f32 %v2982, %v2983
      %v2985 = vand.u32 %v2984, 4294901760
      %2986 = vmatpush1.msra.mxu0 %v2985
      %v2987 = vand.u32 %v2862, 4294901760
      %v2988 = vsub.f32 %v2862, %v2987
      %v2989 = vand.u32 %v2988, 4294901760
      %v2990 = vsub.f32 %v2988, %v2989
      %v2991 = vand.u32 %v2990, 4294901760
      %2992 = vmatprep.subr.mxu0 %v2991
      %v2993 = vand.u32 %v2861, 4294901760
      %v2994 = vsub.f32 %v2861, %v2993
      %v2995 = vand.u32 %v2994, 4294901760
      %v2996 = vsub.f32 %v2994, %v2995
      %v2997 = vand.u32 %v2996, 4294901760
      %2998 = vmatpush1.msra.mxu0 %v2997
      %v2999 = vand.u32 %v2864, 4294901760
      %v3000 = vsub.f32 %v2864, %v2999
      %v3001 = vand.u32 %v3000, 4294901760
      %v3002 = vsub.f32 %v3000, %v3001
      %v3003 = vand.u32 %v3002, 4294901760
      %3004 = vmatprep.subr.mxu0 %v3003
      %v3005 = vand.u32 %v2863, 4294901760
      %v3006 = vsub.f32 %v2863, %v3005
      %v3007 = vand.u32 %v3006, 4294901760
      %v3008 = vsub.f32 %v3006, %v3007
      %v3009 = vand.u32 %v3008, 4294901760
      %3010 = vmatpush1.msra.mxu0 %v3009
      %v3011 = vand.u32 %v2866, 4294901760
      %v3012 = vsub.f32 %v2866, %v3011
      %v3013 = vand.u32 %v3012, 4294901760
      %v3014 = vsub.f32 %v3012, %v3013
      %v3015 = vand.u32 %v3014, 4294901760
      %3016 = vmatprep.subr.mxu0 %v3015
      %v3017 = vand.u32 %v2865, 4294901760
      %v3018 = vsub.f32 %v2865, %v3017
      %v3019 = vand.u32 %v3018, 4294901760
      %v3020 = vsub.f32 %v3018, %v3019
      %v3021 = vand.u32 %v3020, 4294901760
      %3022 = vmatpush1.msra.mxu0 %v3021
      %v3023 = vand.u32 %v2876, 4294901760
      %v3024 = vsub.f32 %v2876, %v3023
      %v3025 = vand.u32 %v3024, 4294901760
      %v3026 = vsub.f32 %v3024, %v3025
      %v3027 = vand.u32 %v3026, 4294901760
      %3028 = vmatprep.subr.mxu0 %v3027
      %v3029 = vand.u32 %v2873, 4294901760
      %v3030 = vsub.f32 %v2873, %v3029
      %v3031 = vand.u32 %v3030, 4294901760
      %v3032 = vsub.f32 %v3030, %v3031
      %v3033 = vand.u32 %v3032, 4294901760
      %3034 = vmatpush1.msra.mxu0 %v3033
      %3035 = vmatprep.subr.mxu0 0.0
      %3036 = vmatpush1.msra.mxu0 0.0
      %3037 = vmatprep.subr.mxu0 0.0
      %3038 = vmatpush1.msra.mxu0 0.0
      %3039 = vmatprep.subr.mxu0 0.0
      %3040 = vmatpush1.msra.mxu0 0.0
      %3041 = vmatprep.subr.mxu0 0.0
      %3042 = vmatpush1.msra.mxu0 0.0
      %3043 = vmatprep.subr.mxu0 0.0
      %3044 = vmatpush1.msra.mxu0 0.0
      %3045 = vmatprep.subr.mxu0 0.0
      %3046 = vmatpush1.msra.mxu0 0.0
      %3047 = vmatprep.subr.mxu0 0.0
      %3048 = vmatpush1.msra.mxu0 0.0
      %3049 = vmatprep.subr.mxu0 0.0
      %3050 = vmatpush1.msra.mxu0 0.0
      %3051 = vmatprep.subr.mxu0 0.0
      %3052 = vmatpush1.msra.mxu0 0.0
      %3053 = vmatprep.subr.mxu0 0.0
      %3054 = vmatpush1.msra.mxu0 0.0
      %3055 = vmatprep.subr.mxu0 0.0
      %3056 = vmatpush1.msra.mxu0 0.0
      %3057 = vmatprep.subr.mxu0 0.0
      %3058 = vmatpush1.msra.mxu0 0.0
      %3059 = vmatprep.subr.mxu0 0.0
      %3060 = vmatpush1.msra.mxu0 0.0
      %3061 = vmatprep.subr.mxu0 0.0
      %3062 = vmatpush1.msra.mxu0 0.0
      %3063 = vmatprep.subr.mxu0 0.0
      %3064 = vmatpush1.msra.mxu0 0.0
      %3065 = vmatprep.subr.mxu0 0.0
      %3066 = vmatpush1.msra.mxu0 0.0
      %3067 = vmatprep.subr.mxu0 0.0
      %3068 = vmatpush1.msra.mxu0 0.0
      %3069 = vmatprep.subr.mxu0 0.0
      %3070 = vmatpush1.msra.mxu0 0.0
      %3071 = vmatprep.subr.mxu0 0.0
      %3072 = vmatpush1.msra.mxu0 0.0
      %3073 = vmatprep.subr.mxu0 0.0
      %3074 = vmatpush1.msra.mxu0 0.0
      %3075 = vmatprep.subr.mxu0 0.0
      %3076 = vmatpush1.msra.mxu0 0.0
      %3077 = vmatprep.subr.mxu0 0.0
      %3078 = vmatpush1.msra.mxu0 0.0
      %3079 = vmatprep.subr.mxu0 0.0
      %3080 = vmatpush1.msra.mxu0 0.0
      %3081 = vmatprep.subr.mxu0 0.0
      %3082 = vmatpush1.msra.mxu0 0.0
      %3083 = vmatprep.subr.mxu0 0.0
      %3084 = vmatpush1.msra.mxu0 0.0
      %3085 = vmatprep.subr.mxu0 0.0
      %3086 = vmatpush1.msra.mxu0 0.0
      %3087 = vmatprep.subr.mxu0 0.0
      %3088 = vmatpush1.msra.mxu0 0.0
      %3089 = vmatprep.mubr.f32.mxu0 0.0
      %v3090 = vand.u32 %v412, 4294901760
      %3091 = vmatmul.mubr.f32.gmra.mrb[0].mxu0 %v3090
      %v3092 = vpop.f32.mrb[0].mxu0
      %v3093 = vadd.f32 %v2960, %v3092
      %v3094 = vpop.f32.mrb[0].mxu0
      %v3095 = vadd.f32 %v2962, %v3094
      %3096 = vmatprep.mubr.f32.mxu0 0.0
      %v3097 = vand.u32 %v415, 4294901760
      %3098 = vmatmul.mubr.f32.gmra.mrb[0].mxu0 %v3097
      %v3099 = vpop.f32.mrb[0].mxu0
      %v3100 = vadd.f32 %v2971, %v3099
      %v3101 = vpop.f32.mrb[0].mxu0
      %v3102 = vadd.f32 %v2973, %v3101
      %3103 = vdwg.mxu0
      %v3104 = vand.u32 %v2860, 4294901760
      %v3105 = vsub.f32 %v2860, %v3104
      %3106 = vmatprep.subr.mxu0 %v3105
      %v3107 = vand.u32 %v2859, 4294901760
      %v3108 = vsub.f32 %v2859, %v3107
      %3109 = vmatpush1.msra.mxu0 %v3108
      %v3110 = vand.u32 %v2862, 4294901760
      %v3111 = vsub.f32 %v2862, %v3110
      %3112 = vmatprep.subr.mxu0 %v3111
      %v3113 = vand.u32 %v2861, 4294901760
      %v3114 = vsub.f32 %v2861, %v3113
      %3115 = vmatpush1.msra.mxu0 %v3114
      %v3116 = vand.u32 %v2864, 4294901760
      %v3117 = vsub.f32 %v2864, %v3116
      %3118 = vmatprep.subr.mxu0 %v3117
      %v3119 = vand.u32 %v2863, 4294901760
      %v3120 = vsub.f32 %v2863, %v3119
      %3121 = vmatpush1.msra.mxu0 %v3120
      %v3122 = vand.u32 %v2866, 4294901760
      %v3123 = vsub.f32 %v2866, %v3122
      %3124 = vmatprep.subr.mxu0 %v3123
      %v3125 = vand.u32 %v2865, 4294901760
      %v3126 = vsub.f32 %v2865, %v3125
      %3127 = vmatpush1.msra.mxu0 %v3126
      %v3128 = vand.u32 %v2876, 4294901760
      %v3129 = vsub.f32 %v2876, %v3128
      %3130 = vmatprep.subr.mxu0 %v3129
      %v3131 = vand.u32 %v2873, 4294901760
      %v3132 = vsub.f32 %v2873, %v3131
      %3133 = vmatpush1.msra.mxu0 %v3132
      %3134 = vmatprep.subr.mxu0 0.0
      %3135 = vmatpush1.msra.mxu0 0.0
      %3136 = vmatprep.subr.mxu0 0.0
      %3137 = vmatpush1.msra.mxu0 0.0
      %3138 = vmatprep.subr.mxu0 0.0
      %3139 = vmatpush1.msra.mxu0 0.0
      %3140 = vmatprep.subr.mxu0 0.0
      %3141 = vmatpush1.msra.mxu0 0.0
      %3142 = vmatprep.subr.mxu0 0.0
      %3143 = vmatpush1.msra.mxu0 0.0
      %3144 = vmatprep.subr.mxu0 0.0
      %3145 = vmatpush1.msra.mxu0 0.0
      %3146 = vmatprep.subr.mxu0 0.0
      %3147 = vmatpush1.msra.mxu0 0.0
      %3148 = vmatprep.subr.mxu0 0.0
      %3149 = vmatpush1.msra.mxu0 0.0
      %3150 = vmatprep.subr.mxu0 0.0
      %3151 = vmatpush1.msra.mxu0 0.0
      %3152 = vmatprep.subr.mxu0 0.0
      %3153 = vmatpush1.msra.mxu0 0.0
      %3154 = vmatprep.subr.mxu0 0.0
      %3155 = vmatpush1.msra.mxu0 0.0
      %3156 = vmatprep.subr.mxu0 0.0
      %3157 = vmatpush1.msra.mxu0 0.0
      %3158 = vmatprep.subr.mxu0 0.0
      %3159 = vmatpush1.msra.mxu0 0.0
      %3160 = vmatprep.subr.mxu0 0.0
      %3161 = vmatpush1.msra.mxu0 0.0
      %3162 = vmatprep.subr.mxu0 0.0
      %3163 = vmatpush1.msra.mxu0 0.0
      %3164 = vmatprep.subr.mxu0 0.0
      %3165 = vmatpush1.msra.mxu0 0.0
      %3166 = vmatprep.subr.mxu0 0.0
      %3167 = vmatpush1.msra.mxu0 0.0
      %3168 = vmatprep.subr.mxu0 0.0
      %3169 = vmatpush1.msra.mxu0 0.0
      %3170 = vmatprep.subr.mxu0 0.0
      %3171 = vmatpush1.msra.mxu0 0.0
      %3172 = vmatprep.subr.mxu0 0.0
      %3173 = vmatpush1.msra.mxu0 0.0
      %3174 = vmatprep.subr.mxu0 0.0
      %3175 = vmatpush1.msra.mxu0 0.0
      %3176 = vmatprep.subr.mxu0 0.0
      %3177 = vmatpush1.msra.mxu0 0.0
      %3178 = vmatprep.subr.mxu0 0.0
      %3179 = vmatpush1.msra.mxu0 0.0
      %3180 = vmatprep.subr.mxu0 0.0
      %3181 = vmatpush1.msra.mxu0 0.0
      %3182 = vmatprep.subr.mxu0 0.0
      %3183 = vmatpush1.msra.mxu0 0.0
      %3184 = vmatprep.subr.mxu0 0.0
      %3185 = vmatpush1.msra.mxu0 0.0
      %3186 = vmatprep.subr.mxu0 0.0
      %3187 = vmatpush1.msra.mxu0 0.0
      %3188 = vmatprep.mubr.f32.mxu0 0.0
      %v3189 = vand.u32 %v412, 4294901760
      %v3190 = vsub.f32 %v412, %v3189
      %3191 = vmatmul.mubr.f32.gmra.mrb[0].mxu0 %v3190
      %v3192 = vpop.f32.mrb[0].mxu0
      %v3193 = vadd.f32 %v3093, %v3192
      %v3194 = vpop.f32.mrb[0].mxu0
      %v3195 = vadd.f32 %v3095, %v3194
      %3196 = vmatprep.mubr.f32.mxu0 0.0
      %v3197 = vand.u32 %v415, 4294901760
      %v3198 = vsub.f32 %v415, %v3197
      %3199 = vmatmul.mubr.f32.gmra.mrb[0].mxu0 %v3198
      %v3200 = vpop.f32.mrb[0].mxu0
      %v3201 = vadd.f32 %v3100, %v3200
      %v3202 = vpop.f32.mrb[0].mxu0
      %v3203 = vadd.f32 %v3102, %v3202
      %3204 = vdwg.mxu0
      %v3205 = vand.u32 %v2860, 4294901760
      %3206 = vmatprep.subr.mxu0 %v3205
      %v3207 = vand.u32 %v2859, 4294901760
      %3208 = vmatpush1.msra.mxu0 %v3207
      %v3209 = vand.u32 %v2862, 4294901760
      %3210 = vmatprep.subr.mxu0 %v3209
      %v3211 = vand.u32 %v2861, 4294901760
      %3212 = vmatpush1.msra.mxu0 %v3211
      %v3213 = vand.u32 %v2864, 4294901760
      %3214 = vmatprep.subr.mxu0 %v3213
      %v3215 = vand.u32 %v2863, 4294901760
      %3216 = vmatpush1.msra.mxu0 %v3215
      %v3217 = vand.u32 %v2866, 4294901760
      %3218 = vmatprep.subr.mxu0 %v3217
      %v3219 = vand.u32 %v2865, 4294901760
      %3220 = vmatpush1.msra.mxu0 %v3219
      %v3221 = vand.u32 %v2876, 4294901760
      %3222 = vmatprep.subr.mxu0 %v3221
      %v3223 = vand.u32 %v2873, 4294901760
      %3224 = vmatpush1.msra.mxu0 %v3223
      %3225 = vmatprep.subr.mxu0 0.0
      %3226 = vmatpush1.msra.mxu0 0.0
      %3227 = vmatprep.subr.mxu0 0.0
      %3228 = vmatpush1.msra.mxu0 0.0
      %3229 = vmatprep.subr.mxu0 0.0
      %3230 = vmatpush1.msra.mxu0 0.0
      %3231 = vmatprep.subr.mxu0 0.0
      %3232 = vmatpush1.msra.mxu0 0.0
      %3233 = vmatprep.subr.mxu0 0.0
      %3234 = vmatpush1.msra.mxu0 0.0
      %3235 = vmatprep.subr.mxu0 0.0
      %3236 = vmatpush1.msra.mxu0 0.0
      %3237 = vmatprep.subr.mxu0 0.0
      %3238 = vmatpush1.msra.mxu0 0.0
      %3239 = vmatprep.subr.mxu0 0.0
      %3240 = vmatpush1.msra.mxu0 0.0
      %3241 = vmatprep.subr.mxu0 0.0
      %3242 = vmatpush1.msra.mxu0 0.0
      %3243 = vmatprep.subr.mxu0 0.0
      %3244 = vmatpush1.msra.mxu0 0.0
      %3245 = vmatprep.subr.mxu0 0.0
      %3246 = vmatpush1.msra.mxu0 0.0
      %3247 = vmatprep.subr.mxu0 0.0
      %3248 = vmatpush1.msra.mxu0 0.0
      %3249 = vmatprep.subr.mxu0 0.0
      %3250 = vmatpush1.msra.mxu0 0.0
      %3251 = vmatprep.subr.mxu0 0.0
      %3252 = vmatpush1.msra.mxu0 0.0
      %3253 = vmatprep.subr.mxu0 0.0
      %3254 = vmatpush1.msra.mxu0 0.0
      %3255 = vmatprep.subr.mxu0 0.0
      %3256 = vmatpush1.msra.mxu0 0.0
      %3257 = vmatprep.subr.mxu0 0.0
      %3258 = vmatpush1.msra.mxu0 0.0
      %3259 = vmatprep.subr.mxu0 0.0
      %3260 = vmatpush1.msra.mxu0 0.0
      %3261 = vmatprep.subr.mxu0 0.0
      %3262 = vmatpush1.msra.mxu0 0.0
      %3263 = vmatprep.subr.mxu0 0.0
      %3264 = vmatpush1.msra.mxu0 0.0
      %3265 = vmatprep.subr.mxu0 0.0
      %3266 = vmatpush1.msra.mxu0 0.0
      %3267 = vmatprep.subr.mxu0 0.0
      %3268 = vmatpush1.msra.mxu0 0.0
      %3269 = vmatprep.subr.mxu0 0.0
      %3270 = vmatpush1.msra.mxu0 0.0
      %3271 = vmatprep.subr.mxu0 0.0
      %3272 = vmatpush1.msra.mxu0 0.0
      %3273 = vmatprep.subr.mxu0 0.0
      %3274 = vmatpush1.msra.mxu0 0.0
      %3275 = vmatprep.subr.mxu0 0.0
      %3276 = vmatpush1.msra.mxu0 0.0
      %3277 = vmatprep.subr.mxu0 0.0
      %3278 = vmatpush1.msra.mxu0 0.0
      %3279 = vmatprep.mubr.f32.mxu0 0.0
      %v3280 = vand.u32 %v412, 4294901760
      %v3281 = vsub.f32 %v412, %v3280
      %v3282 = vand.u32 %v3281, 4294901760
      %3283 = vmatmul.mubr.f32.gmra.mrb[0].mxu0 %v3282
      %v3284 = vpop.f32.mrb[0].mxu0
      %v3285 = vadd.f32 %v3193, %v3284
      %v3286 = vpop.f32.mrb[0].mxu0
      %v3287 = vadd.f32 %v3195, %v3286
      %3288 = vmatprep.mubr.f32.mxu0 0.0
      %v3289 = vand.u32 %v415, 4294901760
      %v3290 = vsub.f32 %v415, %v3289
      %v3291 = vand.u32 %v3290, 4294901760
      %3292 = vmatmul.mubr.f32.gmra.mrb[0].mxu0 %v3291
      %v3293 = vpop.f32.mrb[0].mxu0
      %v3294 = vadd.f32 %v3201, %v3293
      %v3295 = vpop.f32.mrb[0].mxu0
      %v3296 = vadd.f32 %v3203, %v3295
      %3297 = vdwg.mxu0
      %v3298 = vand.u32 %v2860, 4294901760
      %v3299 = vsub.f32 %v2860, %v3298
      %v3300 = vand.u32 %v3299, 4294901760
      %3301 = vmatprep.subr.mxu0 %v3300
      %v3302 = vand.u32 %v2859, 4294901760
      %v3303 = vsub.f32 %v2859, %v3302
      %v3304 = vand.u32 %v3303, 4294901760
      %3305 = vmatpush1.msra.mxu0 %v3304
      %v3306 = vand.u32 %v2862, 4294901760
      %v3307 = vsub.f32 %v2862, %v3306
      %v3308 = vand.u32 %v3307, 4294901760
      %3309 = vmatprep.subr.mxu0 %v3308
      %v3310 = vand.u32 %v2861, 4294901760
      %v3311 = vsub.f32 %v2861, %v3310
      %v3312 = vand.u32 %v3311, 4294901760
      %3313 = vmatpush1.msra.mxu0 %v3312
      %v3314 = vand.u32 %v2864, 4294901760
      %v3315 = vsub.f32 %v2864, %v3314
      %v3316 = vand.u32 %v3315, 4294901760
      %3317 = vmatprep.subr.mxu0 %v3316
      %v3318 = vand.u32 %v2863, 4294901760
      %v3319 = vsub.f32 %v2863, %v3318
      %v3320 = vand.u32 %v3319, 4294901760
      %3321 = vmatpush1.msra.mxu0 %v3320
      %v3322 = vand.u32 %v2866, 4294901760
      %v3323 = vsub.f32 %v2866, %v3322
      %v3324 = vand.u32 %v3323, 4294901760
      %3325 = vmatprep.subr.mxu0 %v3324
      %v3326 = vand.u32 %v2865, 4294901760
      %v3327 = vsub.f32 %v2865, %v3326
      %v3328 = vand.u32 %v3327, 4294901760
      %3329 = vmatpush1.msra.mxu0 %v3328
      %v3330 = vand.u32 %v2876, 4294901760
      %v3331 = vsub.f32 %v2876, %v3330
      %v3332 = vand.u32 %v3331, 4294901760
      %3333 = vmatprep.subr.mxu0 %v3332
      %v3334 = vand.u32 %v2873, 4294901760
      %v3335 = vsub.f32 %v2873, %v3334
      %v3336 = vand.u32 %v3335, 4294901760
      %3337 = vmatpush1.msra.mxu0 %v3336
      %3338 = vmatprep.subr.mxu0 0.0
      %3339 = vmatpush1.msra.mxu0 0.0
      %3340 = vmatprep.subr.mxu0 0.0
      %3341 = vmatpush1.msra.mxu0 0.0
      %3342 = vmatprep.subr.mxu0 0.0
      %3343 = vmatpush1.msra.mxu0 0.0
      %3344 = vmatprep.subr.mxu0 0.0
      %3345 = vmatpush1.msra.mxu0 0.0
      %3346 = vmatprep.subr.mxu0 0.0
      %3347 = vmatpush1.msra.mxu0 0.0
      %3348 = vmatprep.subr.mxu0 0.0
      %3349 = vmatpush1.msra.mxu0 0.0
      %3350 = vmatprep.subr.mxu0 0.0
      %3351 = vmatpush1.msra.mxu0 0.0
      %3352 = vmatprep.subr.mxu0 0.0
      %3353 = vmatpush1.msra.mxu0 0.0
      %3354 = vmatprep.subr.mxu0 0.0
      %3355 = vmatpush1.msra.mxu0 0.0
      %3356 = vmatprep.subr.mxu0 0.0
      %3357 = vmatpush1.msra.mxu0 0.0
      %3358 = vmatprep.subr.mxu0 0.0
      %3359 = vmatpush1.msra.mxu0 0.0
      %3360 = vmatprep.subr.mxu0 0.0
      %3361 = vmatpush1.msra.mxu0 0.0
      %3362 = vmatprep.subr.mxu0 0.0
      %3363 = vmatpush1.msra.mxu0 0.0
      %3364 = vmatprep.subr.mxu0 0.0
      %3365 = vmatpush1.msra.mxu0 0.0
      %3366 = vmatprep.subr.mxu0 0.0
      %3367 = vmatpush1.msra.mxu0 0.0
      %3368 = vmatprep.subr.mxu0 0.0
      %3369 = vmatpush1.msra.mxu0 0.0
      %3370 = vmatprep.subr.mxu0 0.0
      %3371 = vmatpush1.msra.mxu0 0.0
      %3372 = vmatprep.subr.mxu0 0.0
      %3373 = vmatpush1.msra.mxu0 0.0
      %3374 = vmatprep.subr.mxu0 0.0
      %3375 = vmatpush1.msra.mxu0 0.0
      %3376 = vmatprep.subr.mxu0 0.0
      %3377 = vmatpush1.msra.mxu0 0.0
      %3378 = vmatprep.subr.mxu0 0.0
      %3379 = vmatpush1.msra.mxu0 0.0
      %3380 = vmatprep.subr.mxu0 0.0
      %3381 = vmatpush1.msra.mxu0 0.0
      %3382 = vmatprep.subr.mxu0 0.0
      %3383 = vmatpush1.msra.mxu0 0.0
      %3384 = vmatprep.subr.mxu0 0.0
      %3385 = vmatpush1.msra.mxu0 0.0
      %3386 = vmatprep.subr.mxu0 0.0
      %3387 = vmatpush1.msra.mxu0 0.0
      %3388 = vmatprep.subr.mxu0 0.0
      %3389 = vmatpush1.msra.mxu0 0.0
      %3390 = vmatprep.subr.mxu0 0.0
      %3391 = vmatpush1.msra.mxu0 0.0
      %3392 = vmatprep.mubr.f32.mxu0 0.0
      %v3393 = vand.u32 %v412, 4294901760
      %3394 = vmatmul.mubr.f32.gmra.mrb[0].mxu0 %v3393
      %v3395 = vpop.f32.mrb[0].mxu0
      %v3396 = vadd.f32 %v3285, %v3395
      %v3397 = vpop.f32.mrb[0].mxu0
      %v3398 = vadd.f32 %v3287, %v3397
      %3399 = vmatprep.mubr.f32.mxu0 0.0
      %v3400 = vand.u32 %v415, 4294901760
      %3401 = vmatmul.mubr.f32.gmra.mrb[0].mxu0 %v3400
      %v3402 = vpop.f32.mrb[0].mxu0
      %v3403 = vadd.f32 %v3294, %v3402
      %v3404 = vpop.f32.mrb[0].mxu0
      %v3405 = vadd.f32 %v3296, %v3404
      %3406 = vdwg.mxu0
      %v3407 = vand.u32 %v2860, 4294901760
      %3408 = vmatprep.subr.mxu0 %v3407
      %v3409 = vand.u32 %v2859, 4294901760
      %3410 = vmatpush1.msra.mxu0 %v3409
      %v3411 = vand.u32 %v2862, 4294901760
      %3412 = vmatprep.subr.mxu0 %v3411
      %v3413 = vand.u32 %v2861, 4294901760
      %3414 = vmatpush1.msra.mxu0 %v3413
      %v3415 = vand.u32 %v2864, 4294901760
      %3416 = vmatprep.subr.mxu0 %v3415
      %v3417 = vand.u32 %v2863, 4294901760
      %3418 = vmatpush1.msra.mxu0 %v3417
      %v3419 = vand.u32 %v2866, 4294901760
      %3420 = vmatprep.subr.mxu0 %v3419
      %v3421 = vand.u32 %v2865, 4294901760
      %3422 = vmatpush1.msra.mxu0 %v3421
      %v3423 = vand.u32 %v2876, 4294901760
      %3424 = vmatprep.subr.mxu0 %v3423
      %v3425 = vand.u32 %v2873, 4294901760
      %3426 = vmatpush1.msra.mxu0 %v3425
      %3427 = vmatprep.subr.mxu0 0.0
      %3428 = vmatpush1.msra.mxu0 0.0
      %3429 = vmatprep.subr.mxu0 0.0
      %3430 = vmatpush1.msra.mxu0 0.0
      %3431 = vmatprep.subr.mxu0 0.0
      %3432 = vmatpush1.msra.mxu0 0.0
      %3433 = vmatprep.subr.mxu0 0.0
      %3434 = vmatpush1.msra.mxu0 0.0
      %3435 = vmatprep.subr.mxu0 0.0
      %3436 = vmatpush1.msra.mxu0 0.0
      %3437 = vmatprep.subr.mxu0 0.0
      %3438 = vmatpush1.msra.mxu0 0.0
      %3439 = vmatprep.subr.mxu0 0.0
      %3440 = vmatpush1.msra.mxu0 0.0
      %3441 = vmatprep.subr.mxu0 0.0
      %3442 = vmatpush1.msra.mxu0 0.0
      %3443 = vmatprep.subr.mxu0 0.0
      %3444 = vmatpush1.msra.mxu0 0.0
      %3445 = vmatprep.subr.mxu0 0.0
      %3446 = vmatpush1.msra.mxu0 0.0
      %3447 = vmatprep.subr.mxu0 0.0
      %3448 = vmatpush1.msra.mxu0 0.0
      %3449 = vmatprep.subr.mxu0 0.0
      %3450 = vmatpush1.msra.mxu0 0.0
      %3451 = vmatprep.subr.mxu0 0.0
      %3452 = vmatpush1.msra.mxu0 0.0
      %3453 = vmatprep.subr.mxu0 0.0
      %3454 = vmatpush1.msra.mxu0 0.0
      %3455 = vmatprep.subr.mxu0 0.0
      %3456 = vmatpush1.msra.mxu0 0.0
      %3457 = vmatprep.subr.mxu0 0.0
      %3458 = vmatpush1.msra.mxu0 0.0
      %3459 = vmatprep.subr.mxu0 0.0
      %3460 = vmatpush1.msra.mxu0 0.0
      %3461 = vmatprep.subr.mxu0 0.0
      %3462 = vmatpush1.msra.mxu0 0.0
      %3463 = vmatprep.subr.mxu0 0.0
      %3464 = vmatpush1.msra.mxu0 0.0
      %3465 = vmatprep.subr.mxu0 0.0
      %3466 = vmatpush1.msra.mxu0 0.0
      %3467 = vmatprep.subr.mxu0 0.0
      %3468 = vmatpush1.msra.mxu0 0.0
      %3469 = vmatprep.subr.mxu0 0.0
      %3470 = vmatpush1.msra.mxu0 0.0
      %3471 = vmatprep.subr.mxu0 0.0
      %3472 = vmatpush1.msra.mxu0 0.0
      %3473 = vmatprep.subr.mxu0 0.0
      %3474 = vmatpush1.msra.mxu0 0.0
      %3475 = vmatprep.subr.mxu0 0.0
      %3476 = vmatpush1.msra.mxu0 0.0
      %3477 = vmatprep.subr.mxu0 0.0
      %3478 = vmatpush1.msra.mxu0 0.0
      %3479 = vmatprep.subr.mxu0 0.0
      %3480 = vmatpush1.msra.mxu0 0.0
      %3481 = vmatprep.mubr.f32.mxu0 0.0
      %v3482 = vand.u32 %v412, 4294901760
      %3483 = vmatmul.mubr.f32.gmra.mrb[0].mxu0 %v3482
      %v3484 = vpop.f32.mrb[0].mxu0
      %v3485 = vadd.f32 %v3396, %v3484
      %v3486 = vpop.f32.mrb[0].mxu0
      %v3487 = vadd.f32 %v3398, %v3486
      %3488 = vmatprep.mubr.f32.mxu0 0.0
      %v3489 = vand.u32 %v415, 4294901760
      %3490 = vmatmul.mubr.f32.gmra.mrb[0].mxu0 %v3489
      %v3491 = vpop.f32.mrb[0].mxu0
      %v3492 = vadd.f32 %v3403, %v3491
      %v3493 = vpop.f32.mrb[0].mxu0
      %v3494 = vadd.f32 %v3405, %v3493
      %3495 = vdwg.mxu0
      %v3496 = vxor.u32 %v3485, 2147483648
      %v3497 = vxor.u32 %v3487, 2147483648
      %v3498 = vmul.f32 %v3496, 1.442695
      %v3499 = vpow.pop %v3498
      %v3500 = vmul.f32 %v3497, 1.442695
      %v3501 = vpow.pop %v3500
      %v3502 = vadd.f32 %v3499, 1.0
      %v3503 = vadd.f32 %v3501, 1.0
      %v3504 = vrcp.pop %v3502
      %v3505 = vmul.f32 1.0, %v3504
      %v3506 = vrcp.pop %v3503
      %v3507 = vmul.f32 1.0, %v3506
      %v3508 = vtanh.pop %v3492
      %v3509 = vtanh.pop %v3494
      %v3510 = vxor.u32 %v3492, 2147483648
      %v3511 = vxor.u32 %v3494, 2147483648
      %v3512 = vmul.f32 %v3510, 1.442695
      %v3513 = vpow.pop %v3512
      %v3514 = vmul.f32 %v3511, 1.442695
      %v3515 = vpow.pop %v3514
      %v3516 = vadd.f32 %v3513, 1.0
      %v3517 = vadd.f32 %v3515, 1.0
      %v3518 = vrcp.pop %v3516
      %v3519 = vmul.f32 1.0, %v3518
      %v3520 = vrcp.pop %v3517
      %v3521 = vmul.f32 1.0, %v3520
      %v3522 = vmul.f32 %v3505, %v2751
      %v3523 = vmul.f32 %v3507, %v2752
      %v3524 = vmul.f32 %v3505, %v3508
      %v3525 = vmul.f32 %v3507, %v3509
      %v3528 = vrot.slane %v3524, 4
      %v3529 = vrot.slane %v3525, 4
      %v3532 = vadd.f32 %v3522, %v3528
      %v3533 = vadd.f32 %v3523, %v3529
      %v3534 = vtanh.pop %v3532
      %v3535 = vtanh.pop %v3533
      %v3536 = vmul.f32 %v3519, %v3534
      %v3537 = vmul.f32 %v3521, %v3535
      %v3538 = vsel %vm397, %v2759, %v3536
      %v3539 = vsel %vm397, %v2760, %v3537
      %3540 = vst [vmem:[%s205 + $0x10] sm:$0xff] %v3538
      %3541 = vst [vmem:[%s205 + $0x18] sm:$0xff] %v3539
      %v3544 = vrot.slane %v3536, 4
      %v3545 = vrot.slane %v3537, 4
      %3548 = vrot.lane.b32.xlu0 %v3544, 17
      %v3549 = vpop.permute.xlu0 %3548
      %3550 = vrot.lane.b32.xlu0 %v3545, 17
      %v3551 = vpop.permute.xlu0 %3550
      %v3552 = vsel %vm217, %v3549, %v3551
      %v3553 = vsel %vm217, %v3551, %v3549
      %v3554 = vld [vmem:[%s2] ss:$8 sm:$0x3]
      %v3556 = vlaneseq
      %v3557 = vshrl.u32 %v3556, 7
      %v3558 = vsub.s32 0, %v3557
      %v3559 = vrot.slane %v3554, %v3558
      %v3560 = vlaneseq
      %v3561 = vshrl.u32 %v3560, 7
      %v3562 = vsub.s32 1, %v3561
      %v3563 = vrot.slane %v3554, %v3562
      %v3566 = vmul.f32 %v3553, %v3559
      %v3567 = vmul.f32 %v3552, %v3563
      %3568 = vrot.lane.b32.xlu0 %v3544, 16
      %v3569 = vpop.permute.xlu0 %3568
      %3570 = vrot.lane.b32.xlu0 %v3545, 16
      %v3571 = vpop.permute.xlu0 %3570
      %v3572 = vsel %vm234, %v3569, %v3571
      %v3573 = vsel %vm234, %v3571, %v3569
      %v3574 = vld [vmem:[%s235] ss:$8 sm:$0x3]
      %v3576 = vlaneseq
      %v3577 = vshrl.u32 %v3576, 7
      %v3578 = vsub.s32 0, %v3577
      %v3579 = vrot.slane %v3574, %v3578
      %v3580 = vlaneseq
      %v3581 = vshrl.u32 %v3580, 7
      %v3582 = vsub.s32 1, %v3581
      %v3583 = vrot.slane %v3574, %v3582
      %v3586 = vmul.f32 %v3573, %v3579
      %v3587 = vmul.f32 %v3572, %v3583
      %3588 = vrot.lane.b32.xlu0 %v3544, 15
      %v3589 = vpop.permute.xlu0 %3588
      %3590 = vrot.lane.b32.xlu0 %v3545, 15
      %v3591 = vpop.permute.xlu0 %3590
      %v3592 = vsel %vm252, %v3589, %v3591
      %v3593 = vsel %vm252, %v3591, %v3589
      %v3594 = vld [vmem:[%s253] ss:$8 sm:$0x3]
      %v3596 = vlaneseq
      %v3597 = vshrl.u32 %v3596, 7
      %v3598 = vsub.s32 0, %v3597
      %v3599 = vrot.slane %v3594, %v3598
      %v3600 = vlaneseq
      %v3601 = vshrl.u32 %v3600, 7
      %v3602 = vsub.s32 1, %v3601
      %v3603 = vrot.slane %v3594, %v3602
      %v3606 = vmul.f32 %v3593, %v3599
      %v3607 = vmul.f32 %v3592, %v3603
      %3608 = vrot.lane.b32.xlu0 %v3544, 1
      %v3609 = vpop.permute.xlu0 %3608
      %3610 = vrot.lane.b32.xlu0 %v3545, 1
      %v3611 = vpop.permute.xlu0 %3610
      %v3612 = vsel %vm270, %v3609, %v3611
      %v3613 = vsel %vm270, %v3611, %v3609
      %v3614 = vld [vmem:[%s271] ss:$8 sm:$0x3]
      %v3616 = vlaneseq
      %v3617 = vshrl.u32 %v3616, 7
      %v3618 = vsub.s32 0, %v3617
      %v3619 = vrot.slane %v3614, %v3618
      %v3620 = vlaneseq
      %v3621 = vshrl.u32 %v3620, 7
      %v3622 = vsub.s32 1, %v3621
      %v3623 = vrot.slane %v3614, %v3622
      %v3626 = vmul.f32 %v3613, %v3619
      %v3627 = vmul.f32 %v3612, %v3623
      %v3628 = vld [vmem:[%s286] ss:$8 sm:$0x3]
      %v3630 = vlaneseq
      %v3631 = vshrl.u32 %v3630, 7
      %v3632 = vsub.s32 0, %v3631
      %v3633 = vrot.slane %v3628, %v3632
      %v3634 = vlaneseq
      %v3635 = vshrl.u32 %v3634, 7
      %v3636 = vsub.s32 1, %v3635
      %v3637 = vrot.slane %v3628, %v3636
      %v3640 = vmul.f32 %v3536, %v3633
      %v3641 = vmul.f32 %v3537, %v3637
      %3642 = vrot.lane.b32.xlu0 %v3544, 127
      %v3643 = vpop.permute.xlu0 %3642
      %3644 = vrot.lane.b32.xlu0 %v3545, 127
      %v3645 = vpop.permute.xlu0 %3644
      %v3646 = vsel %vm303, %v3643, %v3645
      %v3647 = vsel %vm303, %v3645, %v3643
      %v3648 = vld [vmem:[%s304] ss:$8 sm:$0x3]
      %v3650 = vlaneseq
      %v3651 = vshrl.u32 %v3650, 7
      %v3652 = vsub.s32 0, %v3651
      %v3653 = vrot.slane %v3648, %v3652
      %v3654 = vlaneseq
      %v3655 = vshrl.u32 %v3654, 7
      %v3656 = vsub.s32 1, %v3655
      %v3657 = vrot.slane %v3648, %v3656
      %v3660 = vmul.f32 %v3646, %v3653
      %v3661 = vmul.f32 %v3647, %v3657
      %3662 = vrot.lane.b32.xlu0 %v3544, 113
      %v3663 = vpop.permute.xlu0 %3662
      %3664 = vrot.lane.b32.xlu0 %v3545, 113
      %v3665 = vpop.permute.xlu0 %3664
      %v3666 = vsel %vm321, %v3663, %v3665
      %v3667 = vsel %vm321, %v3665, %v3663
      %v3668 = vld [vmem:[%s322] ss:$8 sm:$0x3]
      %v3670 = vlaneseq
      %v3671 = vshrl.u32 %v3670, 7
      %v3672 = vsub.s32 0, %v3671
      %v3673 = vrot.slane %v3668, %v3672
      %v3674 = vlaneseq
      %v3675 = vshrl.u32 %v3674, 7
      %v3676 = vsub.s32 1, %v3675
      %v3677 = vrot.slane %v3668, %v3676
      %v3680 = vmul.f32 %v3666, %v3673
      %v3681 = vmul.f32 %v3667, %v3677
      %3682 = vrot.lane.b32.xlu0 %v3544, 112
      %v3683 = vpop.permute.xlu0 %3682
      %3684 = vrot.lane.b32.xlu0 %v3545, 112
      %v3685 = vpop.permute.xlu0 %3684
      %v3686 = vsel %vm339, %v3683, %v3685
      %v3687 = vsel %vm339, %v3685, %v3683
      %v3688 = vld [vmem:[%s340] ss:$8 sm:$0x3]
      %v3690 = vlaneseq
      %v3691 = vshrl.u32 %v3690, 7
      %v3692 = vsub.s32 0, %v3691
      %v3693 = vrot.slane %v3688, %v3692
      %v3694 = vlaneseq
      %v3695 = vshrl.u32 %v3694, 7
      %v3696 = vsub.s32 1, %v3695
      %v3697 = vrot.slane %v3688, %v3696
      %v3700 = vmul.f32 %v3686, %v3693
      %v3701 = vmul.f32 %v3687, %v3697
      %3702 = vrot.lane.b32.xlu0 %v3544, 111
      %v3703 = vpop.permute.xlu0 %3702
      %3704 = vrot.lane.b32.xlu0 %v3545, 111
      %v3705 = vpop.permute.xlu0 %3704
      %v3706 = vsel %vm357, %v3703, %v3705
      %v3707 = vsel %vm357, %v3705, %v3703
      %v3708 = vld [vmem:[%s358] ss:$8 sm:$0x3]
      %v3710 = vlaneseq
      %v3711 = vshrl.u32 %v3710, 7
      %v3712 = vsub.s32 0, %v3711
      %v3713 = vrot.slane %v3708, %v3712
      %v3714 = vlaneseq
      %v3715 = vshrl.u32 %v3714, 7
      %v3716 = vsub.s32 1, %v3715
      %v3717 = vrot.slane %v3708, %v3716
      %v3720 = vmul.f32 %v3706, %v3713
      %v3721 = vmul.f32 %v3707, %v3717
      %v3724 = vrot.slane %v3586, 4
      %v3725 = vrot.slane %v3587, 4
      %v3730 = vrot.slane %v3626, 4
      %v3731 = vrot.slane %v3627, 4
      %v3736 = vrot.slane %v3640, 4
      %v3737 = vrot.slane %v3641, 4
      %v3742 = vrot.slane %v3660, 4
      %v3743 = vrot.slane %v3661, 4
      %v3748 = vrot.slane %v3700, 4
      %v3749 = vrot.slane %v3701, 4
      %v3752 = vsel %vm397, %v3566, %v3724
      %v3753 = vsel %vm397, %v3567, %v3725
      %v3754 = vsel %vm397, %v3606, %v3730
      %v3755 = vsel %vm397, %v3607, %v3731
      %v3756 = vsel %vm397, %v3736, %v3742
      %v3757 = vsel %vm397, %v3737, %v3743
      %v3758 = vsel %vm397, %v3680, %v3748
      %v3759 = vsel %vm397, %v3681, %v3749
      %s3760 = scalar_lea.vmem %s200, 128
      %v3761 = vld [vmem:[%s3760] sm:$0xff]
      %v3762 = vld [vmem:[%s3760 + $0x8] sm:$0xff]
      %v3763 = vld [vmem:[%s3760 + $0x10] sm:$0xff]
      %v3764 = vld [vmem:[%s3760 + $0x18] sm:$0xff]
      %v3766 = vsel %vm397, %v3720, 0
      %v3769 = vsel %vm397, %v3721, 0
      %v3771 = vand.u32 %v3753, 4294901760
      %3772 = vmatprep.subr.mxu0 %v3771
      %v3773 = vand.u32 %v3752, 4294901760
      %3774 = vmatpush1.msra.mxu0 %v3773
      %v3775 = vand.u32 %v3755, 4294901760
      %3776 = vmatprep.subr.mxu0 %v3775
      %v3777 = vand.u32 %v3754, 4294901760
      %3778 = vmatpush1.msra.mxu0 %v3777
      %v3779 = vand.u32 %v3757, 4294901760
      %3780 = vmatprep.subr.mxu0 %v3779
      %v3781 = vand.u32 %v3756, 4294901760
      %3782 = vmatpush1.msra.mxu0 %v3781
      %v3783 = vand.u32 %v3759, 4294901760
      %3784 = vmatprep.subr.mxu0 %v3783
      %v3785 = vand.u32 %v3758, 4294901760
      %3786 = vmatpush1.msra.mxu0 %v3785
      %v3787 = vand.u32 %v3769, 4294901760
      %3788 = vmatprep.subr.mxu0 %v3787
      %v3789 = vand.u32 %v3766, 4294901760
      %3790 = vmatpush1.msra.mxu0 %v3789
      %3791 = vmatprep.subr.mxu0 0.0
      %3792 = vmatpush1.msra.mxu0 0.0
      %3793 = vmatprep.subr.mxu0 0.0
      %3794 = vmatpush1.msra.mxu0 0.0
      %3795 = vmatprep.subr.mxu0 0.0
      %3796 = vmatpush1.msra.mxu0 0.0
      %3797 = vmatprep.subr.mxu0 0.0
      %3798 = vmatpush1.msra.mxu0 0.0
      %3799 = vmatprep.subr.mxu0 0.0
      %3800 = vmatpush1.msra.mxu0 0.0
      %3801 = vmatprep.subr.mxu0 0.0
      %3802 = vmatpush1.msra.mxu0 0.0
      %3803 = vmatprep.subr.mxu0 0.0
      %3804 = vmatpush1.msra.mxu0 0.0
      %3805 = vmatprep.subr.mxu0 0.0
      %3806 = vmatpush1.msra.mxu0 0.0
      %3807 = vmatprep.subr.mxu0 0.0
      %3808 = vmatpush1.msra.mxu0 0.0
      %3809 = vmatprep.subr.mxu0 0.0
      %3810 = vmatpush1.msra.mxu0 0.0
      %3811 = vmatprep.subr.mxu0 0.0
      %3812 = vmatpush1.msra.mxu0 0.0
      %3813 = vmatprep.subr.mxu0 0.0
      %3814 = vmatpush1.msra.mxu0 0.0
      %3815 = vmatprep.subr.mxu0 0.0
      %3816 = vmatpush1.msra.mxu0 0.0
      %3817 = vmatprep.subr.mxu0 0.0
      %3818 = vmatpush1.msra.mxu0 0.0
      %3819 = vmatprep.subr.mxu0 0.0
      %3820 = vmatpush1.msra.mxu0 0.0
      %3821 = vmatprep.subr.mxu0 0.0
      %3822 = vmatpush1.msra.mxu0 0.0
      %3823 = vmatprep.subr.mxu0 0.0
      %3824 = vmatpush1.msra.mxu0 0.0
      %3825 = vmatprep.subr.mxu0 0.0
      %3826 = vmatpush1.msra.mxu0 0.0
      %3827 = vmatprep.subr.mxu0 0.0
      %3828 = vmatpush1.msra.mxu0 0.0
      %3829 = vmatprep.subr.mxu0 0.0
      %3830 = vmatpush1.msra.mxu0 0.0
      %3831 = vmatprep.subr.mxu0 0.0
      %3832 = vmatpush1.msra.mxu0 0.0
      %3833 = vmatprep.subr.mxu0 0.0
      %3834 = vmatpush1.msra.mxu0 0.0
      %3835 = vmatprep.subr.mxu0 0.0
      %3836 = vmatpush1.msra.mxu0 0.0
      %3837 = vmatprep.subr.mxu0 0.0
      %3838 = vmatpush1.msra.mxu0 0.0
      %3839 = vmatprep.subr.mxu0 0.0
      %3840 = vmatpush1.msra.mxu0 0.0
      %3841 = vmatprep.subr.mxu0 0.0
      %3842 = vmatpush1.msra.mxu0 0.0
      %3843 = vmatprep.subr.mxu0 0.0
      %3844 = vmatpush1.msra.mxu0 0.0
      %3845 = vmatprep.mubr.f32.mxu0 0.0
      %v3846 = vand.u32 %v412, 4294901760
      %v3847 = vsub.f32 %v412, %v3846
      %v3848 = vand.u32 %v3847, 4294901760
      %v3849 = vsub.f32 %v3847, %v3848
      %v3850 = vand.u32 %v3849, 4294901760
      %3851 = vmatmul.mubr.f32.gmra.mrb[0].mxu0 %v3850
      %v3852 = vpop.f32.mrb[0].mxu0
      %v3853 = vadd.f32 %v3761, %v3852
      %v3854 = vpop.f32.mrb[0].mxu0
      %v3855 = vadd.f32 %v3762, %v3854
      %3856 = vmatprep.mubr.f32.mxu0 0.0
      %v3857 = vand.u32 %v415, 4294901760
      %v3858 = vsub.f32 %v415, %v3857
      %v3859 = vand.u32 %v3858, 4294901760
      %v3860 = vsub.f32 %v3858, %v3859
      %v3861 = vand.u32 %v3860, 4294901760
      %3862 = vmatmul.mubr.f32.gmra.mrb[0].mxu0 %v3861
      %v3863 = vpop.f32.mrb[0].mxu0
      %v3864 = vadd.f32 %v3763, %v3863
      %v3865 = vpop.f32.mrb[0].mxu0
      %v3866 = vadd.f32 %v3764, %v3865
      %3867 = vdwg.mxu0
      %v3868 = vand.u32 %v3753, 4294901760
      %v3869 = vsub.f32 %v3753, %v3868
      %v3870 = vand.u32 %v3869, 4294901760
      %v3871 = vsub.f32 %v3869, %v3870
      %v3872 = vand.u32 %v3871, 4294901760
      %3873 = vmatprep.subr.mxu0 %v3872
      %v3874 = vand.u32 %v3752, 4294901760
      %v3875 = vsub.f32 %v3752, %v3874
      %v3876 = vand.u32 %v3875, 4294901760
      %v3877 = vsub.f32 %v3875, %v3876
      %v3878 = vand.u32 %v3877, 4294901760
      %3879 = vmatpush1.msra.mxu0 %v3878
      %v3880 = vand.u32 %v3755, 4294901760
      %v3881 = vsub.f32 %v3755, %v3880
      %v3882 = vand.u32 %v3881, 4294901760
      %v3883 = vsub.f32 %v3881, %v3882
      %v3884 = vand.u32 %v3883, 4294901760
      %3885 = vmatprep.subr.mxu0 %v3884
      %v3886 = vand.u32 %v3754, 4294901760
      %v3887 = vsub.f32 %v3754, %v3886
      %v3888 = vand.u32 %v3887, 4294901760
      %v3889 = vsub.f32 %v3887, %v3888
      %v3890 = vand.u32 %v3889, 4294901760
      %3891 = vmatpush1.msra.mxu0 %v3890
      %v3892 = vand.u32 %v3757, 4294901760
      %v3893 = vsub.f32 %v3757, %v3892
      %v3894 = vand.u32 %v3893, 4294901760
      %v3895 = vsub.f32 %v3893, %v3894
      %v3896 = vand.u32 %v3895, 4294901760
      %3897 = vmatprep.subr.mxu0 %v3896
      %v3898 = vand.u32 %v3756, 4294901760
      %v3899 = vsub.f32 %v3756, %v3898
      %v3900 = vand.u32 %v3899, 4294901760
      %v3901 = vsub.f32 %v3899, %v3900
      %v3902 = vand.u32 %v3901, 4294901760
      %3903 = vmatpush1.msra.mxu0 %v3902
      %v3904 = vand.u32 %v3759, 4294901760
      %v3905 = vsub.f32 %v3759, %v3904
      %v3906 = vand.u32 %v3905, 4294901760
      %v3907 = vsub.f32 %v3905, %v3906
      %v3908 = vand.u32 %v3907, 4294901760
      %3909 = vmatprep.subr.mxu0 %v3908
      %v3910 = vand.u32 %v3758, 4294901760
      %v3911 = vsub.f32 %v3758, %v3910
      %v3912 = vand.u32 %v3911, 4294901760
      %v3913 = vsub.f32 %v3911, %v3912
      %v3914 = vand.u32 %v3913, 4294901760
      %3915 = vmatpush1.msra.mxu0 %v3914
      %v3916 = vand.u32 %v3769, 4294901760
      %v3917 = vsub.f32 %v3769, %v3916
      %v3918 = vand.u32 %v3917, 4294901760
      %v3919 = vsub.f32 %v3917, %v3918
      %v3920 = vand.u32 %v3919, 4294901760
      %3921 = vmatprep.subr.mxu0 %v3920
      %v3922 = vand.u32 %v3766, 4294901760
      %v3923 = vsub.f32 %v3766, %v3922
      %v3924 = vand.u32 %v3923, 4294901760
      %v3925 = vsub.f32 %v3923, %v3924
      %v3926 = vand.u32 %v3925, 4294901760
      %3927 = vmatpush1.msra.mxu0 %v3926
      %3928 = vmatprep.subr.mxu0 0.0
      %3929 = vmatpush1.msra.mxu0 0.0
      %3930 = vmatprep.subr.mxu0 0.0
      %3931 = vmatpush1.msra.mxu0 0.0
      %3932 = vmatprep.subr.mxu0 0.0
      %3933 = vmatpush1.msra.mxu0 0.0
      %3934 = vmatprep.subr.mxu0 0.0
      %3935 = vmatpush1.msra.mxu0 0.0
      %3936 = vmatprep.subr.mxu0 0.0
      %3937 = vmatpush1.msra.mxu0 0.0
      %3938 = vmatprep.subr.mxu0 0.0
      %3939 = vmatpush1.msra.mxu0 0.0
      %3940 = vmatprep.subr.mxu0 0.0
      %3941 = vmatpush1.msra.mxu0 0.0
      %3942 = vmatprep.subr.mxu0 0.0
      %3943 = vmatpush1.msra.mxu0 0.0
      %3944 = vmatprep.subr.mxu0 0.0
      %3945 = vmatpush1.msra.mxu0 0.0
      %3946 = vmatprep.subr.mxu0 0.0
      %3947 = vmatpush1.msra.mxu0 0.0
      %3948 = vmatprep.subr.mxu0 0.0
      %3949 = vmatpush1.msra.mxu0 0.0
      %3950 = vmatprep.subr.mxu0 0.0
      %3951 = vmatpush1.msra.mxu0 0.0
      %3952 = vmatprep.subr.mxu0 0.0
      %3953 = vmatpush1.msra.mxu0 0.0
      %3954 = vmatprep.subr.mxu0 0.0
      %3955 = vmatpush1.msra.mxu0 0.0
      %3956 = vmatprep.subr.mxu0 0.0
      %3957 = vmatpush1.msra.mxu0 0.0
      %3958 = vmatprep.subr.mxu0 0.0
      %3959 = vmatpush1.msra.mxu0 0.0
      %3960 = vmatprep.subr.mxu0 0.0
      %3961 = vmatpush1.msra.mxu0 0.0
      %3962 = vmatprep.subr.mxu0 0.0
      %3963 = vmatpush1.msra.mxu0 0.0
      %3964 = vmatprep.subr.mxu0 0.0
      %3965 = vmatpush1.msra.mxu0 0.0
      %3966 = vmatprep.subr.mxu0 0.0
      %3967 = vmatpush1.msra.mxu0 0.0
      %3968 = vmatprep.subr.mxu0 0.0
      %3969 = vmatpush1.msra.mxu0 0.0
      %3970 = vmatprep.subr.mxu0 0.0
      %3971 = vmatpush1.msra.mxu0 0.0
      %3972 = vmatprep.subr.mxu0 0.0
      %3973 = vmatpush1.msra.mxu0 0.0
      %3974 = vmatprep.subr.mxu0 0.0
      %3975 = vmatpush1.msra.mxu0 0.0
      %3976 = vmatprep.subr.mxu0 0.0
      %3977 = vmatpush1.msra.mxu0 0.0
      %3978 = vmatprep.subr.mxu0 0.0
      %3979 = vmatpush1.msra.mxu0 0.0
      %3980 = vmatprep.subr.mxu0 0.0
      %3981 = vmatpush1.msra.mxu0 0.0
      %3982 = vmatprep.mubr.f32.mxu0 0.0
      %v3983 = vand.u32 %v412, 4294901760
      %3984 = vmatmul.mubr.f32.gmra.mrb[0].mxu0 %v3983
      %v3985 = vpop.f32.mrb[0].mxu0
      %v3986 = vadd.f32 %v3853, %v3985
      %v3987 = vpop.f32.mrb[0].mxu0
      %v3988 = vadd.f32 %v3855, %v3987
      %3989 = vmatprep.mubr.f32.mxu0 0.0
      %v3990 = vand.u32 %v415, 4294901760
      %3991 = vmatmul.mubr.f32.gmra.mrb[0].mxu0 %v3990
      %v3992 = vpop.f32.mrb[0].mxu0
      %v3993 = vadd.f32 %v3864, %v3992
      %v3994 = vpop.f32.mrb[0].mxu0
      %v3995 = vadd.f32 %v3866, %v3994
      %3996 = vdwg.mxu0
      %v3997 = vand.u32 %v3753, 4294901760
      %v3998 = vsub.f32 %v3753, %v3997
      %3999 = vmatprep.subr.mxu0 %v3998
      %v4000 = vand.u32 %v3752, 4294901760
      %v4001 = vsub.f32 %v3752, %v4000
      %4002 = vmatpush1.msra.mxu0 %v4001
      %v4003 = vand.u32 %v3755, 4294901760
      %v4004 = vsub.f32 %v3755, %v4003
      %4005 = vmatprep.subr.mxu0 %v4004
      %v4006 = vand.u32 %v3754, 4294901760
      %v4007 = vsub.f32 %v3754, %v4006
      %4008 = vmatpush1.msra.mxu0 %v4007
      %v4009 = vand.u32 %v3757, 4294901760
      %v4010 = vsub.f32 %v3757, %v4009
      %4011 = vmatprep.subr.mxu0 %v4010
      %v4012 = vand.u32 %v3756, 4294901760
      %v4013 = vsub.f32 %v3756, %v4012
      %4014 = vmatpush1.msra.mxu0 %v4013
      %v4015 = vand.u32 %v3759, 4294901760
      %v4016 = vsub.f32 %v3759, %v4015
      %4017 = vmatprep.subr.mxu0 %v4016
      %v4018 = vand.u32 %v3758, 4294901760
      %v4019 = vsub.f32 %v3758, %v4018
      %4020 = vmatpush1.msra.mxu0 %v4019
      %v4021 = vand.u32 %v3769, 4294901760
      %v4022 = vsub.f32 %v3769, %v4021
      %4023 = vmatprep.subr.mxu0 %v4022
      %v4024 = vand.u32 %v3766, 4294901760
      %v4025 = vsub.f32 %v3766, %v4024
      %4026 = vmatpush1.msra.mxu0 %v4025
      %4027 = vmatprep.subr.mxu0 0.0
      %4028 = vmatpush1.msra.mxu0 0.0
      %4029 = vmatprep.subr.mxu0 0.0
      %4030 = vmatpush1.msra.mxu0 0.0
      %4031 = vmatprep.subr.mxu0 0.0
      %4032 = vmatpush1.msra.mxu0 0.0
      %4033 = vmatprep.subr.mxu0 0.0
      %4034 = vmatpush1.msra.mxu0 0.0
      %4035 = vmatprep.subr.mxu0 0.0
      %4036 = vmatpush1.msra.mxu0 0.0
      %4037 = vmatprep.subr.mxu0 0.0
      %4038 = vmatpush1.msra.mxu0 0.0
      %4039 = vmatprep.subr.mxu0 0.0
      %4040 = vmatpush1.msra.mxu0 0.0
      %4041 = vmatprep.subr.mxu0 0.0
      %4042 = vmatpush1.msra.mxu0 0.0
      %4043 = vmatprep.subr.mxu0 0.0
      %4044 = vmatpush1.msra.mxu0 0.0
      %4045 = vmatprep.subr.mxu0 0.0
      %4046 = vmatpush1.msra.mxu0 0.0
      %4047 = vmatprep.subr.mxu0 0.0
      %4048 = vmatpush1.msra.mxu0 0.0
      %4049 = vmatprep.subr.mxu0 0.0
      %4050 = vmatpush1.msra.mxu0 0.0
      %4051 = vmatprep.subr.mxu0 0.0
      %4052 = vmatpush1.msra.mxu0 0.0
      %4053 = vmatprep.subr.mxu0 0.0
      %4054 = vmatpush1.msra.mxu0 0.0
      %4055 = vmatprep.subr.mxu0 0.0
      %4056 = vmatpush1.msra.mxu0 0.0
      %4057 = vmatprep.subr.mxu0 0.0
      %4058 = vmatpush1.msra.mxu0 0.0
      %4059 = vmatprep.subr.mxu0 0.0
      %4060 = vmatpush1.msra.mxu0 0.0
      %4061 = vmatprep.subr.mxu0 0.0
      %4062 = vmatpush1.msra.mxu0 0.0
      %4063 = vmatprep.subr.mxu0 0.0
      %4064 = vmatpush1.msra.mxu0 0.0
      %4065 = vmatprep.subr.mxu0 0.0
      %4066 = vmatpush1.msra.mxu0 0.0
      %4067 = vmatprep.subr.mxu0 0.0
      %4068 = vmatpush1.msra.mxu0 0.0
      %4069 = vmatprep.subr.mxu0 0.0
      %4070 = vmatpush1.msra.mxu0 0.0
      %4071 = vmatprep.subr.mxu0 0.0
      %4072 = vmatpush1.msra.mxu0 0.0
      %4073 = vmatprep.subr.mxu0 0.0
      %4074 = vmatpush1.msra.mxu0 0.0
      %4075 = vmatprep.subr.mxu0 0.0
      %4076 = vmatpush1.msra.mxu0 0.0
      %4077 = vmatprep.subr.mxu0 0.0
      %4078 = vmatpush1.msra.mxu0 0.0
      %4079 = vmatprep.subr.mxu0 0.0
      %4080 = vmatpush1.msra.mxu0 0.0
      %4081 = vmatprep.mubr.f32.mxu0 0.0
      %v4082 = vand.u32 %v412, 4294901760
      %v4083 = vsub.f32 %v412, %v4082
      %4084 = vmatmul.mubr.f32.gmra.mrb[0].mxu0 %v4083
      %v4085 = vpop.f32.mrb[0].mxu0
      %v4086 = vadd.f32 %v3986, %v4085
      %v4087 = vpop.f32.mrb[0].mxu0
      %v4088 = vadd.f32 %v3988, %v4087
      %4089 = vmatprep.mubr.f32.mxu0 0.0
      %v4090 = vand.u32 %v415, 4294901760
      %v4091 = vsub.f32 %v415, %v4090
      %4092 = vmatmul.mubr.f32.gmra.mrb[0].mxu0 %v4091
      %v4093 = vpop.f32.mrb[0].mxu0
      %v4094 = vadd.f32 %v3993, %v4093
      %v4095 = vpop.f32.mrb[0].mxu0
      %v4096 = vadd.f32 %v3995, %v4095
      %4097 = vdwg.mxu0
      %v4098 = vand.u32 %v3753, 4294901760
      %4099 = vmatprep.subr.mxu0 %v4098
      %v4100 = vand.u32 %v3752, 4294901760
      %4101 = vmatpush1.msra.mxu0 %v4100
      %v4102 = vand.u32 %v3755, 4294901760
      %4103 = vmatprep.subr.mxu0 %v4102
      %v4104 = vand.u32 %v3754, 4294901760
      %4105 = vmatpush1.msra.mxu0 %v4104
      %v4106 = vand.u32 %v3757, 4294901760
      %4107 = vmatprep.subr.mxu0 %v4106
      %v4108 = vand.u32 %v3756, 4294901760
      %4109 = vmatpush1.msra.mxu0 %v4108
      %v4110 = vand.u32 %v3759, 4294901760
      %4111 = vmatprep.subr.mxu0 %v4110
      %v4112 = vand.u32 %v3758, 4294901760
      %4113 = vmatpush1.msra.mxu0 %v4112
      %v4114 = vand.u32 %v3769, 4294901760
      %4115 = vmatprep.subr.mxu0 %v4114
      %v4116 = vand.u32 %v3766, 4294901760
      %4117 = vmatpush1.msra.mxu0 %v4116
      %4118 = vmatprep.subr.mxu0 0.0
      %4119 = vmatpush1.msra.mxu0 0.0
      %4120 = vmatprep.subr.mxu0 0.0
      %4121 = vmatpush1.msra.mxu0 0.0
      %4122 = vmatprep.subr.mxu0 0.0
      %4123 = vmatpush1.msra.mxu0 0.0
      %4124 = vmatprep.subr.mxu0 0.0
      %4125 = vmatpush1.msra.mxu0 0.0
      %4126 = vmatprep.subr.mxu0 0.0
      %4127 = vmatpush1.msra.mxu0 0.0
      %4128 = vmatprep.subr.mxu0 0.0
      %4129 = vmatpush1.msra.mxu0 0.0
      %4130 = vmatprep.subr.mxu0 0.0
      %4131 = vmatpush1.msra.mxu0 0.0
      %4132 = vmatprep.subr.mxu0 0.0
      %4133 = vmatpush1.msra.mxu0 0.0
      %4134 = vmatprep.subr.mxu0 0.0
      %4135 = vmatpush1.msra.mxu0 0.0
      %4136 = vmatprep.subr.mxu0 0.0
      %4137 = vmatpush1.msra.mxu0 0.0
      %4138 = vmatprep.subr.mxu0 0.0
      %4139 = vmatpush1.msra.mxu0 0.0
      %4140 = vmatprep.subr.mxu0 0.0
      %4141 = vmatpush1.msra.mxu0 0.0
      %4142 = vmatprep.subr.mxu0 0.0
      %4143 = vmatpush1.msra.mxu0 0.0
      %4144 = vmatprep.subr.mxu0 0.0
      %4145 = vmatpush1.msra.mxu0 0.0
      %4146 = vmatprep.subr.mxu0 0.0
      %4147 = vmatpush1.msra.mxu0 0.0
      %4148 = vmatprep.subr.mxu0 0.0
      %4149 = vmatpush1.msra.mxu0 0.0
      %4150 = vmatprep.subr.mxu0 0.0
      %4151 = vmatpush1.msra.mxu0 0.0
      %4152 = vmatprep.subr.mxu0 0.0
      %4153 = vmatpush1.msra.mxu0 0.0
      %4154 = vmatprep.subr.mxu0 0.0
      %4155 = vmatpush1.msra.mxu0 0.0
      %4156 = vmatprep.subr.mxu0 0.0
      %4157 = vmatpush1.msra.mxu0 0.0
      %4158 = vmatprep.subr.mxu0 0.0
      %4159 = vmatpush1.msra.mxu0 0.0
      %4160 = vmatprep.subr.mxu0 0.0
      %4161 = vmatpush1.msra.mxu0 0.0
      %4162 = vmatprep.subr.mxu0 0.0
      %4163 = vmatpush1.msra.mxu0 0.0
      %4164 = vmatprep.subr.mxu0 0.0
      %4165 = vmatpush1.msra.mxu0 0.0
      %4166 = vmatprep.subr.mxu0 0.0
      %4167 = vmatpush1.msra.mxu0 0.0
      %4168 = vmatprep.subr.mxu0 0.0
      %4169 = vmatpush1.msra.mxu0 0.0
      %4170 = vmatprep.subr.mxu0 0.0
      %4171 = vmatpush1.msra.mxu0 0.0
      %4172 = vmatprep.mubr.f32.mxu0 0.0
      %v4173 = vand.u32 %v412, 4294901760
      %v4174 = vsub.f32 %v412, %v4173
      %v4175 = vand.u32 %v4174, 4294901760
      %4176 = vmatmul.mubr.f32.gmra.mrb[0].mxu0 %v4175
      %v4177 = vpop.f32.mrb[0].mxu0
      %v4178 = vadd.f32 %v4086, %v4177
      %v4179 = vpop.f32.mrb[0].mxu0
      %v4180 = vadd.f32 %v4088, %v4179
      %4181 = vmatprep.mubr.f32.mxu0 0.0
      %v4182 = vand.u32 %v415, 4294901760
      %v4183 = vsub.f32 %v415, %v4182
      %v4184 = vand.u32 %v4183, 4294901760
      %4185 = vmatmul.mubr.f32.gmra.mrb[0].mxu0 %v4184
      %v4186 = vpop.f32.mrb[0].mxu0
      %v4187 = vadd.f32 %v4094, %v4186
      %v4188 = vpop.f32.mrb[0].mxu0
      %v4189 = vadd.f32 %v4096, %v4188
      %4190 = vdwg.mxu0
      %v4191 = vand.u32 %v3753, 4294901760
      %v4192 = vsub.f32 %v3753, %v4191
      %v4193 = vand.u32 %v4192, 4294901760
      %4194 = vmatprep.subr.mxu0 %v4193
      %v4195 = vand.u32 %v3752, 4294901760
      %v4196 = vsub.f32 %v3752, %v4195
      %v4197 = vand.u32 %v4196, 4294901760
      %4198 = vmatpush1.msra.mxu0 %v4197
      %v4199 = vand.u32 %v3755, 4294901760
      %v4200 = vsub.f32 %v3755, %v4199
      %v4201 = vand.u32 %v4200, 4294901760
      %4202 = vmatprep.subr.mxu0 %v4201
      %v4203 = vand.u32 %v3754, 4294901760
      %v4204 = vsub.f32 %v3754, %v4203
      %v4205 = vand.u32 %v4204, 4294901760
      %4206 = vmatpush1.msra.mxu0 %v4205
      %v4207 = vand.u32 %v3757, 4294901760
      %v4208 = vsub.f32 %v3757, %v4207
      %v4209 = vand.u32 %v4208, 4294901760
      %4210 = vmatprep.subr.mxu0 %v4209
      %v4211 = vand.u32 %v3756, 4294901760
      %v4212 = vsub.f32 %v3756, %v4211
      %v4213 = vand.u32 %v4212, 4294901760
      %4214 = vmatpush1.msra.mxu0 %v4213
      %v4215 = vand.u32 %v3759, 4294901760
      %v4216 = vsub.f32 %v3759, %v4215
      %v4217 = vand.u32 %v4216, 4294901760
      %4218 = vmatprep.subr.mxu0 %v4217
      %v4219 = vand.u32 %v3758, 4294901760
      %v4220 = vsub.f32 %v3758, %v4219
      %v4221 = vand.u32 %v4220, 4294901760
      %4222 = vmatpush1.msra.mxu0 %v4221
      %v4223 = vand.u32 %v3769, 4294901760
      %v4224 = vsub.f32 %v3769, %v4223
      %v4225 = vand.u32 %v4224, 4294901760
      %4226 = vmatprep.subr.mxu0 %v4225
      %v4227 = vand.u32 %v3766, 4294901760
      %v4228 = vsub.f32 %v3766, %v4227
      %v4229 = vand.u32 %v4228, 4294901760
      %4230 = vmatpush1.msra.mxu0 %v4229
      %4231 = vmatprep.subr.mxu0 0.0
      %4232 = vmatpush1.msra.mxu0 0.0
      %4233 = vmatprep.subr.mxu0 0.0
      %4234 = vmatpush1.msra.mxu0 0.0
      %4235 = vmatprep.subr.mxu0 0.0
      %4236 = vmatpush1.msra.mxu0 0.0
      %4237 = vmatprep.subr.mxu0 0.0
      %4238 = vmatpush1.msra.mxu0 0.0
      %4239 = vmatprep.subr.mxu0 0.0
      %4240 = vmatpush1.msra.mxu0 0.0
      %4241 = vmatprep.subr.mxu0 0.0
      %4242 = vmatpush1.msra.mxu0 0.0
      %4243 = vmatprep.subr.mxu0 0.0
      %4244 = vmatpush1.msra.mxu0 0.0
      %4245 = vmatprep.subr.mxu0 0.0
      %4246 = vmatpush1.msra.mxu0 0.0
      %4247 = vmatprep.subr.mxu0 0.0
      %4248 = vmatpush1.msra.mxu0 0.0
      %4249 = vmatprep.subr.mxu0 0.0
      %4250 = vmatpush1.msra.mxu0 0.0
      %4251 = vmatprep.subr.mxu0 0.0
      %4252 = vmatpush1.msra.mxu0 0.0
      %4253 = vmatprep.subr.mxu0 0.0
      %4254 = vmatpush1.msra.mxu0 0.0
      %4255 = vmatprep.subr.mxu0 0.0
      %4256 = vmatpush1.msra.mxu0 0.0
      %4257 = vmatprep.subr.mxu0 0.0
      %4258 = vmatpush1.msra.mxu0 0.0
      %4259 = vmatprep.subr.mxu0 0.0
      %4260 = vmatpush1.msra.mxu0 0.0
      %4261 = vmatprep.subr.mxu0 0.0
      %4262 = vmatpush1.msra.mxu0 0.0
      %4263 = vmatprep.subr.mxu0 0.0
      %4264 = vmatpush1.msra.mxu0 0.0
      %4265 = vmatprep.subr.mxu0 0.0
      %4266 = vmatpush1.msra.mxu0 0.0
      %4267 = vmatprep.subr.mxu0 0.0
      %4268 = vmatpush1.msra.mxu0 0.0
      %4269 = vmatprep.subr.mxu0 0.0
      %4270 = vmatpush1.msra.mxu0 0.0
      %4271 = vmatprep.subr.mxu0 0.0
      %4272 = vmatpush1.msra.mxu0 0.0
      %4273 = vmatprep.subr.mxu0 0.0
      %4274 = vmatpush1.msra.mxu0 0.0
      %4275 = vmatprep.subr.mxu0 0.0
      %4276 = vmatpush1.msra.mxu0 0.0
      %4277 = vmatprep.subr.mxu0 0.0
      %4278 = vmatpush1.msra.mxu0 0.0
      %4279 = vmatprep.subr.mxu0 0.0
      %4280 = vmatpush1.msra.mxu0 0.0
      %4281 = vmatprep.subr.mxu0 0.0
      %4282 = vmatpush1.msra.mxu0 0.0
      %4283 = vmatprep.subr.mxu0 0.0
      %4284 = vmatpush1.msra.mxu0 0.0
      %4285 = vmatprep.mubr.f32.mxu0 0.0
      %v4286 = vand.u32 %v412, 4294901760
      %4287 = vmatmul.mubr.f32.gmra.mrb[0].mxu0 %v4286
      %v4288 = vpop.f32.mrb[0].mxu0
      %v4289 = vadd.f32 %v4178, %v4288
      %v4290 = vpop.f32.mrb[0].mxu0
      %v4291 = vadd.f32 %v4180, %v4290
      %4292 = vmatprep.mubr.f32.mxu0 0.0
      %v4293 = vand.u32 %v415, 4294901760
      %4294 = vmatmul.mubr.f32.gmra.mrb[0].mxu0 %v4293
      %v4295 = vpop.f32.mrb[0].mxu0
      %v4296 = vadd.f32 %v4187, %v4295
      %v4297 = vpop.f32.mrb[0].mxu0
      %v4298 = vadd.f32 %v4189, %v4297
      %4299 = vdwg.mxu0
      %v4300 = vand.u32 %v3753, 4294901760
      %4301 = vmatprep.subr.mxu0 %v4300
      %v4302 = vand.u32 %v3752, 4294901760
      %4303 = vmatpush1.msra.mxu0 %v4302
      %v4304 = vand.u32 %v3755, 4294901760
      %4305 = vmatprep.subr.mxu0 %v4304
      %v4306 = vand.u32 %v3754, 4294901760
      %4307 = vmatpush1.msra.mxu0 %v4306
      %v4308 = vand.u32 %v3757, 4294901760
      %4309 = vmatprep.subr.mxu0 %v4308
      %v4310 = vand.u32 %v3756, 4294901760
      %4311 = vmatpush1.msra.mxu0 %v4310
      %v4312 = vand.u32 %v3759, 4294901760
      %4313 = vmatprep.subr.mxu0 %v4312
      %v4314 = vand.u32 %v3758, 4294901760
      %4315 = vmatpush1.msra.mxu0 %v4314
      %v4316 = vand.u32 %v3769, 4294901760
      %4317 = vmatprep.subr.mxu0 %v4316
      %v4318 = vand.u32 %v3766, 4294901760
      %4319 = vmatpush1.msra.mxu0 %v4318
      %4320 = vmatprep.subr.mxu0 0.0
      %4321 = vmatpush1.msra.mxu0 0.0
      %4322 = vmatprep.subr.mxu0 0.0
      %4323 = vmatpush1.msra.mxu0 0.0
      %4324 = vmatprep.subr.mxu0 0.0
      %4325 = vmatpush1.msra.mxu0 0.0
      %4326 = vmatprep.subr.mxu0 0.0
      %4327 = vmatpush1.msra.mxu0 0.0
      %4328 = vmatprep.subr.mxu0 0.0
      %4329 = vmatpush1.msra.mxu0 0.0
      %4330 = vmatprep.subr.mxu0 0.0
      %4331 = vmatpush1.msra.mxu0 0.0
      %4332 = vmatprep.subr.mxu0 0.0
      %4333 = vmatpush1.msra.mxu0 0.0
      %4334 = vmatprep.subr.mxu0 0.0
      %4335 = vmatpush1.msra.mxu0 0.0
      %4336 = vmatprep.subr.mxu0 0.0
      %4337 = vmatpush1.msra.mxu0 0.0
      %4338 = vmatprep.subr.mxu0 0.0
      %4339 = vmatpush1.msra.mxu0 0.0
      %4340 = vmatprep.subr.mxu0 0.0
      %4341 = vmatpush1.msra.mxu0 0.0
      %4342 = vmatprep.subr.mxu0 0.0
      %4343 = vmatpush1.msra.mxu0 0.0
      %4344 = vmatprep.subr.mxu0 0.0
      %4345 = vmatpush1.msra.mxu0 0.0
      %4346 = vmatprep.subr.mxu0 0.0
      %4347 = vmatpush1.msra.mxu0 0.0
      %4348 = vmatprep.subr.mxu0 0.0
      %4349 = vmatpush1.msra.mxu0 0.0
      %4350 = vmatprep.subr.mxu0 0.0
      %4351 = vmatpush1.msra.mxu0 0.0
      %4352 = vmatprep.subr.mxu0 0.0
      %4353 = vmatpush1.msra.mxu0 0.0
      %4354 = vmatprep.subr.mxu0 0.0
      %4355 = vmatpush1.msra.mxu0 0.0
      %4356 = vmatprep.subr.mxu0 0.0
      %4357 = vmatpush1.msra.mxu0 0.0
      %4358 = vmatprep.subr.mxu0 0.0
      %4359 = vmatpush1.msra.mxu0 0.0
      %4360 = vmatprep.subr.mxu0 0.0
      %4361 = vmatpush1.msra.mxu0 0.0
      %4362 = vmatprep.subr.mxu0 0.0
      %4363 = vmatpush1.msra.mxu0 0.0
      %4364 = vmatprep.subr.mxu0 0.0
      %4365 = vmatpush1.msra.mxu0 0.0
      %4366 = vmatprep.subr.mxu0 0.0
      %4367 = vmatpush1.msra.mxu0 0.0
      %4368 = vmatprep.subr.mxu0 0.0
      %4369 = vmatpush1.msra.mxu0 0.0
      %4370 = vmatprep.subr.mxu0 0.0
      %4371 = vmatpush1.msra.mxu0 0.0
      %4372 = vmatprep.subr.mxu0 0.0
      %4373 = vmatpush1.msra.mxu0 0.0
      %4374 = vmatprep.mubr.f32.mxu0 0.0
      %v4375 = vand.u32 %v412, 4294901760
      %4376 = vmatmul.mubr.f32.gmra.mrb[0].mxu0 %v4375
      %v4377 = vpop.f32.mrb[0].mxu0
      %v4378 = vadd.f32 %v4289, %v4377
      %v4379 = vpop.f32.mrb[0].mxu0
      %v4380 = vadd.f32 %v4291, %v4379
      %4381 = vmatprep.mubr.f32.mxu0 0.0
      %v4382 = vand.u32 %v415, 4294901760
      %4383 = vmatmul.mubr.f32.gmra.mrb[0].mxu0 %v4382
      %v4384 = vpop.f32.mrb[0].mxu0
      %v4385 = vadd.f32 %v4296, %v4384
      %v4386 = vpop.f32.mrb[0].mxu0
      %v4387 = vadd.f32 %v4298, %v4386
      %4388 = vdwg.mxu0
      %v4389 = vxor.u32 %v4378, 2147483648
      %v4390 = vxor.u32 %v4380, 2147483648
      %v4391 = vmul.f32 %v4389, 1.442695
      %v4392 = vpow.pop %v4391
      %v4393 = vmul.f32 %v4390, 1.442695
      %v4394 = vpow.pop %v4393
      %v4395 = vadd.f32 %v4392, 1.0
      %v4396 = vadd.f32 %v4394, 1.0
      %v4397 = vrcp.pop %v4395
      %v4398 = vmul.f32 1.0, %v4397
      %v4399 = vrcp.pop %v4396
      %v4400 = vmul.f32 1.0, %v4399
      %v4401 = vtanh.pop %v4385
      %v4402 = vtanh.pop %v4387
      %v4403 = vxor.u32 %v4385, 2147483648
      %v4404 = vxor.u32 %v4387, 2147483648
      %v4405 = vmul.f32 %v4403, 1.442695
      %v4406 = vpow.pop %v4405
      %v4407 = vmul.f32 %v4404, 1.442695
      %v4408 = vpow.pop %v4407
      %v4409 = vadd.f32 %v4406, 1.0
      %v4410 = vadd.f32 %v4408, 1.0
      %v4411 = vrcp.pop %v4409
      %v4412 = vmul.f32 1.0, %v4411
      %v4413 = vrcp.pop %v4410
      %v4414 = vmul.f32 1.0, %v4413
      %v4415 = vmul.f32 %v4398, %v3532
      %v4416 = vmul.f32 %v4400, %v3533
      %v4417 = vmul.f32 %v4398, %v4401
      %v4418 = vmul.f32 %v4400, %v4402
      %v4421 = vrot.slane %v4417, 4
      %v4422 = vrot.slane %v4418, 4
      %v4425 = vadd.f32 %v4415, %v4421
      %v4426 = vadd.f32 %v4416, %v4422
      %v4427 = vtanh.pop %v4425
      %v4428 = vtanh.pop %v4426
      %v4429 = vmul.f32 %v4412, %v4427
      %v4430 = vmul.f32 %v4414, %v4428
      %v4433 = vrot.slane %v4429, 4
      %v4434 = vrot.slane %v4430, 4
      %4437 = vrot.lane.b32.xlu0 %v4433, 17
      %v4438 = vpop.permute.xlu0 %4437
      %4439 = vrot.lane.b32.xlu0 %v4434, 17
      %v4440 = vpop.permute.xlu0 %4439
      %v4441 = vsel %vm217, %v4438, %v4440
      %v4442 = vsel %vm217, %v4440, %v4438
      %v4443 = vmul.f32 %v4442, %v3559
      %v4444 = vmul.f32 %v4441, %v3563
      %4445 = vrot.lane.b32.xlu0 %v4433, 16
      %v4446 = vpop.permute.xlu0 %4445
      %4447 = vrot.lane.b32.xlu0 %v4434, 16
      %v4448 = vpop.permute.xlu0 %4447
      %v4449 = vsel %vm234, %v4446, %v4448
      %v4450 = vsel %vm234, %v4448, %v4446
      %v4451 = vmul.f32 %v4450, %v3579
      %v4452 = vmul.f32 %v4449, %v3583
      %4453 = vrot.lane.b32.xlu0 %v4433, 15
      %v4454 = vpop.permute.xlu0 %4453
      %4455 = vrot.lane.b32.xlu0 %v4434, 15
      %v4456 = vpop.permute.xlu0 %4455
      %v4457 = vsel %vm252, %v4454, %v4456
      %v4458 = vsel %vm252, %v4456, %v4454
      %v4459 = vmul.f32 %v4458, %v3599
      %v4460 = vmul.f32 %v4457, %v3603
      %4461 = vrot.lane.b32.xlu0 %v4433, 1
      %v4462 = vpop.permute.xlu0 %4461
      %4463 = vrot.lane.b32.xlu0 %v4434, 1
      %v4464 = vpop.permute.xlu0 %4463
      %v4465 = vsel %vm270, %v4462, %v4464
      %v4466 = vsel %vm270, %v4464, %v4462
      %v4467 = vmul.f32 %v4466, %v3619
      %v4468 = vmul.f32 %v4465, %v3623
      %v4469 = vmul.f32 %v4429, %v3633
      %v4470 = vmul.f32 %v4430, %v3637
      %4471 = vrot.lane.b32.xlu0 %v4433, 127
      %v4472 = vpop.permute.xlu0 %4471
      %4473 = vrot.lane.b32.xlu0 %v4434, 127
      %v4474 = vpop.permute.xlu0 %4473
      %v4475 = vsel %vm303, %v4472, %v4474
      %v4476 = vsel %vm303, %v4474, %v4472
      %v4477 = vmul.f32 %v4475, %v3653
      %v4478 = vmul.f32 %v4476, %v3657
      %4479 = vrot.lane.b32.xlu0 %v4433, 113
      %v4480 = vpop.permute.xlu0 %4479
      %4481 = vrot.lane.b32.xlu0 %v4434, 113
      %v4482 = vpop.permute.xlu0 %4481
      %v4483 = vsel %vm321, %v4480, %v4482
      %v4484 = vsel %vm321, %v4482, %v4480
      %v4485 = vmul.f32 %v4483, %v3673
      %v4486 = vmul.f32 %v4484, %v3677
      %4487 = vrot.lane.b32.xlu0 %v4433, 112
      %v4488 = vpop.permute.xlu0 %4487
      %4489 = vrot.lane.b32.xlu0 %v4434, 112
      %v4490 = vpop.permute.xlu0 %4489
      %v4491 = vsel %vm339, %v4488, %v4490
      %v4492 = vsel %vm339, %v4490, %v4488
      %v4493 = vmul.f32 %v4491, %v3693
      %v4494 = vmul.f32 %v4492, %v3697
      %4495 = vrot.lane.b32.xlu0 %v4433, 111
      %v4496 = vpop.permute.xlu0 %4495
      %4497 = vrot.lane.b32.xlu0 %v4434, 111
      %v4498 = vpop.permute.xlu0 %4497
      %v4499 = vsel %vm357, %v4496, %v4498
      %v4500 = vsel %vm357, %v4498, %v4496
      %v4501 = vmul.f32 %v4499, %v3713
      %v4502 = vmul.f32 %v4500, %v3717
      %v4505 = vrot.slane %v4451, 4
      %v4506 = vrot.slane %v4452, 4
      %v4511 = vrot.slane %v4467, 4
      %v4512 = vrot.slane %v4468, 4
      %v4517 = vrot.slane %v4469, 4
      %v4518 = vrot.slane %v4470, 4
      %v4523 = vrot.slane %v4477, 4
      %v4524 = vrot.slane %v4478, 4
      %v4529 = vrot.slane %v4493, 4
      %v4530 = vrot.slane %v4494, 4
      %v4533 = vsel %vm397, %v4443, %v4505
      %v4534 = vsel %vm397, %v4444, %v4506
      %v4535 = vsel %vm397, %v4459, %v4511
      %v4536 = vsel %vm397, %v4460, %v4512
      %v4537 = vsel %vm397, %v4517, %v4523
      %v4538 = vsel %vm397, %v4518, %v4524
      %v4539 = vsel %vm397, %v4485, %v4529
      %v4540 = vsel %vm397, %v4486, %v4530
      %s4541 = scalar_lea.vmem %s200, 160
      %v4542 = vld [vmem:[%s4541] sm:$0xff]
      %v4543 = vld [vmem:[%s4541 + $0x8] sm:$0xff]
      %v4544 = vld [vmem:[%s4541 + $0x10] sm:$0xff]
      %v4545 = vld [vmem:[%s4541 + $0x18] sm:$0xff]
      %v4547 = vsel %vm397, %v4501, 0
      %v4550 = vsel %vm397, %v4502, 0
      %v4552 = vand.u32 %v4534, 4294901760
      %4553 = vmatprep.subr.mxu0 %v4552
      %v4554 = vand.u32 %v4533, 4294901760
      %4555 = vmatpush1.msra.mxu0 %v4554
      %v4556 = vand.u32 %v4536, 4294901760
      %4557 = vmatprep.subr.mxu0 %v4556
      %v4558 = vand.u32 %v4535, 4294901760
      %4559 = vmatpush1.msra.mxu0 %v4558
      %v4560 = vand.u32 %v4538, 4294901760
      %4561 = vmatprep.subr.mxu0 %v4560
      %v4562 = vand.u32 %v4537, 4294901760
      %4563 = vmatpush1.msra.mxu0 %v4562
      %v4564 = vand.u32 %v4540, 4294901760
      %4565 = vmatprep.subr.mxu0 %v4564
      %v4566 = vand.u32 %v4539, 4294901760
      %4567 = vmatpush1.msra.mxu0 %v4566
      %v4568 = vand.u32 %v4550, 4294901760
      %4569 = vmatprep.subr.mxu0 %v4568
      %v4570 = vand.u32 %v4547, 4294901760
      %4571 = vmatpush1.msra.mxu0 %v4570
      %4572 = vmatprep.subr.mxu0 0.0
      %4573 = vmatpush1.msra.mxu0 0.0
      %4574 = vmatprep.subr.mxu0 0.0
      %4575 = vmatpush1.msra.mxu0 0.0
      %4576 = vmatprep.subr.mxu0 0.0
      %4577 = vmatpush1.msra.mxu0 0.0
      %4578 = vmatprep.subr.mxu0 0.0
      %4579 = vmatpush1.msra.mxu0 0.0
      %4580 = vmatprep.subr.mxu0 0.0
      %4581 = vmatpush1.msra.mxu0 0.0
      %4582 = vmatprep.subr.mxu0 0.0
      %4583 = vmatpush1.msra.mxu0 0.0
      %4584 = vmatprep.subr.mxu0 0.0
      %4585 = vmatpush1.msra.mxu0 0.0
      %4586 = vmatprep.subr.mxu0 0.0
      %4587 = vmatpush1.msra.mxu0 0.0
      %4588 = vmatprep.subr.mxu0 0.0
      %4589 = vmatpush1.msra.mxu0 0.0
      %4590 = vmatprep.subr.mxu0 0.0
      %4591 = vmatpush1.msra.mxu0 0.0
      %4592 = vmatprep.subr.mxu0 0.0
      %4593 = vmatpush1.msra.mxu0 0.0
      %4594 = vmatprep.subr.mxu0 0.0
      %4595 = vmatpush1.msra.mxu0 0.0
      %4596 = vmatprep.subr.mxu0 0.0
      %4597 = vmatpush1.msra.mxu0 0.0
      %4598 = vmatprep.subr.mxu0 0.0
      %4599 = vmatpush1.msra.mxu0 0.0
      %4600 = vmatprep.subr.mxu0 0.0
      %4601 = vmatpush1.msra.mxu0 0.0
      %4602 = vmatprep.subr.mxu0 0.0
      %4603 = vmatpush1.msra.mxu0 0.0
      %4604 = vmatprep.subr.mxu0 0.0
      %4605 = vmatpush1.msra.mxu0 0.0
      %4606 = vmatprep.subr.mxu0 0.0
      %4607 = vmatpush1.msra.mxu0 0.0
      %4608 = vmatprep.subr.mxu0 0.0
      %4609 = vmatpush1.msra.mxu0 0.0
      %4610 = vmatprep.subr.mxu0 0.0
      %4611 = vmatpush1.msra.mxu0 0.0
      %4612 = vmatprep.subr.mxu0 0.0
      %4613 = vmatpush1.msra.mxu0 0.0
      %4614 = vmatprep.subr.mxu0 0.0
      %4615 = vmatpush1.msra.mxu0 0.0
      %4616 = vmatprep.subr.mxu0 0.0
      %4617 = vmatpush1.msra.mxu0 0.0
      %4618 = vmatprep.subr.mxu0 0.0
      %4619 = vmatpush1.msra.mxu0 0.0
      %4620 = vmatprep.subr.mxu0 0.0
      %4621 = vmatpush1.msra.mxu0 0.0
      %4622 = vmatprep.subr.mxu0 0.0
      %4623 = vmatpush1.msra.mxu0 0.0
      %4624 = vmatprep.subr.mxu0 0.0
      %4625 = vmatpush1.msra.mxu0 0.0
      %4626 = vmatprep.mubr.f32.mxu0 0.0
      %v4627 = vand.u32 %v412, 4294901760
      %v4628 = vsub.f32 %v412, %v4627
      %v4629 = vand.u32 %v4628, 4294901760
      %v4630 = vsub.f32 %v4628, %v4629
      %v4631 = vand.u32 %v4630, 4294901760
      %4632 = vmatmul.mubr.f32.gmra.mrb[0].mxu0 %v4631
      %v4633 = vpop.f32.mrb[0].mxu0
      %v4634 = vadd.f32 %v4542, %v4633
      %v4635 = vpop.f32.mrb[0].mxu0
      %v4636 = vadd.f32 %v4543, %v4635
      %4637 = vmatprep.mubr.f32.mxu0 0.0
      %v4638 = vand.u32 %v415, 4294901760
      %v4639 = vsub.f32 %v415, %v4638
      %v4640 = vand.u32 %v4639, 4294901760
      %v4641 = vsub.f32 %v4639, %v4640
      %v4642 = vand.u32 %v4641, 4294901760
      %4643 = vmatmul.mubr.f32.gmra.mrb[0].mxu0 %v4642
      %v4644 = vpop.f32.mrb[0].mxu0
      %v4645 = vadd.f32 %v4544, %v4644
      %v4646 = vpop.f32.mrb[0].mxu0
      %v4647 = vadd.f32 %v4545, %v4646
      %4648 = vdwg.mxu0
      %v4649 = vand.u32 %v4534, 4294901760
      %v4650 = vsub.f32 %v4534, %v4649
      %v4651 = vand.u32 %v4650, 4294901760
      %v4652 = vsub.f32 %v4650, %v4651
      %v4653 = vand.u32 %v4652, 4294901760
      %4654 = vmatprep.subr.mxu0 %v4653
      %v4655 = vand.u32 %v4533, 4294901760
      %v4656 = vsub.f32 %v4533, %v4655
      %v4657 = vand.u32 %v4656, 4294901760
      %v4658 = vsub.f32 %v4656, %v4657
      %v4659 = vand.u32 %v4658, 4294901760
      %4660 = vmatpush1.msra.mxu0 %v4659
      %v4661 = vand.u32 %v4536, 4294901760
      %v4662 = vsub.f32 %v4536, %v4661
      %v4663 = vand.u32 %v4662, 4294901760
      %v4664 = vsub.f32 %v4662, %v4663
      %v4665 = vand.u32 %v4664, 4294901760
      %4666 = vmatprep.subr.mxu0 %v4665
      %v4667 = vand.u32 %v4535, 4294901760
      %v4668 = vsub.f32 %v4535, %v4667
      %v4669 = vand.u32 %v4668, 4294901760
      %v4670 = vsub.f32 %v4668, %v4669
      %v4671 = vand.u32 %v4670, 4294901760
      %4672 = vmatpush1.msra.mxu0 %v4671
      %v4673 = vand.u32 %v4538, 4294901760
      %v4674 = vsub.f32 %v4538, %v4673
      %v4675 = vand.u32 %v4674, 4294901760
      %v4676 = vsub.f32 %v4674, %v4675
      %v4677 = vand.u32 %v4676, 4294901760
      %4678 = vmatprep.subr.mxu0 %v4677
      %v4679 = vand.u32 %v4537, 4294901760
      %v4680 = vsub.f32 %v4537, %v4679
      %v4681 = vand.u32 %v4680, 4294901760
      %v4682 = vsub.f32 %v4680, %v4681
      %v4683 = vand.u32 %v4682, 4294901760
      %4684 = vmatpush1.msra.mxu0 %v4683
      %v4685 = vand.u32 %v4540, 4294901760
      %v4686 = vsub.f32 %v4540, %v4685
      %v4687 = vand.u32 %v4686, 4294901760
      %v4688 = vsub.f32 %v4686, %v4687
      %v4689 = vand.u32 %v4688, 4294901760
      %4690 = vmatprep.subr.mxu0 %v4689
      %v4691 = vand.u32 %v4539, 4294901760
      %v4692 = vsub.f32 %v4539, %v4691
      %v4693 = vand.u32 %v4692, 4294901760
      %v4694 = vsub.f32 %v4692, %v4693
      %v4695 = vand.u32 %v4694, 4294901760
      %4696 = vmatpush1.msra.mxu0 %v4695
      %v4697 = vand.u32 %v4550, 4294901760
      %v4698 = vsub.f32 %v4550, %v4697
      %v4699 = vand.u32 %v4698, 4294901760
      %v4700 = vsub.f32 %v4698, %v4699
      %v4701 = vand.u32 %v4700, 4294901760
      %4702 = vmatprep.subr.mxu0 %v4701
      %v4703 = vand.u32 %v4547, 4294901760
      %v4704 = vsub.f32 %v4547, %v4703
      %v4705 = vand.u32 %v4704, 4294901760
      %v4706 = vsub.f32 %v4704, %v4705
      %v4707 = vand.u32 %v4706, 4294901760
      %4708 = vmatpush1.msra.mxu0 %v4707
      %4709 = vmatprep.subr.mxu0 0.0
      %4710 = vmatpush1.msra.mxu0 0.0
      %4711 = vmatprep.subr.mxu0 0.0
      %4712 = vmatpush1.msra.mxu0 0.0
      %4713 = vmatprep.subr.mxu0 0.0
      %4714 = vmatpush1.msra.mxu0 0.0
      %4715 = vmatprep.subr.mxu0 0.0
      %4716 = vmatpush1.msra.mxu0 0.0
      %4717 = vmatprep.subr.mxu0 0.0
      %4718 = vmatpush1.msra.mxu0 0.0
      %4719 = vmatprep.subr.mxu0 0.0
      %4720 = vmatpush1.msra.mxu0 0.0
      %4721 = vmatprep.subr.mxu0 0.0
      %4722 = vmatpush1.msra.mxu0 0.0
      %4723 = vmatprep.subr.mxu0 0.0
      %4724 = vmatpush1.msra.mxu0 0.0
      %4725 = vmatprep.subr.mxu0 0.0
      %4726 = vmatpush1.msra.mxu0 0.0
      %4727 = vmatprep.subr.mxu0 0.0
      %4728 = vmatpush1.msra.mxu0 0.0
      %4729 = vmatprep.subr.mxu0 0.0
      %4730 = vmatpush1.msra.mxu0 0.0
      %4731 = vmatprep.subr.mxu0 0.0
      %4732 = vmatpush1.msra.mxu0 0.0
      %4733 = vmatprep.subr.mxu0 0.0
      %4734 = vmatpush1.msra.mxu0 0.0
      %4735 = vmatprep.subr.mxu0 0.0
      %4736 = vmatpush1.msra.mxu0 0.0
      %4737 = vmatprep.subr.mxu0 0.0
      %4738 = vmatpush1.msra.mxu0 0.0
      %4739 = vmatprep.subr.mxu0 0.0
      %4740 = vmatpush1.msra.mxu0 0.0
      %4741 = vmatprep.subr.mxu0 0.0
      %4742 = vmatpush1.msra.mxu0 0.0
      %4743 = vmatprep.subr.mxu0 0.0
      %4744 = vmatpush1.msra.mxu0 0.0
      %4745 = vmatprep.subr.mxu0 0.0
      %4746 = vmatpush1.msra.mxu0 0.0
      %4747 = vmatprep.subr.mxu0 0.0
      %4748 = vmatpush1.msra.mxu0 0.0
      %4749 = vmatprep.subr.mxu0 0.0
      %4750 = vmatpush1.msra.mxu0 0.0
      %4751 = vmatprep.subr.mxu0 0.0
      %4752 = vmatpush1.msra.mxu0 0.0
      %4753 = vmatprep.subr.mxu0 0.0
      %4754 = vmatpush1.msra.mxu0 0.0
      %4755 = vmatprep.subr.mxu0 0.0
      %4756 = vmatpush1.msra.mxu0 0.0
      %4757 = vmatprep.subr.mxu0 0.0
      %4758 = vmatpush1.msra.mxu0 0.0
      %4759 = vmatprep.subr.mxu0 0.0
      %4760 = vmatpush1.msra.mxu0 0.0
      %4761 = vmatprep.subr.mxu0 0.0
      %4762 = vmatpush1.msra.mxu0 0.0
      %4763 = vmatprep.mubr.f32.mxu0 0.0
      %v4764 = vand.u32 %v412, 4294901760
      %4765 = vmatmul.mubr.f32.gmra.mrb[0].mxu0 %v4764
      %v4766 = vpop.f32.mrb[0].mxu0
      %v4767 = vadd.f32 %v4634, %v4766
      %v4768 = vpop.f32.mrb[0].mxu0
      %v4769 = vadd.f32 %v4636, %v4768
      %4770 = vmatprep.mubr.f32.mxu0 0.0
      %v4771 = vand.u32 %v415, 4294901760
      %4772 = vmatmul.mubr.f32.gmra.mrb[0].mxu0 %v4771
      %v4773 = vpop.f32.mrb[0].mxu0
      %v4774 = vadd.f32 %v4645, %v4773
      %v4775 = vpop.f32.mrb[0].mxu0
      %v4776 = vadd.f32 %v4647, %v4775
      %4777 = vdwg.mxu0
      %v4778 = vand.u32 %v4534, 4294901760
      %v4779 = vsub.f32 %v4534, %v4778
      %4780 = vmatprep.subr.mxu0 %v4779
      %v4781 = vand.u32 %v4533, 4294901760
      %v4782 = vsub.f32 %v4533, %v4781
      %4783 = vmatpush1.msra.mxu0 %v4782
      %v4784 = vand.u32 %v4536, 4294901760
      %v4785 = vsub.f32 %v4536, %v4784
      %4786 = vmatprep.subr.mxu0 %v4785
      %v4787 = vand.u32 %v4535, 4294901760
      %v4788 = vsub.f32 %v4535, %v4787
      %4789 = vmatpush1.msra.mxu0 %v4788
      %v4790 = vand.u32 %v4538, 4294901760
      %v4791 = vsub.f32 %v4538, %v4790
      %4792 = vmatprep.subr.mxu0 %v4791
      %v4793 = vand.u32 %v4537, 4294901760
      %v4794 = vsub.f32 %v4537, %v4793
      %4795 = vmatpush1.msra.mxu0 %v4794
      %v4796 = vand.u32 %v4540, 4294901760
      %v4797 = vsub.f32 %v4540, %v4796
      %4798 = vmatprep.subr.mxu0 %v4797
      %v4799 = vand.u32 %v4539, 4294901760
      %v4800 = vsub.f32 %v4539, %v4799
      %4801 = vmatpush1.msra.mxu0 %v4800
      %v4802 = vand.u32 %v4550, 4294901760
      %v4803 = vsub.f32 %v4550, %v4802
      %4804 = vmatprep.subr.mxu0 %v4803
      %v4805 = vand.u32 %v4547, 4294901760
      %v4806 = vsub.f32 %v4547, %v4805
      %4807 = vmatpush1.msra.mxu0 %v4806
      %4808 = vmatprep.subr.mxu0 0.0
      %4809 = vmatpush1.msra.mxu0 0.0
      %4810 = vmatprep.subr.mxu0 0.0
      %4811 = vmatpush1.msra.mxu0 0.0
      %4812 = vmatprep.subr.mxu0 0.0
      %4813 = vmatpush1.msra.mxu0 0.0
      %4814 = vmatprep.subr.mxu0 0.0
      %4815 = vmatpush1.msra.mxu0 0.0
      %4816 = vmatprep.subr.mxu0 0.0
      %4817 = vmatpush1.msra.mxu0 0.0
      %4818 = vmatprep.subr.mxu0 0.0
      %4819 = vmatpush1.msra.mxu0 0.0
      %4820 = vmatprep.subr.mxu0 0.0
      %4821 = vmatpush1.msra.mxu0 0.0
      %4822 = vmatprep.subr.mxu0 0.0
      %4823 = vmatpush1.msra.mxu0 0.0
      %4824 = vmatprep.subr.mxu0 0.0
      %4825 = vmatpush1.msra.mxu0 0.0
      %4826 = vmatprep.subr.mxu0 0.0
      %4827 = vmatpush1.msra.mxu0 0.0
      %4828 = vmatprep.subr.mxu0 0.0
      %4829 = vmatpush1.msra.mxu0 0.0
      %4830 = vmatprep.subr.mxu0 0.0
      %4831 = vmatpush1.msra.mxu0 0.0
      %4832 = vmatprep.subr.mxu0 0.0
      %4833 = vmatpush1.msra.mxu0 0.0
      %4834 = vmatprep.subr.mxu0 0.0
      %4835 = vmatpush1.msra.mxu0 0.0
      %4836 = vmatprep.subr.mxu0 0.0
      %4837 = vmatpush1.msra.mxu0 0.0
      %4838 = vmatprep.subr.mxu0 0.0
      %4839 = vmatpush1.msra.mxu0 0.0
      %4840 = vmatprep.subr.mxu0 0.0
      %4841 = vmatpush1.msra.mxu0 0.0
      %4842 = vmatprep.subr.mxu0 0.0
      %4843 = vmatpush1.msra.mxu0 0.0
      %4844 = vmatprep.subr.mxu0 0.0
      %4845 = vmatpush1.msra.mxu0 0.0
      %4846 = vmatprep.subr.mxu0 0.0
      %4847 = vmatpush1.msra.mxu0 0.0
      %4848 = vmatprep.subr.mxu0 0.0
      %4849 = vmatpush1.msra.mxu0 0.0
      %4850 = vmatprep.subr.mxu0 0.0
      %4851 = vmatpush1.msra.mxu0 0.0
      %4852 = vmatprep.subr.mxu0 0.0
      %4853 = vmatpush1.msra.mxu0 0.0
      %4854 = vmatprep.subr.mxu0 0.0
      %4855 = vmatpush1.msra.mxu0 0.0
      %4856 = vmatprep.subr.mxu0 0.0
      %4857 = vmatpush1.msra.mxu0 0.0
      %4858 = vmatprep.subr.mxu0 0.0
      %4859 = vmatpush1.msra.mxu0 0.0
      %4860 = vmatprep.subr.mxu0 0.0
      %4861 = vmatpush1.msra.mxu0 0.0
      %4862 = vmatprep.mubr.f32.mxu0 0.0
      %v4863 = vand.u32 %v412, 4294901760
      %v4864 = vsub.f32 %v412, %v4863
      %4865 = vmatmul.mubr.f32.gmra.mrb[0].mxu0 %v4864
      %v4866 = vpop.f32.mrb[0].mxu0
      %v4867 = vadd.f32 %v4767, %v4866
      %v4868 = vpop.f32.mrb[0].mxu0
      %v4869 = vadd.f32 %v4769, %v4868
      %4870 = vmatprep.mubr.f32.mxu0 0.0
      %v4871 = vand.u32 %v415, 4294901760
      %v4872 = vsub.f32 %v415, %v4871
      %4873 = vmatmul.mubr.f32.gmra.mrb[0].mxu0 %v4872
      %v4874 = vpop.f32.mrb[0].mxu0
      %v4875 = vadd.f32 %v4774, %v4874
      %v4876 = vpop.f32.mrb[0].mxu0
      %v4877 = vadd.f32 %v4776, %v4876
      %4878 = vdwg.mxu0
      %v4879 = vand.u32 %v4534, 4294901760
      %4880 = vmatprep.subr.mxu0 %v4879
      %v4881 = vand.u32 %v4533, 4294901760
      %4882 = vmatpush1.msra.mxu0 %v4881
      %v4883 = vand.u32 %v4536, 4294901760
      %4884 = vmatprep.subr.mxu0 %v4883
      %v4885 = vand.u32 %v4535, 4294901760
      %4886 = vmatpush1.msra.mxu0 %v4885
      %v4887 = vand.u32 %v4538, 4294901760
      %4888 = vmatprep.subr.mxu0 %v4887
      %v4889 = vand.u32 %v4537, 4294901760
      %4890 = vmatpush1.msra.mxu0 %v4889
      %v4891 = vand.u32 %v4540, 4294901760
      %4892 = vmatprep.subr.mxu0 %v4891
      %v4893 = vand.u32 %v4539, 4294901760
      %4894 = vmatpush1.msra.mxu0 %v4893
      %v4895 = vand.u32 %v4550, 4294901760
      %4896 = vmatprep.subr.mxu0 %v4895
      %v4897 = vand.u32 %v4547, 4294901760
      %4898 = vmatpush1.msra.mxu0 %v4897
      %4899 = vmatprep.subr.mxu0 0.0
      %4900 = vmatpush1.msra.mxu0 0.0
      %4901 = vmatprep.subr.mxu0 0.0
      %4902 = vmatpush1.msra.mxu0 0.0
      %4903 = vmatprep.subr.mxu0 0.0
      %4904 = vmatpush1.msra.mxu0 0.0
      %4905 = vmatprep.subr.mxu0 0.0
      %4906 = vmatpush1.msra.mxu0 0.0
      %4907 = vmatprep.subr.mxu0 0.0
      %4908 = vmatpush1.msra.mxu0 0.0
      %4909 = vmatprep.subr.mxu0 0.0
      %4910 = vmatpush1.msra.mxu0 0.0
      %4911 = vmatprep.subr.mxu0 0.0
      %4912 = vmatpush1.msra.mxu0 0.0
      %4913 = vmatprep.subr.mxu0 0.0
      %4914 = vmatpush1.msra.mxu0 0.0
      %4915 = vmatprep.subr.mxu0 0.0
      %4916 = vmatpush1.msra.mxu0 0.0
      %4917 = vmatprep.subr.mxu0 0.0
      %4918 = vmatpush1.msra.mxu0 0.0
      %4919 = vmatprep.subr.mxu0 0.0
      %4920 = vmatpush1.msra.mxu0 0.0
      %4921 = vmatprep.subr.mxu0 0.0
      %4922 = vmatpush1.msra.mxu0 0.0
      %4923 = vmatprep.subr.mxu0 0.0
      %4924 = vmatpush1.msra.mxu0 0.0
      %4925 = vmatprep.subr.mxu0 0.0
      %4926 = vmatpush1.msra.mxu0 0.0
      %4927 = vmatprep.subr.mxu0 0.0
      %4928 = vmatpush1.msra.mxu0 0.0
      %4929 = vmatprep.subr.mxu0 0.0
      %4930 = vmatpush1.msra.mxu0 0.0
      %4931 = vmatprep.subr.mxu0 0.0
      %4932 = vmatpush1.msra.mxu0 0.0
      %4933 = vmatprep.subr.mxu0 0.0
      %4934 = vmatpush1.msra.mxu0 0.0
      %4935 = vmatprep.subr.mxu0 0.0
      %4936 = vmatpush1.msra.mxu0 0.0
      %4937 = vmatprep.subr.mxu0 0.0
      %4938 = vmatpush1.msra.mxu0 0.0
      %4939 = vmatprep.subr.mxu0 0.0
      %4940 = vmatpush1.msra.mxu0 0.0
      %4941 = vmatprep.subr.mxu0 0.0
      %4942 = vmatpush1.msra.mxu0 0.0
      %4943 = vmatprep.subr.mxu0 0.0
      %4944 = vmatpush1.msra.mxu0 0.0
      %4945 = vmatprep.subr.mxu0 0.0
      %4946 = vmatpush1.msra.mxu0 0.0
      %4947 = vmatprep.subr.mxu0 0.0
      %4948 = vmatpush1.msra.mxu0 0.0
      %4949 = vmatprep.subr.mxu0 0.0
      %4950 = vmatpush1.msra.mxu0 0.0
      %4951 = vmatprep.subr.mxu0 0.0
      %4952 = vmatpush1.msra.mxu0 0.0
      %4953 = vmatprep.mubr.f32.mxu0 0.0
      %v4954 = vand.u32 %v412, 4294901760
      %v4955 = vsub.f32 %v412, %v4954
      %v4956 = vand.u32 %v4955, 4294901760
      %4957 = vmatmul.mubr.f32.gmra.mrb[0].mxu0 %v4956
      %v4958 = vpop.f32.mrb[0].mxu0
      %v4959 = vadd.f32 %v4867, %v4958
      %v4960 = vpop.f32.mrb[0].mxu0
      %v4961 = vadd.f32 %v4869, %v4960
      %4962 = vmatprep.mubr.f32.mxu0 0.0
      %v4963 = vand.u32 %v415, 4294901760
      %v4964 = vsub.f32 %v415, %v4963
      %v4965 = vand.u32 %v4964, 4294901760
      %4966 = vmatmul.mubr.f32.gmra.mrb[0].mxu0 %v4965
      %v4967 = vpop.f32.mrb[0].mxu0
      %v4968 = vadd.f32 %v4875, %v4967
      %v4969 = vpop.f32.mrb[0].mxu0
      %v4970 = vadd.f32 %v4877, %v4969
      %4971 = vdwg.mxu0
      %v4972 = vand.u32 %v4534, 4294901760
      %v4973 = vsub.f32 %v4534, %v4972
      %v4974 = vand.u32 %v4973, 4294901760
      %4975 = vmatprep.subr.mxu0 %v4974
      %v4976 = vand.u32 %v4533, 4294901760
      %v4977 = vsub.f32 %v4533, %v4976
      %v4978 = vand.u32 %v4977, 4294901760
      %4979 = vmatpush1.msra.mxu0 %v4978
      %v4980 = vand.u32 %v4536, 4294901760
      %v4981 = vsub.f32 %v4536, %v4980
      %v4982 = vand.u32 %v4981, 4294901760
      %4983 = vmatprep.subr.mxu0 %v4982
      %v4984 = vand.u32 %v4535, 4294901760
      %v4985 = vsub.f32 %v4535, %v4984
      %v4986 = vand.u32 %v4985, 4294901760
      %4987 = vmatpush1.msra.mxu0 %v4986
      %v4988 = vand.u32 %v4538, 4294901760
      %v4989 = vsub.f32 %v4538, %v4988
      %v4990 = vand.u32 %v4989, 4294901760
      %4991 = vmatprep.subr.mxu0 %v4990
      %v4992 = vand.u32 %v4537, 4294901760
      %v4993 = vsub.f32 %v4537, %v4992
      %v4994 = vand.u32 %v4993, 4294901760
      %4995 = vmatpush1.msra.mxu0 %v4994
      %v4996 = vand.u32 %v4540, 4294901760
      %v4997 = vsub.f32 %v4540, %v4996
      %v4998 = vand.u32 %v4997, 4294901760
      %4999 = vmatprep.subr.mxu0 %v4998
      %v5000 = vand.u32 %v4539, 4294901760
      %v5001 = vsub.f32 %v4539, %v5000
      %v5002 = vand.u32 %v5001, 4294901760
      %5003 = vmatpush1.msra.mxu0 %v5002
      %v5004 = vand.u32 %v4550, 4294901760
      %v5005 = vsub.f32 %v4550, %v5004
      %v5006 = vand.u32 %v5005, 4294901760
      %5007 = vmatprep.subr.mxu0 %v5006
      %v5008 = vand.u32 %v4547, 4294901760
      %v5009 = vsub.f32 %v4547, %v5008
      %v5010 = vand.u32 %v5009, 4294901760
      %5011 = vmatpush1.msra.mxu0 %v5010
      %5012 = vmatprep.subr.mxu0 0.0
      %5013 = vmatpush1.msra.mxu0 0.0
      %5014 = vmatprep.subr.mxu0 0.0
      %5015 = vmatpush1.msra.mxu0 0.0
      %5016 = vmatprep.subr.mxu0 0.0
      %5017 = vmatpush1.msra.mxu0 0.0
      %5018 = vmatprep.subr.mxu0 0.0
      %5019 = vmatpush1.msra.mxu0 0.0
      %5020 = vmatprep.subr.mxu0 0.0
      %5021 = vmatpush1.msra.mxu0 0.0
      %5022 = vmatprep.subr.mxu0 0.0
      %5023 = vmatpush1.msra.mxu0 0.0
      %5024 = vmatprep.subr.mxu0 0.0
      %5025 = vmatpush1.msra.mxu0 0.0
      %5026 = vmatprep.subr.mxu0 0.0
      %5027 = vmatpush1.msra.mxu0 0.0
      %5028 = vmatprep.subr.mxu0 0.0
      %5029 = vmatpush1.msra.mxu0 0.0
      %5030 = vmatprep.subr.mxu0 0.0
      %5031 = vmatpush1.msra.mxu0 0.0
      %5032 = vmatprep.subr.mxu0 0.0
      %5033 = vmatpush1.msra.mxu0 0.0
      %5034 = vmatprep.subr.mxu0 0.0
      %5035 = vmatpush1.msra.mxu0 0.0
      %5036 = vmatprep.subr.mxu0 0.0
      %5037 = vmatpush1.msra.mxu0 0.0
      %5038 = vmatprep.subr.mxu0 0.0
      %5039 = vmatpush1.msra.mxu0 0.0
      %5040 = vmatprep.subr.mxu0 0.0
      %5041 = vmatpush1.msra.mxu0 0.0
      %5042 = vmatprep.subr.mxu0 0.0
      %5043 = vmatpush1.msra.mxu0 0.0
      %5044 = vmatprep.subr.mxu0 0.0
      %5045 = vmatpush1.msra.mxu0 0.0
      %5046 = vmatprep.subr.mxu0 0.0
      %5047 = vmatpush1.msra.mxu0 0.0
      %5048 = vmatprep.subr.mxu0 0.0
      %5049 = vmatpush1.msra.mxu0 0.0
      %5050 = vmatprep.subr.mxu0 0.0
      %5051 = vmatpush1.msra.mxu0 0.0
      %5052 = vmatprep.subr.mxu0 0.0
      %5053 = vmatpush1.msra.mxu0 0.0
      %5054 = vmatprep.subr.mxu0 0.0
      %5055 = vmatpush1.msra.mxu0 0.0
      %5056 = vmatprep.subr.mxu0 0.0
      %5057 = vmatpush1.msra.mxu0 0.0
      %5058 = vmatprep.subr.mxu0 0.0
      %5059 = vmatpush1.msra.mxu0 0.0
      %5060 = vmatprep.subr.mxu0 0.0
      %5061 = vmatpush1.msra.mxu0 0.0
      %5062 = vmatprep.subr.mxu0 0.0
      %5063 = vmatpush1.msra.mxu0 0.0
      %5064 = vmatprep.subr.mxu0 0.0
      %5065 = vmatpush1.msra.mxu0 0.0
      %5066 = vmatprep.mubr.f32.mxu0 0.0
      %v5067 = vand.u32 %v412, 4294901760
      %5068 = vmatmul.mubr.f32.gmra.mrb[0].mxu0 %v5067
      %v5069 = vpop.f32.mrb[0].mxu0
      %v5070 = vadd.f32 %v4959, %v5069
      %v5071 = vpop.f32.mrb[0].mxu0
      %v5072 = vadd.f32 %v4961, %v5071
      %5073 = vmatprep.mubr.f32.mxu0 0.0
      %v5074 = vand.u32 %v415, 4294901760
      %5075 = vmatmul.mubr.f32.gmra.mrb[0].mxu0 %v5074
      %v5076 = vpop.f32.mrb[0].mxu0
      %v5077 = vadd.f32 %v4968, %v5076
      %v5078 = vpop.f32.mrb[0].mxu0
      %v5079 = vadd.f32 %v4970, %v5078
      %5080 = vdwg.mxu0
      %v5081 = vand.u32 %v4534, 4294901760
      %5082 = vmatprep.subr.mxu0 %v5081
      %v5083 = vand.u32 %v4533, 4294901760
      %5084 = vmatpush1.msra.mxu0 %v5083
      %v5085 = vand.u32 %v4536, 4294901760
      %5086 = vmatprep.subr.mxu0 %v5085
      %v5087 = vand.u32 %v4535, 4294901760
      %5088 = vmatpush1.msra.mxu0 %v5087
      %v5089 = vand.u32 %v4538, 4294901760
      %5090 = vmatprep.subr.mxu0 %v5089
      %v5091 = vand.u32 %v4537, 4294901760
      %5092 = vmatpush1.msra.mxu0 %v5091
      %v5093 = vand.u32 %v4540, 4294901760
      %5094 = vmatprep.subr.mxu0 %v5093
      %v5095 = vand.u32 %v4539, 4294901760
      %5096 = vmatpush1.msra.mxu0 %v5095
      %v5097 = vand.u32 %v4550, 4294901760
      %5098 = vmatprep.subr.mxu0 %v5097
      %v5099 = vand.u32 %v4547, 4294901760
      %5100 = vmatpush1.msra.mxu0 %v5099
      %5101 = vmatprep.subr.mxu0 0.0
      %5102 = vmatpush1.msra.mxu0 0.0
      %5103 = vmatprep.subr.mxu0 0.0
      %5104 = vmatpush1.msra.mxu0 0.0
      %5105 = vmatprep.subr.mxu0 0.0
      %5106 = vmatpush1.msra.mxu0 0.0
      %5107 = vmatprep.subr.mxu0 0.0
      %5108 = vmatpush1.msra.mxu0 0.0
      %5109 = vmatprep.subr.mxu0 0.0
      %5110 = vmatpush1.msra.mxu0 0.0
      %5111 = vmatprep.subr.mxu0 0.0
      %5112 = vmatpush1.msra.mxu0 0.0
      %5113 = vmatprep.subr.mxu0 0.0
      %5114 = vmatpush1.msra.mxu0 0.0
      %5115 = vmatprep.subr.mxu0 0.0
      %5116 = vmatpush1.msra.mxu0 0.0
      %5117 = vmatprep.subr.mxu0 0.0
      %5118 = vmatpush1.msra.mxu0 0.0
      %5119 = vmatprep.subr.mxu0 0.0
      %5120 = vmatpush1.msra.mxu0 0.0
      %5121 = vmatprep.subr.mxu0 0.0
      %5122 = vmatpush1.msra.mxu0 0.0
      %5123 = vmatprep.subr.mxu0 0.0
      %5124 = vmatpush1.msra.mxu0 0.0
      %5125 = vmatprep.subr.mxu0 0.0
      %5126 = vmatpush1.msra.mxu0 0.0
      %5127 = vmatprep.subr.mxu0 0.0
      %5128 = vmatpush1.msra.mxu0 0.0
      %5129 = vmatprep.subr.mxu0 0.0
      %5130 = vmatpush1.msra.mxu0 0.0
      %5131 = vmatprep.subr.mxu0 0.0
      %5132 = vmatpush1.msra.mxu0 0.0
      %5133 = vmatprep.subr.mxu0 0.0
      %5134 = vmatpush1.msra.mxu0 0.0
      %5135 = vmatprep.subr.mxu0 0.0
      %5136 = vmatpush1.msra.mxu0 0.0
      %5137 = vmatprep.subr.mxu0 0.0
      %5138 = vmatpush1.msra.mxu0 0.0
      %5139 = vmatprep.subr.mxu0 0.0
      %5140 = vmatpush1.msra.mxu0 0.0
      %5141 = vmatprep.subr.mxu0 0.0
      %5142 = vmatpush1.msra.mxu0 0.0
      %5143 = vmatprep.subr.mxu0 0.0
      %5144 = vmatpush1.msra.mxu0 0.0
      %5145 = vmatprep.subr.mxu0 0.0
      %5146 = vmatpush1.msra.mxu0 0.0
      %5147 = vmatprep.subr.mxu0 0.0
      %5148 = vmatpush1.msra.mxu0 0.0
      %5149 = vmatprep.subr.mxu0 0.0
      %5150 = vmatpush1.msra.mxu0 0.0
      %5151 = vmatprep.subr.mxu0 0.0
      %5152 = vmatpush1.msra.mxu0 0.0
      %5153 = vmatprep.subr.mxu0 0.0
      %5154 = vmatpush1.msra.mxu0 0.0
      %5155 = vmatprep.mubr.f32.mxu0 0.0
      %v5156 = vand.u32 %v412, 4294901760
      %5157 = vmatmul.mubr.f32.gmra.mrb[0].mxu0 %v5156
      %v5158 = vpop.f32.mrb[0].mxu0
      %v5159 = vadd.f32 %v5070, %v5158
      %v5160 = vpop.f32.mrb[0].mxu0
      %v5161 = vadd.f32 %v5072, %v5160
      %5162 = vmatprep.mubr.f32.mxu0 0.0
      %v5163 = vand.u32 %v415, 4294901760
      %5164 = vmatmul.mubr.f32.gmra.mrb[0].mxu0 %v5163
      %v5165 = vpop.f32.mrb[0].mxu0
      %v5166 = vadd.f32 %v5077, %v5165
      %v5167 = vpop.f32.mrb[0].mxu0
      %v5168 = vadd.f32 %v5079, %v5167
      %5169 = vdwg.mxu0
      %v5170 = vxor.u32 %v5159, 2147483648
      %v5171 = vxor.u32 %v5161, 2147483648
      %v5172 = vmul.f32 %v5170, 1.442695
      %v5173 = vpow.pop %v5172
      %v5174 = vmul.f32 %v5171, 1.442695
      %v5175 = vpow.pop %v5174
      %v5176 = vadd.f32 %v5173, 1.0
      %v5177 = vadd.f32 %v5175, 1.0
      %v5178 = vrcp.pop %v5176
      %v5179 = vmul.f32 1.0, %v5178
      %v5180 = vrcp.pop %v5177
      %v5181 = vmul.f32 1.0, %v5180
      %v5182 = vtanh.pop %v5166
      %v5183 = vtanh.pop %v5168
      %v5184 = vxor.u32 %v5166, 2147483648
      %v5185 = vxor.u32 %v5168, 2147483648
      %v5186 = vmul.f32 %v5184, 1.442695
      %v5187 = vpow.pop %v5186
      %v5188 = vmul.f32 %v5185, 1.442695
      %v5189 = vpow.pop %v5188
      %v5190 = vadd.f32 %v5187, 1.0
      %v5191 = vadd.f32 %v5189, 1.0
      %v5192 = vrcp.pop %v5190
      %v5193 = vmul.f32 1.0, %v5192
      %v5194 = vrcp.pop %v5191
      %v5195 = vmul.f32 1.0, %v5194
      %v5196 = vmul.f32 %v5179, %v4425
      %v5197 = vmul.f32 %v5181, %v4426
      %v5198 = vmul.f32 %v5179, %v5182
      %v5199 = vmul.f32 %v5181, %v5183
      %v5202 = vrot.slane %v5198, 4
      %v5203 = vrot.slane %v5199, 4
      %v5206 = vadd.f32 %v5196, %v5202
      %v5207 = vadd.f32 %v5197, %v5203
      %v5208 = vtanh.pop %v5206
      %v5209 = vtanh.pop %v5207
      %v5210 = vmul.f32 %v5193, %v5208
      %v5211 = vmul.f32 %v5195, %v5209
      %v5212 = vsel %vm397, %v4433, %v5210
      %v5213 = vsel %vm397, %v4434, %v5211
      %5214 = vst [vmem:[%s205 + $0x20] sm:$0xff] %v5212
      %5215 = vst [vmem:[%s205 + $0x28] sm:$0xff] %v5213
      %v5218 = vrot.slane %v5210, 4
      %v5219 = vrot.slane %v5211, 4
      %5222 = vrot.lane.b32.xlu0 %v5218, 17
      %v5223 = vpop.permute.xlu0 %5222
      %5224 = vrot.lane.b32.xlu0 %v5219, 17
      %v5225 = vpop.permute.xlu0 %5224
      %v5226 = vsel %vm217, %v5223, %v5225
      %v5227 = vsel %vm217, %v5225, %v5223
      %v5228 = vld [vmem:[%s2] ss:$8 sm:$0x3]
      %v5230 = vlaneseq
      %v5231 = vshrl.u32 %v5230, 7
      %v5232 = vsub.s32 0, %v5231
      %v5233 = vrot.slane %v5228, %v5232
      %v5234 = vlaneseq
      %v5235 = vshrl.u32 %v5234, 7
      %v5236 = vsub.s32 1, %v5235
      %v5237 = vrot.slane %v5228, %v5236
      %v5240 = vmul.f32 %v5227, %v5233
      %v5241 = vmul.f32 %v5226, %v5237
      %5242 = vrot.lane.b32.xlu0 %v5218, 16
      %v5243 = vpop.permute.xlu0 %5242
      %5244 = vrot.lane.b32.xlu0 %v5219, 16
      %v5245 = vpop.permute.xlu0 %5244
      %v5246 = vsel %vm234, %v5243, %v5245
      %v5247 = vsel %vm234, %v5245, %v5243
      %v5248 = vld [vmem:[%s235] ss:$8 sm:$0x3]
      %v5250 = vlaneseq
      %v5251 = vshrl.u32 %v5250, 7
      %v5252 = vsub.s32 0, %v5251
      %v5253 = vrot.slane %v5248, %v5252
      %v5254 = vlaneseq
      %v5255 = vshrl.u32 %v5254, 7
      %v5256 = vsub.s32 1, %v5255
      %v5257 = vrot.slane %v5248, %v5256
      %v5260 = vmul.f32 %v5247, %v5253
      %v5261 = vmul.f32 %v5246, %v5257
      %5262 = vrot.lane.b32.xlu0 %v5218, 15
      %v5263 = vpop.permute.xlu0 %5262
      %5264 = vrot.lane.b32.xlu0 %v5219, 15
      %v5265 = vpop.permute.xlu0 %5264
      %v5266 = vsel %vm252, %v5263, %v5265
      %v5267 = vsel %vm252, %v5265, %v5263
      %v5268 = vld [vmem:[%s253] ss:$8 sm:$0x3]
      %v5270 = vlaneseq
      %v5271 = vshrl.u32 %v5270, 7
      %v5272 = vsub.s32 0, %v5271
      %v5273 = vrot.slane %v5268, %v5272
      %v5274 = vlaneseq
      %v5275 = vshrl.u32 %v5274, 7
      %v5276 = vsub.s32 1, %v5275
      %v5277 = vrot.slane %v5268, %v5276
      %v5280 = vmul.f32 %v5267, %v5273
      %v5281 = vmul.f32 %v5266, %v5277
      %5282 = vrot.lane.b32.xlu0 %v5218, 1
      %v5283 = vpop.permute.xlu0 %5282
      %5284 = vrot.lane.b32.xlu0 %v5219, 1
      %v5285 = vpop.permute.xlu0 %5284
      %v5286 = vsel %vm270, %v5283, %v5285
      %v5287 = vsel %vm270, %v5285, %v5283
      %v5288 = vld [vmem:[%s271] ss:$8 sm:$0x3]
      %v5290 = vlaneseq
      %v5291 = vshrl.u32 %v5290, 7
      %v5292 = vsub.s32 0, %v5291
      %v5293 = vrot.slane %v5288, %v5292
      %v5294 = vlaneseq
      %v5295 = vshrl.u32 %v5294, 7
      %v5296 = vsub.s32 1, %v5295
      %v5297 = vrot.slane %v5288, %v5296
      %v5300 = vmul.f32 %v5287, %v5293
      %v5301 = vmul.f32 %v5286, %v5297
      %v5302 = vld [vmem:[%s286] ss:$8 sm:$0x3]
      %v5304 = vlaneseq
      %v5305 = vshrl.u32 %v5304, 7
      %v5306 = vsub.s32 0, %v5305
      %v5307 = vrot.slane %v5302, %v5306
      %v5308 = vlaneseq
      %v5309 = vshrl.u32 %v5308, 7
      %v5310 = vsub.s32 1, %v5309
      %v5311 = vrot.slane %v5302, %v5310
      %v5314 = vmul.f32 %v5210, %v5307
      %v5315 = vmul.f32 %v5211, %v5311
      %5316 = vrot.lane.b32.xlu0 %v5218, 127
      %v5317 = vpop.permute.xlu0 %5316
      %5318 = vrot.lane.b32.xlu0 %v5219, 127
      %v5319 = vpop.permute.xlu0 %5318
      %v5320 = vsel %vm303, %v5317, %v5319
      %v5321 = vsel %vm303, %v5319, %v5317
      %v5322 = vld [vmem:[%s304] ss:$8 sm:$0x3]
      %v5324 = vlaneseq
      %v5325 = vshrl.u32 %v5324, 7
      %v5326 = vsub.s32 0, %v5325
      %v5327 = vrot.slane %v5322, %v5326
      %v5328 = vlaneseq
      %v5329 = vshrl.u32 %v5328, 7
      %v5330 = vsub.s32 1, %v5329
      %v5331 = vrot.slane %v5322, %v5330
      %v5334 = vmul.f32 %v5320, %v5327
      %v5335 = vmul.f32 %v5321, %v5331
      %5336 = vrot.lane.b32.xlu0 %v5218, 113
      %v5337 = vpop.permute.xlu0 %5336
      %5338 = vrot.lane.b32.xlu0 %v5219, 113
      %v5339 = vpop.permute.xlu0 %5338
      %v5340 = vsel %vm321, %v5337, %v5339
      %v5341 = vsel %vm321, %v5339, %v5337
      %v5342 = vld [vmem:[%s322] ss:$8 sm:$0x3]
      %v5344 = vlaneseq
      %v5345 = vshrl.u32 %v5344, 7
      %v5346 = vsub.s32 0, %v5345
      %v5347 = vrot.slane %v5342, %v5346
      %v5348 = vlaneseq
      %v5349 = vshrl.u32 %v5348, 7
      %v5350 = vsub.s32 1, %v5349
      %v5351 = vrot.slane %v5342, %v5350
      %v5354 = vmul.f32 %v5340, %v5347
      %v5355 = vmul.f32 %v5341, %v5351
      %5356 = vrot.lane.b32.xlu0 %v5218, 112
      %v5357 = vpop.permute.xlu0 %5356
      %5358 = vrot.lane.b32.xlu0 %v5219, 112
      %v5359 = vpop.permute.xlu0 %5358
      %v5360 = vsel %vm339, %v5357, %v5359
      %v5361 = vsel %vm339, %v5359, %v5357
      %v5362 = vld [vmem:[%s340] ss:$8 sm:$0x3]
      %v5364 = vlaneseq
      %v5365 = vshrl.u32 %v5364, 7
      %v5366 = vsub.s32 0, %v5365
      %v5367 = vrot.slane %v5362, %v5366
      %v5368 = vlaneseq
      %v5369 = vshrl.u32 %v5368, 7
      %v5370 = vsub.s32 1, %v5369
      %v5371 = vrot.slane %v5362, %v5370
      %v5374 = vmul.f32 %v5360, %v5367
      %v5375 = vmul.f32 %v5361, %v5371
      %5376 = vrot.lane.b32.xlu0 %v5218, 111
      %v5377 = vpop.permute.xlu0 %5376
      %5378 = vrot.lane.b32.xlu0 %v5219, 111
      %v5379 = vpop.permute.xlu0 %5378
      %v5380 = vsel %vm357, %v5377, %v5379
      %v5381 = vsel %vm357, %v5379, %v5377
      %v5382 = vld [vmem:[%s358] ss:$8 sm:$0x3]
      %v5384 = vlaneseq
      %v5385 = vshrl.u32 %v5384, 7
      %v5386 = vsub.s32 0, %v5385
      %v5387 = vrot.slane %v5382, %v5386
      %v5388 = vlaneseq
      %v5389 = vshrl.u32 %v5388, 7
      %v5390 = vsub.s32 1, %v5389
      %v5391 = vrot.slane %v5382, %v5390
      %v5394 = vmul.f32 %v5380, %v5387
      %v5395 = vmul.f32 %v5381, %v5391
      %v5398 = vrot.slane %v5260, 4
      %v5399 = vrot.slane %v5261, 4
      %v5404 = vrot.slane %v5300, 4
      %v5405 = vrot.slane %v5301, 4
      %v5410 = vrot.slane %v5314, 4
      %v5411 = vrot.slane %v5315, 4
      %v5416 = vrot.slane %v5334, 4
      %v5417 = vrot.slane %v5335, 4
      %v5422 = vrot.slane %v5374, 4
      %v5423 = vrot.slane %v5375, 4
      %v5426 = vsel %vm397, %v5240, %v5398
      %v5427 = vsel %vm397, %v5241, %v5399
      %v5428 = vsel %vm397, %v5280, %v5404
      %v5429 = vsel %vm397, %v5281, %v5405
      %v5430 = vsel %vm397, %v5410, %v5416
      %v5431 = vsel %vm397, %v5411, %v5417
      %v5432 = vsel %vm397, %v5354, %v5422
      %v5433 = vsel %vm397, %v5355, %v5423
      %s5434 = scalar_lea.vmem %s200, 192
      %v5435 = vld [vmem:[%s5434] sm:$0xff]
      %v5436 = vld [vmem:[%s5434 + $0x8] sm:$0xff]
      %v5437 = vld [vmem:[%s5434 + $0x10] sm:$0xff]
      %v5438 = vld [vmem:[%s5434 + $0x18] sm:$0xff]
      %v5440 = vsel %vm397, %v5394, 0
      %v5443 = vsel %vm397, %v5395, 0
      %v5445 = vand.u32 %v5427, 4294901760
      %5446 = vmatprep.subr.mxu0 %v5445
      %v5447 = vand.u32 %v5426, 4294901760
      %5448 = vmatpush1.msra.mxu0 %v5447
      %v5449 = vand.u32 %v5429, 4294901760
      %5450 = vmatprep.subr.mxu0 %v5449
      %v5451 = vand.u32 %v5428, 4294901760
      %5452 = vmatpush1.msra.mxu0 %v5451
      %v5453 = vand.u32 %v5431, 4294901760
      %5454 = vmatprep.subr.mxu0 %v5453
      %v5455 = vand.u32 %v5430, 4294901760
      %5456 = vmatpush1.msra.mxu0 %v5455
      %v5457 = vand.u32 %v5433, 4294901760
      %5458 = vmatprep.subr.mxu0 %v5457
      %v5459 = vand.u32 %v5432, 4294901760
      %5460 = vmatpush1.msra.mxu0 %v5459
      %v5461 = vand.u32 %v5443, 4294901760
      %5462 = vmatprep.subr.mxu0 %v5461
      %v5463 = vand.u32 %v5440, 4294901760
      %5464 = vmatpush1.msra.mxu0 %v5463
      %5465 = vmatprep.subr.mxu0 0.0
      %5466 = vmatpush1.msra.mxu0 0.0
      %5467 = vmatprep.subr.mxu0 0.0
      %5468 = vmatpush1.msra.mxu0 0.0
      %5469 = vmatprep.subr.mxu0 0.0
      %5470 = vmatpush1.msra.mxu0 0.0
      %5471 = vmatprep.subr.mxu0 0.0
      %5472 = vmatpush1.msra.mxu0 0.0
      %5473 = vmatprep.subr.mxu0 0.0
      %5474 = vmatpush1.msra.mxu0 0.0
      %5475 = vmatprep.subr.mxu0 0.0
      %5476 = vmatpush1.msra.mxu0 0.0
      %5477 = vmatprep.subr.mxu0 0.0
      %5478 = vmatpush1.msra.mxu0 0.0
      %5479 = vmatprep.subr.mxu0 0.0
      %5480 = vmatpush1.msra.mxu0 0.0
      %5481 = vmatprep.subr.mxu0 0.0
      %5482 = vmatpush1.msra.mxu0 0.0
      %5483 = vmatprep.subr.mxu0 0.0
      %5484 = vmatpush1.msra.mxu0 0.0
      %5485 = vmatprep.subr.mxu0 0.0
      %5486 = vmatpush1.msra.mxu0 0.0
      %5487 = vmatprep.subr.mxu0 0.0
      %5488 = vmatpush1.msra.mxu0 0.0
      %5489 = vmatprep.subr.mxu0 0.0
      %5490 = vmatpush1.msra.mxu0 0.0
      %5491 = vmatprep.subr.mxu0 0.0
      %5492 = vmatpush1.msra.mxu0 0.0
      %5493 = vmatprep.subr.mxu0 0.0
      %5494 = vmatpush1.msra.mxu0 0.0
      %5495 = vmatprep.subr.mxu0 0.0
      %5496 = vmatpush1.msra.mxu0 0.0
      %5497 = vmatprep.subr.mxu0 0.0
      %5498 = vmatpush1.msra.mxu0 0.0
      %5499 = vmatprep.subr.mxu0 0.0
      %5500 = vmatpush1.msra.mxu0 0.0
      %5501 = vmatprep.subr.mxu0 0.0
      %5502 = vmatpush1.msra.mxu0 0.0
      %5503 = vmatprep.subr.mxu0 0.0
      %5504 = vmatpush1.msra.mxu0 0.0
      %5505 = vmatprep.subr.mxu0 0.0
      %5506 = vmatpush1.msra.mxu0 0.0
      %5507 = vmatprep.subr.mxu0 0.0
      %5508 = vmatpush1.msra.mxu0 0.0
      %5509 = vmatprep.subr.mxu0 0.0
      %5510 = vmatpush1.msra.mxu0 0.0
      %5511 = vmatprep.subr.mxu0 0.0
      %5512 = vmatpush1.msra.mxu0 0.0
      %5513 = vmatprep.subr.mxu0 0.0
      %5514 = vmatpush1.msra.mxu0 0.0
      %5515 = vmatprep.subr.mxu0 0.0
      %5516 = vmatpush1.msra.mxu0 0.0
      %5517 = vmatprep.subr.mxu0 0.0
      %5518 = vmatpush1.msra.mxu0 0.0
      %5519 = vmatprep.mubr.f32.mxu0 0.0
      %v5520 = vand.u32 %v412, 4294901760
      %v5521 = vsub.f32 %v412, %v5520
      %v5522 = vand.u32 %v5521, 4294901760
      %v5523 = vsub.f32 %v5521, %v5522
      %v5524 = vand.u32 %v5523, 4294901760
      %5525 = vmatmul.mubr.f32.gmra.mrb[0].mxu0 %v5524
      %v5526 = vpop.f32.mrb[0].mxu0
      %v5527 = vadd.f32 %v5435, %v5526
      %v5528 = vpop.f32.mrb[0].mxu0
      %v5529 = vadd.f32 %v5436, %v5528
      %5530 = vmatprep.mubr.f32.mxu0 0.0
      %v5531 = vand.u32 %v415, 4294901760
      %v5532 = vsub.f32 %v415, %v5531
      %v5533 = vand.u32 %v5532, 4294901760
      %v5534 = vsub.f32 %v5532, %v5533
      %v5535 = vand.u32 %v5534, 4294901760
      %5536 = vmatmul.mubr.f32.gmra.mrb[0].mxu0 %v5535
      %v5537 = vpop.f32.mrb[0].mxu0
      %v5538 = vadd.f32 %v5437, %v5537
      %v5539 = vpop.f32.mrb[0].mxu0
      %v5540 = vadd.f32 %v5438, %v5539
      %5541 = vdwg.mxu0
      %v5542 = vand.u32 %v5427, 4294901760
      %v5543 = vsub.f32 %v5427, %v5542
      %v5544 = vand.u32 %v5543, 4294901760
      %v5545 = vsub.f32 %v5543, %v5544
      %v5546 = vand.u32 %v5545, 4294901760
      %5547 = vmatprep.subr.mxu0 %v5546
      %v5548 = vand.u32 %v5426, 4294901760
      %v5549 = vsub.f32 %v5426, %v5548
      %v5550 = vand.u32 %v5549, 4294901760
      %v5551 = vsub.f32 %v5549, %v5550
      %v5552 = vand.u32 %v5551, 4294901760
      %5553 = vmatpush1.msra.mxu0 %v5552
      %v5554 = vand.u32 %v5429, 4294901760
      %v5555 = vsub.f32 %v5429, %v5554
      %v5556 = vand.u32 %v5555, 4294901760
      %v5557 = vsub.f32 %v5555, %v5556
      %v5558 = vand.u32 %v5557, 4294901760
      %5559 = vmatprep.subr.mxu0 %v5558
      %v5560 = vand.u32 %v5428, 4294901760
      %v5561 = vsub.f32 %v5428, %v5560
      %v5562 = vand.u32 %v5561, 4294901760
      %v5563 = vsub.f32 %v5561, %v5562
      %v5564 = vand.u32 %v5563, 4294901760
      %5565 = vmatpush1.msra.mxu0 %v5564
      %v5566 = vand.u32 %v5431, 4294901760
      %v5567 = vsub.f32 %v5431, %v5566
      %v5568 = vand.u32 %v5567, 4294901760
      %v5569 = vsub.f32 %v5567, %v5568
      %v5570 = vand.u32 %v5569, 4294901760
      %5571 = vmatprep.subr.mxu0 %v5570
      %v5572 = vand.u32 %v5430, 4294901760
      %v5573 = vsub.f32 %v5430, %v5572
      %v5574 = vand.u32 %v5573, 4294901760
      %v5575 = vsub.f32 %v5573, %v5574
      %v5576 = vand.u32 %v5575, 4294901760
      %5577 = vmatpush1.msra.mxu0 %v5576
      %v5578 = vand.u32 %v5433, 4294901760
      %v5579 = vsub.f32 %v5433, %v5578
      %v5580 = vand.u32 %v5579, 4294901760
      %v5581 = vsub.f32 %v5579, %v5580
      %v5582 = vand.u32 %v5581, 4294901760
      %5583 = vmatprep.subr.mxu0 %v5582
      %v5584 = vand.u32 %v5432, 4294901760
      %v5585 = vsub.f32 %v5432, %v5584
      %v5586 = vand.u32 %v5585, 4294901760
      %v5587 = vsub.f32 %v5585, %v5586
      %v5588 = vand.u32 %v5587, 4294901760
      %5589 = vmatpush1.msra.mxu0 %v5588
      %v5590 = vand.u32 %v5443, 4294901760
      %v5591 = vsub.f32 %v5443, %v5590
      %v5592 = vand.u32 %v5591, 4294901760
      %v5593 = vsub.f32 %v5591, %v5592
      %v5594 = vand.u32 %v5593, 4294901760
      %5595 = vmatprep.subr.mxu0 %v5594
      %v5596 = vand.u32 %v5440, 4294901760
      %v5597 = vsub.f32 %v5440, %v5596
      %v5598 = vand.u32 %v5597, 4294901760
      %v5599 = vsub.f32 %v5597, %v5598
      %v5600 = vand.u32 %v5599, 4294901760
      %5601 = vmatpush1.msra.mxu0 %v5600
      %5602 = vmatprep.subr.mxu0 0.0
      %5603 = vmatpush1.msra.mxu0 0.0
      %5604 = vmatprep.subr.mxu0 0.0
      %5605 = vmatpush1.msra.mxu0 0.0
      %5606 = vmatprep.subr.mxu0 0.0
      %5607 = vmatpush1.msra.mxu0 0.0
      %5608 = vmatprep.subr.mxu0 0.0
      %5609 = vmatpush1.msra.mxu0 0.0
      %5610 = vmatprep.subr.mxu0 0.0
      %5611 = vmatpush1.msra.mxu0 0.0
      %5612 = vmatprep.subr.mxu0 0.0
      %5613 = vmatpush1.msra.mxu0 0.0
      %5614 = vmatprep.subr.mxu0 0.0
      %5615 = vmatpush1.msra.mxu0 0.0
      %5616 = vmatprep.subr.mxu0 0.0
      %5617 = vmatpush1.msra.mxu0 0.0
      %5618 = vmatprep.subr.mxu0 0.0
      %5619 = vmatpush1.msra.mxu0 0.0
      %5620 = vmatprep.subr.mxu0 0.0
      %5621 = vmatpush1.msra.mxu0 0.0
      %5622 = vmatprep.subr.mxu0 0.0
      %5623 = vmatpush1.msra.mxu0 0.0
      %5624 = vmatprep.subr.mxu0 0.0
      %5625 = vmatpush1.msra.mxu0 0.0
      %5626 = vmatprep.subr.mxu0 0.0
      %5627 = vmatpush1.msra.mxu0 0.0
      %5628 = vmatprep.subr.mxu0 0.0
      %5629 = vmatpush1.msra.mxu0 0.0
      %5630 = vmatprep.subr.mxu0 0.0
      %5631 = vmatpush1.msra.mxu0 0.0
      %5632 = vmatprep.subr.mxu0 0.0
      %5633 = vmatpush1.msra.mxu0 0.0
      %5634 = vmatprep.subr.mxu0 0.0
      %5635 = vmatpush1.msra.mxu0 0.0
      %5636 = vmatprep.subr.mxu0 0.0
      %5637 = vmatpush1.msra.mxu0 0.0
      %5638 = vmatprep.subr.mxu0 0.0
      %5639 = vmatpush1.msra.mxu0 0.0
      %5640 = vmatprep.subr.mxu0 0.0
      %5641 = vmatpush1.msra.mxu0 0.0
      %5642 = vmatprep.subr.mxu0 0.0
      %5643 = vmatpush1.msra.mxu0 0.0
      %5644 = vmatprep.subr.mxu0 0.0
      %5645 = vmatpush1.msra.mxu0 0.0
      %5646 = vmatprep.subr.mxu0 0.0
      %5647 = vmatpush1.msra.mxu0 0.0
      %5648 = vmatprep.subr.mxu0 0.0
      %5649 = vmatpush1.msra.mxu0 0.0
      %5650 = vmatprep.subr.mxu0 0.0
      %5651 = vmatpush1.msra.mxu0 0.0
      %5652 = vmatprep.subr.mxu0 0.0
      %5653 = vmatpush1.msra.mxu0 0.0
      %5654 = vmatprep.subr.mxu0 0.0
      %5655 = vmatpush1.msra.mxu0 0.0
      %5656 = vmatprep.mubr.f32.mxu0 0.0
      %v5657 = vand.u32 %v412, 4294901760
      %5658 = vmatmul.mubr.f32.gmra.mrb[0].mxu0 %v5657
      %v5659 = vpop.f32.mrb[0].mxu0
      %v5660 = vadd.f32 %v5527, %v5659
      %v5661 = vpop.f32.mrb[0].mxu0
      %v5662 = vadd.f32 %v5529, %v5661
      %5663 = vmatprep.mubr.f32.mxu0 0.0
      %v5664 = vand.u32 %v415, 4294901760
      %5665 = vmatmul.mubr.f32.gmra.mrb[0].mxu0 %v5664
      %v5666 = vpop.f32.mrb[0].mxu0
      %v5667 = vadd.f32 %v5538, %v5666
      %v5668 = vpop.f32.mrb[0].mxu0
      %v5669 = vadd.f32 %v5540, %v5668
      %5670 = vdwg.mxu0
      %v5671 = vand.u32 %v5427, 4294901760
      %v5672 = vsub.f32 %v5427, %v5671
      %5673 = vmatprep.subr.mxu0 %v5672
      %v5674 = vand.u32 %v5426, 4294901760
      %v5675 = vsub.f32 %v5426, %v5674
      %5676 = vmatpush1.msra.mxu0 %v5675
      %v5677 = vand.u32 %v5429, 4294901760
      %v5678 = vsub.f32 %v5429, %v5677
      %5679 = vmatprep.subr.mxu0 %v5678
      %v5680 = vand.u32 %v5428, 4294901760
      %v5681 = vsub.f32 %v5428, %v5680
      %5682 = vmatpush1.msra.mxu0 %v5681
      %v5683 = vand.u32 %v5431, 4294901760
      %v5684 = vsub.f32 %v5431, %v5683
      %5685 = vmatprep.subr.mxu0 %v5684
      %v5686 = vand.u32 %v5430, 4294901760
      %v5687 = vsub.f32 %v5430, %v5686
      %5688 = vmatpush1.msra.mxu0 %v5687
      %v5689 = vand.u32 %v5433, 4294901760
      %v5690 = vsub.f32 %v5433, %v5689
      %5691 = vmatprep.subr.mxu0 %v5690
      %v5692 = vand.u32 %v5432, 4294901760
      %v5693 = vsub.f32 %v5432, %v5692
      %5694 = vmatpush1.msra.mxu0 %v5693
      %v5695 = vand.u32 %v5443, 4294901760
      %v5696 = vsub.f32 %v5443, %v5695
      %5697 = vmatprep.subr.mxu0 %v5696
      %v5698 = vand.u32 %v5440, 4294901760
      %v5699 = vsub.f32 %v5440, %v5698
      %5700 = vmatpush1.msra.mxu0 %v5699
      %5701 = vmatprep.subr.mxu0 0.0
      %5702 = vmatpush1.msra.mxu0 0.0
      %5703 = vmatprep.subr.mxu0 0.0
      %5704 = vmatpush1.msra.mxu0 0.0
      %5705 = vmatprep.subr.mxu0 0.0
      %5706 = vmatpush1.msra.mxu0 0.0
      %5707 = vmatprep.subr.mxu0 0.0
      %5708 = vmatpush1.msra.mxu0 0.0
      %5709 = vmatprep.subr.mxu0 0.0
      %5710 = vmatpush1.msra.mxu0 0.0
      %5711 = vmatprep.subr.mxu0 0.0
      %5712 = vmatpush1.msra.mxu0 0.0
      %5713 = vmatprep.subr.mxu0 0.0
      %5714 = vmatpush1.msra.mxu0 0.0
      %5715 = vmatprep.subr.mxu0 0.0
      %5716 = vmatpush1.msra.mxu0 0.0
      %5717 = vmatprep.subr.mxu0 0.0
      %5718 = vmatpush1.msra.mxu0 0.0
      %5719 = vmatprep.subr.mxu0 0.0
      %5720 = vmatpush1.msra.mxu0 0.0
      %5721 = vmatprep.subr.mxu0 0.0
      %5722 = vmatpush1.msra.mxu0 0.0
      %5723 = vmatprep.subr.mxu0 0.0
      %5724 = vmatpush1.msra.mxu0 0.0
      %5725 = vmatprep.subr.mxu0 0.0
      %5726 = vmatpush1.msra.mxu0 0.0
      %5727 = vmatprep.subr.mxu0 0.0
      %5728 = vmatpush1.msra.mxu0 0.0
      %5729 = vmatprep.subr.mxu0 0.0
      %5730 = vmatpush1.msra.mxu0 0.0
      %5731 = vmatprep.subr.mxu0 0.0
      %5732 = vmatpush1.msra.mxu0 0.0
      %5733 = vmatprep.subr.mxu0 0.0
      %5734 = vmatpush1.msra.mxu0 0.0
      %5735 = vmatprep.subr.mxu0 0.0
      %5736 = vmatpush1.msra.mxu0 0.0
      %5737 = vmatprep.subr.mxu0 0.0
      %5738 = vmatpush1.msra.mxu0 0.0
      %5739 = vmatprep.subr.mxu0 0.0
      %5740 = vmatpush1.msra.mxu0 0.0
      %5741 = vmatprep.subr.mxu0 0.0
      %5742 = vmatpush1.msra.mxu0 0.0
      %5743 = vmatprep.subr.mxu0 0.0
      %5744 = vmatpush1.msra.mxu0 0.0
      %5745 = vmatprep.subr.mxu0 0.0
      %5746 = vmatpush1.msra.mxu0 0.0
      %5747 = vmatprep.subr.mxu0 0.0
      %5748 = vmatpush1.msra.mxu0 0.0
      %5749 = vmatprep.subr.mxu0 0.0
      %5750 = vmatpush1.msra.mxu0 0.0
      %5751 = vmatprep.subr.mxu0 0.0
      %5752 = vmatpush1.msra.mxu0 0.0
      %5753 = vmatprep.subr.mxu0 0.0
      %5754 = vmatpush1.msra.mxu0 0.0
      %5755 = vmatprep.mubr.f32.mxu0 0.0
      %v5756 = vand.u32 %v412, 4294901760
      %v5757 = vsub.f32 %v412, %v5756
      %5758 = vmatmul.mubr.f32.gmra.mrb[0].mxu0 %v5757
      %v5759 = vpop.f32.mrb[0].mxu0
      %v5760 = vadd.f32 %v5660, %v5759
      %v5761 = vpop.f32.mrb[0].mxu0
      %v5762 = vadd.f32 %v5662, %v5761
      %5763 = vmatprep.mubr.f32.mxu0 0.0
      %v5764 = vand.u32 %v415, 4294901760
      %v5765 = vsub.f32 %v415, %v5764
      %5766 = vmatmul.mubr.f32.gmra.mrb[0].mxu0 %v5765
      %v5767 = vpop.f32.mrb[0].mxu0
      %v5768 = vadd.f32 %v5667, %v5767
      %v5769 = vpop.f32.mrb[0].mxu0
      %v5770 = vadd.f32 %v5669, %v5769
      %5771 = vdwg.mxu0
      %v5772 = vand.u32 %v5427, 4294901760
      %5773 = vmatprep.subr.mxu0 %v5772
      %v5774 = vand.u32 %v5426, 4294901760
      %5775 = vmatpush1.msra.mxu0 %v5774
      %v5776 = vand.u32 %v5429, 4294901760
      %5777 = vmatprep.subr.mxu0 %v5776
      %v5778 = vand.u32 %v5428, 4294901760
      %5779 = vmatpush1.msra.mxu0 %v5778
      %v5780 = vand.u32 %v5431, 4294901760
      %5781 = vmatprep.subr.mxu0 %v5780
      %v5782 = vand.u32 %v5430, 4294901760
      %5783 = vmatpush1.msra.mxu0 %v5782
      %v5784 = vand.u32 %v5433, 4294901760
      %5785 = vmatprep.subr.mxu0 %v5784
      %v5786 = vand.u32 %v5432, 4294901760
      %5787 = vmatpush1.msra.mxu0 %v5786
      %v5788 = vand.u32 %v5443, 4294901760
      %5789 = vmatprep.subr.mxu0 %v5788
      %v5790 = vand.u32 %v5440, 4294901760
      %5791 = vmatpush1.msra.mxu0 %v5790
      %5792 = vmatprep.subr.mxu0 0.0
      %5793 = vmatpush1.msra.mxu0 0.0
      %5794 = vmatprep.subr.mxu0 0.0
      %5795 = vmatpush1.msra.mxu0 0.0
      %5796 = vmatprep.subr.mxu0 0.0
      %5797 = vmatpush1.msra.mxu0 0.0
      %5798 = vmatprep.subr.mxu0 0.0
      %5799 = vmatpush1.msra.mxu0 0.0
      %5800 = vmatprep.subr.mxu0 0.0
      %5801 = vmatpush1.msra.mxu0 0.0
      %5802 = vmatprep.subr.mxu0 0.0
      %5803 = vmatpush1.msra.mxu0 0.0
      %5804 = vmatprep.subr.mxu0 0.0
      %5805 = vmatpush1.msra.mxu0 0.0
      %5806 = vmatprep.subr.mxu0 0.0
      %5807 = vmatpush1.msra.mxu0 0.0
      %5808 = vmatprep.subr.mxu0 0.0
      %5809 = vmatpush1.msra.mxu0 0.0
      %5810 = vmatprep.subr.mxu0 0.0
      %5811 = vmatpush1.msra.mxu0 0.0
      %5812 = vmatprep.subr.mxu0 0.0
      %5813 = vmatpush1.msra.mxu0 0.0
      %5814 = vmatprep.subr.mxu0 0.0
      %5815 = vmatpush1.msra.mxu0 0.0
      %5816 = vmatprep.subr.mxu0 0.0
      %5817 = vmatpush1.msra.mxu0 0.0
      %5818 = vmatprep.subr.mxu0 0.0
      %5819 = vmatpush1.msra.mxu0 0.0
      %5820 = vmatprep.subr.mxu0 0.0
      %5821 = vmatpush1.msra.mxu0 0.0
      %5822 = vmatprep.subr.mxu0 0.0
      %5823 = vmatpush1.msra.mxu0 0.0
      %5824 = vmatprep.subr.mxu0 0.0
      %5825 = vmatpush1.msra.mxu0 0.0
      %5826 = vmatprep.subr.mxu0 0.0
      %5827 = vmatpush1.msra.mxu0 0.0
      %5828 = vmatprep.subr.mxu0 0.0
      %5829 = vmatpush1.msra.mxu0 0.0
      %5830 = vmatprep.subr.mxu0 0.0
      %5831 = vmatpush1.msra.mxu0 0.0
      %5832 = vmatprep.subr.mxu0 0.0
      %5833 = vmatpush1.msra.mxu0 0.0
      %5834 = vmatprep.subr.mxu0 0.0
      %5835 = vmatpush1.msra.mxu0 0.0
      %5836 = vmatprep.subr.mxu0 0.0
      %5837 = vmatpush1.msra.mxu0 0.0
      %5838 = vmatprep.subr.mxu0 0.0
      %5839 = vmatpush1.msra.mxu0 0.0
      %5840 = vmatprep.subr.mxu0 0.0
      %5841 = vmatpush1.msra.mxu0 0.0
      %5842 = vmatprep.subr.mxu0 0.0
      %5843 = vmatpush1.msra.mxu0 0.0
      %5844 = vmatprep.subr.mxu0 0.0
      %5845 = vmatpush1.msra.mxu0 0.0
      %5846 = vmatprep.mubr.f32.mxu0 0.0
      %v5847 = vand.u32 %v412, 4294901760
      %v5848 = vsub.f32 %v412, %v5847
      %v5849 = vand.u32 %v5848, 4294901760
      %5850 = vmatmul.mubr.f32.gmra.mrb[0].mxu0 %v5849
      %v5851 = vpop.f32.mrb[0].mxu0
      %v5852 = vadd.f32 %v5760, %v5851
      %v5853 = vpop.f32.mrb[0].mxu0
      %v5854 = vadd.f32 %v5762, %v5853
      %5855 = vmatprep.mubr.f32.mxu0 0.0
      %v5856 = vand.u32 %v415, 4294901760
      %v5857 = vsub.f32 %v415, %v5856
      %v5858 = vand.u32 %v5857, 4294901760
      %5859 = vmatmul.mubr.f32.gmra.mrb[0].mxu0 %v5858
      %v5860 = vpop.f32.mrb[0].mxu0
      %v5861 = vadd.f32 %v5768, %v5860
      %v5862 = vpop.f32.mrb[0].mxu0
      %v5863 = vadd.f32 %v5770, %v5862
      %5864 = vdwg.mxu0
      %v5865 = vand.u32 %v5427, 4294901760
      %v5866 = vsub.f32 %v5427, %v5865
      %v5867 = vand.u32 %v5866, 4294901760
      %5868 = vmatprep.subr.mxu0 %v5867
      %v5869 = vand.u32 %v5426, 4294901760
      %v5870 = vsub.f32 %v5426, %v5869
      %v5871 = vand.u32 %v5870, 4294901760
      %5872 = vmatpush1.msra.mxu0 %v5871
      %v5873 = vand.u32 %v5429, 4294901760
      %v5874 = vsub.f32 %v5429, %v5873
      %v5875 = vand.u32 %v5874, 4294901760
      %5876 = vmatprep.subr.mxu0 %v5875
      %v5877 = vand.u32 %v5428, 4294901760
      %v5878 = vsub.f32 %v5428, %v5877
      %v5879 = vand.u32 %v5878, 4294901760
      %5880 = vmatpush1.msra.mxu0 %v5879
      %v5881 = vand.u32 %v5431, 4294901760
      %v5882 = vsub.f32 %v5431, %v5881
      %v5883 = vand.u32 %v5882, 4294901760
      %5884 = vmatprep.subr.mxu0 %v5883
      %v5885 = vand.u32 %v5430, 4294901760
      %v5886 = vsub.f32 %v5430, %v5885
      %v5887 = vand.u32 %v5886, 4294901760
      %5888 = vmatpush1.msra.mxu0 %v5887
      %v5889 = vand.u32 %v5433, 4294901760
      %v5890 = vsub.f32 %v5433, %v5889
      %v5891 = vand.u32 %v5890, 4294901760
      %5892 = vmatprep.subr.mxu0 %v5891
      %v5893 = vand.u32 %v5432, 4294901760
      %v5894 = vsub.f32 %v5432, %v5893
      %v5895 = vand.u32 %v5894, 4294901760
      %5896 = vmatpush1.msra.mxu0 %v5895
      %v5897 = vand.u32 %v5443, 4294901760
      %v5898 = vsub.f32 %v5443, %v5897
      %v5899 = vand.u32 %v5898, 4294901760
      %5900 = vmatprep.subr.mxu0 %v5899
      %v5901 = vand.u32 %v5440, 4294901760
      %v5902 = vsub.f32 %v5440, %v5901
      %v5903 = vand.u32 %v5902, 4294901760
      %5904 = vmatpush1.msra.mxu0 %v5903
      %5905 = vmatprep.subr.mxu0 0.0
      %5906 = vmatpush1.msra.mxu0 0.0
      %5907 = vmatprep.subr.mxu0 0.0
      %5908 = vmatpush1.msra.mxu0 0.0
      %5909 = vmatprep.subr.mxu0 0.0
      %5910 = vmatpush1.msra.mxu0 0.0
      %5911 = vmatprep.subr.mxu0 0.0
      %5912 = vmatpush1.msra.mxu0 0.0
      %5913 = vmatprep.subr.mxu0 0.0
      %5914 = vmatpush1.msra.mxu0 0.0
      %5915 = vmatprep.subr.mxu0 0.0
      %5916 = vmatpush1.msra.mxu0 0.0
      %5917 = vmatprep.subr.mxu0 0.0
      %5918 = vmatpush1.msra.mxu0 0.0
      %5919 = vmatprep.subr.mxu0 0.0
      %5920 = vmatpush1.msra.mxu0 0.0
      %5921 = vmatprep.subr.mxu0 0.0
      %5922 = vmatpush1.msra.mxu0 0.0
      %5923 = vmatprep.subr.mxu0 0.0
      %5924 = vmatpush1.msra.mxu0 0.0
      %5925 = vmatprep.subr.mxu0 0.0
      %5926 = vmatpush1.msra.mxu0 0.0
      %5927 = vmatprep.subr.mxu0 0.0
      %5928 = vmatpush1.msra.mxu0 0.0
      %5929 = vmatprep.subr.mxu0 0.0
      %5930 = vmatpush1.msra.mxu0 0.0
      %5931 = vmatprep.subr.mxu0 0.0
      %5932 = vmatpush1.msra.mxu0 0.0
      %5933 = vmatprep.subr.mxu0 0.0
      %5934 = vmatpush1.msra.mxu0 0.0
      %5935 = vmatprep.subr.mxu0 0.0
      %5936 = vmatpush1.msra.mxu0 0.0
      %5937 = vmatprep.subr.mxu0 0.0
      %5938 = vmatpush1.msra.mxu0 0.0
      %5939 = vmatprep.subr.mxu0 0.0
      %5940 = vmatpush1.msra.mxu0 0.0
      %5941 = vmatprep.subr.mxu0 0.0
      %5942 = vmatpush1.msra.mxu0 0.0
      %5943 = vmatprep.subr.mxu0 0.0
      %5944 = vmatpush1.msra.mxu0 0.0
      %5945 = vmatprep.subr.mxu0 0.0
      %5946 = vmatpush1.msra.mxu0 0.0
      %5947 = vmatprep.subr.mxu0 0.0
      %5948 = vmatpush1.msra.mxu0 0.0
      %5949 = vmatprep.subr.mxu0 0.0
      %5950 = vmatpush1.msra.mxu0 0.0
      %5951 = vmatprep.subr.mxu0 0.0
      %5952 = vmatpush1.msra.mxu0 0.0
      %5953 = vmatprep.subr.mxu0 0.0
      %5954 = vmatpush1.msra.mxu0 0.0
      %5955 = vmatprep.subr.mxu0 0.0
      %5956 = vmatpush1.msra.mxu0 0.0
      %5957 = vmatprep.subr.mxu0 0.0
      %5958 = vmatpush1.msra.mxu0 0.0
      %5959 = vmatprep.mubr.f32.mxu0 0.0
      %v5960 = vand.u32 %v412, 4294901760
      %5961 = vmatmul.mubr.f32.gmra.mrb[0].mxu0 %v5960
      %v5962 = vpop.f32.mrb[0].mxu0
      %v5963 = vadd.f32 %v5852, %v5962
      %v5964 = vpop.f32.mrb[0].mxu0
      %v5965 = vadd.f32 %v5854, %v5964
      %5966 = vmatprep.mubr.f32.mxu0 0.0
      %v5967 = vand.u32 %v415, 4294901760
      %5968 = vmatmul.mubr.f32.gmra.mrb[0].mxu0 %v5967
      %v5969 = vpop.f32.mrb[0].mxu0
      %v5970 = vadd.f32 %v5861, %v5969
      %v5971 = vpop.f32.mrb[0].mxu0
      %v5972 = vadd.f32 %v5863, %v5971
      %5973 = vdwg.mxu0
      %v5974 = vand.u32 %v5427, 4294901760
      %5975 = vmatprep.subr.mxu0 %v5974
      %v5976 = vand.u32 %v5426, 4294901760
      %5977 = vmatpush1.msra.mxu0 %v5976
      %v5978 = vand.u32 %v5429, 4294901760
      %5979 = vmatprep.subr.mxu0 %v5978
      %v5980 = vand.u32 %v5428, 4294901760
      %5981 = vmatpush1.msra.mxu0 %v5980
      %v5982 = vand.u32 %v5431, 4294901760
      %5983 = vmatprep.subr.mxu0 %v5982
      %v5984 = vand.u32 %v5430, 4294901760
      %5985 = vmatpush1.msra.mxu0 %v5984
      %v5986 = vand.u32 %v5433, 4294901760
      %5987 = vmatprep.subr.mxu0 %v5986
      %v5988 = vand.u32 %v5432, 4294901760
      %5989 = vmatpush1.msra.mxu0 %v5988
      %v5990 = vand.u32 %v5443, 4294901760
      %5991 = vmatprep.subr.mxu0 %v5990
      %v5992 = vand.u32 %v5440, 4294901760
      %5993 = vmatpush1.msra.mxu0 %v5992
      %5994 = vmatprep.subr.mxu0 0.0
      %5995 = vmatpush1.msra.mxu0 0.0
      %5996 = vmatprep.subr.mxu0 0.0
      %5997 = vmatpush1.msra.mxu0 0.0
      %5998 = vmatprep.subr.mxu0 0.0
      %5999 = vmatpush1.msra.mxu0 0.0
      %6000 = vmatprep.subr.mxu0 0.0
      %6001 = vmatpush1.msra.mxu0 0.0
      %6002 = vmatprep.subr.mxu0 0.0
      %6003 = vmatpush1.msra.mxu0 0.0
      %6004 = vmatprep.subr.mxu0 0.0
      %6005 = vmatpush1.msra.mxu0 0.0
      %6006 = vmatprep.subr.mxu0 0.0
      %6007 = vmatpush1.msra.mxu0 0.0
      %6008 = vmatprep.subr.mxu0 0.0
      %6009 = vmatpush1.msra.mxu0 0.0
      %6010 = vmatprep.subr.mxu0 0.0
      %6011 = vmatpush1.msra.mxu0 0.0
      %6012 = vmatprep.subr.mxu0 0.0
      %6013 = vmatpush1.msra.mxu0 0.0
      %6014 = vmatprep.subr.mxu0 0.0
      %6015 = vmatpush1.msra.mxu0 0.0
      %6016 = vmatprep.subr.mxu0 0.0
      %6017 = vmatpush1.msra.mxu0 0.0
      %6018 = vmatprep.subr.mxu0 0.0
      %6019 = vmatpush1.msra.mxu0 0.0
      %6020 = vmatprep.subr.mxu0 0.0
      %6021 = vmatpush1.msra.mxu0 0.0
      %6022 = vmatprep.subr.mxu0 0.0
      %6023 = vmatpush1.msra.mxu0 0.0
      %6024 = vmatprep.subr.mxu0 0.0
      %6025 = vmatpush1.msra.mxu0 0.0
      %6026 = vmatprep.subr.mxu0 0.0
      %6027 = vmatpush1.msra.mxu0 0.0
      %6028 = vmatprep.subr.mxu0 0.0
      %6029 = vmatpush1.msra.mxu0 0.0
      %6030 = vmatprep.subr.mxu0 0.0
      %6031 = vmatpush1.msra.mxu0 0.0
      %6032 = vmatprep.subr.mxu0 0.0
      %6033 = vmatpush1.msra.mxu0 0.0
      %6034 = vmatprep.subr.mxu0 0.0
      %6035 = vmatpush1.msra.mxu0 0.0
      %6036 = vmatprep.subr.mxu0 0.0
      %6037 = vmatpush1.msra.mxu0 0.0
      %6038 = vmatprep.subr.mxu0 0.0
      %6039 = vmatpush1.msra.mxu0 0.0
      %6040 = vmatprep.subr.mxu0 0.0
      %6041 = vmatpush1.msra.mxu0 0.0
      %6042 = vmatprep.subr.mxu0 0.0
      %6043 = vmatpush1.msra.mxu0 0.0
      %6044 = vmatprep.subr.mxu0 0.0
      %6045 = vmatpush1.msra.mxu0 0.0
      %6046 = vmatprep.subr.mxu0 0.0
      %6047 = vmatpush1.msra.mxu0 0.0
      %6048 = vmatprep.mubr.f32.mxu0 0.0
      %v6049 = vand.u32 %v412, 4294901760
      %6050 = vmatmul.mubr.f32.gmra.mrb[0].mxu0 %v6049
      %v6051 = vpop.f32.mrb[0].mxu0
      %v6052 = vadd.f32 %v5963, %v6051
      %v6053 = vpop.f32.mrb[0].mxu0
      %v6054 = vadd.f32 %v5965, %v6053
      %6055 = vmatprep.mubr.f32.mxu0 0.0
      %v6056 = vand.u32 %v415, 4294901760
      %6057 = vmatmul.mubr.f32.gmra.mrb[0].mxu0 %v6056
      %v6058 = vpop.f32.mrb[0].mxu0
      %v6059 = vadd.f32 %v5970, %v6058
      %v6060 = vpop.f32.mrb[0].mxu0
      %v6061 = vadd.f32 %v5972, %v6060
      %6062 = vdwg.mxu0
      %v6063 = vxor.u32 %v6052, 2147483648
      %v6064 = vxor.u32 %v6054, 2147483648
      %v6065 = vmul.f32 %v6063, 1.442695
      %v6066 = vpow.pop %v6065
      %v6067 = vmul.f32 %v6064, 1.442695
      %v6068 = vpow.pop %v6067
      %v6069 = vadd.f32 %v6066, 1.0
      %v6070 = vadd.f32 %v6068, 1.0
      %v6071 = vrcp.pop %v6069
      %v6072 = vmul.f32 1.0, %v6071
      %v6073 = vrcp.pop %v6070
      %v6074 = vmul.f32 1.0, %v6073
      %v6075 = vtanh.pop %v6059
      %v6076 = vtanh.pop %v6061
      %v6077 = vxor.u32 %v6059, 2147483648
      %v6078 = vxor.u32 %v6061, 2147483648
      %v6079 = vmul.f32 %v6077, 1.442695
      %v6080 = vpow.pop %v6079
      %v6081 = vmul.f32 %v6078, 1.442695
      %v6082 = vpow.pop %v6081
      %v6083 = vadd.f32 %v6080, 1.0
      %v6084 = vadd.f32 %v6082, 1.0
      %v6085 = vrcp.pop %v6083
      %v6086 = vmul.f32 1.0, %v6085
      %v6087 = vrcp.pop %v6084
      %v6088 = vmul.f32 1.0, %v6087
      %v6089 = vmul.f32 %v6072, %v5206
      %v6090 = vmul.f32 %v6074, %v5207
      %v6091 = vmul.f32 %v6072, %v6075
      %v6092 = vmul.f32 %v6074, %v6076
      %v6095 = vrot.slane %v6091, 4
      %v6096 = vrot.slane %v6092, 4
      %v6099 = vadd.f32 %v6089, %v6095
      %v6100 = vadd.f32 %v6090, %v6096
      %v6101 = vtanh.pop %v6099
      %v6102 = vtanh.pop %v6100
      %v6103 = vmul.f32 %v6086, %v6101
      %v6104 = vmul.f32 %v6088, %v6102
      %v6107 = vrot.slane %v6103, 4
      %v6108 = vrot.slane %v6104, 4
      %6111 = vrot.lane.b32.xlu0 %v6107, 17
      %v6112 = vpop.permute.xlu0 %6111
      %6113 = vrot.lane.b32.xlu0 %v6108, 17
      %v6114 = vpop.permute.xlu0 %6113
      %v6115 = vsel %vm217, %v6112, %v6114
      %v6116 = vsel %vm217, %v6114, %v6112
      %v6117 = vmul.f32 %v6116, %v5233
      %v6118 = vmul.f32 %v6115, %v5237
      %6119 = vrot.lane.b32.xlu0 %v6107, 16
      %v6120 = vpop.permute.xlu0 %6119
      %6121 = vrot.lane.b32.xlu0 %v6108, 16
      %v6122 = vpop.permute.xlu0 %6121
      %v6123 = vsel %vm234, %v6120, %v6122
      %v6124 = vsel %vm234, %v6122, %v6120
      %v6125 = vmul.f32 %v6124, %v5253
      %v6126 = vmul.f32 %v6123, %v5257
      %6127 = vrot.lane.b32.xlu0 %v6107, 15
      %v6128 = vpop.permute.xlu0 %6127
      %6129 = vrot.lane.b32.xlu0 %v6108, 15
      %v6130 = vpop.permute.xlu0 %6129
      %v6131 = vsel %vm252, %v6128, %v6130
      %v6132 = vsel %vm252, %v6130, %v6128
      %v6133 = vmul.f32 %v6132, %v5273
      %v6134 = vmul.f32 %v6131, %v5277
      %6135 = vrot.lane.b32.xlu0 %v6107, 1
      %v6136 = vpop.permute.xlu0 %6135
      %6137 = vrot.lane.b32.xlu0 %v6108, 1
      %v6138 = vpop.permute.xlu0 %6137
      %v6139 = vsel %vm270, %v6136, %v6138
      %v6140 = vsel %vm270, %v6138, %v6136
      %v6141 = vmul.f32 %v6140, %v5293
      %v6142 = vmul.f32 %v6139, %v5297
      %v6143 = vmul.f32 %v6103, %v5307
      %v6144 = vmul.f32 %v6104, %v5311
      %6145 = vrot.lane.b32.xlu0 %v6107, 127
      %v6146 = vpop.permute.xlu0 %6145
      %6147 = vrot.lane.b32.xlu0 %v6108, 127
      %v6148 = vpop.permute.xlu0 %6147
      %v6149 = vsel %vm303, %v6146, %v6148
      %v6150 = vsel %vm303, %v6148, %v6146
      %v6151 = vmul.f32 %v6149, %v5327
      %v6152 = vmul.f32 %v6150, %v5331
      %6153 = vrot.lane.b32.xlu0 %v6107, 113
      %v6154 = vpop.permute.xlu0 %6153
      %6155 = vrot.lane.b32.xlu0 %v6108, 113
      %v6156 = vpop.permute.xlu0 %6155
      %v6157 = vsel %vm321, %v6154, %v6156
      %v6158 = vsel %vm321, %v6156, %v6154
      %v6159 = vmul.f32 %v6157, %v5347
      %v6160 = vmul.f32 %v6158, %v5351
      %6161 = vrot.lane.b32.xlu0 %v6107, 112
      %v6162 = vpop.permute.xlu0 %6161
      %6163 = vrot.lane.b32.xlu0 %v6108, 112
      %v6164 = vpop.permute.xlu0 %6163
      %v6165 = vsel %vm339, %v6162, %v6164
      %v6166 = vsel %vm339, %v6164, %v6162
      %v6167 = vmul.f32 %v6165, %v5367
      %v6168 = vmul.f32 %v6166, %v5371
      %6169 = vrot.lane.b32.xlu0 %v6107, 111
      %v6170 = vpop.permute.xlu0 %6169
      %6171 = vrot.lane.b32.xlu0 %v6108, 111
      %v6172 = vpop.permute.xlu0 %6171
      %v6173 = vsel %vm357, %v6170, %v6172
      %v6174 = vsel %vm357, %v6172, %v6170
      %v6175 = vmul.f32 %v6173, %v5387
      %v6176 = vmul.f32 %v6174, %v5391
      %v6179 = vrot.slane %v6125, 4
      %v6180 = vrot.slane %v6126, 4
      %v6185 = vrot.slane %v6141, 4
      %v6186 = vrot.slane %v6142, 4
      %v6191 = vrot.slane %v6143, 4
      %v6192 = vrot.slane %v6144, 4
      %v6197 = vrot.slane %v6151, 4
      %v6198 = vrot.slane %v6152, 4
      %v6203 = vrot.slane %v6167, 4
      %v6204 = vrot.slane %v6168, 4
      %v6207 = vsel %vm397, %v6117, %v6179
      %v6208 = vsel %vm397, %v6118, %v6180
      %v6209 = vsel %vm397, %v6133, %v6185
      %v6210 = vsel %vm397, %v6134, %v6186
      %v6211 = vsel %vm397, %v6191, %v6197
      %v6212 = vsel %vm397, %v6192, %v6198
      %v6213 = vsel %vm397, %v6159, %v6203
      %v6214 = vsel %vm397, %v6160, %v6204
      %s6215 = scalar_lea.vmem %s200, 224
      %v6216 = vld [vmem:[%s6215] sm:$0xff]
      %v6217 = vld [vmem:[%s6215 + $0x8] sm:$0xff]
      %v6218 = vld [vmem:[%s6215 + $0x10] sm:$0xff]
      %v6219 = vld [vmem:[%s6215 + $0x18] sm:$0xff]
      %v6221 = vsel %vm397, %v6175, 0
      %v6224 = vsel %vm397, %v6176, 0
      %v6226 = vand.u32 %v6208, 4294901760
      %6227 = vmatprep.subr.mxu0 %v6226
      %v6228 = vand.u32 %v6207, 4294901760
      %6229 = vmatpush1.msra.mxu0 %v6228
      %v6230 = vand.u32 %v6210, 4294901760
      %6231 = vmatprep.subr.mxu0 %v6230
      %v6232 = vand.u32 %v6209, 4294901760
      %6233 = vmatpush1.msra.mxu0 %v6232
      %v6234 = vand.u32 %v6212, 4294901760
      %6235 = vmatprep.subr.mxu0 %v6234
      %v6236 = vand.u32 %v6211, 4294901760
      %6237 = vmatpush1.msra.mxu0 %v6236
      %v6238 = vand.u32 %v6214, 4294901760
      %6239 = vmatprep.subr.mxu0 %v6238
      %v6240 = vand.u32 %v6213, 4294901760
      %6241 = vmatpush1.msra.mxu0 %v6240
      %v6242 = vand.u32 %v6224, 4294901760
      %6243 = vmatprep.subr.mxu0 %v6242
      %v6244 = vand.u32 %v6221, 4294901760
      %6245 = vmatpush1.msra.mxu0 %v6244
      %6246 = vmatprep.subr.mxu0 0.0
      %6247 = vmatpush1.msra.mxu0 0.0
      %6248 = vmatprep.subr.mxu0 0.0
      %6249 = vmatpush1.msra.mxu0 0.0
      %6250 = vmatprep.subr.mxu0 0.0
      %6251 = vmatpush1.msra.mxu0 0.0
      %6252 = vmatprep.subr.mxu0 0.0
      %6253 = vmatpush1.msra.mxu0 0.0
      %6254 = vmatprep.subr.mxu0 0.0
      %6255 = vmatpush1.msra.mxu0 0.0
      %6256 = vmatprep.subr.mxu0 0.0
      %6257 = vmatpush1.msra.mxu0 0.0
      %6258 = vmatprep.subr.mxu0 0.0
      %6259 = vmatpush1.msra.mxu0 0.0
      %6260 = vmatprep.subr.mxu0 0.0
      %6261 = vmatpush1.msra.mxu0 0.0
      %6262 = vmatprep.subr.mxu0 0.0
      %6263 = vmatpush1.msra.mxu0 0.0
      %6264 = vmatprep.subr.mxu0 0.0
      %6265 = vmatpush1.msra.mxu0 0.0
      %6266 = vmatprep.subr.mxu0 0.0
      %6267 = vmatpush1.msra.mxu0 0.0
      %6268 = vmatprep.subr.mxu0 0.0
      %6269 = vmatpush1.msra.mxu0 0.0
      %6270 = vmatprep.subr.mxu0 0.0
      %6271 = vmatpush1.msra.mxu0 0.0
      %6272 = vmatprep.subr.mxu0 0.0
      %6273 = vmatpush1.msra.mxu0 0.0
      %6274 = vmatprep.subr.mxu0 0.0
      %6275 = vmatpush1.msra.mxu0 0.0
      %6276 = vmatprep.subr.mxu0 0.0
      %6277 = vmatpush1.msra.mxu0 0.0
      %6278 = vmatprep.subr.mxu0 0.0
      %6279 = vmatpush1.msra.mxu0 0.0
      %6280 = vmatprep.subr.mxu0 0.0
      %6281 = vmatpush1.msra.mxu0 0.0
      %6282 = vmatprep.subr.mxu0 0.0
      %6283 = vmatpush1.msra.mxu0 0.0
      %6284 = vmatprep.subr.mxu0 0.0
      %6285 = vmatpush1.msra.mxu0 0.0
      %6286 = vmatprep.subr.mxu0 0.0
      %6287 = vmatpush1.msra.mxu0 0.0
      %6288 = vmatprep.subr.mxu0 0.0
      %6289 = vmatpush1.msra.mxu0 0.0
      %6290 = vmatprep.subr.mxu0 0.0
      %6291 = vmatpush1.msra.mxu0 0.0
      %6292 = vmatprep.subr.mxu0 0.0
      %6293 = vmatpush1.msra.mxu0 0.0
      %6294 = vmatprep.subr.mxu0 0.0
      %6295 = vmatpush1.msra.mxu0 0.0
      %6296 = vmatprep.subr.mxu0 0.0
      %6297 = vmatpush1.msra.mxu0 0.0
      %6298 = vmatprep.subr.mxu0 0.0
      %6299 = vmatpush1.msra.mxu0 0.0
      %6300 = vmatprep.mubr.f32.mxu0 0.0
      %v6301 = vand.u32 %v412, 4294901760
      %v6302 = vsub.f32 %v412, %v6301
      %v6303 = vand.u32 %v6302, 4294901760
      %v6304 = vsub.f32 %v6302, %v6303
      %v6305 = vand.u32 %v6304, 4294901760
      %6306 = vmatmul.mubr.f32.gmra.mrb[0].mxu0 %v6305
      %v6307 = vpop.f32.mrb[0].mxu0
      %v6308 = vadd.f32 %v6216, %v6307
      %v6309 = vpop.f32.mrb[0].mxu0
      %v6310 = vadd.f32 %v6217, %v6309
      %6311 = vmatprep.mubr.f32.mxu0 0.0
      %v6312 = vand.u32 %v415, 4294901760
      %v6313 = vsub.f32 %v415, %v6312
      %v6314 = vand.u32 %v6313, 4294901760
      %v6315 = vsub.f32 %v6313, %v6314
      %v6316 = vand.u32 %v6315, 4294901760
      %6317 = vmatmul.mubr.f32.gmra.mrb[0].mxu0 %v6316
      %v6318 = vpop.f32.mrb[0].mxu0
      %v6319 = vadd.f32 %v6218, %v6318
      %v6320 = vpop.f32.mrb[0].mxu0
      %v6321 = vadd.f32 %v6219, %v6320
      %6322 = vdwg.mxu0
      %v6323 = vand.u32 %v6208, 4294901760
      %v6324 = vsub.f32 %v6208, %v6323
      %v6325 = vand.u32 %v6324, 4294901760
      %v6326 = vsub.f32 %v6324, %v6325
      %v6327 = vand.u32 %v6326, 4294901760
      %6328 = vmatprep.subr.mxu0 %v6327
      %v6329 = vand.u32 %v6207, 4294901760
      %v6330 = vsub.f32 %v6207, %v6329
      %v6331 = vand.u32 %v6330, 4294901760
      %v6332 = vsub.f32 %v6330, %v6331
      %v6333 = vand.u32 %v6332, 4294901760
      %6334 = vmatpush1.msra.mxu0 %v6333
      %v6335 = vand.u32 %v6210, 4294901760
      %v6336 = vsub.f32 %v6210, %v6335
      %v6337 = vand.u32 %v6336, 4294901760
      %v6338 = vsub.f32 %v6336, %v6337
      %v6339 = vand.u32 %v6338, 4294901760
      %6340 = vmatprep.subr.mxu0 %v6339
      %v6341 = vand.u32 %v6209, 4294901760
      %v6342 = vsub.f32 %v6209, %v6341
      %v6343 = vand.u32 %v6342, 4294901760
      %v6344 = vsub.f32 %v6342, %v6343
      %v6345 = vand.u32 %v6344, 4294901760
      %6346 = vmatpush1.msra.mxu0 %v6345
      %v6347 = vand.u32 %v6212, 4294901760
      %v6348 = vsub.f32 %v6212, %v6347
      %v6349 = vand.u32 %v6348, 4294901760
      %v6350 = vsub.f32 %v6348, %v6349
      %v6351 = vand.u32 %v6350, 4294901760
      %6352 = vmatprep.subr.mxu0 %v6351
      %v6353 = vand.u32 %v6211, 4294901760
      %v6354 = vsub.f32 %v6211, %v6353
      %v6355 = vand.u32 %v6354, 4294901760
      %v6356 = vsub.f32 %v6354, %v6355
      %v6357 = vand.u32 %v6356, 4294901760
      %6358 = vmatpush1.msra.mxu0 %v6357
      %v6359 = vand.u32 %v6214, 4294901760
      %v6360 = vsub.f32 %v6214, %v6359
      %v6361 = vand.u32 %v6360, 4294901760
      %v6362 = vsub.f32 %v6360, %v6361
      %v6363 = vand.u32 %v6362, 4294901760
      %6364 = vmatprep.subr.mxu0 %v6363
      %v6365 = vand.u32 %v6213, 4294901760
      %v6366 = vsub.f32 %v6213, %v6365
      %v6367 = vand.u32 %v6366, 4294901760
      %v6368 = vsub.f32 %v6366, %v6367
      %v6369 = vand.u32 %v6368, 4294901760
      %6370 = vmatpush1.msra.mxu0 %v6369
      %v6371 = vand.u32 %v6224, 4294901760
      %v6372 = vsub.f32 %v6224, %v6371
      %v6373 = vand.u32 %v6372, 4294901760
      %v6374 = vsub.f32 %v6372, %v6373
      %v6375 = vand.u32 %v6374, 4294901760
      %6376 = vmatprep.subr.mxu0 %v6375
      %v6377 = vand.u32 %v6221, 4294901760
      %v6378 = vsub.f32 %v6221, %v6377
      %v6379 = vand.u32 %v6378, 4294901760
      %v6380 = vsub.f32 %v6378, %v6379
      %v6381 = vand.u32 %v6380, 4294901760
      %6382 = vmatpush1.msra.mxu0 %v6381
      %6383 = vmatprep.subr.mxu0 0.0
      %6384 = vmatpush1.msra.mxu0 0.0
      %6385 = vmatprep.subr.mxu0 0.0
      %6386 = vmatpush1.msra.mxu0 0.0
      %6387 = vmatprep.subr.mxu0 0.0
      %6388 = vmatpush1.msra.mxu0 0.0
      %6389 = vmatprep.subr.mxu0 0.0
      %6390 = vmatpush1.msra.mxu0 0.0
      %6391 = vmatprep.subr.mxu0 0.0
      %6392 = vmatpush1.msra.mxu0 0.0
      %6393 = vmatprep.subr.mxu0 0.0
      %6394 = vmatpush1.msra.mxu0 0.0
      %6395 = vmatprep.subr.mxu0 0.0
      %6396 = vmatpush1.msra.mxu0 0.0
      %6397 = vmatprep.subr.mxu0 0.0
      %6398 = vmatpush1.msra.mxu0 0.0
      %6399 = vmatprep.subr.mxu0 0.0
      %6400 = vmatpush1.msra.mxu0 0.0
      %6401 = vmatprep.subr.mxu0 0.0
      %6402 = vmatpush1.msra.mxu0 0.0
      %6403 = vmatprep.subr.mxu0 0.0
      %6404 = vmatpush1.msra.mxu0 0.0
      %6405 = vmatprep.subr.mxu0 0.0
      %6406 = vmatpush1.msra.mxu0 0.0
      %6407 = vmatprep.subr.mxu0 0.0
      %6408 = vmatpush1.msra.mxu0 0.0
      %6409 = vmatprep.subr.mxu0 0.0
      %6410 = vmatpush1.msra.mxu0 0.0
      %6411 = vmatprep.subr.mxu0 0.0
      %6412 = vmatpush1.msra.mxu0 0.0
      %6413 = vmatprep.subr.mxu0 0.0
      %6414 = vmatpush1.msra.mxu0 0.0
      %6415 = vmatprep.subr.mxu0 0.0
      %6416 = vmatpush1.msra.mxu0 0.0
      %6417 = vmatprep.subr.mxu0 0.0
      %6418 = vmatpush1.msra.mxu0 0.0
      %6419 = vmatprep.subr.mxu0 0.0
      %6420 = vmatpush1.msra.mxu0 0.0
      %6421 = vmatprep.subr.mxu0 0.0
      %6422 = vmatpush1.msra.mxu0 0.0
      %6423 = vmatprep.subr.mxu0 0.0
      %6424 = vmatpush1.msra.mxu0 0.0
      %6425 = vmatprep.subr.mxu0 0.0
      %6426 = vmatpush1.msra.mxu0 0.0
      %6427 = vmatprep.subr.mxu0 0.0
      %6428 = vmatpush1.msra.mxu0 0.0
      %6429 = vmatprep.subr.mxu0 0.0
      %6430 = vmatpush1.msra.mxu0 0.0
      %6431 = vmatprep.subr.mxu0 0.0
      %6432 = vmatpush1.msra.mxu0 0.0
      %6433 = vmatprep.subr.mxu0 0.0
      %6434 = vmatpush1.msra.mxu0 0.0
      %6435 = vmatprep.subr.mxu0 0.0
      %6436 = vmatpush1.msra.mxu0 0.0
      %6437 = vmatprep.mubr.f32.mxu0 0.0
      %v6438 = vand.u32 %v412, 4294901760
      %6439 = vmatmul.mubr.f32.gmra.mrb[0].mxu0 %v6438
      %v6440 = vpop.f32.mrb[0].mxu0
      %v6441 = vadd.f32 %v6308, %v6440
      %v6442 = vpop.f32.mrb[0].mxu0
      %v6443 = vadd.f32 %v6310, %v6442
      %6444 = vmatprep.mubr.f32.mxu0 0.0
      %v6445 = vand.u32 %v415, 4294901760
      %6446 = vmatmul.mubr.f32.gmra.mrb[0].mxu0 %v6445
      %v6447 = vpop.f32.mrb[0].mxu0
      %v6448 = vadd.f32 %v6319, %v6447
      %v6449 = vpop.f32.mrb[0].mxu0
      %v6450 = vadd.f32 %v6321, %v6449
      %6451 = vdwg.mxu0
      %v6452 = vand.u32 %v6208, 4294901760
      %v6453 = vsub.f32 %v6208, %v6452
      %6454 = vmatprep.subr.mxu0 %v6453
      %v6455 = vand.u32 %v6207, 4294901760
      %v6456 = vsub.f32 %v6207, %v6455
      %6457 = vmatpush1.msra.mxu0 %v6456
      %v6458 = vand.u32 %v6210, 4294901760
      %v6459 = vsub.f32 %v6210, %v6458
      %6460 = vmatprep.subr.mxu0 %v6459
      %v6461 = vand.u32 %v6209, 4294901760
      %v6462 = vsub.f32 %v6209, %v6461
      %6463 = vmatpush1.msra.mxu0 %v6462
      %v6464 = vand.u32 %v6212, 4294901760
      %v6465 = vsub.f32 %v6212, %v6464
      %6466 = vmatprep.subr.mxu0 %v6465
      %v6467 = vand.u32 %v6211, 4294901760
      %v6468 = vsub.f32 %v6211, %v6467
      %6469 = vmatpush1.msra.mxu0 %v6468
      %v6470 = vand.u32 %v6214, 4294901760
      %v6471 = vsub.f32 %v6214, %v6470
      %6472 = vmatprep.subr.mxu0 %v6471
      %v6473 = vand.u32 %v6213, 4294901760
      %v6474 = vsub.f32 %v6213, %v6473
      %6475 = vmatpush1.msra.mxu0 %v6474
      %v6476 = vand.u32 %v6224, 4294901760
      %v6477 = vsub.f32 %v6224, %v6476
      %6478 = vmatprep.subr.mxu0 %v6477
      %v6479 = vand.u32 %v6221, 4294901760
      %v6480 = vsub.f32 %v6221, %v6479
      %6481 = vmatpush1.msra.mxu0 %v6480
      %6482 = vmatprep.subr.mxu0 0.0
      %6483 = vmatpush1.msra.mxu0 0.0
      %6484 = vmatprep.subr.mxu0 0.0
      %6485 = vmatpush1.msra.mxu0 0.0
      %6486 = vmatprep.subr.mxu0 0.0
      %6487 = vmatpush1.msra.mxu0 0.0
      %6488 = vmatprep.subr.mxu0 0.0
      %6489 = vmatpush1.msra.mxu0 0.0
      %6490 = vmatprep.subr.mxu0 0.0
      %6491 = vmatpush1.msra.mxu0 0.0
      %6492 = vmatprep.subr.mxu0 0.0
      %6493 = vmatpush1.msra.mxu0 0.0
      %6494 = vmatprep.subr.mxu0 0.0
      %6495 = vmatpush1.msra.mxu0 0.0
      %6496 = vmatprep.subr.mxu0 0.0
      %6497 = vmatpush1.msra.mxu0 0.0
      %6498 = vmatprep.subr.mxu0 0.0
      %6499 = vmatpush1.msra.mxu0 0.0
      %6500 = vmatprep.subr.mxu0 0.0
      %6501 = vmatpush1.msra.mxu0 0.0
      %6502 = vmatprep.subr.mxu0 0.0
      %6503 = vmatpush1.msra.mxu0 0.0
      %6504 = vmatprep.subr.mxu0 0.0
      %6505 = vmatpush1.msra.mxu0 0.0
      %6506 = vmatprep.subr.mxu0 0.0
      %6507 = vmatpush1.msra.mxu0 0.0
      %6508 = vmatprep.subr.mxu0 0.0
      %6509 = vmatpush1.msra.mxu0 0.0
      %6510 = vmatprep.subr.mxu0 0.0
      %6511 = vmatpush1.msra.mxu0 0.0
      %6512 = vmatprep.subr.mxu0 0.0
      %6513 = vmatpush1.msra.mxu0 0.0
      %6514 = vmatprep.subr.mxu0 0.0
      %6515 = vmatpush1.msra.mxu0 0.0
      %6516 = vmatprep.subr.mxu0 0.0
      %6517 = vmatpush1.msra.mxu0 0.0
      %6518 = vmatprep.subr.mxu0 0.0
      %6519 = vmatpush1.msra.mxu0 0.0
      %6520 = vmatprep.subr.mxu0 0.0
      %6521 = vmatpush1.msra.mxu0 0.0
      %6522 = vmatprep.subr.mxu0 0.0
      %6523 = vmatpush1.msra.mxu0 0.0
      %6524 = vmatprep.subr.mxu0 0.0
      %6525 = vmatpush1.msra.mxu0 0.0
      %6526 = vmatprep.subr.mxu0 0.0
      %6527 = vmatpush1.msra.mxu0 0.0
      %6528 = vmatprep.subr.mxu0 0.0
      %6529 = vmatpush1.msra.mxu0 0.0
      %6530 = vmatprep.subr.mxu0 0.0
      %6531 = vmatpush1.msra.mxu0 0.0
      %6532 = vmatprep.subr.mxu0 0.0
      %6533 = vmatpush1.msra.mxu0 0.0
      %6534 = vmatprep.subr.mxu0 0.0
      %6535 = vmatpush1.msra.mxu0 0.0
      %6536 = vmatprep.mubr.f32.mxu0 0.0
      %v6537 = vand.u32 %v412, 4294901760
      %v6538 = vsub.f32 %v412, %v6537
      %6539 = vmatmul.mubr.f32.gmra.mrb[0].mxu0 %v6538
      %v6540 = vpop.f32.mrb[0].mxu0
      %v6541 = vadd.f32 %v6441, %v6540
      %v6542 = vpop.f32.mrb[0].mxu0
      %v6543 = vadd.f32 %v6443, %v6542
      %6544 = vmatprep.mubr.f32.mxu0 0.0
      %v6545 = vand.u32 %v415, 4294901760
      %v6546 = vsub.f32 %v415, %v6545
      %6547 = vmatmul.mubr.f32.gmra.mrb[0].mxu0 %v6546
      %v6548 = vpop.f32.mrb[0].mxu0
      %v6549 = vadd.f32 %v6448, %v6548
      %v6550 = vpop.f32.mrb[0].mxu0
      %v6551 = vadd.f32 %v6450, %v6550
      %6552 = vdwg.mxu0
      %v6553 = vand.u32 %v6208, 4294901760
      %6554 = vmatprep.subr.mxu0 %v6553
      %v6555 = vand.u32 %v6207, 4294901760
      %6556 = vmatpush1.msra.mxu0 %v6555
      %v6557 = vand.u32 %v6210, 4294901760
      %6558 = vmatprep.subr.mxu0 %v6557
      %v6559 = vand.u32 %v6209, 4294901760
      %6560 = vmatpush1.msra.mxu0 %v6559
      %v6561 = vand.u32 %v6212, 4294901760
      %6562 = vmatprep.subr.mxu0 %v6561
      %v6563 = vand.u32 %v6211, 4294901760
      %6564 = vmatpush1.msra.mxu0 %v6563
      %v6565 = vand.u32 %v6214, 4294901760
      %6566 = vmatprep.subr.mxu0 %v6565
      %v6567 = vand.u32 %v6213, 4294901760
      %6568 = vmatpush1.msra.mxu0 %v6567
      %v6569 = vand.u32 %v6224, 4294901760
      %6570 = vmatprep.subr.mxu0 %v6569
      %v6571 = vand.u32 %v6221, 4294901760
      %6572 = vmatpush1.msra.mxu0 %v6571
      %6573 = vmatprep.subr.mxu0 0.0
      %6574 = vmatpush1.msra.mxu0 0.0
      %6575 = vmatprep.subr.mxu0 0.0
      %6576 = vmatpush1.msra.mxu0 0.0
      %6577 = vmatprep.subr.mxu0 0.0
      %6578 = vmatpush1.msra.mxu0 0.0
      %6579 = vmatprep.subr.mxu0 0.0
      %6580 = vmatpush1.msra.mxu0 0.0
      %6581 = vmatprep.subr.mxu0 0.0
      %6582 = vmatpush1.msra.mxu0 0.0
      %6583 = vmatprep.subr.mxu0 0.0
      %6584 = vmatpush1.msra.mxu0 0.0
      %6585 = vmatprep.subr.mxu0 0.0
      %6586 = vmatpush1.msra.mxu0 0.0
      %6587 = vmatprep.subr.mxu0 0.0
      %6588 = vmatpush1.msra.mxu0 0.0
      %6589 = vmatprep.subr.mxu0 0.0
      %6590 = vmatpush1.msra.mxu0 0.0
      %6591 = vmatprep.subr.mxu0 0.0
      %6592 = vmatpush1.msra.mxu0 0.0
      %6593 = vmatprep.subr.mxu0 0.0
      %6594 = vmatpush1.msra.mxu0 0.0
      %6595 = vmatprep.subr.mxu0 0.0
      %6596 = vmatpush1.msra.mxu0 0.0
      %6597 = vmatprep.subr.mxu0 0.0
      %6598 = vmatpush1.msra.mxu0 0.0
      %6599 = vmatprep.subr.mxu0 0.0
      %6600 = vmatpush1.msra.mxu0 0.0
      %6601 = vmatprep.subr.mxu0 0.0
      %6602 = vmatpush1.msra.mxu0 0.0
      %6603 = vmatprep.subr.mxu0 0.0
      %6604 = vmatpush1.msra.mxu0 0.0
      %6605 = vmatprep.subr.mxu0 0.0
      %6606 = vmatpush1.msra.mxu0 0.0
      %6607 = vmatprep.subr.mxu0 0.0
      %6608 = vmatpush1.msra.mxu0 0.0
      %6609 = vmatprep.subr.mxu0 0.0
      %6610 = vmatpush1.msra.mxu0 0.0
      %6611 = vmatprep.subr.mxu0 0.0
      %6612 = vmatpush1.msra.mxu0 0.0
      %6613 = vmatprep.subr.mxu0 0.0
      %6614 = vmatpush1.msra.mxu0 0.0
      %6615 = vmatprep.subr.mxu0 0.0
      %6616 = vmatpush1.msra.mxu0 0.0
      %6617 = vmatprep.subr.mxu0 0.0
      %6618 = vmatpush1.msra.mxu0 0.0
      %6619 = vmatprep.subr.mxu0 0.0
      %6620 = vmatpush1.msra.mxu0 0.0
      %6621 = vmatprep.subr.mxu0 0.0
      %6622 = vmatpush1.msra.mxu0 0.0
      %6623 = vmatprep.subr.mxu0 0.0
      %6624 = vmatpush1.msra.mxu0 0.0
      %6625 = vmatprep.subr.mxu0 0.0
      %6626 = vmatpush1.msra.mxu0 0.0
      %6627 = vmatprep.mubr.f32.mxu0 0.0
      %v6628 = vand.u32 %v412, 4294901760
      %v6629 = vsub.f32 %v412, %v6628
      %v6630 = vand.u32 %v6629, 4294901760
      %6631 = vmatmul.mubr.f32.gmra.mrb[0].mxu0 %v6630
      %v6632 = vpop.f32.mrb[0].mxu0
      %v6633 = vadd.f32 %v6541, %v6632
      %v6634 = vpop.f32.mrb[0].mxu0
      %v6635 = vadd.f32 %v6543, %v6634
      %6636 = vmatprep.mubr.f32.mxu0 0.0
      %v6637 = vand.u32 %v415, 4294901760
      %v6638 = vsub.f32 %v415, %v6637
      %v6639 = vand.u32 %v6638, 4294901760
      %6640 = vmatmul.mubr.f32.gmra.mrb[0].mxu0 %v6639
      %v6641 = vpop.f32.mrb[0].mxu0
      %v6642 = vadd.f32 %v6549, %v6641
      %v6643 = vpop.f32.mrb[0].mxu0
      %v6644 = vadd.f32 %v6551, %v6643
      %6645 = vdwg.mxu0
      %v6646 = vand.u32 %v6208, 4294901760
      %v6647 = vsub.f32 %v6208, %v6646
      %v6648 = vand.u32 %v6647, 4294901760
      %6649 = vmatprep.subr.mxu0 %v6648
      %v6650 = vand.u32 %v6207, 4294901760
      %v6651 = vsub.f32 %v6207, %v6650
      %v6652 = vand.u32 %v6651, 4294901760
      %6653 = vmatpush1.msra.mxu0 %v6652
      %v6654 = vand.u32 %v6210, 4294901760
      %v6655 = vsub.f32 %v6210, %v6654
      %v6656 = vand.u32 %v6655, 4294901760
      %6657 = vmatprep.subr.mxu0 %v6656
      %v6658 = vand.u32 %v6209, 4294901760
      %v6659 = vsub.f32 %v6209, %v6658
      %v6660 = vand.u32 %v6659, 4294901760
      %6661 = vmatpush1.msra.mxu0 %v6660
      %v6662 = vand.u32 %v6212, 4294901760
      %v6663 = vsub.f32 %v6212, %v6662
      %v6664 = vand.u32 %v6663, 4294901760
      %6665 = vmatprep.subr.mxu0 %v6664
      %v6666 = vand.u32 %v6211, 4294901760
      %v6667 = vsub.f32 %v6211, %v6666
      %v6668 = vand.u32 %v6667, 4294901760
      %6669 = vmatpush1.msra.mxu0 %v6668
      %v6670 = vand.u32 %v6214, 4294901760
      %v6671 = vsub.f32 %v6214, %v6670
      %v6672 = vand.u32 %v6671, 4294901760
      %6673 = vmatprep.subr.mxu0 %v6672
      %v6674 = vand.u32 %v6213, 4294901760
      %v6675 = vsub.f32 %v6213, %v6674
      %v6676 = vand.u32 %v6675, 4294901760
      %6677 = vmatpush1.msra.mxu0 %v6676
      %v6678 = vand.u32 %v6224, 4294901760
      %v6679 = vsub.f32 %v6224, %v6678
      %v6680 = vand.u32 %v6679, 4294901760
      %6681 = vmatprep.subr.mxu0 %v6680
      %v6682 = vand.u32 %v6221, 4294901760
      %v6683 = vsub.f32 %v6221, %v6682
      %v6684 = vand.u32 %v6683, 4294901760
      %6685 = vmatpush1.msra.mxu0 %v6684
      %6686 = vmatprep.subr.mxu0 0.0
      %6687 = vmatpush1.msra.mxu0 0.0
      %6688 = vmatprep.subr.mxu0 0.0
      %6689 = vmatpush1.msra.mxu0 0.0
      %6690 = vmatprep.subr.mxu0 0.0
      %6691 = vmatpush1.msra.mxu0 0.0
      %6692 = vmatprep.subr.mxu0 0.0
      %6693 = vmatpush1.msra.mxu0 0.0
      %6694 = vmatprep.subr.mxu0 0.0
      %6695 = vmatpush1.msra.mxu0 0.0
      %6696 = vmatprep.subr.mxu0 0.0
      %6697 = vmatpush1.msra.mxu0 0.0
      %6698 = vmatprep.subr.mxu0 0.0
      %6699 = vmatpush1.msra.mxu0 0.0
      %6700 = vmatprep.subr.mxu0 0.0
      %6701 = vmatpush1.msra.mxu0 0.0
      %6702 = vmatprep.subr.mxu0 0.0
      %6703 = vmatpush1.msra.mxu0 0.0
      %6704 = vmatprep.subr.mxu0 0.0
      %6705 = vmatpush1.msra.mxu0 0.0
      %6706 = vmatprep.subr.mxu0 0.0
      %6707 = vmatpush1.msra.mxu0 0.0
      %6708 = vmatprep.subr.mxu0 0.0
      %6709 = vmatpush1.msra.mxu0 0.0
      %6710 = vmatprep.subr.mxu0 0.0
      %6711 = vmatpush1.msra.mxu0 0.0
      %6712 = vmatprep.subr.mxu0 0.0
      %6713 = vmatpush1.msra.mxu0 0.0
      %6714 = vmatprep.subr.mxu0 0.0
      %6715 = vmatpush1.msra.mxu0 0.0
      %6716 = vmatprep.subr.mxu0 0.0
      %6717 = vmatpush1.msra.mxu0 0.0
      %6718 = vmatprep.subr.mxu0 0.0
      %6719 = vmatpush1.msra.mxu0 0.0
      %6720 = vmatprep.subr.mxu0 0.0
      %6721 = vmatpush1.msra.mxu0 0.0
      %6722 = vmatprep.subr.mxu0 0.0
      %6723 = vmatpush1.msra.mxu0 0.0
      %6724 = vmatprep.subr.mxu0 0.0
      %6725 = vmatpush1.msra.mxu0 0.0
      %6726 = vmatprep.subr.mxu0 0.0
      %6727 = vmatpush1.msra.mxu0 0.0
      %6728 = vmatprep.subr.mxu0 0.0
      %6729 = vmatpush1.msra.mxu0 0.0
      %6730 = vmatprep.subr.mxu0 0.0
      %6731 = vmatpush1.msra.mxu0 0.0
      %6732 = vmatprep.subr.mxu0 0.0
      %6733 = vmatpush1.msra.mxu0 0.0
      %6734 = vmatprep.subr.mxu0 0.0
      %6735 = vmatpush1.msra.mxu0 0.0
      %6736 = vmatprep.subr.mxu0 0.0
      %6737 = vmatpush1.msra.mxu0 0.0
      %6738 = vmatprep.subr.mxu0 0.0
      %6739 = vmatpush1.msra.mxu0 0.0
      %6740 = vmatprep.mubr.f32.mxu0 0.0
      %v6741 = vand.u32 %v412, 4294901760
      %6742 = vmatmul.mubr.f32.gmra.mrb[0].mxu0 %v6741
      %v6743 = vpop.f32.mrb[0].mxu0
      %v6744 = vadd.f32 %v6633, %v6743
      %v6745 = vpop.f32.mrb[0].mxu0
      %v6746 = vadd.f32 %v6635, %v6745
      %6747 = vmatprep.mubr.f32.mxu0 0.0
      %v6748 = vand.u32 %v415, 4294901760
      %6749 = vmatmul.mubr.f32.gmra.mrb[0].mxu0 %v6748
      %v6750 = vpop.f32.mrb[0].mxu0
      %v6751 = vadd.f32 %v6642, %v6750
      %v6752 = vpop.f32.mrb[0].mxu0
      %v6753 = vadd.f32 %v6644, %v6752
      %6754 = vdwg.mxu0
      %v6755 = vand.u32 %v6208, 4294901760
      %6756 = vmatprep.subr.mxu0 %v6755
      %v6757 = vand.u32 %v6207, 4294901760
      %6758 = vmatpush1.msra.mxu0 %v6757
      %v6759 = vand.u32 %v6210, 4294901760
      %6760 = vmatprep.subr.mxu0 %v6759
      %v6761 = vand.u32 %v6209, 4294901760
      %6762 = vmatpush1.msra.mxu0 %v6761
      %v6763 = vand.u32 %v6212, 4294901760
      %6764 = vmatprep.subr.mxu0 %v6763
      %v6765 = vand.u32 %v6211, 4294901760
      %6766 = vmatpush1.msra.mxu0 %v6765
      %v6767 = vand.u32 %v6214, 4294901760
      %6768 = vmatprep.subr.mxu0 %v6767
      %v6769 = vand.u32 %v6213, 4294901760
      %6770 = vmatpush1.msra.mxu0 %v6769
      %v6771 = vand.u32 %v6224, 4294901760
      %6772 = vmatprep.subr.mxu0 %v6771
      %v6773 = vand.u32 %v6221, 4294901760
      %6774 = vmatpush1.msra.mxu0 %v6773
      %6775 = vmatprep.subr.mxu0 0.0
      %6776 = vmatpush1.msra.mxu0 0.0
      %6777 = vmatprep.subr.mxu0 0.0
      %6778 = vmatpush1.msra.mxu0 0.0
      %6779 = vmatprep.subr.mxu0 0.0
      %6780 = vmatpush1.msra.mxu0 0.0
      %6781 = vmatprep.subr.mxu0 0.0
      %6782 = vmatpush1.msra.mxu0 0.0
      %6783 = vmatprep.subr.mxu0 0.0
      %6784 = vmatpush1.msra.mxu0 0.0
      %6785 = vmatprep.subr.mxu0 0.0
      %6786 = vmatpush1.msra.mxu0 0.0
      %6787 = vmatprep.subr.mxu0 0.0
      %6788 = vmatpush1.msra.mxu0 0.0
      %6789 = vmatprep.subr.mxu0 0.0
      %6790 = vmatpush1.msra.mxu0 0.0
      %6791 = vmatprep.subr.mxu0 0.0
      %6792 = vmatpush1.msra.mxu0 0.0
      %6793 = vmatprep.subr.mxu0 0.0
      %6794 = vmatpush1.msra.mxu0 0.0
      %6795 = vmatprep.subr.mxu0 0.0
      %6796 = vmatpush1.msra.mxu0 0.0
      %6797 = vmatprep.subr.mxu0 0.0
      %6798 = vmatpush1.msra.mxu0 0.0
      %6799 = vmatprep.subr.mxu0 0.0
      %6800 = vmatpush1.msra.mxu0 0.0
      %6801 = vmatprep.subr.mxu0 0.0
      %6802 = vmatpush1.msra.mxu0 0.0
      %6803 = vmatprep.subr.mxu0 0.0
      %6804 = vmatpush1.msra.mxu0 0.0
      %6805 = vmatprep.subr.mxu0 0.0
      %6806 = vmatpush1.msra.mxu0 0.0
      %6807 = vmatprep.subr.mxu0 0.0
      %6808 = vmatpush1.msra.mxu0 0.0
      %6809 = vmatprep.subr.mxu0 0.0
      %6810 = vmatpush1.msra.mxu0 0.0
      %6811 = vmatprep.subr.mxu0 0.0
      %6812 = vmatpush1.msra.mxu0 0.0
      %6813 = vmatprep.subr.mxu0 0.0
      %6814 = vmatpush1.msra.mxu0 0.0
      %6815 = vmatprep.subr.mxu0 0.0
      %6816 = vmatpush1.msra.mxu0 0.0
      %6817 = vmatprep.subr.mxu0 0.0
      %6818 = vmatpush1.msra.mxu0 0.0
      %6819 = vmatprep.subr.mxu0 0.0
      %6820 = vmatpush1.msra.mxu0 0.0
      %6821 = vmatprep.subr.mxu0 0.0
      %6822 = vmatpush1.msra.mxu0 0.0
      %6823 = vmatprep.subr.mxu0 0.0
      %6824 = vmatpush1.msra.mxu0 0.0
      %6825 = vmatprep.subr.mxu0 0.0
      %6826 = vmatpush1.msra.mxu0 0.0
      %6827 = vmatprep.subr.mxu0 0.0
      %6828 = vmatpush1.msra.mxu0 0.0
      %6829 = vmatprep.mubr.f32.mxu0 0.0
      %v6830 = vand.u32 %v412, 4294901760
      %6831 = vmatmul.mubr.f32.gmra.mrb[0].mxu0 %v6830
      %v6832 = vpop.f32.mrb[0].mxu0
      %v6833 = vadd.f32 %v6744, %v6832
      %v6834 = vpop.f32.mrb[0].mxu0
      %v6835 = vadd.f32 %v6746, %v6834
      %6836 = vmatprep.mubr.f32.mxu0 0.0
      %v6837 = vand.u32 %v415, 4294901760
      %6838 = vmatmul.mubr.f32.gmra.mrb[0].mxu0 %v6837
      %v6839 = vpop.f32.mrb[0].mxu0
      %v6840 = vadd.f32 %v6751, %v6839
      %v6841 = vpop.f32.mrb[0].mxu0
      %v6842 = vadd.f32 %v6753, %v6841
      %6843 = vdwg.mxu0
      %v6844 = vxor.u32 %v6833, 2147483648
      %v6845 = vxor.u32 %v6835, 2147483648
      %v6846 = vmul.f32 %v6844, 1.442695
      %v6847 = vpow.pop %v6846
      %v6848 = vmul.f32 %v6845, 1.442695
      %v6849 = vpow.pop %v6848
      %v6850 = vadd.f32 %v6847, 1.0
      %v6851 = vadd.f32 %v6849, 1.0
      %v6852 = vrcp.pop %v6850
      %v6853 = vmul.f32 1.0, %v6852
      %v6854 = vrcp.pop %v6851
      %v6855 = vmul.f32 1.0, %v6854
      %v6856 = vtanh.pop %v6840
      %v6857 = vtanh.pop %v6842
      %v6858 = vxor.u32 %v6840, 2147483648
      %v6859 = vxor.u32 %v6842, 2147483648
      %v6860 = vmul.f32 %v6858, 1.442695
      %v6861 = vpow.pop %v6860
      %v6862 = vmul.f32 %v6859, 1.442695
      %v6863 = vpow.pop %v6862
      %v6864 = vadd.f32 %v6861, 1.0
      %v6865 = vadd.f32 %v6863, 1.0
      %v6866 = vrcp.pop %v6864
      %v6867 = vmul.f32 1.0, %v6866
      %v6868 = vrcp.pop %v6865
      %v6869 = vmul.f32 1.0, %v6868
      %v6870 = vmul.f32 %v6853, %v6099
      %v6871 = vmul.f32 %v6855, %v6100
      %v6872 = vmul.f32 %v6853, %v6856
      %v6873 = vmul.f32 %v6855, %v6857
      %v6876 = vrot.slane %v6872, 4
      %v6877 = vrot.slane %v6873, 4
      %v6880 = vadd.f32 %v6870, %v6876
      %v6881 = vadd.f32 %v6871, %v6877
      %v6882 = vtanh.pop %v6880
      %v6883 = vtanh.pop %v6881
      %v6884 = vmul.f32 %v6867, %v6882
      %v6885 = vmul.f32 %v6869, %v6883
      %v6886 = vsel %vm397, %v6107, %v6884
      %v6887 = vsel %vm397, %v6108, %v6885
      %6888 = vst [vmem:[%s205 + $0x30] sm:$0xff] %v6886
      %6889 = vst [vmem:[%s205 + $0x38] sm:$0xff] %v6887
      %v6892 = vcombine.high %v6880, %v6881
      %6894 = vst [vmem:[%s210] sm:$0xff] %v6892
      %p6895 = scmp.lt.s32.totalorder %s16, 1
      %s6896 = scalar_select %p6895, %s16, 1
      %s6897 = smul.addr %s6896, 8
      %s6898 = smul.addr %s6897, 8
      %s6899 = scalar_lea.vmem %s3, %s6898
      %p6900 = scmp.lt.s32.totalorder %s16, 1
      %s6901 = scalar_select %p6900, %s16, 1
      %s6902 = smul.addr %s6901, 2
      %s6903 = smul.addr %s6902, 4
      %s6904 = scalar_lea.vmem %s4, %s6903
      // Predicated region
      $region33: #{conv_lstm_forward.1} parent=31 // pred_check
        %p6905 = pneg %p102
      $region34: #{conv_lstm_forward.1} parent=31 // pred_check_branch
        %6907 = sbr.rel (%p6905) target = $region36
      $region35: #{conv_lstm_forward.1} parent=31 // pred_region
        _
      $region36: #{conv_lstm_forward.1} parent=31 // pred_fallthru
        _
      // Predicated region
      $region37: #{conv_lstm_forward.1} parent=31 // pred_check
        %p6908 = pneg %p128
      $region38: #{conv_lstm_forward.1} parent=31 // pred_check_branch
        %6910 = sbr.rel (%p6908) target = $region40
      $region39: #{conv_lstm_forward.1} parent=31 // pred_region
        _
      $region40: #{conv_lstm_forward.1} parent=31 // pred_fallthru
        _
    $region32: #{conv_lstm_forward.1} parent=5 // pred_fallthru
      _
    %p6911 = scmp.le.s32.totalorder 2, %s11
    // Predicated region
    $region41: #{conv_lstm_forward.1} parent=5 // pred_check
      %p6912 = pneg %p6911
    $region42: #{conv_lstm_forward.1} parent=5 // pred_check_branch
      %6914 = sbr.rel (%p6912) target = $region44
    $region43: #{conv_lstm_forward.1} parent=5 // pred_region
      %s6915 = ssub.s32 %s11, 2
      // Predicated region
      $region45: #{conv_lstm_forward.1} parent=43 // pred_check
        %p6916 = pneg %p108
      $region46: #{conv_lstm_forward.1} parent=43 // pred_check_branch
        %6918 = sbr.rel (%p6916) target = $region48
      $region47: #{conv_lstm_forward.1} parent=43 // pred_region
        %p6919 = scmp.lt.s32.totalorder %s17, 1
        %s6920 = scalar_select %p6919, %s17, 1
        %s6921 = smul.addr %s6920, 8
        %s6922 = smul.addr %s6921, 8
        %s6923 = scalar_lea.vmem %s3, %s6922
      $region48: #{conv_lstm_forward.1} parent=43 // pred_fallthru
        _
      // Predicated region
      $region49: #{conv_lstm_forward.1} parent=43 // pred_check
        %p6924 = pneg %p134
      $region50: #{conv_lstm_forward.1} parent=43 // pred_check_branch
        %6926 = sbr.rel (%p6924) target = $region52
      $region51: #{conv_lstm_forward.1} parent=43 // pred_region
        %p6927 = scmp.lt.s32.totalorder %s17, 1
        %s6928 = scalar_select %p6927, %s17, 1
        %s6929 = smul.addr %s6928, 2
        %s6930 = smul.addr %s6929, 4
        %s6931 = scalar_lea.vmem %s4, %s6930
      $region52: #{conv_lstm_forward.1} parent=43 // pred_fallthru
        _
    $region44: #{conv_lstm_forward.1} parent=5 // pred_fallthru
      _
  $region6: #{conv_lstm_forward.1} parent=0 // loop_footer
    %s15 = sadd.s32 1, %s11
  $region7: #{conv_lstm_forward.1} parent=0 // loop_footer_branch
    %10 = sbr.rel target = $region3
  $region8: #{conv_lstm_forward.1} parent=0 // loop_exit
    _

</llo_original>
